<compile_context>
chip_gen: v7x
topology: tpu7x:2x2x1
jax: 0.10.0
libtpu: 0.0.40
codegen_flags: <defaults>
</compile_context>

<pallas_src>
import functools

import jax
import jax.numpy as jnp
from jax import lax
from jax.experimental import pallas as pl
from jax.experimental.pallas import tpu as pltpu


def _round_up(x, m):
    return (x + m - 1) // m * m


SUB = 16   # bf16 sublane packing: keep row strides / slice starts 16-aligned
EXT = 16   # scratch front/back row extension (>=1 for the +/-1 shifted stores)


# ------------------------------ Pallas kernel ------------------------------ #

def _bottleneck_kernel(x_ref, mask_ref, w1_ref, b1_ref, w2_ref, b2_ref,
                       w3_ref, b3_ref, o_ref, h1c_ref, *, rows_per_band, wq,
                       ch_flat, compute_dtype):
    """Fused Bottleneck for one row-band of one image.

    Layout: channels-last, spatially padded image flattened to rows of stride
    `wq` (a multiple of 16 so shifted tap slices stay sublane aligned).

    x_ref   : (He*wq, cin_p)   bf16  full padded image (resident, revisited)
    mask_ref: (He*wq, 1)       f32   1.0 on interior pixels, 0.0 elsewhere
    w*_ref  : BN-scale-folded conv weights (bf16); b*_ref folded biases (f32)
    o_ref   : (RB*wq, cout_p)  bf16  this band's output rows
    h1c_ref : (3, 2*EXT + (RB+2)*wq, wd_p) bf16 scratch: the three kw-shifted
              copies of conv1's output, so every 3x3 tap read is aligned.
    """
    rb = pl.program_id(1)
    out_flat = rows_per_band * wq                  # output rows in this band
    halo_flat = (rows_per_band + 2) * wq           # band rows + 1-row halo each side
    band0 = pl.multiple_of(rb * out_flat, SUB)     # global flat row of halo start
    wd_p = w2_ref.shape[2]

    # ---- conv1 (1x1) + bn1 + relu over band+halo rows, chunked; stage the
    #      three column(kw)-shifted bf16 copies:  copy_j[i] = h1[i + (j-1)].
    for s in range(0, halo_flat, ch_flat):
        c = min(ch_flat, halo_flat - s)
        g0 = pl.multiple_of(band0 + s, SUB)
        xs = x_ref[pl.ds(g0, c), :]                                # (c, cin_p) bf16
        h1 = jnp.dot(xs, w1_ref[...], preferred_element_type=jnp.float32)
        h1 = jnp.maximum(h1 + b1_ref[...], 0.0) * mask_ref[pl.ds(g0, c), :]
        h1 = h1.astype(compute_dtype)
        for j in range(3):                         # 2 of 3 stores are off by +/-1
            h1c_ref[j, EXT + s + (1 - j):EXT + s + (1 - j) + c, :] = h1

    # ---- conv2 (3x3) + bn2 + relu  ->  conv3 (1x1) + bn3 + residual + relu,
    #      chunked over output rows: the f32 accumulator stays a small tile
    #      and the 9-tap loop is innermost.
    for s in range(0, out_flat, ch_flat):
        c = min(ch_flat, out_flat - s)
        acc = jnp.zeros((c, wd_p), jnp.float32)
        for kh in range(3):
            base = EXT + wq + s + (kh - 1) * wq                    # static, 16-aligned
            for kw in range(3):
                tap = h1c_ref[kw, base:base + c, :]                # aligned bf16 load
                acc += jnp.dot(tap, w2_ref[kh * 3 + kw],
                               preferred_element_type=jnp.float32)
        h2 = jnp.maximum(acc + b2_ref[...], 0.0).astype(compute_dtype)
        y = jnp.dot(h2, w3_ref[...], preferred_element_type=jnp.float32)
        g0 = pl.multiple_of(band0 + wq + s, SUB)                   # residual rows
        y = y + b3_ref[...] + x_ref[pl.ds(g0, c), :].astype(jnp.float32)
        o_ref[s:s + c, :] = jnp.maximum(y, 0.0).astype(o_ref.dtype)


# --------------------------------- wrapper ---------------------------------- #

def _fold_bn(gamma, beta, mean, var, eps=1e-5):
    s = gamma / jnp.sqrt(var + eps)
    return s, beta - mean * s


def bottleneck_forward(x_nchw, params, *, compute_dtype=jnp.bfloat16,
                       out_dtype=jnp.bfloat16, lane=128, rows_per_band=None,
                       chunk_flat_rows=512):
    """Pallas implementation of Bottleneck.forward (eval-mode BN, default path)."""
    N, Cin, H, W = x_nchw.shape
    width = params["w1"].shape[0]            # torch conv1 weight: (width, Cin, 1, 1)
    Cout = params["w3"].shape[0]             # (planes*4, width, 1, 1)
    assert Cout == Cin, "downsample=None requires inplanes == planes*expansion"

    cin_p = _round_up(Cin, lane)
    wd_p = _round_up(width, lane)
    cout_p = _round_up(Cout, lane)
    assert cin_p == cout_p                   # needed for the in-kernel residual

    wq = _round_up(W + 2, SUB)               # aligned flat row stride (incl. conv pad)

    if rows_per_band is None:                # spatial grid axis (v7x / big H*W)
        rows_per_band = max(1, min(H, 2048 // wq))
        if N == 1 and rows_per_band >= H:    # keep both TensorCores busy at N==1
            rows_per_band = max(1, (H + 1) // 2)
    RB = rows_per_band
    NB = -(-H // RB)                         # number of row bands
    H_r = NB * RB
    He = H_r + 2                             # +1 halo/ring row top & bottom
    ch_flat = max(SUB, (chunk_flat_rows // SUB) * SUB)

    # NCHW -> NHWC, embed into the zero (He, wq) canvas, flatten spatial to rows.
    x = jnp.transpose(x_nchw, (0, 2, 3, 1)).astype(jnp.float32)
    canvas = jnp.zeros((N, He, wq, cin_p), jnp.float32)
    canvas = canvas.at[:, 1:H + 1, 1:W + 1, :Cin].set(x)
    x_flat = canvas.reshape(N, He * wq, cin_p).astype(compute_dtype)

    # Interior mask (1 inside HxW, 0 on ring / alignment pad) in flat-row layout.
    g = jnp.arange(He)[:, None]
    col = jnp.arange(wq)[None, :]
    mask = (((g >= 1) & (g <= H) & (col >= 1) & (col <= W))
            .astype(jnp.float32).reshape(He * wq, 1))

    # Fold BN scale into the conv weights (per output channel); keep the bias.
    s1, b1 = _fold_bn(*params["bn1"])
    s2, b2 = _fold_bn(*params["bn2"])
    s3, b3 = _fold_bn(*params["bn3"])
    w1 = params["w1"][:, :, 0, 0].T * s1[None, :]                       # (Cin, width)
    w2 = (jnp.transpose(params["w2"], (2, 3, 1, 0)).reshape(9, width, width)
          * s2[None, None, :])                                          # (9, In, Out)
    w3 = params["w3"][:, :, 0, 0].T * s3[None, :]                       # (width, Cout)

    # Zero-pad to lane-dense shapes; weights to compute dtype, biases stay f32.
    w1p = jnp.zeros((cin_p, wd_p), jnp.float32).at[:Cin, :width].set(w1).astype(compute_dtype)
    w2p = jnp.zeros((9, wd_p, wd_p), jnp.float32).at[:, :width, :width].set(w2).astype(compute_dtype)
    w3p = jnp.zeros((wd_p, cout_p), jnp.float32).at[:width, :Cout].set(w3).astype(compute_dtype)
    b1p = jnp.zeros((1, wd_p), jnp.float32).at[0, :width].set(b1)
    b2p = jnp.zeros((1, wd_p), jnp.float32).at[0, :width].set(b2)
    b3p = jnp.zeros((1, cout_p), jnp.float32).at[0, :Cout].set(b3)

    kernel = functools.partial(_bottleneck_kernel, rows_per_band=RB, wq=wq,
                               ch_flat=ch_flat, compute_dtype=compute_dtype)

    out_flat = pl.pallas_call(
        kernel,
        out_shape=jax.ShapeDtypeStruct((N, H_r * wq, cout_p), out_dtype),
        grid=(N, NB),
        in_specs=[
            pl.BlockSpec((None, He * wq, cin_p), lambda n, rb: (n, 0, 0)),  # image (resident per n)
            pl.BlockSpec((He * wq, 1), lambda n, rb: (0, 0)),               # interior mask
            pl.BlockSpec((cin_p, wd_p), lambda n, rb: (0, 0)),              # w1
            pl.BlockSpec((1, wd_p), lambda n, rb: (0, 0)),                  # b1
            pl.BlockSpec((9, wd_p, wd_p), lambda n, rb: (0, 0, 0)),         # w2 taps
            pl.BlockSpec((1, wd_p), lambda n, rb: (0, 0)),                  # b2
            pl.BlockSpec((wd_p, cout_p), lambda n, rb: (0, 0)),             # w3
            pl.BlockSpec((1, cout_p), lambda n, rb: (0, 0)),                # b3
        ],
        out_specs=pl.BlockSpec((None, RB * wq, cout_p), lambda n, rb: (n, rb, 0)),
        scratch_shapes=[pltpu.VMEM((3, 2 * EXT + (RB + 2) * wq, wd_p),
                                   compute_dtype)],
        compiler_params=pltpu.CompilerParams(
            dimension_semantics=("parallel", "parallel"),
            vmem_limit_bytes=64 * 1024 * 1024),
    )(x_flat, mask, w1p, b1p, w2p, b2p, w3p, b3p)

    out = out_flat.reshape(N, H_r, wq, cout_p)[:, :H, 1:W + 1, :Cout]
    return jnp.transpose(out, (0, 3, 1, 2))                           # back to NCHW


# ----------------------- pure-JAX reference (check) ------------------------ #

def reference_forward(x_nchw, params, eps=1e-5):
    x = jnp.transpose(x_nchw, (0, 2, 3, 1)).astype(jnp.float32)

    def bn(y, p):
        g, b, m, v = p
        return (y - m) / jnp.sqrt(v + eps) * g + b

    w1 = params["w1"][:, :, 0, 0].T
    h1 = jnp.maximum(bn(jnp.einsum("nhwc,cd->nhwd", x, w1), params["bn1"]), 0.0)
    w2 = jnp.transpose(params["w2"], (2, 3, 1, 0))                    # HWIO
    h2 = lax.conv_general_dilated(h1, w2, (1, 1), ((1, 1), (1, 1)),
                                  dimension_numbers=("NHWC", "HWIO", "NHWC"))
    h2 = jnp.maximum(bn(h2, params["bn2"]), 0.0)
    w3 = params["w3"][:, :, 0, 0].T
    h3 = bn(jnp.einsum("nhwd,de->nhwe", h2, w3), params["bn3"])
    out = jnp.maximum(h3 + x, 0.0)
    return jnp.transpose(out, (0, 3, 1, 2))


# --------------------------------- main ------------------------------------ #

def init_params(key, inplanes, planes, base_width=64, groups=1, expansion=4):
    width = int(planes * (base_width / 64.0)) * groups
    out_c = planes * expansion
    keys = jax.random.split(key, 6)

    def bn_params(k, c):
        k1, k2, k3, k4 = jax.random.split(k, 4)
        gamma = 1.0 + 0.1 * jax.random.normal(k1, (c,), jnp.float32)
        beta = 0.1 * jax.random.normal(k2, (c,), jnp.float32)
        mean = 0.1 * jax.random.normal(k3, (c,), jnp.float32)
        var = 0.5 + jnp.abs(jax.random.normal(k4, (c,), jnp.float32))
        return (gamma, beta, mean, var)

    return {
        "w1": 0.1 * jax.random.normal(keys[0], (width, inplanes, 1, 1), jnp.float32),
        "bn1": bn_params(keys[1], width),
        "w2": 0.1 * jax.random.normal(keys[2], (width, width, 3, 3), jnp.float32),
        "bn2": bn_params(keys[3], width),
        "w3": 0.1 * jax.random.normal(keys[4], (out_c, width, 1, 1), jnp.float32),
        "bn3": bn_params(keys[5], out_c),
    }


if __name__ == "__main__":
    key = jax.random.PRNGKey(0)
    kx, kp = jax.random.split(key)

    inplanes, planes = 16, 4          # width = 4, out channels = 16 == inplanes
    N, H, W = 2, 16, 16
    x = jax.random.normal(kx, (N, inplanes, H, W), jnp.float32)       # NCHW, as PyTorch
    params = init_params(kp, inplanes, planes)

    fwd = jax.jit(bottleneck_forward)
    out = jax.block_until_ready(fwd(x, params))
    ref = jax.block_until_ready(reference_forward(x, params))

    assert out.shape == (N, planes * 4, H, W)
    max_err = float(jnp.max(jnp.abs(out.astype(jnp.float32) - ref)))
    # bf16 MXU inputs/outputs with f32 accumulation -> loosened tolerance vs f32 ref.
    assert jnp.allclose(out.astype(jnp.float32), ref, atol=5e-2, rtol=5e-2), \
        f"mismatch vs reference (max abs err={max_err})"
    print("KERNEL_OK")
</pallas_src>

<mosaic_0001>
module attributes {stable_mosaic.version = 11 : i64} {
  func.func @_bottleneck_kernel(%arg0: i32, %arg1: i32, %arg2: memref<1x576x128xbf16, #tpu.memory_space<vmem>>, %arg3: memref<576x1xf32, #tpu.memory_space<vmem>>, %arg4: memref<128x128xbf16, #tpu.memory_space<vmem>>, %arg5: memref<1x128xf32, #tpu.memory_space<vmem>>, %arg6: memref<9x128x128xbf16, #tpu.memory_space<vmem>>, %arg7: memref<1x128xf32, #tpu.memory_space<vmem>>, %arg8: memref<128x128xbf16, #tpu.memory_space<vmem>>, %arg9: memref<1x128xf32, #tpu.memory_space<vmem>>, %arg10: memref<1x512x128xbf16, #tpu.memory_space<vmem>>, %arg11: memref<3x608x128xbf16, #tpu.memory_space<vmem>>) attributes {dimension_semantics = [#tpu.dimension_semantics<parallel>, #tpu.dimension_semantics<parallel>], iteration_bounds = array<i64: 2, 1>, scalar_prefetch = 0 : i64, scratch_operands = 1 : i64, tpu.core_type = #tpu.core_type<tc>, window_params = [{transform_indices = @transform_0, window_bounds = array<i64: 1, 576, 128>}, {pipeline_mode = #tpu.pipeline_mode<synchronous>, transform_indices = @transform_1, window_bounds = array<i64: 576, 1>}, {pipeline_mode = #tpu.pipeline_mode<synchronous>, transform_indices = @transform_2, window_bounds = array<i64: 128, 128>}, {pipeline_mode = #tpu.pipeline_mode<synchronous>, transform_indices = @transform_3, window_bounds = array<i64: 1, 128>}, {pipeline_mode = #tpu.pipeline_mode<synchronous>, transform_indices = @transform_4, window_bounds = array<i64: 9, 128, 128>}, {pipeline_mode = #tpu.pipeline_mode<synchronous>, transform_indices = @transform_5, window_bounds = array<i64: 1, 128>}, {pipeline_mode = #tpu.pipeline_mode<synchronous>, transform_indices = @transform_6, window_bounds = array<i64: 128, 128>}, {pipeline_mode = #tpu.pipeline_mode<synchronous>, transform_indices = @transform_7, window_bounds = array<i64: 1, 128>}, {transform_indices = @transform_8, window_bounds = array<i64: 1, 512, 128>}]} {
    %c512_i32 = arith.constant 512 : i32
    %0 = arith.muli %arg1, %c512_i32 : i32
    %1 = tpu.assume_multiple %0, 16 : i32
    %c0_i32 = arith.constant 0 : i32
    %2 = arith.addi %1, %c0_i32 : i32
    %3 = tpu.assume_multiple %2, 16 : i32
    %c0 = arith.constant 0 : index
    %4 = arith.index_cast %3 : i32 to index
    %c0_0 = arith.constant 0 : index
    %5 = vector.load %arg2[%c0, %4, %c0_0] : memref<1x576x128xbf16, #tpu.memory_space<vmem>>, vector<1x512x128xbf16>
    %6 = vector.shape_cast %5 : vector<1x512x128xbf16> to vector<512x128xbf16>
    %c0_1 = arith.constant 0 : index
    %c0_2 = arith.constant 0 : index
    %7 = vector.load %arg4[%c0_1, %c0_2] : memref<128x128xbf16, #tpu.memory_space<vmem>>, vector<128x128xbf16>
    %cst = arith.constant dense<0.000000e+00> : vector<512x128xf32>
    %8 = tpu.matmul %6, %7, %cst {dimension_numbers = #tpu.dot_dimension_numbers<[1], [0], [0], [1], [0, 0, 1, 1], [], []>} : vector<512x128xbf16>, vector<128x128xbf16>, vector<512x128xf32> -> vector<512x128xf32>
    %c0_3 = arith.constant 0 : index
    %c0_4 = arith.constant 0 : index
    %9 = vector.load %arg5[%c0_3, %c0_4] : memref<1x128xf32, #tpu.memory_space<vmem>>, vector<1x128xf32>
    %10 = vector.broadcast %9 : vector<1x128xf32> to vector<512x128xf32>
    %11 = arith.addf %8, %10 : vector<512x128xf32>
    %cst_5 = arith.constant 0.000000e+00 : f32
    %12 = vector.broadcast %cst_5 : f32 to vector<512x128xf32>
    %13 = arith.maximumf %11, %12 : vector<512x128xf32>
    %14 = arith.index_cast %3 : i32 to index
    %c0_6 = arith.constant 0 : index
    %15 = vector.load %arg3[%14, %c0_6] : memref<576x1xf32, #tpu.memory_space<vmem>>, vector<512x1xf32>
    %16 = vector.broadcast %15 : vector<512x1xf32> to vector<512x128xf32>
    %17 = arith.mulf %13, %16 : vector<512x128xf32>
    %18 = arith.truncf %17 : vector<512x128xf32> to vector<512x128xbf16>
    %c0_7 = arith.constant 0 : index
    %c17 = arith.constant 17 : index
    %c0_8 = arith.constant 0 : index
    %19 = vector.load %arg11[%c0_7, %c17, %c0_8] : memref<3x608x128xbf16, #tpu.memory_space<vmem>>, vector<1x512x128xbf16>
    %20 = vector.shape_cast %19 : vector<1x512x128xbf16> to vector<512x128xbf16>
    %21 = vector.shape_cast %18 : vector<512x128xbf16> to vector<1x512x128xbf16>
    tpu.vector_store %arg11[%c0_7, %c17, %c0_8], %21 {strides = array<i32>} : memref<3x608x128xbf16, #tpu.memory_space<vmem>>, vector<1x512x128xbf16>,
    %c1 = arith.constant 1 : index
    %c16 = arith.constant 16 : index
    %c0_9 = arith.constant 0 : index
    %22 = vector.load %arg11[%c1, %c16, %c0_9] : memref<3x608x128xbf16, #tpu.memory_space<vmem>>, vector<1x512x128xbf16>
    %23 = vector.shape_cast %22 : vector<1x512x128xbf16> to vector<512x128xbf16>
    %24 = vector.shape_cast %18 : vector<512x128xbf16> to vector<1x512x128xbf16>
    tpu.vector_store %arg11[%c1, %c16, %c0_9], %24 {strides = array<i32>} : memref<3x608x128xbf16, #tpu.memory_space<vmem>>, vector<1x512x128xbf16>,
    %c2 = arith.constant 2 : index
    %c15 = arith.constant 15 : index
    %c0_10 = arith.constant 0 : index
    %25 = vector.load %arg11[%c2, %c15, %c0_10] : memref<3x608x128xbf16, #tpu.memory_space<vmem>>, vector<1x512x128xbf16>
    %26 = vector.shape_cast %25 : vector<1x512x128xbf16> to vector<512x128xbf16>
    %27 = vector.shape_cast %18 : vector<512x128xbf16> to vector<1x512x128xbf16>
    tpu.vector_store %arg11[%c2, %c15, %c0_10], %27 {strides = array<i32>} : memref<3x608x128xbf16, #tpu.memory_space<vmem>>, vector<1x512x128xbf16>,
    %c512_i32_11 = arith.constant 512 : i32
    %28 = arith.addi %1, %c512_i32_11 : i32
    %29 = tpu.assume_multiple %28, 16 : i32
    %c0_12 = arith.constant 0 : index
    %30 = arith.index_cast %29 : i32 to index
    %c0_13 = arith.constant 0 : index
    %31 = vector.load %arg2[%c0_12, %30, %c0_13] : memref<1x576x128xbf16, #tpu.memory_space<vmem>>, vector<1x64x128xbf16>
    %32 = vector.shape_cast %31 : vector<1x64x128xbf16> to vector<64x128xbf16>
    %c0_14 = arith.constant 0 : index
    %c0_15 = arith.constant 0 : index
    %33 = vector.load %arg4[%c0_14, %c0_15] : memref<128x128xbf16, #tpu.memory_space<vmem>>, vector<128x128xbf16>
    %cst_16 = arith.constant dense<0.000000e+00> : vector<64x128xf32>
    %34 = tpu.matmul %32, %33, %cst_16 {dimension_numbers = #tpu.dot_dimension_numbers<[1], [0], [0], [1], [0, 0, 1, 1], [], []>} : vector<64x128xbf16>, vector<128x128xbf16>, vector<64x128xf32> -> vector<64x128xf32>
    %c0_17 = arith.constant 0 : index
    %c0_18 = arith.constant 0 : index
    %35 = vector.load %arg5[%c0_17, %c0_18] : memref<1x128xf32, #tpu.memory_space<vmem>>, vector<1x128xf32>
    %36 = vector.broadcast %35 : vector<1x128xf32> to vector<64x128xf32>
    %37 = arith.addf %34, %36 : vector<64x128xf32>
    %cst_19 = arith.constant 0.000000e+00 : f32
    %38 = vector.broadcast %cst_19 : f32 to vector<64x128xf32>
    %39 = arith.maximumf %37, %38 : vector<64x128xf32>
    %40 = arith.index_cast %29 : i32 to index
    %c0_20 = arith.constant 0 : index
    %41 = vector.load %arg3[%40, %c0_20] : memref<576x1xf32, #tpu.memory_space<vmem>>, vector<64x1xf32>
    %42 = vector.broadcast %41 : vector<64x1xf32> to vector<64x128xf32>
    %43 = arith.mulf %39, %42 : vector<64x128xf32>
    %44 = arith.truncf %43 : vector<64x128xf32> to vector<64x128xbf16>
    %c0_21 = arith.constant 0 : index
    %c529 = arith.constant 529 : index
    %c0_22 = arith.constant 0 : index
    %45 = vector.load %arg11[%c0_21, %c529, %c0_22] : memref<3x608x128xbf16, #tpu.memory_space<vmem>>, vector<1x64x128xbf16>
    %46 = vector.shape_cast %45 : vector<1x64x128xbf16> to vector<64x128xbf16>
    %47 = vector.shape_cast %44 : vector<64x128xbf16> to vector<1x64x128xbf16>
    tpu.vector_store %arg11[%c0_21, %c529, %c0_22], %47 {strides = array<i32>} : memref<3x608x128xbf16, #tpu.memory_space<vmem>>, vector<1x64x128xbf16>,
    %c1_23 = arith.constant 1 : index
    %c528 = arith.constant 528 : index
    %c0_24 = arith.constant 0 : index
    %48 = vector.load %arg11[%c1_23, %c528, %c0_24] : memref<3x608x128xbf16, #tpu.memory_space<vmem>>, vector<1x64x128xbf16>
    %49 = vector.shape_cast %48 : vector<1x64x128xbf16> to vector<64x128xbf16>
    %50 = vector.shape_cast %44 : vector<64x128xbf16> to vector<1x64x128xbf16>
    tpu.vector_store %arg11[%c1_23, %c528, %c0_24], %50 {strides = array<i32>} : memref<3x608x128xbf16, #tpu.memory_space<vmem>>, vector<1x64x128xbf16>,
    %c2_25 = arith.constant 2 : index
    %c527 = arith.constant 527 : index
    %c0_26 = arith.constant 0 : index
    %51 = vector.load %arg11[%c2_25, %c527, %c0_26] : memref<3x608x128xbf16, #tpu.memory_space<vmem>>, vector<1x64x128xbf16>
    %52 = vector.shape_cast %51 : vector<1x64x128xbf16> to vector<64x128xbf16>
    %53 = vector.shape_cast %44 : vector<64x128xbf16> to vector<1x64x128xbf16>
    tpu.vector_store %arg11[%c2_25, %c527, %c0_26], %53 {strides = array<i32>} : memref<3x608x128xbf16, #tpu.memory_space<vmem>>, vector<1x64x128xbf16>,
    %cst_27 = arith.constant 0.000000e+00 : f32
    %54 = vector.broadcast %cst_27 : f32 to vector<512x128xf32>
    %c0_28 = arith.constant 0 : index
    %c16_29 = arith.constant 16 : index
    %c0_30 = arith.constant 0 : index
    %55 = vector.load %arg11[%c0_28, %c16_29, %c0_30] : memref<3x608x128xbf16, #tpu.memory_space<vmem>>, vector<1x512x128xbf16>
    %56 = vector.shape_cast %55 : vector<1x512x128xbf16> to vector<512x128xbf16>
    %c0_31 = arith.constant 0 : index
    %c0_32 = arith.constant 0 : index
    %c0_33 = arith.constant 0 : index
    %57 = vector.load %arg6[%c0_31, %c0_32, %c0_33] : memref<9x128x128xbf16, #tpu.memory_space<vmem>>, vector<1x128x128xbf16>
    %58 = vector.shape_cast %57 : vector<1x128x128xbf16> to vector<128x128xbf16>
    %cst_34 = arith.constant dense<0.000000e+00> : vector<512x128xf32>
    %59 = tpu.matmul %56, %58, %cst_34 {dimension_numbers = #tpu.dot_dimension_numbers<[1], [0], [0], [1], [0, 0, 1, 1], [], []>} : vector<512x128xbf16>, vector<128x128xbf16>, vector<512x128xf32> -> vector<512x128xf32>
    %60 = arith.addf %54, %59 : vector<512x128xf32>
    %c1_35 = arith.constant 1 : index
    %c16_36 = arith.constant 16 : index
    %c0_37 = arith.constant 0 : index
    %61 = vector.load %arg11[%c1_35, %c16_36, %c0_37] : memref<3x608x128xbf16, #tpu.memory_space<vmem>>, vector<1x512x128xbf16>
    %62 = vector.shape_cast %61 : vector<1x512x128xbf16> to vector<512x128xbf16>
    %c1_38 = arith.constant 1 : index
    %c0_39 = arith.constant 0 : index
    %c0_40 = arith.constant 0 : index
    %63 = vector.load %arg6[%c1_38, %c0_39, %c0_40] : memref<9x128x128xbf16, #tpu.memory_space<vmem>>, vector<1x128x128xbf16>
    %64 = vector.shape_cast %63 : vector<1x128x128xbf16> to vector<128x128xbf16>
    %cst_41 = arith.constant dense<0.000000e+00> : vector<512x128xf32>
    %65 = tpu.matmul %62, %64, %cst_41 {dimension_numbers = #tpu.dot_dimension_numbers<[1], [0], [0], [1], [0, 0, 1, 1], [], []>} : vector<512x128xbf16>, vector<128x128xbf16>, vector<512x128xf32> -> vector<512x128xf32>
    %66 = arith.addf %60, %65 : vector<512x128xf32>
    %c2_42 = arith.constant 2 : index
    %c16_43 = arith.constant 16 : index
    %c0_44 = arith.constant 0 : index
    %67 = vector.load %arg11[%c2_42, %c16_43, %c0_44] : memref<3x608x128xbf16, #tpu.memory_space<vmem>>, vector<1x512x128xbf16>
    %68 = vector.shape_cast %67 : vector<1x512x128xbf16> to vector<512x128xbf16>
    %c2_45 = arith.constant 2 : index
    %c0_46 = arith.constant 0 : index
    %c0_47 = arith.constant 0 : index
    %69 = vector.load %arg6[%c2_45, %c0_46, %c0_47] : memref<9x128x128xbf16, #tpu.memory_space<vmem>>, vector<1x128x128xbf16>
    %70 = vector.shape_cast %69 : vector<1x128x128xbf16> to vector<128x128xbf16>
    %cst_48 = arith.constant dense<0.000000e+00> : vector<512x128xf32>
    %71 = tpu.matmul %68, %70, %cst_48 {dimension_numbers = #tpu.dot_dimension_numbers<[1], [0], [0], [1], [0, 0, 1, 1], [], []>} : vector<512x128xbf16>, vector<128x128xbf16>, vector<512x128xf32> -> vector<512x128xf32>
    %72 = arith.addf %66, %71 : vector<512x128xf32>
    %c0_49 = arith.constant 0 : index
    %c48 = arith.constant 48 : index
    %c0_50 = arith.constant 0 : index
    %73 = vector.load %arg11[%c0_49, %c48, %c0_50] : memref<3x608x128xbf16, #tpu.memory_space<vmem>>, vector<1x512x128xbf16>
    %74 = vector.shape_cast %73 : vector<1x512x128xbf16> to vector<512x128xbf16>
    %c3 = arith.constant 3 : index
    %c0_51 = arith.constant 0 : index
    %c0_52 = arith.constant 0 : index
    %75 = vector.load %arg6[%c3, %c0_51, %c0_52] : memref<9x128x128xbf16, #tpu.memory_space<vmem>>, vector<1x128x128xbf16>
    %76 = vector.shape_cast %75 : vector<1x128x128xbf16> to vector<128x128xbf16>
    %cst_53 = arith.constant dense<0.000000e+00> : vector<512x128xf32>
    %77 = tpu.matmul %74, %76, %cst_53 {dimension_numbers = #tpu.dot_dimension_numbers<[1], [0], [0], [1], [0, 0, 1, 1], [], []>} : vector<512x128xbf16>, vector<128x128xbf16>, vector<512x128xf32> -> vector<512x128xf32>
    %78 = arith.addf %72, %77 : vector<512x128xf32>
    %c1_54 = arith.constant 1 : index
    %c48_55 = arith.constant 48 : index
    %c0_56 = arith.constant 0 : index
    %79 = vector.load %arg11[%c1_54, %c48_55, %c0_56] : memref<3x608x128xbf16, #tpu.memory_space<vmem>>, vector<1x512x128xbf16>
    %80 = vector.shape_cast %79 : vector<1x512x128xbf16> to vector<512x128xbf16>
    %c4 = arith.constant 4 : index
    %c0_57 = arith.constant 0 : index
    %c0_58 = arith.constant 0 : index
    %81 = vector.load %arg6[%c4, %c0_57, %c0_58] : memref<9x128x128xbf16, #tpu.memory_space<vmem>>, vector<1x128x128xbf16>
    %82 = vector.shape_cast %81 : vector<1x128x128xbf16> to vector<128x128xbf16>
    %cst_59 = arith.constant dense<0.000000e+00> : vector<512x128xf32>
    %83 = tpu.matmul %80, %82, %cst_59 {dimension_numbers = #tpu.dot_dimension_numbers<[1], [0], [0], [1], [0, 0, 1, 1], [], []>} : vector<512x128xbf16>, vector<128x128xbf16>, vector<512x128xf32> -> vector<512x128xf32>
    %84 = arith.addf %78, %83 : vector<512x128xf32>
    %c2_60 = arith.constant 2 : index
    %c48_61 = arith.constant 48 : index
    %c0_62 = arith.constant 0 : index
    %85 = vector.load %arg11[%c2_60, %c48_61, %c0_62] : memref<3x608x128xbf16, #tpu.memory_space<vmem>>, vector<1x512x128xbf16>
    %86 = vector.shape_cast %85 : vector<1x512x128xbf16> to vector<512x128xbf16>
    %c5 = arith.constant 5 : index
    %c0_63 = arith.constant 0 : index
    %c0_64 = arith.constant 0 : index
    %87 = vector.load %arg6[%c5, %c0_63, %c0_64] : memref<9x128x128xbf16, #tpu.memory_space<vmem>>, vector<1x128x128xbf16>
    %88 = vector.shape_cast %87 : vector<1x128x128xbf16> to vector<128x128xbf16>
    %cst_65 = arith.constant dense<0.000000e+00> : vector<512x128xf32>
    %89 = tpu.matmul %86, %88, %cst_65 {dimension_numbers = #tpu.dot_dimension_numbers<[1], [0], [0], [1], [0, 0, 1, 1], [], []>} : vector<512x128xbf16>, vector<128x128xbf16>, vector<512x128xf32> -> vector<512x128xf32>
    %90 = arith.addf %84, %89 : vector<512x128xf32>
    %c0_66 = arith.constant 0 : index
    %c80 = arith.constant 80 : index
    %c0_67 = arith.constant 0 : index
    %91 = vector.load %arg11[%c0_66, %c80, %c0_67] : memref<3x608x128xbf16, #tpu.memory_space<vmem>>, vector<1x512x128xbf16>
    %92 = vector.shape_cast %91 : vector<1x512x128xbf16> to vector<512x128xbf16>
    %c6 = arith.constant 6 : index
    %c0_68 = arith.constant 0 : index
    %c0_69 = arith.constant 0 : index
    %93 = vector.load %arg6[%c6, %c0_68, %c0_69] : memref<9x128x128xbf16, #tpu.memory_space<vmem>>, vector<1x128x128xbf16>
    %94 = vector.shape_cast %93 : vector<1x128x128xbf16> to vector<128x128xbf16>
    %cst_70 = arith.constant dense<0.000000e+00> : vector<512x128xf32>
    %95 = tpu.matmul %92, %94, %cst_70 {dimension_numbers = #tpu.dot_dimension_numbers<[1], [0], [0], [1], [0, 0, 1, 1], [], []>} : vector<512x128xbf16>, vector<128x128xbf16>, vector<512x128xf32> -> vector<512x128xf32>
    %96 = arith.addf %90, %95 : vector<512x128xf32>
    %c1_71 = arith.constant 1 : index
    %c80_72 = arith.constant 80 : index
    %c0_73 = arith.constant 0 : index
    %97 = vector.load %arg11[%c1_71, %c80_72, %c0_73] : memref<3x608x128xbf16, #tpu.memory_space<vmem>>, vector<1x512x128xbf16>
    %98 = vector.shape_cast %97 : vector<1x512x128xbf16> to vector<512x128xbf16>
    %c7 = arith.constant 7 : index
    %c0_74 = arith.constant 0 : index
    %c0_75 = arith.constant 0 : index
    %99 = vector.load %arg6[%c7, %c0_74, %c0_75] : memref<9x128x128xbf16, #tpu.memory_space<vmem>>, vector<1x128x128xbf16>
    %100 = vector.shape_cast %99 : vector<1x128x128xbf16> to vector<128x128xbf16>
    %cst_76 = arith.constant dense<0.000000e+00> : vector<512x128xf32>
    %101 = tpu.matmul %98, %100, %cst_76 {dimension_numbers = #tpu.dot_dimension_numbers<[1], [0], [0], [1], [0, 0, 1, 1], [], []>} : vector<512x128xbf16>, vector<128x128xbf16>, vector<512x128xf32> -> vector<512x128xf32>
    %102 = arith.addf %96, %101 : vector<512x128xf32>
    %c2_77 = arith.constant 2 : index
    %c80_78 = arith.constant 80 : index
    %c0_79 = arith.constant 0 : index
    %103 = vector.load %arg11[%c2_77, %c80_78, %c0_79] : memref<3x608x128xbf16, #tpu.memory_space<vmem>>, vector<1x512x128xbf16>
    %104 = vector.shape_cast %103 : vector<1x512x128xbf16> to vector<512x128xbf16>
    %c8 = arith.constant 8 : index
    %c0_80 = arith.constant 0 : index
    %c0_81 = arith.constant 0 : index
    %105 = vector.load %arg6[%c8, %c0_80, %c0_81] : memref<9x128x128xbf16, #tpu.memory_space<vmem>>, vector<1x128x128xbf16>
    %106 = vector.shape_cast %105 : vector<1x128x128xbf16> to vector<128x128xbf16>
    %cst_82 = arith.constant dense<0.000000e+00> : vector<512x128xf32>
    %107 = tpu.matmul %104, %106, %cst_82 {dimension_numbers = #tpu.dot_dimension_numbers<[1], [0], [0], [1], [0, 0, 1, 1], [], []>} : vector<512x128xbf16>, vector<128x128xbf16>, vector<512x128xf32> -> vector<512x128xf32>
    %108 = arith.addf %102, %107 : vector<512x128xf32>
    %c0_83 = arith.constant 0 : index
    %c0_84 = arith.constant 0 : index
    %109 = vector.load %arg7[%c0_83, %c0_84] : memref<1x128xf32, #tpu.memory_space<vmem>>, vector<1x128xf32>
    %110 = vector.broadcast %109 : vector<1x128xf32> to vector<512x128xf32>
    %111 = arith.addf %108, %110 : vector<512x128xf32>
    %cst_85 = arith.constant 0.000000e+00 : f32
    %112 = vector.broadcast %cst_85 : f32 to vector<512x128xf32>
    %113 = arith.maximumf %111, %112 : vector<512x128xf32>
    %114 = arith.truncf %113 : vector<512x128xf32> to vector<512x128xbf16>
    %c0_86 = arith.constant 0 : index
    %c0_87 = arith.constant 0 : index
    %115 = vector.load %arg8[%c0_86, %c0_87] : memref<128x128xbf16, #tpu.memory_space<vmem>>, vector<128x128xbf16>
    %cst_88 = arith.constant dense<0.000000e+00> : vector<512x128xf32>
    %116 = tpu.matmul %114, %115, %cst_88 {dimension_numbers = #tpu.dot_dimension_numbers<[1], [0], [0], [1], [0, 0, 1, 1], [], []>} : vector<512x128xbf16>, vector<128x128xbf16>, vector<512x128xf32> -> vector<512x128xf32>
    %c32_i32 = arith.constant 32 : i32
    %117 = arith.addi %1, %c32_i32 : i32
    %c0_i32_89 = arith.constant 0 : i32
    %118 = arith.addi %117, %c0_i32_89 : i32
    %119 = tpu.assume_multiple %118, 16 : i32
    %c0_90 = arith.constant 0 : index
    %c0_91 = arith.constant 0 : index
    %120 = vector.load %arg9[%c0_90, %c0_91] : memref<1x128xf32, #tpu.memory_space<vmem>>, vector<1x128xf32>
    %121 = vector.broadcast %120 : vector<1x128xf32> to vector<512x128xf32>
    %122 = arith.addf %116, %121 : vector<512x128xf32>
    %c0_92 = arith.constant 0 : index
    %123 = arith.index_cast %119 : i32 to index
    %c0_93 = arith.constant 0 : index
    %124 = vector.load %arg2[%c0_92, %123, %c0_93] : memref<1x576x128xbf16, #tpu.memory_space<vmem>>, vector<1x512x128xbf16>
    %125 = vector.shape_cast %124 : vector<1x512x128xbf16> to vector<512x128xbf16>
    %126 = arith.extf %125 : vector<512x128xbf16> to vector<512x128xf32>
    %127 = arith.addf %122, %126 : vector<512x128xf32>
    %cst_94 = arith.constant 0.000000e+00 : f32
    %128 = vector.broadcast %cst_94 : f32 to vector<512x128xf32>
    %129 = arith.maximumf %127, %128 : vector<512x128xf32>
    %130 = arith.truncf %129 : vector<512x128xf32> to vector<512x128xbf16>
    %c0_95 = arith.constant 0 : index
    %c0_96 = arith.constant 0 : index
    %c0_97 = arith.constant 0 : index
    %131 = vector.load %arg10[%c0_95, %c0_96, %c0_97] : memref<1x512x128xbf16, #tpu.memory_space<vmem>>, vector<1x512x128xbf16>
    %132 = vector.shape_cast %131 : vector<1x512x128xbf16> to vector<512x128xbf16>
    %133 = vector.shape_cast %130 : vector<512x128xbf16> to vector<1x512x128xbf16>
    tpu.vector_store %arg10[%c0_95, %c0_96, %c0_97], %133 {strides = array<i32>} : memref<1x512x128xbf16, #tpu.memory_space<vmem>>, vector<1x512x128xbf16>,
    return
  }
  func.func @transform_0(%arg0: i32, %arg1: i32) -> (i32, i32, i32) {
    %c0_i32 = arith.constant 0 : i32
    %c0_i32_0 = arith.constant 0 : i32
    %c0_i32_1 = arith.constant 0 : i32
    return %arg0, %c0_i32, %c0_i32_0 : i32, i32, i32
  }
  func.func @transform_1(%arg0: i32, %arg1: i32) -> (i32, i32) {
    %c0_i32 = arith.constant 0 : i32
    %c0_i32_0 = arith.constant 0 : i32
    %c0_i32_1 = arith.constant 0 : i32
    return %c0_i32, %c0_i32_0 : i32, i32
  }
  func.func @transform_2(%arg0: i32, %arg1: i32) -> (i32, i32) {
    %c0_i32 = arith.constant 0 : i32
    %c0_i32_0 = arith.constant 0 : i32
    %c0_i32_1 = arith.constant 0 : i32
    return %c0_i32, %c0_i32_0 : i32, i32
  }
  func.func @transform_3(%arg0: i32, %arg1: i32) -> (i32, i32) {
    %c0_i32 = arith.constant 0 : i32
    %c0_i32_0 = arith.constant 0 : i32
    %c0_i32_1 = arith.constant 0 : i32
    return %c0_i32, %c0_i32_0 : i32, i32
  }
  func.func @transform_4(%arg0: i32, %arg1: i32) -> (i32, i32, i32) {
    %c0_i32 = arith.constant 0 : i32
    %c0_i32_0 = arith.constant 0 : i32
    %c0_i32_1 = arith.constant 0 : i32
    %c0_i32_2 = arith.constant 0 : i32
    return %c0_i32, %c0_i32_0, %c0_i32_1 : i32, i32, i32
  }
  func.func @transform_5(%arg0: i32, %arg1: i32) -> (i32, i32) {
    %c0_i32 = arith.constant 0 : i32
    %c0_i32_0 = arith.constant 0 : i32
    %c0_i32_1 = arith.constant 0 : i32
    return %c0_i32, %c0_i32_0 : i32, i32
  }
  func.func @transform_6(%arg0: i32, %arg1: i32) -> (i32, i32) {
    %c0_i32 = arith.constant 0 : i32
    %c0_i32_0 = arith.constant 0 : i32
    %c0_i32_1 = arith.constant 0 : i32
    return %c0_i32, %c0_i32_0 : i32, i32
  }
  func.func @transform_7(%arg0: i32, %arg1: i32) -> (i32, i32) {
    %c0_i32 = arith.constant 0 : i32
    %c0_i32_0 = arith.constant 0 : i32
    %c0_i32_1 = arith.constant 0 : i32
    return %c0_i32, %c0_i32_0 : i32, i32
  }
  func.func @transform_8(%arg0: i32, %arg1: i32) -> (i32, i32, i32) {
    %c0_i32 = arith.constant 0 : i32
    %c0_i32_0 = arith.constant 0 : i32
    return %arg0, %arg1, %c0_i32 : i32, i32, i32
  }
}

</mosaic_0001>

<llo_original>
// kernel: bottleneck_forward.1
$region0: #{bottleneck_forward.1}
  #allocation0 [shape = 'u32[]', space=smem, size = 0x4, offset = 0x4, fixed_abs, tag = 'smem constant byte address 0x4 - core index']
  #allocation1 [shape = 'u32[144,128]{1,0:T(1,128)}', space=vmem, size = 0x12000, scoped, tag = 'internal scratch']
  #allocation2 [shape = 'bf16[3,608,128]{2,1,0:T(16,128)(2,1)}', space=vmem, size = 0x72000, scoped, tag = 'scratch operand']
  %s0 = inlined_call_operand.hbm [shape: bf16[2,576,128], index: 0, kind: input, shape index: {}]
  %s1 = inlined_call_operand.hbm [shape: f32[576,1], index: 1, kind: input, shape index: {}]
  %s2 = inlined_call_operand.hbm [shape: bf16[128,128], index: 2, kind: input, shape index: {}]
  %s3 = inlined_call_operand.hbm [shape: f32[1,128], index: 3, kind: input, shape index: {}]
  %s4 = inlined_call_operand.hbm [shape: bf16[9,128,128], index: 4, kind: input, shape index: {}]
  %s5 = inlined_call_operand.hbm [shape: f32[1,128], index: 5, kind: input, shape index: {}]
  %s6 = inlined_call_operand.hbm [shape: bf16[128,128], index: 6, kind: input, shape index: {}]
  %s7 = inlined_call_operand.hbm [shape: f32[1,128], index: 7, kind: input, shape index: {}]
  %s8 = inlined_call_operand.hbm [shape: bf16[2,512,128], index: 8, kind: output, shape index: {}]
  %s9 = sld [smem:[#allocation0]]
  $region97: #{bottleneck_forward.1} parent=0
    _
  %s11 = ssub.s32 1, %s9
  %s12 = scalar_select 0, %s11, %s9
  $region1: #{bottleneck_forward.1} parent=0
    #allocation3 [shape = 'u8[294912]{0}', space=vmem, size = 0x48000, scoped, tag = 'input window, operand 0']
    #allocation4 [shape = 's32[2]{0}', space=sflag, size = 0x8, scoped, tag = 'scoped memory for bottleneck_forward.1']
    #allocation5 [shape = 's32[2]{0}', space=sflag, size = 0x8, scoped, tag = 'scoped memory for bottleneck_forward.1']
    #allocation6 [shape = 'u8[294912]{0}', space=vmem, size = 0x48000, scoped, tag = 'input window, operand 1, single buffered']
    #allocation7 [shape = 's32[1]{0}', space=sflag, size = 0x4, scoped, tag = 'scoped memory for bottleneck_forward.1']
    #allocation8 [shape = 'u8[32768]{0}', space=vmem, size = 0x8000, scoped, tag = 'input window, operand 2, single buffered']
    #allocation9 [shape = 'u8[512]{0}', space=vmem, size = 0x400, scoped, tag = 'input window, operand 3, single buffered']
    #allocation10 [shape = 's32[1]{0}', space=sflag, size = 0x4, scoped, tag = 'scoped memory for bottleneck_forward.1']
    #allocation11 [shape = 'u8[294912]{0}', space=vmem, size = 0x48000, scoped, tag = 'input window, operand 4, single buffered']
    #allocation12 [shape = 'u8[512]{0}', space=vmem, size = 0x400, scoped, tag = 'input window, operand 5, single buffered']
    #allocation13 [shape = 's32[1]{0}', space=sflag, size = 0x4, scoped, tag = 'scoped memory for bottleneck_forward.1']
    #allocation14 [shape = 'u8[32768]{0}', space=vmem, size = 0x8000, scoped, tag = 'input window, operand 6, single buffered']
    #allocation15 [shape = 'u8[512]{0}', space=vmem, size = 0x400, scoped, tag = 'input window, operand 7, single buffered']
    #allocation16 [shape = 's32[1]{0}', space=sflag, size = 0x4, scoped, tag = 'scoped memory for bottleneck_forward.1']
    #allocation17 [shape = 'u8[262144]{0}', space=vmem, size = 0x40000, scoped, tag = 'output window, operand 0']
    %13 = vsyncpa [#allocation4], 0
    %s14 = scalar_lea.sflag [#allocation4], 1
    %15 = vsyncpa %s14, 0
    %16 = vsyncpa [#allocation7], 0
    %17 = vsyncpa [#allocation10], 0
    %18 = vsyncpa [#allocation13], 0
    %19 = vsyncpa [#allocation16], 0
    %20 = vsyncpa [#allocation5], 0
    %s21 = scalar_lea.sflag [#allocation5], 1
    %22 = vsyncpa %s21, 0
    loop: start=0, step=1, limit=4
    $region2: #{bottleneck_forward.1} parent=1 // loop_pre_header
      _
    $region3: #{bottleneck_forward.1} parent=1 // loop_header
      %s24 = sphi 0, %s28
      %p25 = scmp.ge.s32.totalorder %s24, 4
      %s31 = sphi 0, %s43
      %s32 = sphi 0, %s39
      %s33 = sphi 0, %s31
      %s34 = sphi 0, %s32
      %s35 = sphi 0, %s33
      %s36 = sphi 0, %s34
      %s46 = sphi 0, %s48
      %s49 = sphi 0, %s46
      %s50 = sphi 0, %s49
      %s66 = sphi 0, %s50
      %s70 = sphi 0, %s70
      %s72 = sphi 0, %s70
      %s73 = sphi 0, %s72
      %s87 = sphi 0, %s73
      %s91 = sphi 0, %s91
      %s93 = sphi 0, %s91
      %s94 = sphi 0, %s93
      %s108 = sphi 0, %s94
      %s112 = sphi 0, %s112
      %s114 = sphi 0, %s112
      %s115 = sphi 0, %s114
      %s129 = sphi 0, %s115
      %s133 = sphi 0, %s133
      %s135 = sphi 0, %s133
      %s136 = sphi 0, %s135
      %s150 = sphi 0, %s136
      %s154 = sphi 0, %s154
      %s156 = sphi 0, %s154
      %s157 = sphi 0, %s156
      %s171 = sphi 0, %s157
      %s175 = sphi 0, %s175
      %s177 = sphi 0, %s175
      %s178 = sphi 0, %s177
      %s192 = sphi 0, %s178
      %s196 = sphi 0, %s196
      %s198 = sphi 0, %s196
      %s199 = sphi 0, %s198
      %s213 = sphi 0, %s199
      %s221 = sphi 0, %s223
      %s224 = sphi 0, %s221
      %s225 = sphi 0, %s224
      %s241 = sphi 0, %s225
    $region4: #{bottleneck_forward.1} parent=1 // loop_header_branch
      %27 = sbr.rel (%p25) target = $region8
    $region5: #{bottleneck_forward.1} parent=1 // loop_body
      %s29 = ssub.s32 %s24, 1
      %s30 = ssub.s32 %s24, 2
      %s37 = sadd.s32 1, %s32
      %p38 = scmp.ge.s32.totalorder %s37, 1
      %s39 = scalar_select %p38, 0, %s37
      %s40 = sadd.s32 1, %s31
      %s41 = scalar_select %p38, %s40, %s31
      %p42 = scmp.ge.s32.totalorder %s41, 2
      %s43 = scalar_select %p42, 0, %s41
      %s44 = ssub.s32 %s31, %s43
      %p45 = scmp.eq.s32.totalorder %s44, 0
      %s47 = sadd.s32 %s46, 1
      %s48 = scalar_select %p45, %s46, %s47
      %p51 = pneg %p45
      %p52 = scmp.eq.s32.totalorder %s24, 1
      %p53 = por %p51, %p52
      %p54 = scmp.ne.s32.totalorder %s46, %s49
      %p55 = scmp.eq.s32.totalorder %s24, 0
      %p56 = por %p54, %p55
      %p57 = scmp.ne.s32.totalorder %s46, %s49
      %p58 = scmp.eq.s32.totalorder %s29, 1
      %p59 = por %p57, %p58
      %p60 = scmp.ne.s32.totalorder %s49, %s50
      %p61 = scmp.eq.s32.totalorder %s29, 0
      %p62 = por %p60, %p61
      %p63 = scmp.ne.s32.totalorder %s49, %s50
      %p64 = scmp.eq.s32.totalorder %s30, 1
      %p65 = por %p63, %p64
      %p67 = scmp.ne.s32.totalorder %s50, %s66
      %p68 = scmp.eq.s32.totalorder %s30, 0
      %p69 = por %p67, %p68
      %s71 = sadd.s32 %s70, 1
      %p74 = scmp.eq.s32.totalorder %s24, 1
      %p75 = scmp.ne.s32.totalorder %s70, %s72
      %p76 = scmp.eq.s32.totalorder %s24, 0
      %p77 = por %p75, %p76
      %p78 = scmp.ne.s32.totalorder %s70, %s72
      %p79 = scmp.eq.s32.totalorder %s29, 1
      %p80 = por %p78, %p79
      %p81 = scmp.ne.s32.totalorder %s72, %s73
      %p82 = scmp.eq.s32.totalorder %s29, 0
      %p83 = por %p81, %p82
      %p84 = scmp.ne.s32.totalorder %s72, %s73
      %p85 = scmp.eq.s32.totalorder %s30, 1
      %p86 = por %p84, %p85
      %p88 = scmp.ne.s32.totalorder %s73, %s87
      %p89 = scmp.eq.s32.totalorder %s30, 0
      %p90 = por %p88, %p89
      %s92 = sadd.s32 %s91, 1
      %p95 = scmp.eq.s32.totalorder %s24, 1
      %p96 = scmp.ne.s32.totalorder %s91, %s93
      %p97 = scmp.eq.s32.totalorder %s24, 0
      %p98 = por %p96, %p97
      %p99 = scmp.ne.s32.totalorder %s91, %s93
      %p100 = scmp.eq.s32.totalorder %s29, 1
      %p101 = por %p99, %p100
      %p102 = scmp.ne.s32.totalorder %s93, %s94
      %p103 = scmp.eq.s32.totalorder %s29, 0
      %p104 = por %p102, %p103
      %p105 = scmp.ne.s32.totalorder %s93, %s94
      %p106 = scmp.eq.s32.totalorder %s30, 1
      %p107 = por %p105, %p106
      %p109 = scmp.ne.s32.totalorder %s94, %s108
      %p110 = scmp.eq.s32.totalorder %s30, 0
      %p111 = por %p109, %p110
      %s113 = sadd.s32 %s112, 1
      %p116 = scmp.eq.s32.totalorder %s24, 1
      %p117 = scmp.ne.s32.totalorder %s112, %s114
      %p118 = scmp.eq.s32.totalorder %s24, 0
      %p119 = por %p117, %p118
      %p120 = scmp.ne.s32.totalorder %s112, %s114
      %p121 = scmp.eq.s32.totalorder %s29, 1
      %p122 = por %p120, %p121
      %p123 = scmp.ne.s32.totalorder %s114, %s115
      %p124 = scmp.eq.s32.totalorder %s29, 0
      %p125 = por %p123, %p124
      %p126 = scmp.ne.s32.totalorder %s114, %s115
      %p127 = scmp.eq.s32.totalorder %s30, 1
      %p128 = por %p126, %p127
      %p130 = scmp.ne.s32.totalorder %s115, %s129
      %p131 = scmp.eq.s32.totalorder %s30, 0
      %p132 = por %p130, %p131
      %s134 = sadd.s32 %s133, 1
      %p137 = scmp.eq.s32.totalorder %s24, 1
      %p138 = scmp.ne.s32.totalorder %s133, %s135
      %p139 = scmp.eq.s32.totalorder %s24, 0
      %p140 = por %p138, %p139
      %p141 = scmp.ne.s32.totalorder %s133, %s135
      %p142 = scmp.eq.s32.totalorder %s29, 1
      %p143 = por %p141, %p142
      %p144 = scmp.ne.s32.totalorder %s135, %s136
      %p145 = scmp.eq.s32.totalorder %s29, 0
      %p146 = por %p144, %p145
      %p147 = scmp.ne.s32.totalorder %s135, %s136
      %p148 = scmp.eq.s32.totalorder %s30, 1
      %p149 = por %p147, %p148
      %p151 = scmp.ne.s32.totalorder %s136, %s150
      %p152 = scmp.eq.s32.totalorder %s30, 0
      %p153 = por %p151, %p152
      %s155 = sadd.s32 %s154, 1
      %p158 = scmp.eq.s32.totalorder %s24, 1
      %p159 = scmp.ne.s32.totalorder %s154, %s156
      %p160 = scmp.eq.s32.totalorder %s24, 0
      %p161 = por %p159, %p160
      %p162 = scmp.ne.s32.totalorder %s154, %s156
      %p163 = scmp.eq.s32.totalorder %s29, 1
      %p164 = por %p162, %p163
      %p165 = scmp.ne.s32.totalorder %s156, %s157
      %p166 = scmp.eq.s32.totalorder %s29, 0
      %p167 = por %p165, %p166
      %p168 = scmp.ne.s32.totalorder %s156, %s157
      %p169 = scmp.eq.s32.totalorder %s30, 1
      %p170 = por %p168, %p169
      %p172 = scmp.ne.s32.totalorder %s157, %s171
      %p173 = scmp.eq.s32.totalorder %s30, 0
      %p174 = por %p172, %p173
      %s176 = sadd.s32 %s175, 1
      %p179 = scmp.eq.s32.totalorder %s24, 1
      %p180 = scmp.ne.s32.totalorder %s175, %s177
      %p181 = scmp.eq.s32.totalorder %s24, 0
      %p182 = por %p180, %p181
      %p183 = scmp.ne.s32.totalorder %s175, %s177
      %p184 = scmp.eq.s32.totalorder %s29, 1
      %p185 = por %p183, %p184
      %p186 = scmp.ne.s32.totalorder %s177, %s178
      %p187 = scmp.eq.s32.totalorder %s29, 0
      %p188 = por %p186, %p187
      %p189 = scmp.ne.s32.totalorder %s177, %s178
      %p190 = scmp.eq.s32.totalorder %s30, 1
      %p191 = por %p189, %p190
      %p193 = scmp.ne.s32.totalorder %s178, %s192
      %p194 = scmp.eq.s32.totalorder %s30, 0
      %p195 = por %p193, %p194
      %s197 = sadd.s32 %s196, 1
      %p200 = scmp.eq.s32.totalorder %s24, 1
      %p201 = scmp.ne.s32.totalorder %s196, %s198
      %p202 = scmp.eq.s32.totalorder %s24, 0
      %p203 = por %p201, %p202
      %p204 = scmp.ne.s32.totalorder %s196, %s198
      %p205 = scmp.eq.s32.totalorder %s29, 1
      %p206 = por %p204, %p205
      %p207 = scmp.ne.s32.totalorder %s198, %s199
      %p208 = scmp.eq.s32.totalorder %s29, 0
      %p209 = por %p207, %p208
      %p210 = scmp.ne.s32.totalorder %s198, %s199
      %p211 = scmp.eq.s32.totalorder %s30, 1
      %p212 = por %p210, %p211
      %p214 = scmp.ne.s32.totalorder %s199, %s213
      %p215 = scmp.eq.s32.totalorder %s30, 0
      %p216 = por %p214, %p215
      %s217 = ssub.s32 %s31, %s43
      %s218 = ssub.s32 %s32, %s39
      %s219 = sor.u32 %s217, %s218
      %p220 = scmp.eq.s32.totalorder %s219, 0
      %s222 = sadd.s32 %s221, 1
      %s223 = scalar_select %p220, %s221, %s222
      %p226 = pneg %p220
      %p227 = scmp.eq.s32.totalorder %s24, 1
      %p228 = por %p226, %p227
      %p229 = scmp.ne.s32.totalorder %s221, %s224
      %p230 = scmp.eq.s32.totalorder %s24, 0
      %p231 = por %p229, %p230
      %p232 = scmp.ne.s32.totalorder %s221, %s224
      %p233 = scmp.eq.s32.totalorder %s29, 1
      %p234 = por %p232, %p233
      %p235 = scmp.ne.s32.totalorder %s224, %s225
      %p236 = scmp.eq.s32.totalorder %s29, 0
      %p237 = por %p235, %p236
      %p238 = scmp.ne.s32.totalorder %s224, %s225
      %p239 = scmp.eq.s32.totalorder %s30, 1
      %p240 = por %p238, %p239
      %p242 = scmp.ne.s32.totalorder %s225, %s241
      %p243 = scmp.eq.s32.totalorder %s30, 0
      %p244 = por %p242, %p243
      %p245 = scmp.le.s32.totalorder 1, %s24
      %p246 = scmp.lt.s32.totalorder %s24, 3
      %p247 = pnand %p245, %p246
      %p248 = pneg %p247
      // Predicated region
      $region9: #{bottleneck_forward.1} parent=5 // pred_check
        _
      $region10: #{bottleneck_forward.1} parent=5 // pred_check_branch
        %250 = sbr.rel (%p247) target = $region12
      $region11: #{bottleneck_forward.1} parent=5 // pred_region
        %s251 = ssub.s32 %s24, 1
        // Predicated region
        $region13: #{bottleneck_forward.1} parent=11 // pred_check
          %p252 = pneg %p83
        $region14: #{bottleneck_forward.1} parent=11 // pred_check_branch
          %254 = sbr.rel (%p252) target = $region16
        $region15: #{bottleneck_forward.1} parent=11 // pred_region
          %s256 = ssub.s32 9216, 9216
          %257 = vsyncadd [#allocation7], %s256
          %s258 = sshll.u32 [#allocation6], 4
          %s259 = int_to_ptr.vmem [resolvable:$true] %s258
          %264 = dma.hbm_to_vmem [thread:$0]  %s1, 9216, %s259, [#allocation7], 128, 128, 8
        $region16: #{bottleneck_forward.1} parent=11 // pred_fallthru
          _
        // Predicated region
        $region17: #{bottleneck_forward.1} parent=11 // pred_check
          %p265 = pneg %p104
        $region18: #{bottleneck_forward.1} parent=11 // pred_check_branch
          %267 = sbr.rel (%p265) target = $region20
        $region19: #{bottleneck_forward.1} parent=11 // pred_region
          %s269 = ssub.s32 1024, 1024
          %270 = vsyncadd [#allocation7], %s269
          %s271 = sshll.u32 [#allocation8], 4
          %s272 = int_to_ptr.vmem [resolvable:$true] %s271
          %277 = dma.hbm_to_vmem [thread:$0]  %s2, 1024, %s272, [#allocation7], 64, 64, 4
        $region20: #{bottleneck_forward.1} parent=11 // pred_fallthru
          _
        // Predicated region
        $region21: #{bottleneck_forward.1} parent=11 // pred_check
          %p278 = pneg %p125
        $region22: #{bottleneck_forward.1} parent=11 // pred_check_branch
          %280 = sbr.rel (%p278) target = $region24
        $region23: #{bottleneck_forward.1} parent=11 // pred_region
          %s282 = ssub.s32 16, 16
          %283 = vsyncadd [#allocation10], %s282
          %s285 = sshll.u32 [#allocation9], 4
          %s286 = int_to_ptr.vmem [resolvable:$true] %s285
          %288 = dma.hbm_to_vmem [thread:$0]  %s3, 16, %s286, [#allocation10]
        $region24: #{bottleneck_forward.1} parent=11 // pred_fallthru
          _
        // Predicated region
        $region25: #{bottleneck_forward.1} parent=11 // pred_check
          %p289 = pneg %p146
        $region26: #{bottleneck_forward.1} parent=11 // pred_check_branch
          %291 = sbr.rel (%p289) target = $region28
        $region27: #{bottleneck_forward.1} parent=11 // pred_region
          %s293 = ssub.s32 9216, 9216
          %294 = vsyncadd [#allocation10], %s293
          %s295 = sshll.u32 [#allocation11], 4
          %s296 = int_to_ptr.vmem [resolvable:$true] %s295
          %301 = dma.hbm_to_vmem [thread:$0]  %s4, 9216, %s296, [#allocation10], 64, 64, 4
        $region28: #{bottleneck_forward.1} parent=11 // pred_fallthru
          _
        // Predicated region
        $region29: #{bottleneck_forward.1} parent=11 // pred_check
          %p302 = pneg %p167
        $region30: #{bottleneck_forward.1} parent=11 // pred_check_branch
          %304 = sbr.rel (%p302) target = $region32
        $region31: #{bottleneck_forward.1} parent=11 // pred_region
          %s306 = ssub.s32 16, 16
          %307 = vsyncadd [#allocation13], %s306
          %s309 = sshll.u32 [#allocation12], 4
          %s310 = int_to_ptr.vmem [resolvable:$true] %s309
          %312 = dma.hbm_to_vmem [thread:$0]  %s5, 16, %s310, [#allocation13]
        $region32: #{bottleneck_forward.1} parent=11 // pred_fallthru
          _
        // Predicated region
        $region33: #{bottleneck_forward.1} parent=11 // pred_check
          %p313 = pneg %p188
        $region34: #{bottleneck_forward.1} parent=11 // pred_check_branch
          %315 = sbr.rel (%p313) target = $region36
        $region35: #{bottleneck_forward.1} parent=11 // pred_region
          %s317 = ssub.s32 1024, 1024
          %318 = vsyncadd [#allocation13], %s317
          %s319 = sshll.u32 [#allocation14], 4
          %s320 = int_to_ptr.vmem [resolvable:$true] %s319
          %325 = dma.hbm_to_vmem [thread:$0]  %s6, 1024, %s320, [#allocation13], 64, 64, 4
        $region36: #{bottleneck_forward.1} parent=11 // pred_fallthru
          _
        // Predicated region
        $region37: #{bottleneck_forward.1} parent=11 // pred_check
          %p326 = pneg %p209
        $region38: #{bottleneck_forward.1} parent=11 // pred_check_branch
          %328 = sbr.rel (%p326) target = $region40
        $region39: #{bottleneck_forward.1} parent=11 // pred_region
          %s330 = ssub.s32 16, 16
          %331 = vsyncadd [#allocation16], %s330
          %s333 = sshll.u32 [#allocation15], 4
          %s334 = int_to_ptr.vmem [resolvable:$true] %s333
          %336 = dma.hbm_to_vmem [thread:$0]  %s7, 16, %s334, [#allocation16]
        $region40: #{bottleneck_forward.1} parent=11 // pred_fallthru
          _
      $region12: #{bottleneck_forward.1} parent=5 // pred_fallthru
        _
      %p337 = scmp.lt.s32.totalorder %s24, 2
      // Predicated region
      $region41: #{bottleneck_forward.1} parent=5 // pred_check
        %p338 = pneg %p337
      $region42: #{bottleneck_forward.1} parent=5 // pred_check_branch
        %340 = sbr.rel (%p338) target = $region44
      $region43: #{bottleneck_forward.1} parent=5 // pred_region
        // Predicated region
        $region45: #{bottleneck_forward.1} parent=43 // pred_check
          %p341 = pneg %p56
        $region46: #{bottleneck_forward.1} parent=43 // pred_check_branch
          %343 = sbr.rel (%p341) target = $region48
        $region47: #{bottleneck_forward.1} parent=43 // pred_region
          %s344 = sand.u32 %s46, 1
          %s345 = scalar_lea.sflag [#allocation4], %s344
          %s346 = sand.u32 %s46, 1
          %s347 = smul.addr %s346, 288
          %s348 = scalar_lea.vmem [#allocation3], %s347
          %s350 = ssub.s32 4608, 4608
          %351 = vsyncadd %s345, %s350
          %s352 = smul.addr %s31, 72
          %s353 = smul.addr %s352, 64
          %s354 = scalar_lea.hbm %s0, %s353
          %s355 = sshll.u32 %s348, 4
          %s356 = int_to_ptr.vmem [resolvable:$true] %s355
          %361 = dma.hbm_to_vmem [thread:$0]  %s354, 4608, %s356, %s345, 64, 64, 4
        $region48: #{bottleneck_forward.1} parent=43 // pred_fallthru
          _
      $region44: #{bottleneck_forward.1} parent=5 // pred_fallthru
        _
      %p362 = scmp.le.s32.totalorder 1, %s24
      %p363 = scmp.lt.s32.totalorder %s24, 3
      %p364 = pnand %p362, %p363
      %p365 = pneg %p364
      // Predicated region
      $region49: #{bottleneck_forward.1} parent=5 // pred_check
        _
      $region50: #{bottleneck_forward.1} parent=5 // pred_check_branch
        %367 = sbr.rel (%p364) target = $region52
      $region51: #{bottleneck_forward.1} parent=5 // pred_region
        %s368 = ssub.s32 %s24, 1
        %s369 = sand.u32 %s49, 1
        %s370 = scalar_lea.sflag [#allocation4], %s369
        %s371 = sand.u32 %s49, 1
        %s372 = smul.addr %s371, 288
        %s373 = scalar_lea.vmem [#allocation3], %s372
        // Predicated region
        $region53: #{bottleneck_forward.1} parent=51 // pred_check
          %p374 = pneg %p62
        $region54: #{bottleneck_forward.1} parent=51 // pred_check_branch
          %376 = sbr.rel (%p374) target = $region56
        $region55: #{bottleneck_forward.1} parent=51 // pred_region
          %377 = dma.done %s370, 4608
        $region56: #{bottleneck_forward.1} parent=51 // pred_fallthru
          _
        // Predicated region
        $region57: #{bottleneck_forward.1} parent=51 // pred_check
          %p378 = pneg %p83
        $region58: #{bottleneck_forward.1} parent=51 // pred_check_branch
          %380 = sbr.rel (%p378) target = $region60
        $region59: #{bottleneck_forward.1} parent=51 // pred_region
          %381 = dma.done [#allocation7], 9216
        $region60: #{bottleneck_forward.1} parent=51 // pred_fallthru
          _
        // Predicated region
        $region61: #{bottleneck_forward.1} parent=51 // pred_check
          %p382 = pneg %p104
        $region62: #{bottleneck_forward.1} parent=51 // pred_check_branch
          %384 = sbr.rel (%p382) target = $region64
        $region63: #{bottleneck_forward.1} parent=51 // pred_region
          %385 = dma.done [#allocation7], 1024
        $region64: #{bottleneck_forward.1} parent=51 // pred_fallthru
          _
        // Predicated region
        $region65: #{bottleneck_forward.1} parent=51 // pred_check
          %p386 = pneg %p125
        $region66: #{bottleneck_forward.1} parent=51 // pred_check_branch
          %388 = sbr.rel (%p386) target = $region68
        $region67: #{bottleneck_forward.1} parent=51 // pred_region
          %389 = dma.done [#allocation10], 16
        $region68: #{bottleneck_forward.1} parent=51 // pred_fallthru
          _
        // Predicated region
        $region69: #{bottleneck_forward.1} parent=51 // pred_check
          %p390 = pneg %p146
        $region70: #{bottleneck_forward.1} parent=51 // pred_check_branch
          %392 = sbr.rel (%p390) target = $region72
        $region71: #{bottleneck_forward.1} parent=51 // pred_region
          %393 = dma.done [#allocation10], 9216
        $region72: #{bottleneck_forward.1} parent=51 // pred_fallthru
          _
        // Predicated region
        $region73: #{bottleneck_forward.1} parent=51 // pred_check
          %p394 = pneg %p167
        $region74: #{bottleneck_forward.1} parent=51 // pred_check_branch
          %396 = sbr.rel (%p394) target = $region76
        $region75: #{bottleneck_forward.1} parent=51 // pred_region
          %397 = dma.done [#allocation13], 16
        $region76: #{bottleneck_forward.1} parent=51 // pred_fallthru
          _
        // Predicated region
        $region77: #{bottleneck_forward.1} parent=51 // pred_check
          %p398 = pneg %p188
        $region78: #{bottleneck_forward.1} parent=51 // pred_check_branch
          %400 = sbr.rel (%p398) target = $region80
        $region79: #{bottleneck_forward.1} parent=51 // pred_region
          %401 = dma.done [#allocation13], 1024
        $region80: #{bottleneck_forward.1} parent=51 // pred_fallthru
          _
        // Predicated region
        $region81: #{bottleneck_forward.1} parent=51 // pred_check
          %p402 = pneg %p209
        $region82: #{bottleneck_forward.1} parent=51 // pred_check_branch
          %404 = sbr.rel (%p402) target = $region84
        $region83: #{bottleneck_forward.1} parent=51 // pred_region
          %405 = dma.done [#allocation16], 16
        $region84: #{bottleneck_forward.1} parent=51 // pred_fallthru
          _
        %s406 = sand.u32 %s49, 1
        %s407 = scalar_lea.sflag [#allocation4], %s406
        %s408 = sand.u32 %s49, 1
        %s409 = smul.addr %s408, 288
        %s410 = scalar_lea.vmem [#allocation3], %s409
        %p411 = pneg %p62
        %p412 = pneg %p59
        %p413 = pneg %p83
        %p414 = pneg %p80
        %p415 = pneg %p104
        %p416 = pneg %p101
        %p417 = pneg %p125
        %p418 = pneg %p122
        %p419 = pneg %p146
        %p420 = pneg %p143
        %p421 = pneg %p167
        %p422 = pneg %p164
        %p423 = pneg %p188
        %p424 = pneg %p185
        %p425 = pneg %p209
        %p426 = pneg %p206
        %p427 = pneg %p237
        %p428 = pneg %p234
        %s429 = sand.u32 %s224, 1
        %s430 = scalar_lea.sflag [#allocation5], %s429
        %s431 = sand.u32 %s224, 1
        %s432 = smul.addr %s431, 256
        %s433 = scalar_lea.vmem [#allocation17], %s432
        %s434 = smul.u32 64, %s34
        %s436 = smul.u32 %s34, 512
        %s437 = sshra.s32 %s436, 3
        %s438 = sand.u32 %s436, 7
        %s439 = smul.addr %s437, 4
        %s440 = scalar_lea.vmem %s373, %s439 [#allocation3]
        %v441 = vld [vmem:[%s440] sm:$0xf]
        %v442 = vld [vmem:[%s440 + $0x4] sm:$0xf]
        %v443 = vld [vmem:[%s440 + $0x8] sm:$0xf]
        %v444 = vld [vmem:[%s440 + $0xc] sm:$0xf]
        %v445 = vld [vmem:[%s440 + $0x10] sm:$0xf]
        %v446 = vld [vmem:[%s440 + $0x14] sm:$0xf]
        %v447 = vld [vmem:[%s440 + $0x18] sm:$0xf]
        %v448 = vld [vmem:[%s440 + $0x1c] sm:$0xf]
        %v449 = vld [vmem:[%s440 + $0x20] sm:$0xf]
        %v450 = vld [vmem:[%s440 + $0x24] sm:$0xf]
        %v451 = vld [vmem:[%s440 + $0x28] sm:$0xf]
        %v452 = vld [vmem:[%s440 + $0x2c] sm:$0xf]
        %v453 = vld [vmem:[%s440 + $0x30] sm:$0xf]
        %v454 = vld [vmem:[%s440 + $0x34] sm:$0xf]
        %v455 = vld [vmem:[%s440 + $0x38] sm:$0xf]
        %v456 = vld [vmem:[%s440 + $0x3c] sm:$0xf]
        %v457 = vld [vmem:[%s440 + $0x40] sm:$0xf]
        %v458 = vld [vmem:[%s440 + $0x44] sm:$0xf]
        %v459 = vld [vmem:[%s440 + $0x48] sm:$0xf]
        %v460 = vld [vmem:[%s440 + $0x4c] sm:$0xf]
        %v461 = vld [vmem:[%s440 + $0x50] sm:$0xf]
        %v462 = vld [vmem:[%s440 + $0x54] sm:$0xf]
        %v463 = vld [vmem:[%s440 + $0x58] sm:$0xf]
        %v464 = vld [vmem:[%s440 + $0x5c] sm:$0xf]
        %v465 = vld [vmem:[%s440 + $0x60] sm:$0xf]
        %v466 = vld [vmem:[%s440 + $0x64] sm:$0xf]
        %v467 = vld [vmem:[%s440 + $0x68] sm:$0xf]
        %v468 = vld [vmem:[%s440 + $0x6c] sm:$0xf]
        %v469 = vld [vmem:[%s440 + $0x70] sm:$0xf]
        %v470 = vld [vmem:[%s440 + $0x74] sm:$0xf]
        %v471 = vld [vmem:[%s440 + $0x78] sm:$0xf]
        %v472 = vld [vmem:[%s440 + $0x7c] sm:$0xf]
        %v473 = vld [vmem:[%s440 + $0x80] sm:$0xf]
        %v474 = vld [vmem:[%s440 + $0x84] sm:$0xf]
        %v475 = vld [vmem:[%s440 + $0x88] sm:$0xf]
        %v476 = vld [vmem:[%s440 + $0x8c] sm:$0xf]
        %v477 = vld [vmem:[%s440 + $0x90] sm:$0xf]
        %v478 = vld [vmem:[%s440 + $0x94] sm:$0xf]
        %v479 = vld [vmem:[%s440 + $0x98] sm:$0xf]
        %v480 = vld [vmem:[%s440 + $0x9c] sm:$0xf]
        %v481 = vld [vmem:[%s440 + $0xa0] sm:$0xf]
        %v482 = vld [vmem:[%s440 + $0xa4] sm:$0xf]
        %v483 = vld [vmem:[%s440 + $0xa8] sm:$0xf]
        %v484 = vld [vmem:[%s440 + $0xac] sm:$0xf]
        %v485 = vld [vmem:[%s440 + $0xb0] sm:$0xf]
        %v486 = vld [vmem:[%s440 + $0xb4] sm:$0xf]
        %v487 = vld [vmem:[%s440 + $0xb8] sm:$0xf]
        %v488 = vld [vmem:[%s440 + $0xbc] sm:$0xf]
        %v489 = vld [vmem:[%s440 + $0xc0] sm:$0xf]
        %v490 = vld [vmem:[%s440 + $0xc4] sm:$0xf]
        %v491 = vld [vmem:[%s440 + $0xc8] sm:$0xf]
        %v492 = vld [vmem:[%s440 + $0xcc] sm:$0xf]
        %v493 = vld [vmem:[%s440 + $0xd0] sm:$0xf]
        %v494 = vld [vmem:[%s440 + $0xd4] sm:$0xf]
        %v495 = vld [vmem:[%s440 + $0xd8] sm:$0xf]
        %v496 = vld [vmem:[%s440 + $0xdc] sm:$0xf]
        %v497 = vld [vmem:[%s440 + $0xe0] sm:$0xf]
        %v498 = vld [vmem:[%s440 + $0xe4] sm:$0xf]
        %v499 = vld [vmem:[%s440 + $0xe8] sm:$0xf]
        %v500 = vld [vmem:[%s440 + $0xec] sm:$0xf]
        %v501 = vld [vmem:[%s440 + $0xf0] sm:$0xf]
        %v502 = vld [vmem:[%s440 + $0xf4] sm:$0xf]
        %v503 = vld [vmem:[%s440 + $0xf8] sm:$0xf]
        %v504 = vld [vmem:[%s440 + $0xfc] sm:$0xf]
        %v505 = vld [vmem:[#allocation8] sm:$0xf]
        %v506 = vld [vmem:[#allocation8 + $0x4] sm:$0xf]
        %v507 = vld [vmem:[#allocation8 + $0x8] sm:$0xf]
        %v508 = vld [vmem:[#allocation8 + $0xc] sm:$0xf]
        %v509 = vld [vmem:[#allocation8 + $0x10] sm:$0xf]
        %v510 = vld [vmem:[#allocation8 + $0x14] sm:$0xf]
        %v511 = vld [vmem:[#allocation8 + $0x18] sm:$0xf]
        %v512 = vld [vmem:[#allocation8 + $0x1c] sm:$0xf]
        %v513 = vld [vmem:[#allocation8 + $0x20] sm:$0xf]
        %v514 = vld [vmem:[#allocation8 + $0x24] sm:$0xf]
        %v515 = vld [vmem:[#allocation8 + $0x28] sm:$0xf]
        %v516 = vld [vmem:[#allocation8 + $0x2c] sm:$0xf]
        %v517 = vld [vmem:[#allocation8 + $0x30] sm:$0xf]
        %v518 = vld [vmem:[#allocation8 + $0x34] sm:$0xf]
        %v519 = vld [vmem:[#allocation8 + $0x38] sm:$0xf]
        %v520 = vld [vmem:[#allocation8 + $0x3c] sm:$0xf]
        %v521 = vld [vmem:[#allocation9] sm:$0x1]
        %v523 = vlaneseq
        %v524 = vshrl.u32 %v523, 7
        %v525 = vsub.s32 0, %v524
        %v526 = vrot.slane %v521, %v525
        %v592 = vunpack.c.l.b16 %v441
        %v593 = vunpack.c.l.b16 %v442
        %v594 = vunpack.c.l.b16 %v443
        %v595 = vunpack.c.l.b16 %v444
        %v596 = vunpack.c.l.b16 %v445
        %v597 = vunpack.c.l.b16 %v446
        %v598 = vunpack.c.l.b16 %v447
        %v599 = vunpack.c.l.b16 %v448
        %v600 = vunpack.c.l.b16 %v449
        %v601 = vunpack.c.l.b16 %v450
        %v602 = vunpack.c.l.b16 %v451
        %v603 = vunpack.c.l.b16 %v452
        %v604 = vunpack.c.l.b16 %v453
        %v605 = vunpack.c.l.b16 %v454
        %v606 = vunpack.c.l.b16 %v455
        %v607 = vunpack.c.l.b16 %v456
        %v608 = vunpack.c.l.b16 %v457
        %v609 = vunpack.c.l.b16 %v458
        %v610 = vunpack.c.l.b16 %v459
        %v611 = vunpack.c.l.b16 %v460
        %v612 = vunpack.c.l.b16 %v461
        %v613 = vunpack.c.l.b16 %v462
        %v614 = vunpack.c.l.b16 %v463
        %v615 = vunpack.c.l.b16 %v464
        %v616 = vunpack.c.l.b16 %v465
        %v617 = vunpack.c.l.b16 %v466
        %v618 = vunpack.c.l.b16 %v467
        %v619 = vunpack.c.l.b16 %v468
        %v620 = vunpack.c.l.b16 %v469
        %v621 = vunpack.c.l.b16 %v470
        %v622 = vunpack.c.l.b16 %v471
        %v623 = vunpack.c.l.b16 %v472
        %v624 = vunpack.c.l.b16 %v473
        %v625 = vunpack.c.l.b16 %v474
        %v626 = vunpack.c.l.b16 %v475
        %v627 = vunpack.c.l.b16 %v476
        %v628 = vunpack.c.l.b16 %v477
        %v629 = vunpack.c.l.b16 %v478
        %v630 = vunpack.c.l.b16 %v479
        %v631 = vunpack.c.l.b16 %v480
        %v632 = vunpack.c.l.b16 %v481
        %v633 = vunpack.c.l.b16 %v482
        %v634 = vunpack.c.l.b16 %v483
        %v635 = vunpack.c.l.b16 %v484
        %v636 = vunpack.c.l.b16 %v485
        %v637 = vunpack.c.l.b16 %v486
        %v638 = vunpack.c.l.b16 %v487
        %v639 = vunpack.c.l.b16 %v488
        %v640 = vunpack.c.l.b16 %v489
        %v641 = vunpack.c.l.b16 %v490
        %v642 = vunpack.c.l.b16 %v491
        %v643 = vunpack.c.l.b16 %v492
        %v644 = vunpack.c.l.b16 %v493
        %v645 = vunpack.c.l.b16 %v494
        %v646 = vunpack.c.l.b16 %v495
        %v647 = vunpack.c.l.b16 %v496
        %v648 = vunpack.c.l.b16 %v497
        %v649 = vunpack.c.l.b16 %v498
        %v650 = vunpack.c.l.b16 %v499
        %v651 = vunpack.c.l.b16 %v500
        %v652 = vunpack.c.l.b16 %v501
        %v653 = vunpack.c.l.b16 %v502
        %v654 = vunpack.c.l.b16 %v503
        %v655 = vunpack.c.l.b16 %v504
        %v656 = vpack.c.b16 %v593, %v592
        %v657 = vpack.c.b16 %v595, %v594
        %v658 = vpack.c.b16 %v597, %v596
        %v659 = vpack.c.b16 %v599, %v598
        %v660 = vpack.c.b16 %v601, %v600
        %v661 = vpack.c.b16 %v603, %v602
        %v662 = vpack.c.b16 %v605, %v604
        %v663 = vpack.c.b16 %v607, %v606
        %v664 = vpack.c.b16 %v609, %v608
        %v665 = vpack.c.b16 %v611, %v610
        %v666 = vpack.c.b16 %v613, %v612
        %v667 = vpack.c.b16 %v615, %v614
        %v668 = vpack.c.b16 %v617, %v616
        %v669 = vpack.c.b16 %v619, %v618
        %v670 = vpack.c.b16 %v621, %v620
        %v671 = vpack.c.b16 %v623, %v622
        %v672 = vpack.c.b16 %v625, %v624
        %v673 = vpack.c.b16 %v627, %v626
        %v674 = vpack.c.b16 %v629, %v628
        %v675 = vpack.c.b16 %v631, %v630
        %v676 = vpack.c.b16 %v633, %v632
        %v677 = vpack.c.b16 %v635, %v634
        %v678 = vpack.c.b16 %v637, %v636
        %v679 = vpack.c.b16 %v639, %v638
        %v680 = vpack.c.b16 %v641, %v640
        %v681 = vpack.c.b16 %v643, %v642
        %v682 = vpack.c.b16 %v645, %v644
        %v683 = vpack.c.b16 %v647, %v646
        %v684 = vpack.c.b16 %v649, %v648
        %v685 = vpack.c.b16 %v651, %v650
        %v686 = vpack.c.b16 %v653, %v652
        %v687 = vpack.c.b16 %v655, %v654
        %v736 = vunpack.c.l.b16 %v505
        %v737 = vunpack.c.l.b16 %v506
        %v738 = vunpack.c.l.b16 %v507
        %v739 = vunpack.c.l.b16 %v508
        %v740 = vunpack.c.l.b16 %v509
        %v741 = vunpack.c.l.b16 %v510
        %v742 = vunpack.c.l.b16 %v511
        %v743 = vunpack.c.l.b16 %v512
        %v744 = vunpack.c.l.b16 %v513
        %v745 = vunpack.c.l.b16 %v514
        %v746 = vunpack.c.l.b16 %v515
        %v747 = vunpack.c.l.b16 %v516
        %v748 = vunpack.c.l.b16 %v517
        %v749 = vunpack.c.l.b16 %v518
        %v750 = vunpack.c.l.b16 %v519
        %v751 = vunpack.c.l.b16 %v520
        %v752 = vpack.c.b16 %v737, %v736
        %v753 = vpack.c.b16 %v739, %v738
        %v754 = vpack.c.b16 %v741, %v740
        %v755 = vpack.c.b16 %v743, %v742
        %v756 = vpack.c.b16 %v745, %v744
        %v757 = vpack.c.b16 %v747, %v746
        %v758 = vpack.c.b16 %v749, %v748
        %v759 = vpack.c.b16 %v751, %v750
        %768 = vmatprep.subr.bf16.mxu0 0
        %769 = vmatpush1.bf16.msra.mxu0 %v752
        %770 = vmatprep.subr.bf16.mxu0 0
        %771 = vmatpush1.bf16.msra.mxu0 %v753
        %772 = vmatprep.subr.bf16.mxu0 0
        %773 = vmatpush1.bf16.msra.mxu0 %v754
        %774 = vmatprep.subr.bf16.mxu0 0
        %775 = vmatpush1.bf16.msra.mxu0 %v755
        %776 = vmatprep.subr.bf16.mxu0 0
        %777 = vmatpush1.bf16.msra.mxu0 %v756
        %778 = vmatprep.subr.bf16.mxu0 0
        %779 = vmatpush1.bf16.msra.mxu0 %v757
        %780 = vmatprep.subr.bf16.mxu0 0
        %781 = vmatpush1.bf16.msra.mxu0 %v758
        %782 = vmatprep.subr.bf16.mxu0 0
        %783 = vmatpush1.bf16.msra.mxu0 %v759
        %784 = vmatprep.subr.bf16.mxu0 0
        %785 = vmatpush1.bf16.msra.mxu0 0
        %786 = vmatprep.subr.bf16.mxu0 0
        %787 = vmatpush1.bf16.msra.mxu0 0
        %788 = vmatprep.subr.bf16.mxu0 0
        %789 = vmatpush1.bf16.msra.mxu0 0
        %790 = vmatprep.subr.bf16.mxu0 0
        %791 = vmatpush1.bf16.msra.mxu0 0
        %792 = vmatprep.subr.bf16.mxu0 0
        %793 = vmatpush1.bf16.msra.mxu0 0
        %794 = vmatprep.subr.bf16.mxu0 0
        %795 = vmatpush1.bf16.msra.mxu0 0
        %796 = vmatprep.subr.bf16.mxu0 0
        %797 = vmatpush1.bf16.msra.mxu0 0
        %798 = vmatprep.subr.bf16.mxu0 0
        %799 = vmatpush1.bf16.msra.mxu0 0
        %800 = vmatprep.mubr.bf16.mxu0 0
        %801 = vmatmul.mubr.bf16.gmra.mrb[0].mxu0 %v656
        %v802 = vpop.f32.mrb[0].mxu0
        %v803 = vadd.f32 %v526, %v802
        %v804 = vpop.f32.mrb[0].mxu0
        %v805 = vpop.f32.mrb[0].mxu0
        %v806 = vadd.f32 %v526, %v805
        %v807 = vpop.f32.mrb[0].mxu0
        %808 = vmatprep.mubr.bf16.mxu0 0
        %809 = vmatmul.mubr.bf16.gmra.mrb[0].mxu0 %v657
        %v810 = vpop.f32.mrb[0].mxu0
        %v811 = vadd.f32 %v526, %v810
        %v812 = vpop.f32.mrb[0].mxu0
        %v813 = vpop.f32.mrb[0].mxu0
        %v814 = vadd.f32 %v526, %v813
        %v815 = vpop.f32.mrb[0].mxu0
        %816 = vmatprep.mubr.bf16.mxu0 0
        %817 = vmatmul.mubr.bf16.gmra.mrb[0].mxu0 %v658
        %v818 = vpop.f32.mrb[0].mxu0
        %v819 = vadd.f32 %v526, %v818
        %v820 = vpop.f32.mrb[0].mxu0
        %v821 = vpop.f32.mrb[0].mxu0
        %v822 = vadd.f32 %v526, %v821
        %v823 = vpop.f32.mrb[0].mxu0
        %824 = vmatprep.mubr.bf16.mxu0 0
        %825 = vmatmul.mubr.bf16.gmra.mrb[0].mxu0 %v659
        %v826 = vpop.f32.mrb[0].mxu0
        %v827 = vadd.f32 %v526, %v826
        %v828 = vpop.f32.mrb[0].mxu0
        %v829 = vpop.f32.mrb[0].mxu0
        %v830 = vadd.f32 %v526, %v829
        %v831 = vpop.f32.mrb[0].mxu0
        %832 = vmatprep.mubr.bf16.mxu0 0
        %833 = vmatmul.mubr.bf16.gmra.mrb[0].mxu0 %v660
        %v834 = vpop.f32.mrb[0].mxu0
        %v835 = vadd.f32 %v526, %v834
        %v836 = vpop.f32.mrb[0].mxu0
        %v837 = vpop.f32.mrb[0].mxu0
        %v838 = vadd.f32 %v526, %v837
        %v839 = vpop.f32.mrb[0].mxu0
        %840 = vmatprep.mubr.bf16.mxu0 0
        %841 = vmatmul.mubr.bf16.gmra.mrb[0].mxu0 %v661
        %v842 = vpop.f32.mrb[0].mxu0
        %v843 = vadd.f32 %v526, %v842
        %v844 = vpop.f32.mrb[0].mxu0
        %v845 = vpop.f32.mrb[0].mxu0
        %v846 = vadd.f32 %v526, %v845
        %v847 = vpop.f32.mrb[0].mxu0
        %848 = vmatprep.mubr.bf16.mxu0 0
        %849 = vmatmul.mubr.bf16.gmra.mrb[0].mxu0 %v662
        %v850 = vpop.f32.mrb[0].mxu0
        %v851 = vadd.f32 %v526, %v850
        %v852 = vpop.f32.mrb[0].mxu0
        %v853 = vpop.f32.mrb[0].mxu0
        %v854 = vadd.f32 %v526, %v853
        %v855 = vpop.f32.mrb[0].mxu0
        %856 = vmatprep.mubr.bf16.mxu0 0
        %857 = vmatmul.mubr.bf16.gmra.mrb[0].mxu0 %v663
        %v858 = vpop.f32.mrb[0].mxu0
        %v859 = vadd.f32 %v526, %v858
        %v860 = vpop.f32.mrb[0].mxu0
        %v861 = vpop.f32.mrb[0].mxu0
        %v862 = vadd.f32 %v526, %v861
        %v863 = vpop.f32.mrb[0].mxu0
        %864 = vmatprep.mubr.bf16.mxu0 0
        %865 = vmatmul.mubr.bf16.gmra.mrb[0].mxu0 %v664
        %v866 = vpop.f32.mrb[0].mxu0
        %v867 = vadd.f32 %v526, %v866
        %v868 = vpop.f32.mrb[0].mxu0
        %v869 = vpop.f32.mrb[0].mxu0
        %v870 = vadd.f32 %v526, %v869
        %v871 = vpop.f32.mrb[0].mxu0
        %872 = vmatprep.mubr.bf16.mxu0 0
        %873 = vmatmul.mubr.bf16.gmra.mrb[0].mxu0 %v665
        %v874 = vpop.f32.mrb[0].mxu0
        %v875 = vadd.f32 %v526, %v874
        %v876 = vpop.f32.mrb[0].mxu0
        %v877 = vpop.f32.mrb[0].mxu0
        %v878 = vadd.f32 %v526, %v877
        %v879 = vpop.f32.mrb[0].mxu0
        %880 = vmatprep.mubr.bf16.mxu0 0
        %881 = vmatmul.mubr.bf16.gmra.mrb[0].mxu0 %v666
        %v882 = vpop.f32.mrb[0].mxu0
        %v883 = vadd.f32 %v526, %v882
        %v884 = vpop.f32.mrb[0].mxu0
        %v885 = vpop.f32.mrb[0].mxu0
        %v886 = vadd.f32 %v526, %v885
        %v887 = vpop.f32.mrb[0].mxu0
        %888 = vmatprep.mubr.bf16.mxu0 0
        %889 = vmatmul.mubr.bf16.gmra.mrb[0].mxu0 %v667
        %v890 = vpop.f32.mrb[0].mxu0
        %v891 = vadd.f32 %v526, %v890
        %v892 = vpop.f32.mrb[0].mxu0
        %v893 = vpop.f32.mrb[0].mxu0
        %v894 = vadd.f32 %v526, %v893
        %v895 = vpop.f32.mrb[0].mxu0
        %896 = vmatprep.mubr.bf16.mxu0 0
        %897 = vmatmul.mubr.bf16.gmra.mrb[0].mxu0 %v668
        %v898 = vpop.f32.mrb[0].mxu0
        %v899 = vadd.f32 %v526, %v898
        %v900 = vpop.f32.mrb[0].mxu0
        %v901 = vpop.f32.mrb[0].mxu0
        %v902 = vadd.f32 %v526, %v901
        %v903 = vpop.f32.mrb[0].mxu0
        %904 = vmatprep.mubr.bf16.mxu0 0
        %905 = vmatmul.mubr.bf16.gmra.mrb[0].mxu0 %v669
        %v906 = vpop.f32.mrb[0].mxu0
        %v907 = vadd.f32 %v526, %v906
        %v908 = vpop.f32.mrb[0].mxu0
        %v909 = vpop.f32.mrb[0].mxu0
        %v910 = vadd.f32 %v526, %v909
        %v911 = vpop.f32.mrb[0].mxu0
        %912 = vmatprep.mubr.bf16.mxu0 0
        %913 = vmatmul.mubr.bf16.gmra.mrb[0].mxu0 %v670
        %v914 = vpop.f32.mrb[0].mxu0
        %v915 = vadd.f32 %v526, %v914
        %v916 = vpop.f32.mrb[0].mxu0
        %v917 = vpop.f32.mrb[0].mxu0
        %v918 = vadd.f32 %v526, %v917
        %v919 = vpop.f32.mrb[0].mxu0
        %920 = vmatprep.mubr.bf16.mxu0 0
        %921 = vmatmul.mubr.bf16.gmra.mrb[0].mxu0 %v671
        %v922 = vpop.f32.mrb[0].mxu0
        %v923 = vadd.f32 %v526, %v922
        %v924 = vpop.f32.mrb[0].mxu0
        %v925 = vpop.f32.mrb[0].mxu0
        %v926 = vadd.f32 %v526, %v925
        %v927 = vpop.f32.mrb[0].mxu0
        %928 = vmatprep.mubr.bf16.mxu0 0
        %929 = vmatmul.mubr.bf16.gmra.mrb[0].mxu0 %v672
        %v930 = vpop.f32.mrb[0].mxu0
        %v931 = vadd.f32 %v526, %v930
        %v932 = vpop.f32.mrb[0].mxu0
        %v933 = vpop.f32.mrb[0].mxu0
        %v934 = vadd.f32 %v526, %v933
        %v935 = vpop.f32.mrb[0].mxu0
        %936 = vmatprep.mubr.bf16.mxu0 0
        %937 = vmatmul.mubr.bf16.gmra.mrb[0].mxu0 %v673
        %v938 = vpop.f32.mrb[0].mxu0
        %v939 = vadd.f32 %v526, %v938
        %v940 = vpop.f32.mrb[0].mxu0
        %v941 = vpop.f32.mrb[0].mxu0
        %v942 = vadd.f32 %v526, %v941
        %v943 = vpop.f32.mrb[0].mxu0
        %944 = vmatprep.mubr.bf16.mxu0 0
        %945 = vmatmul.mubr.bf16.gmra.mrb[0].mxu0 %v674
        %v946 = vpop.f32.mrb[0].mxu0
        %v947 = vadd.f32 %v526, %v946
        %v948 = vpop.f32.mrb[0].mxu0
        %v949 = vpop.f32.mrb[0].mxu0
        %v950 = vadd.f32 %v526, %v949
        %v951 = vpop.f32.mrb[0].mxu0
        %952 = vmatprep.mubr.bf16.mxu0 0
        %953 = vmatmul.mubr.bf16.gmra.mrb[0].mxu0 %v675
        %v954 = vpop.f32.mrb[0].mxu0
        %v955 = vadd.f32 %v526, %v954
        %v956 = vpop.f32.mrb[0].mxu0
        %v957 = vpop.f32.mrb[0].mxu0
        %v958 = vadd.f32 %v526, %v957
        %v959 = vpop.f32.mrb[0].mxu0
        %960 = vmatprep.mubr.bf16.mxu0 0
        %961 = vmatmul.mubr.bf16.gmra.mrb[0].mxu0 %v676
        %v962 = vpop.f32.mrb[0].mxu0
        %v963 = vadd.f32 %v526, %v962
        %v964 = vpop.f32.mrb[0].mxu0
        %v965 = vpop.f32.mrb[0].mxu0
        %v966 = vadd.f32 %v526, %v965
        %v967 = vpop.f32.mrb[0].mxu0
        %968 = vmatprep.mubr.bf16.mxu0 0
        %969 = vmatmul.mubr.bf16.gmra.mrb[0].mxu0 %v677
        %v970 = vpop.f32.mrb[0].mxu0
        %v971 = vadd.f32 %v526, %v970
        %v972 = vpop.f32.mrb[0].mxu0
        %v973 = vpop.f32.mrb[0].mxu0
        %v974 = vadd.f32 %v526, %v973
        %v975 = vpop.f32.mrb[0].mxu0
        %976 = vmatprep.mubr.bf16.mxu0 0
        %977 = vmatmul.mubr.bf16.gmra.mrb[0].mxu0 %v678
        %v978 = vpop.f32.mrb[0].mxu0
        %v979 = vadd.f32 %v526, %v978
        %v980 = vpop.f32.mrb[0].mxu0
        %v981 = vpop.f32.mrb[0].mxu0
        %v982 = vadd.f32 %v526, %v981
        %v983 = vpop.f32.mrb[0].mxu0
        %984 = vmatprep.mubr.bf16.mxu0 0
        %985 = vmatmul.mubr.bf16.gmra.mrb[0].mxu0 %v679
        %v986 = vpop.f32.mrb[0].mxu0
        %v987 = vadd.f32 %v526, %v986
        %v988 = vpop.f32.mrb[0].mxu0
        %v989 = vpop.f32.mrb[0].mxu0
        %v990 = vadd.f32 %v526, %v989
        %v991 = vpop.f32.mrb[0].mxu0
        %992 = vmatprep.mubr.bf16.mxu0 0
        %993 = vmatmul.mubr.bf16.gmra.mrb[0].mxu0 %v680
        %v994 = vpop.f32.mrb[0].mxu0
        %v995 = vadd.f32 %v526, %v994
        %v996 = vpop.f32.mrb[0].mxu0
        %v997 = vpop.f32.mrb[0].mxu0
        %v998 = vadd.f32 %v526, %v997
        %v999 = vpop.f32.mrb[0].mxu0
        %1000 = vmatprep.mubr.bf16.mxu0 0
        %1001 = vmatmul.mubr.bf16.gmra.mrb[0].mxu0 %v681
        %v1002 = vpop.f32.mrb[0].mxu0
        %v1003 = vadd.f32 %v526, %v1002
        %v1004 = vpop.f32.mrb[0].mxu0
        %v1005 = vpop.f32.mrb[0].mxu0
        %v1006 = vadd.f32 %v526, %v1005
        %v1007 = vpop.f32.mrb[0].mxu0
        %1008 = vmatprep.mubr.bf16.mxu0 0
        %1009 = vmatmul.mubr.bf16.gmra.mrb[0].mxu0 %v682
        %v1010 = vpop.f32.mrb[0].mxu0
        %v1011 = vadd.f32 %v526, %v1010
        %v1012 = vpop.f32.mrb[0].mxu0
        %v1013 = vpop.f32.mrb[0].mxu0
        %v1014 = vadd.f32 %v526, %v1013
        %v1015 = vpop.f32.mrb[0].mxu0
        %1016 = vmatprep.mubr.bf16.mxu0 0
        %1017 = vmatmul.mubr.bf16.gmra.mrb[0].mxu0 %v683
        %v1018 = vpop.f32.mrb[0].mxu0
        %v1019 = vadd.f32 %v526, %v1018
        %v1020 = vpop.f32.mrb[0].mxu0
        %v1021 = vpop.f32.mrb[0].mxu0
        %v1022 = vadd.f32 %v526, %v1021
        %v1023 = vpop.f32.mrb[0].mxu0
        %1024 = vmatprep.mubr.bf16.mxu0 0
        %1025 = vmatmul.mubr.bf16.gmra.mrb[0].mxu0 %v684
        %v1026 = vpop.f32.mrb[0].mxu0
        %v1027 = vadd.f32 %v526, %v1026
        %v1028 = vpop.f32.mrb[0].mxu0
        %v1029 = vpop.f32.mrb[0].mxu0
        %v1030 = vadd.f32 %v526, %v1029
        %v1031 = vpop.f32.mrb[0].mxu0
        %1032 = vmatprep.mubr.bf16.mxu0 0
        %1033 = vmatmul.mubr.bf16.gmra.mrb[0].mxu0 %v685
        %v1034 = vpop.f32.mrb[0].mxu0
        %v1035 = vadd.f32 %v526, %v1034
        %v1036 = vpop.f32.mrb[0].mxu0
        %v1037 = vpop.f32.mrb[0].mxu0
        %v1038 = vadd.f32 %v526, %v1037
        %v1039 = vpop.f32.mrb[0].mxu0
        %1040 = vmatprep.mubr.bf16.mxu0 0
        %1041 = vmatmul.mubr.bf16.gmra.mrb[0].mxu0 %v686
        %v1042 = vpop.f32.mrb[0].mxu0
        %v1043 = vadd.f32 %v526, %v1042
        %v1044 = vpop.f32.mrb[0].mxu0
        %v1045 = vpop.f32.mrb[0].mxu0
        %v1046 = vadd.f32 %v526, %v1045
        %v1047 = vpop.f32.mrb[0].mxu0
        %1048 = vmatprep.mubr.bf16.mxu0 0
        %1049 = vmatmul.mubr.bf16.gmra.mrb[0].mxu0 %v687
        %v1050 = vpop.f32.mrb[0].mxu0
        %v1051 = vadd.f32 %v526, %v1050
        %v1052 = vpop.f32.mrb[0].mxu0
        %v1053 = vpop.f32.mrb[0].mxu0
        %v1054 = vadd.f32 %v526, %v1053
        %v1055 = vpop.f32.mrb[0].mxu0
        %1056 = vdwg.mxu0
        %v1057 = vmax.f32 %v803, 0.0
        %v1058 = vmax.f32 %v806, 0.0
        %v1059 = vmax.f32 %v811, 0.0
        %v1060 = vmax.f32 %v814, 0.0
        %v1061 = vmax.f32 %v819, 0.0
        %v1062 = vmax.f32 %v822, 0.0
        %v1063 = vmax.f32 %v827, 0.0
        %v1064 = vmax.f32 %v830, 0.0
        %v1065 = vmax.f32 %v835, 0.0
        %v1066 = vmax.f32 %v838, 0.0
        %v1067 = vmax.f32 %v843, 0.0
        %v1068 = vmax.f32 %v846, 0.0
        %v1069 = vmax.f32 %v851, 0.0
        %v1070 = vmax.f32 %v854, 0.0
        %v1071 = vmax.f32 %v859, 0.0
        %v1072 = vmax.f32 %v862, 0.0
        %v1073 = vmax.f32 %v867, 0.0
        %v1074 = vmax.f32 %v870, 0.0
        %v1075 = vmax.f32 %v875, 0.0
        %v1076 = vmax.f32 %v878, 0.0
        %v1077 = vmax.f32 %v883, 0.0
        %v1078 = vmax.f32 %v886, 0.0
        %v1079 = vmax.f32 %v891, 0.0
        %v1080 = vmax.f32 %v894, 0.0
        %v1081 = vmax.f32 %v899, 0.0
        %v1082 = vmax.f32 %v902, 0.0
        %v1083 = vmax.f32 %v907, 0.0
        %v1084 = vmax.f32 %v910, 0.0
        %v1085 = vmax.f32 %v915, 0.0
        %v1086 = vmax.f32 %v918, 0.0
        %v1087 = vmax.f32 %v923, 0.0
        %v1088 = vmax.f32 %v926, 0.0
        %v1089 = vmax.f32 %v931, 0.0
        %v1090 = vmax.f32 %v934, 0.0
        %v1091 = vmax.f32 %v939, 0.0
        %v1092 = vmax.f32 %v942, 0.0
        %v1093 = vmax.f32 %v947, 0.0
        %v1094 = vmax.f32 %v950, 0.0
        %v1095 = vmax.f32 %v955, 0.0
        %v1096 = vmax.f32 %v958, 0.0
        %v1097 = vmax.f32 %v963, 0.0
        %v1098 = vmax.f32 %v966, 0.0
        %v1099 = vmax.f32 %v971, 0.0
        %v1100 = vmax.f32 %v974, 0.0
        %v1101 = vmax.f32 %v979, 0.0
        %v1102 = vmax.f32 %v982, 0.0
        %v1103 = vmax.f32 %v987, 0.0
        %v1104 = vmax.f32 %v990, 0.0
        %v1105 = vmax.f32 %v995, 0.0
        %v1106 = vmax.f32 %v998, 0.0
        %v1107 = vmax.f32 %v1003, 0.0
        %v1108 = vmax.f32 %v1006, 0.0
        %v1109 = vmax.f32 %v1011, 0.0
        %v1110 = vmax.f32 %v1014, 0.0
        %v1111 = vmax.f32 %v1019, 0.0
        %v1112 = vmax.f32 %v1022, 0.0
        %v1113 = vmax.f32 %v1027, 0.0
        %v1114 = vmax.f32 %v1030, 0.0
        %v1115 = vmax.f32 %v1035, 0.0
        %v1116 = vmax.f32 %v1038, 0.0
        %v1117 = vmax.f32 %v1043, 0.0
        %v1118 = vmax.f32 %v1046, 0.0
        %v1119 = vmax.f32 %v1051, 0.0
        %v1120 = vmax.f32 %v1054, 0.0
        %s1121 = scalar_lea.vmem [#allocation6], %s436
        %v1122 = vld [vmem:[%s1121] sm:$0xff]
        %v1123 = vld [vmem:[%s1121 + $0x8] sm:$0xff]
        %v1124 = vld [vmem:[%s1121 + $0x10] sm:$0xff]
        %v1125 = vld [vmem:[%s1121 + $0x18] sm:$0xff]
        %v1126 = vld [vmem:[%s1121 + $0x20] sm:$0xff]
        %v1127 = vld [vmem:[%s1121 + $0x28] sm:$0xff]
        %v1128 = vld [vmem:[%s1121 + $0x30] sm:$0xff]
        %v1129 = vld [vmem:[%s1121 + $0x38] sm:$0xff]
        %v1130 = vld [vmem:[%s1121 + $0x40] sm:$0xff]
        %v1131 = vld [vmem:[%s1121 + $0x48] sm:$0xff]
        %v1132 = vld [vmem:[%s1121 + $0x50] sm:$0xff]
        %v1133 = vld [vmem:[%s1121 + $0x58] sm:$0xff]
        %v1134 = vld [vmem:[%s1121 + $0x60] sm:$0xff]
        %v1135 = vld [vmem:[%s1121 + $0x68] sm:$0xff]
        %v1136 = vld [vmem:[%s1121 + $0x70] sm:$0xff]
        %v1137 = vld [vmem:[%s1121 + $0x78] sm:$0xff]
        %v1138 = vld [vmem:[%s1121 + $0x80] sm:$0xff]
        %v1139 = vld [vmem:[%s1121 + $0x88] sm:$0xff]
        %v1140 = vld [vmem:[%s1121 + $0x90] sm:$0xff]
        %v1141 = vld [vmem:[%s1121 + $0x98] sm:$0xff]
        %v1142 = vld [vmem:[%s1121 + $0xa0] sm:$0xff]
        %v1143 = vld [vmem:[%s1121 + $0xa8] sm:$0xff]
        %v1144 = vld [vmem:[%s1121 + $0xb0] sm:$0xff]
        %v1145 = vld [vmem:[%s1121 + $0xb8] sm:$0xff]
        %v1146 = vld [vmem:[%s1121 + $0xc0] sm:$0xff]
        %v1147 = vld [vmem:[%s1121 + $0xc8] sm:$0xff]
        %v1148 = vld [vmem:[%s1121 + $0xd0] sm:$0xff]
        %v1149 = vld [vmem:[%s1121 + $0xd8] sm:$0xff]
        %v1150 = vld [vmem:[%s1121 + $0xe0] sm:$0xff]
        %v1151 = vld [vmem:[%s1121 + $0xe8] sm:$0xff]
        %v1152 = vld [vmem:[%s1121 + $0xf0] sm:$0xff]
        %v1153 = vld [vmem:[%s1121 + $0xf8] sm:$0xff]
        %v1154 = vld [vmem:[%s1121 + $0x100] sm:$0xff]
        %v1155 = vld [vmem:[%s1121 + $0x108] sm:$0xff]
        %v1156 = vld [vmem:[%s1121 + $0x110] sm:$0xff]
        %v1157 = vld [vmem:[%s1121 + $0x118] sm:$0xff]
        %v1158 = vld [vmem:[%s1121 + $0x120] sm:$0xff]
        %v1159 = vld [vmem:[%s1121 + $0x128] sm:$0xff]
        %v1160 = vld [vmem:[%s1121 + $0x130] sm:$0xff]
        %v1161 = vld [vmem:[%s1121 + $0x138] sm:$0xff]
        %v1162 = vld [vmem:[%s1121 + $0x140] sm:$0xff]
        %v1163 = vld [vmem:[%s1121 + $0x148] sm:$0xff]
        %v1164 = vld [vmem:[%s1121 + $0x150] sm:$0xff]
        %v1165 = vld [vmem:[%s1121 + $0x158] sm:$0xff]
        %v1166 = vld [vmem:[%s1121 + $0x160] sm:$0xff]
        %v1167 = vld [vmem:[%s1121 + $0x168] sm:$0xff]
        %v1168 = vld [vmem:[%s1121 + $0x170] sm:$0xff]
        %v1169 = vld [vmem:[%s1121 + $0x178] sm:$0xff]
        %v1170 = vld [vmem:[%s1121 + $0x180] sm:$0xff]
        %v1171 = vld [vmem:[%s1121 + $0x188] sm:$0xff]
        %v1172 = vld [vmem:[%s1121 + $0x190] sm:$0xff]
        %v1173 = vld [vmem:[%s1121 + $0x198] sm:$0xff]
        %v1174 = vld [vmem:[%s1121 + $0x1a0] sm:$0xff]
        %v1175 = vld [vmem:[%s1121 + $0x1a8] sm:$0xff]
        %v1176 = vld [vmem:[%s1121 + $0x1b0] sm:$0xff]
        %v1177 = vld [vmem:[%s1121 + $0x1b8] sm:$0xff]
        %v1178 = vld [vmem:[%s1121 + $0x1c0] sm:$0xff]
        %v1179 = vld [vmem:[%s1121 + $0x1c8] sm:$0xff]
        %v1180 = vld [vmem:[%s1121 + $0x1d0] sm:$0xff]
        %v1181 = vld [vmem:[%s1121 + $0x1d8] sm:$0xff]
        %v1182 = vld [vmem:[%s1121 + $0x1e0] sm:$0xff]
        %v1183 = vld [vmem:[%s1121 + $0x1e8] sm:$0xff]
        %v1184 = vld [vmem:[%s1121 + $0x1f0] sm:$0xff]
        %v1185 = vld [vmem:[%s1121 + $0x1f8] sm:$0xff]
        %1187 = vset.pattern.permute.xlu0 0
        %1188 = vperm.xlu0 %1187, %v1122
        %v1189 = vpop.permute.xlu0 %1188
        %1192 = vset.pattern.permute.xlu0 0
        %1193 = vperm.xlu0 %1192, %v1123
        %v1194 = vpop.permute.xlu0 %1193
        %1197 = vset.pattern.permute.xlu0 0
        %1198 = vperm.xlu0 %1197, %v1124
        %v1199 = vpop.permute.xlu0 %1198
        %1202 = vset.pattern.permute.xlu0 0
        %1203 = vperm.xlu0 %1202, %v1125
        %v1204 = vpop.permute.xlu0 %1203
        %1207 = vset.pattern.permute.xlu0 0
        %1208 = vperm.xlu0 %1207, %v1126
        %v1209 = vpop.permute.xlu0 %1208
        %1212 = vset.pattern.permute.xlu0 0
        %1213 = vperm.xlu0 %1212, %v1127
        %v1214 = vpop.permute.xlu0 %1213
        %1217 = vset.pattern.permute.xlu0 0
        %1218 = vperm.xlu0 %1217, %v1128
        %v1219 = vpop.permute.xlu0 %1218
        %1222 = vset.pattern.permute.xlu0 0
        %1223 = vperm.xlu0 %1222, %v1129
        %v1224 = vpop.permute.xlu0 %1223
        %1227 = vset.pattern.permute.xlu0 0
        %1228 = vperm.xlu0 %1227, %v1130
        %v1229 = vpop.permute.xlu0 %1228
        %1232 = vset.pattern.permute.xlu0 0
        %1233 = vperm.xlu0 %1232, %v1131
        %v1234 = vpop.permute.xlu0 %1233
        %1237 = vset.pattern.permute.xlu0 0
        %1238 = vperm.xlu0 %1237, %v1132
        %v1239 = vpop.permute.xlu0 %1238
        %1242 = vset.pattern.permute.xlu0 0
        %1243 = vperm.xlu0 %1242, %v1133
        %v1244 = vpop.permute.xlu0 %1243
        %1247 = vset.pattern.permute.xlu0 0
        %1248 = vperm.xlu0 %1247, %v1134
        %v1249 = vpop.permute.xlu0 %1248
        %1252 = vset.pattern.permute.xlu0 0
        %1253 = vperm.xlu0 %1252, %v1135
        %v1254 = vpop.permute.xlu0 %1253
        %1257 = vset.pattern.permute.xlu0 0
        %1258 = vperm.xlu0 %1257, %v1136
        %v1259 = vpop.permute.xlu0 %1258
        %1262 = vset.pattern.permute.xlu0 0
        %1263 = vperm.xlu0 %1262, %v1137
        %v1264 = vpop.permute.xlu0 %1263
        %1267 = vset.pattern.permute.xlu0 0
        %1268 = vperm.xlu0 %1267, %v1138
        %v1269 = vpop.permute.xlu0 %1268
        %1272 = vset.pattern.permute.xlu0 0
        %1273 = vperm.xlu0 %1272, %v1139
        %v1274 = vpop.permute.xlu0 %1273
        %1277 = vset.pattern.permute.xlu0 0
        %1278 = vperm.xlu0 %1277, %v1140
        %v1279 = vpop.permute.xlu0 %1278
        %1282 = vset.pattern.permute.xlu0 0
        %1283 = vperm.xlu0 %1282, %v1141
        %v1284 = vpop.permute.xlu0 %1283
        %1287 = vset.pattern.permute.xlu0 0
        %1288 = vperm.xlu0 %1287, %v1142
        %v1289 = vpop.permute.xlu0 %1288
        %1292 = vset.pattern.permute.xlu0 0
        %1293 = vperm.xlu0 %1292, %v1143
        %v1294 = vpop.permute.xlu0 %1293
        %1297 = vset.pattern.permute.xlu0 0
        %1298 = vperm.xlu0 %1297, %v1144
        %v1299 = vpop.permute.xlu0 %1298
        %1302 = vset.pattern.permute.xlu0 0
        %1303 = vperm.xlu0 %1302, %v1145
        %v1304 = vpop.permute.xlu0 %1303
        %1307 = vset.pattern.permute.xlu0 0
        %1308 = vperm.xlu0 %1307, %v1146
        %v1309 = vpop.permute.xlu0 %1308
        %1312 = vset.pattern.permute.xlu0 0
        %1313 = vperm.xlu0 %1312, %v1147
        %v1314 = vpop.permute.xlu0 %1313
        %1317 = vset.pattern.permute.xlu0 0
        %1318 = vperm.xlu0 %1317, %v1148
        %v1319 = vpop.permute.xlu0 %1318
        %1322 = vset.pattern.permute.xlu0 0
        %1323 = vperm.xlu0 %1322, %v1149
        %v1324 = vpop.permute.xlu0 %1323
        %1327 = vset.pattern.permute.xlu0 0
        %1328 = vperm.xlu0 %1327, %v1150
        %v1329 = vpop.permute.xlu0 %1328
        %1332 = vset.pattern.permute.xlu0 0
        %1333 = vperm.xlu0 %1332, %v1151
        %v1334 = vpop.permute.xlu0 %1333
        %1337 = vset.pattern.permute.xlu0 0
        %1338 = vperm.xlu0 %1337, %v1152
        %v1339 = vpop.permute.xlu0 %1338
        %1342 = vset.pattern.permute.xlu0 0
        %1343 = vperm.xlu0 %1342, %v1153
        %v1344 = vpop.permute.xlu0 %1343
        %1347 = vset.pattern.permute.xlu0 0
        %1348 = vperm.xlu0 %1347, %v1154
        %v1349 = vpop.permute.xlu0 %1348
        %1352 = vset.pattern.permute.xlu0 0
        %1353 = vperm.xlu0 %1352, %v1155
        %v1354 = vpop.permute.xlu0 %1353
        %1357 = vset.pattern.permute.xlu0 0
        %1358 = vperm.xlu0 %1357, %v1156
        %v1359 = vpop.permute.xlu0 %1358
        %1362 = vset.pattern.permute.xlu0 0
        %1363 = vperm.xlu0 %1362, %v1157
        %v1364 = vpop.permute.xlu0 %1363
        %1367 = vset.pattern.permute.xlu0 0
        %1368 = vperm.xlu0 %1367, %v1158
        %v1369 = vpop.permute.xlu0 %1368
        %1372 = vset.pattern.permute.xlu0 0
        %1373 = vperm.xlu0 %1372, %v1159
        %v1374 = vpop.permute.xlu0 %1373
        %1377 = vset.pattern.permute.xlu0 0
        %1378 = vperm.xlu0 %1377, %v1160
        %v1379 = vpop.permute.xlu0 %1378
        %1382 = vset.pattern.permute.xlu0 0
        %1383 = vperm.xlu0 %1382, %v1161
        %v1384 = vpop.permute.xlu0 %1383
        %1387 = vset.pattern.permute.xlu0 0
        %1388 = vperm.xlu0 %1387, %v1162
        %v1389 = vpop.permute.xlu0 %1388
        %1392 = vset.pattern.permute.xlu0 0
        %1393 = vperm.xlu0 %1392, %v1163
        %v1394 = vpop.permute.xlu0 %1393
        %1397 = vset.pattern.permute.xlu0 0
        %1398 = vperm.xlu0 %1397, %v1164
        %v1399 = vpop.permute.xlu0 %1398
        %1402 = vset.pattern.permute.xlu0 0
        %1403 = vperm.xlu0 %1402, %v1165
        %v1404 = vpop.permute.xlu0 %1403
        %1407 = vset.pattern.permute.xlu0 0
        %1408 = vperm.xlu0 %1407, %v1166
        %v1409 = vpop.permute.xlu0 %1408
        %1412 = vset.pattern.permute.xlu0 0
        %1413 = vperm.xlu0 %1412, %v1167
        %v1414 = vpop.permute.xlu0 %1413
        %1417 = vset.pattern.permute.xlu0 0
        %1418 = vperm.xlu0 %1417, %v1168
        %v1419 = vpop.permute.xlu0 %1418
        %1422 = vset.pattern.permute.xlu0 0
        %1423 = vperm.xlu0 %1422, %v1169
        %v1424 = vpop.permute.xlu0 %1423
        %1427 = vset.pattern.permute.xlu0 0
        %1428 = vperm.xlu0 %1427, %v1170
        %v1429 = vpop.permute.xlu0 %1428
        %1432 = vset.pattern.permute.xlu0 0
        %1433 = vperm.xlu0 %1432, %v1171
        %v1434 = vpop.permute.xlu0 %1433
        %1437 = vset.pattern.permute.xlu0 0
        %1438 = vperm.xlu0 %1437, %v1172
        %v1439 = vpop.permute.xlu0 %1438
        %1442 = vset.pattern.permute.xlu0 0
        %1443 = vperm.xlu0 %1442, %v1173
        %v1444 = vpop.permute.xlu0 %1443
        %1447 = vset.pattern.permute.xlu0 0
        %1448 = vperm.xlu0 %1447, %v1174
        %v1449 = vpop.permute.xlu0 %1448
        %1452 = vset.pattern.permute.xlu0 0
        %1453 = vperm.xlu0 %1452, %v1175
        %v1454 = vpop.permute.xlu0 %1453
        %1457 = vset.pattern.permute.xlu0 0
        %1458 = vperm.xlu0 %1457, %v1176
        %v1459 = vpop.permute.xlu0 %1458
        %1462 = vset.pattern.permute.xlu0 0
        %1463 = vperm.xlu0 %1462, %v1177
        %v1464 = vpop.permute.xlu0 %1463
        %1467 = vset.pattern.permute.xlu0 0
        %1468 = vperm.xlu0 %1467, %v1178
        %v1469 = vpop.permute.xlu0 %1468
        %1472 = vset.pattern.permute.xlu0 0
        %1473 = vperm.xlu0 %1472, %v1179
        %v1474 = vpop.permute.xlu0 %1473
        %1477 = vset.pattern.permute.xlu0 0
        %1478 = vperm.xlu0 %1477, %v1180
        %v1479 = vpop.permute.xlu0 %1478
        %1482 = vset.pattern.permute.xlu0 0
        %1483 = vperm.xlu0 %1482, %v1181
        %v1484 = vpop.permute.xlu0 %1483
        %1487 = vset.pattern.permute.xlu0 0
        %1488 = vperm.xlu0 %1487, %v1182
        %v1489 = vpop.permute.xlu0 %1488
        %1492 = vset.pattern.permute.xlu0 0
        %1493 = vperm.xlu0 %1492, %v1183
        %v1494 = vpop.permute.xlu0 %1493
        %1497 = vset.pattern.permute.xlu0 0
        %1498 = vperm.xlu0 %1497, %v1184
        %v1499 = vpop.permute.xlu0 %1498
        %1502 = vset.pattern.permute.xlu0 0
        %1503 = vperm.xlu0 %1502, %v1185
        %v1504 = vpop.permute.xlu0 %1503
        %v1506 = vmul.f32 %v1057, %v1189
        %v1507 = vmul.f32 %v1058, %v1194
        %v1508 = vmul.f32 %v1059, %v1199
        %v1509 = vmul.f32 %v1060, %v1204
        %v1510 = vmul.f32 %v1061, %v1209
        %v1511 = vmul.f32 %v1062, %v1214
        %v1512 = vmul.f32 %v1063, %v1219
        %v1513 = vmul.f32 %v1064, %v1224
        %v1514 = vmul.f32 %v1065, %v1229
        %v1515 = vmul.f32 %v1066, %v1234
        %v1516 = vmul.f32 %v1067, %v1239
        %v1517 = vmul.f32 %v1068, %v1244
        %v1518 = vmul.f32 %v1069, %v1249
        %v1519 = vmul.f32 %v1070, %v1254
        %v1520 = vmul.f32 %v1071, %v1259
        %v1521 = vmul.f32 %v1072, %v1264
        %v1522 = vmul.f32 %v1073, %v1269
        %v1523 = vmul.f32 %v1074, %v1274
        %v1524 = vmul.f32 %v1075, %v1279
        %v1525 = vmul.f32 %v1076, %v1284
        %v1526 = vmul.f32 %v1077, %v1289
        %v1527 = vmul.f32 %v1078, %v1294
        %v1528 = vmul.f32 %v1079, %v1299
        %v1529 = vmul.f32 %v1080, %v1304
        %v1530 = vmul.f32 %v1081, %v1309
        %v1531 = vmul.f32 %v1082, %v1314
        %v1532 = vmul.f32 %v1083, %v1319
        %v1533 = vmul.f32 %v1084, %v1324
        %v1534 = vmul.f32 %v1085, %v1329
        %v1535 = vmul.f32 %v1086, %v1334
        %v1536 = vmul.f32 %v1087, %v1339
        %v1537 = vmul.f32 %v1088, %v1344
        %v1538 = vmul.f32 %v1089, %v1349
        %v1539 = vmul.f32 %v1090, %v1354
        %v1540 = vmul.f32 %v1091, %v1359
        %v1541 = vmul.f32 %v1092, %v1364
        %v1542 = vmul.f32 %v1093, %v1369
        %v1543 = vmul.f32 %v1094, %v1374
        %v1544 = vmul.f32 %v1095, %v1379
        %v1545 = vmul.f32 %v1096, %v1384
        %v1546 = vmul.f32 %v1097, %v1389
        %v1547 = vmul.f32 %v1098, %v1394
        %v1548 = vmul.f32 %v1099, %v1399
        %v1549 = vmul.f32 %v1100, %v1404
        %v1550 = vmul.f32 %v1101, %v1409
        %v1551 = vmul.f32 %v1102, %v1414
        %v1552 = vmul.f32 %v1103, %v1419
        %v1553 = vmul.f32 %v1104, %v1424
        %v1554 = vmul.f32 %v1105, %v1429
        %v1555 = vmul.f32 %v1106, %v1434
        %v1556 = vmul.f32 %v1107, %v1439
        %v1557 = vmul.f32 %v1108, %v1444
        %v1558 = vmul.f32 %v1109, %v1449
        %v1559 = vmul.f32 %v1110, %v1454
        %v1560 = vmul.f32 %v1111, %v1459
        %v1561 = vmul.f32 %v1112, %v1464
        %v1562 = vmul.f32 %v1113, %v1469
        %v1563 = vmul.f32 %v1114, %v1474
        %v1564 = vmul.f32 %v1115, %v1479
        %v1565 = vmul.f32 %v1116, %v1484
        %v1566 = vmul.f32 %v1117, %v1489
        %v1567 = vmul.f32 %v1118, %v1494
        %v1568 = vmul.f32 %v1119, %v1499
        %v1569 = vmul.f32 %v1120, %v1504
        %v1570 = vpack.c.bf16 %v1507, %v1506
        %v1571 = vpack.c.bf16 %v1509, %v1508
        %v1572 = vpack.c.bf16 %v1511, %v1510
        %v1573 = vpack.c.bf16 %v1513, %v1512
        %v1574 = vpack.c.bf16 %v1515, %v1514
        %v1575 = vpack.c.bf16 %v1517, %v1516
        %v1576 = vpack.c.bf16 %v1519, %v1518
        %v1577 = vpack.c.bf16 %v1521, %v1520
        %v1578 = vpack.c.bf16 %v1523, %v1522
        %v1579 = vpack.c.bf16 %v1525, %v1524
        %v1580 = vpack.c.bf16 %v1527, %v1526
        %v1581 = vpack.c.bf16 %v1529, %v1528
        %v1582 = vpack.c.bf16 %v1531, %v1530
        %v1583 = vpack.c.bf16 %v1533, %v1532
        %v1584 = vpack.c.bf16 %v1535, %v1534
        %v1585 = vpack.c.bf16 %v1537, %v1536
        %v1586 = vpack.c.bf16 %v1539, %v1538
        %v1587 = vpack.c.bf16 %v1541, %v1540
        %v1588 = vpack.c.bf16 %v1543, %v1542
        %v1589 = vpack.c.bf16 %v1545, %v1544
        %v1590 = vpack.c.bf16 %v1547, %v1546
        %v1591 = vpack.c.bf16 %v1549, %v1548
        %v1592 = vpack.c.bf16 %v1551, %v1550
        %v1593 = vpack.c.bf16 %v1553, %v1552
        %v1594 = vpack.c.bf16 %v1555, %v1554
        %v1595 = vpack.c.bf16 %v1557, %v1556
        %v1596 = vpack.c.bf16 %v1559, %v1558
        %v1597 = vpack.c.bf16 %v1561, %v1560
        %v1598 = vpack.c.bf16 %v1563, %v1562
        %v1599 = vpack.c.bf16 %v1565, %v1564
        %v1600 = vpack.c.bf16 %v1567, %v1566
        %v1601 = vpack.c.bf16 %v1569, %v1568
        %vm1602 = vsmask.f32 256
        %v1604 = vshrl.u32 %v1570, 16
        %v1606 = vrot.slane %v1604, 7
        %v1607 = vshll.u32 %v1570, 16
        %v1609 = vor.u32 %v1606, %v1607
        %v1611 = vshrl.u32 %v1571, 16
        %v1613 = vrot.slane %v1611, 7
        %v1614 = vshll.u32 %v1571, 16
        %v1616 = vor.u32 %v1613, %v1614
        %v1617 = vsel %vm1602, %v1606, %v1616
        %v1619 = vshrl.u32 %v1572, 16
        %v1621 = vrot.slane %v1619, 7
        %v1622 = vshll.u32 %v1572, 16
        %v1624 = vor.u32 %v1621, %v1622
        %v1625 = vsel %vm1602, %v1613, %v1624
        %v1627 = vshrl.u32 %v1573, 16
        %v1629 = vrot.slane %v1627, 7
        %v1630 = vshll.u32 %v1573, 16
        %v1632 = vor.u32 %v1629, %v1630
        %v1633 = vsel %vm1602, %v1621, %v1632
        %v1635 = vshrl.u32 %v1574, 16
        %v1637 = vrot.slane %v1635, 7
        %v1638 = vshll.u32 %v1574, 16
        %v1640 = vor.u32 %v1637, %v1638
        %v1641 = vsel %vm1602, %v1629, %v1640
        %v1643 = vshrl.u32 %v1575, 16
        %v1645 = vrot.slane %v1643, 7
        %v1646 = vshll.u32 %v1575, 16
        %v1648 = vor.u32 %v1645, %v1646
        %v1649 = vsel %vm1602, %v1637, %v1648
        %v1651 = vshrl.u32 %v1576, 16
        %v1653 = vrot.slane %v1651, 7
        %v1654 = vshll.u32 %v1576, 16
        %v1656 = vor.u32 %v1653, %v1654
        %v1657 = vsel %vm1602, %v1645, %v1656
        %v1659 = vshrl.u32 %v1577, 16
        %v1661 = vrot.slane %v1659, 7
        %v1662 = vshll.u32 %v1577, 16
        %v1664 = vor.u32 %v1661, %v1662
        %v1665 = vsel %vm1602, %v1653, %v1664
        %v1667 = vshrl.u32 %v1578, 16
        %v1669 = vrot.slane %v1667, 7
        %v1670 = vshll.u32 %v1578, 16
        %v1672 = vor.u32 %v1669, %v1670
        %v1673 = vsel %vm1602, %v1661, %v1672
        %v1675 = vshrl.u32 %v1579, 16
        %v1677 = vrot.slane %v1675, 7
        %v1678 = vshll.u32 %v1579, 16
        %v1680 = vor.u32 %v1677, %v1678
        %v1681 = vsel %vm1602, %v1669, %v1680
        %v1683 = vshrl.u32 %v1580, 16
        %v1685 = vrot.slane %v1683, 7
        %v1686 = vshll.u32 %v1580, 16
        %v1688 = vor.u32 %v1685, %v1686
        %v1689 = vsel %vm1602, %v1677, %v1688
        %v1691 = vshrl.u32 %v1581, 16
        %v1693 = vrot.slane %v1691, 7
        %v1694 = vshll.u32 %v1581, 16
        %v1696 = vor.u32 %v1693, %v1694
        %v1697 = vsel %vm1602, %v1685, %v1696
        %v1699 = vshrl.u32 %v1582, 16
        %v1701 = vrot.slane %v1699, 7
        %v1702 = vshll.u32 %v1582, 16
        %v1704 = vor.u32 %v1701, %v1702
        %v1705 = vsel %vm1602, %v1693, %v1704
        %v1707 = vshrl.u32 %v1583, 16
        %v1709 = vrot.slane %v1707, 7
        %v1710 = vshll.u32 %v1583, 16
        %v1712 = vor.u32 %v1709, %v1710
        %v1713 = vsel %vm1602, %v1701, %v1712
        %v1715 = vshrl.u32 %v1584, 16
        %v1717 = vrot.slane %v1715, 7
        %v1718 = vshll.u32 %v1584, 16
        %v1720 = vor.u32 %v1717, %v1718
        %v1721 = vsel %vm1602, %v1709, %v1720
        %v1723 = vshrl.u32 %v1585, 16
        %v1725 = vrot.slane %v1723, 7
        %v1726 = vshll.u32 %v1585, 16
        %v1728 = vor.u32 %v1725, %v1726
        %v1729 = vsel %vm1602, %v1717, %v1728
        %v1731 = vshrl.u32 %v1586, 16
        %v1733 = vrot.slane %v1731, 7
        %v1734 = vshll.u32 %v1586, 16
        %v1736 = vor.u32 %v1733, %v1734
        %v1737 = vsel %vm1602, %v1725, %v1736
        %v1739 = vshrl.u32 %v1587, 16
        %v1741 = vrot.slane %v1739, 7
        %v1742 = vshll.u32 %v1587, 16
        %v1744 = vor.u32 %v1741, %v1742
        %v1745 = vsel %vm1602, %v1733, %v1744
        %v1747 = vshrl.u32 %v1588, 16
        %v1749 = vrot.slane %v1747, 7
        %v1750 = vshll.u32 %v1588, 16
        %v1752 = vor.u32 %v1749, %v1750
        %v1753 = vsel %vm1602, %v1741, %v1752
        %v1755 = vshrl.u32 %v1589, 16
        %v1757 = vrot.slane %v1755, 7
        %v1758 = vshll.u32 %v1589, 16
        %v1760 = vor.u32 %v1757, %v1758
        %v1761 = vsel %vm1602, %v1749, %v1760
        %v1763 = vshrl.u32 %v1590, 16
        %v1765 = vrot.slane %v1763, 7
        %v1766 = vshll.u32 %v1590, 16
        %v1768 = vor.u32 %v1765, %v1766
        %v1769 = vsel %vm1602, %v1757, %v1768
        %v1771 = vshrl.u32 %v1591, 16
        %v1773 = vrot.slane %v1771, 7
        %v1774 = vshll.u32 %v1591, 16
        %v1776 = vor.u32 %v1773, %v1774
        %v1777 = vsel %vm1602, %v1765, %v1776
        %v1779 = vshrl.u32 %v1592, 16
        %v1781 = vrot.slane %v1779, 7
        %v1782 = vshll.u32 %v1592, 16
        %v1784 = vor.u32 %v1781, %v1782
        %v1785 = vsel %vm1602, %v1773, %v1784
        %v1787 = vshrl.u32 %v1593, 16
        %v1789 = vrot.slane %v1787, 7
        %v1790 = vshll.u32 %v1593, 16
        %v1792 = vor.u32 %v1789, %v1790
        %v1793 = vsel %vm1602, %v1781, %v1792
        %v1795 = vshrl.u32 %v1594, 16
        %v1797 = vrot.slane %v1795, 7
        %v1798 = vshll.u32 %v1594, 16
        %v1800 = vor.u32 %v1797, %v1798
        %v1801 = vsel %vm1602, %v1789, %v1800
        %v1803 = vshrl.u32 %v1595, 16
        %v1805 = vrot.slane %v1803, 7
        %v1806 = vshll.u32 %v1595, 16
        %v1808 = vor.u32 %v1805, %v1806
        %v1809 = vsel %vm1602, %v1797, %v1808
        %v1811 = vshrl.u32 %v1596, 16
        %v1813 = vrot.slane %v1811, 7
        %v1814 = vshll.u32 %v1596, 16
        %v1816 = vor.u32 %v1813, %v1814
        %v1817 = vsel %vm1602, %v1805, %v1816
        %v1819 = vshrl.u32 %v1597, 16
        %v1821 = vrot.slane %v1819, 7
        %v1822 = vshll.u32 %v1597, 16
        %v1824 = vor.u32 %v1821, %v1822
        %v1825 = vsel %vm1602, %v1813, %v1824
        %v1827 = vshrl.u32 %v1598, 16
        %v1829 = vrot.slane %v1827, 7
        %v1830 = vshll.u32 %v1598, 16
        %v1832 = vor.u32 %v1829, %v1830
        %v1833 = vsel %vm1602, %v1821, %v1832
        %v1835 = vshrl.u32 %v1599, 16
        %v1837 = vrot.slane %v1835, 7
        %v1838 = vshll.u32 %v1599, 16
        %v1840 = vor.u32 %v1837, %v1838
        %v1841 = vsel %vm1602, %v1829, %v1840
        %v1843 = vshrl.u32 %v1600, 16
        %v1845 = vrot.slane %v1843, 7
        %v1846 = vshll.u32 %v1600, 16
        %v1848 = vor.u32 %v1845, %v1846
        %v1849 = vsel %vm1602, %v1837, %v1848
        %v1851 = vshrl.u32 %v1601, 16
        %v1853 = vrot.slane %v1851, 7
        %v1854 = vshll.u32 %v1601, 16
        %v1856 = vor.u32 %v1853, %v1854
        %v1857 = vsel %vm1602, %v1845, %v1856
        %vm1891 = vcmask 1047552
        %vm1892 = vsmask.f32 7938
        %vm1893 = vmand %vm1891, %vm1892
        %v1894 = vld [vmem:[#allocation2 + $0x8] sm:$0xff]
        %v1895 = vsel %vm1893, %v1609, %v1894
        %1896 = vst [vmem:[#allocation2 + $0x8] sm:$0xff] %v1895
        %1897 = vst [vmem:[#allocation2 + $0x10] sm:$0xff] %v1617
        %1898 = vst [vmem:[#allocation2 + $0x18] sm:$0xff] %v1625
        %1899 = vst [vmem:[#allocation2 + $0x20] sm:$0xff] %v1633
        %1900 = vst [vmem:[#allocation2 + $0x28] sm:$0xff] %v1641
        %1901 = vst [vmem:[#allocation2 + $0x30] sm:$0xff] %v1649
        %1902 = vst [vmem:[#allocation2 + $0x38] sm:$0xff] %v1657
        %1903 = vst [vmem:[#allocation2 + $0x40] sm:$0xff] %v1665
        %1904 = vst [vmem:[#allocation2 + $0x48] sm:$0xff] %v1673
        %1905 = vst [vmem:[#allocation2 + $0x50] sm:$0xff] %v1681
        %1906 = vst [vmem:[#allocation2 + $0x58] sm:$0xff] %v1689
        %1907 = vst [vmem:[#allocation2 + $0x60] sm:$0xff] %v1697
        %1908 = vst [vmem:[#allocation2 + $0x68] sm:$0xff] %v1705
        %1909 = vst [vmem:[#allocation2 + $0x70] sm:$0xff] %v1713
        %1910 = vst [vmem:[#allocation2 + $0x78] sm:$0xff] %v1721
        %1911 = vst [vmem:[#allocation2 + $0x80] sm:$0xff] %v1729
        %1912 = vst [vmem:[#allocation2 + $0x88] sm:$0xff] %v1737
        %1913 = vst [vmem:[#allocation2 + $0x90] sm:$0xff] %v1745
        %1914 = vst [vmem:[#allocation2 + $0x98] sm:$0xff] %v1753
        %1915 = vst [vmem:[#allocation2 + $0xa0] sm:$0xff] %v1761
        %1916 = vst [vmem:[#allocation2 + $0xa8] sm:$0xff] %v1769
        %1917 = vst [vmem:[#allocation2 + $0xb0] sm:$0xff] %v1777
        %1918 = vst [vmem:[#allocation2 + $0xb8] sm:$0xff] %v1785
        %1919 = vst [vmem:[#allocation2 + $0xc0] sm:$0xff] %v1793
        %1920 = vst [vmem:[#allocation2 + $0xc8] sm:$0xff] %v1801
        %1921 = vst [vmem:[#allocation2 + $0xd0] sm:$0xff] %v1809
        %1922 = vst [vmem:[#allocation2 + $0xd8] sm:$0xff] %v1817
        %1923 = vst [vmem:[#allocation2 + $0xe0] sm:$0xff] %v1825
        %1924 = vst [vmem:[#allocation2 + $0xe8] sm:$0xff] %v1833
        %1925 = vst [vmem:[#allocation2 + $0xf0] sm:$0xff] %v1841
        %1926 = vst [vmem:[#allocation2 + $0xf8] sm:$0xff] %v1849
        %1927 = vst [vmem:[#allocation2 + $0x100] sm:$0xff] %v1857
        %vm1928 = vcmask 1040384
        %vm1929 = vmand %vm1928, %vm1602
        %v1930 = vld [vmem:[#allocation2 + $0x108] sm:$0x1]
        %v1931 = vsel %vm1929, %v1853, %v1930
        %1932 = vst [vmem:[#allocation2 + $0x108] sm:$0x1] %v1931
        %s1933 = scalar_lea.vmem [#allocation2], 304
        %1934 = vst [vmem:[%s1933 + $0x8] sm:$0xff] %v1570
        %1935 = vst [vmem:[%s1933 + $0x10] sm:$0xff] %v1571
        %1936 = vst [vmem:[%s1933 + $0x18] sm:$0xff] %v1572
        %1937 = vst [vmem:[%s1933 + $0x20] sm:$0xff] %v1573
        %1938 = vst [vmem:[%s1933 + $0x28] sm:$0xff] %v1574
        %1939 = vst [vmem:[%s1933 + $0x30] sm:$0xff] %v1575
        %1940 = vst [vmem:[%s1933 + $0x38] sm:$0xff] %v1576
        %1941 = vst [vmem:[%s1933 + $0x40] sm:$0xff] %v1577
        %1942 = vst [vmem:[%s1933 + $0x48] sm:$0xff] %v1578
        %1943 = vst [vmem:[%s1933 + $0x50] sm:$0xff] %v1579
        %1944 = vst [vmem:[%s1933 + $0x58] sm:$0xff] %v1580
        %1945 = vst [vmem:[%s1933 + $0x60] sm:$0xff] %v1581
        %1946 = vst [vmem:[%s1933 + $0x68] sm:$0xff] %v1582
        %1947 = vst [vmem:[%s1933 + $0x70] sm:$0xff] %v1583
        %1948 = vst [vmem:[%s1933 + $0x78] sm:$0xff] %v1584
        %1949 = vst [vmem:[%s1933 + $0x80] sm:$0xff] %v1585
        %1950 = vst [vmem:[%s1933 + $0x88] sm:$0xff] %v1586
        %1951 = vst [vmem:[%s1933 + $0x90] sm:$0xff] %v1587
        %1952 = vst [vmem:[%s1933 + $0x98] sm:$0xff] %v1588
        %1953 = vst [vmem:[%s1933 + $0xa0] sm:$0xff] %v1589
        %1954 = vst [vmem:[%s1933 + $0xa8] sm:$0xff] %v1590
        %1955 = vst [vmem:[%s1933 + $0xb0] sm:$0xff] %v1591
        %1956 = vst [vmem:[%s1933 + $0xb8] sm:$0xff] %v1592
        %1957 = vst [vmem:[%s1933 + $0xc0] sm:$0xff] %v1593
        %1958 = vst [vmem:[%s1933 + $0xc8] sm:$0xff] %v1594
        %1959 = vst [vmem:[%s1933 + $0xd0] sm:$0xff] %v1595
        %1960 = vst [vmem:[%s1933 + $0xd8] sm:$0xff] %v1596
        %1961 = vst [vmem:[%s1933 + $0xe0] sm:$0xff] %v1597
        %1962 = vst [vmem:[%s1933 + $0xe8] sm:$0xff] %v1598
        %1963 = vst [vmem:[%s1933 + $0xf0] sm:$0xff] %v1599
        %1964 = vst [vmem:[%s1933 + $0xf8] sm:$0xff] %v1600
        %1965 = vst [vmem:[%s1933 + $0x100] sm:$0xff] %v1601
        %vm1966 = vsmask.f32 7424
        %v1967 = vrot.slane %v1607, 1
        %v1968 = vor.u32 %v1604, %v1967
        %v1969 = vrot.slane %v1614, 1
        %v1970 = vsel %vm1966, %v1968, %v1969
        %v1971 = vor.u32 %v1611, %v1969
        %v1972 = vrot.slane %v1622, 1
        %v1973 = vsel %vm1966, %v1971, %v1972
        %v1974 = vor.u32 %v1619, %v1972
        %v1975 = vrot.slane %v1630, 1
        %v1976 = vsel %vm1966, %v1974, %v1975
        %v1977 = vor.u32 %v1627, %v1975
        %v1978 = vrot.slane %v1638, 1
        %v1979 = vsel %vm1966, %v1977, %v1978
        %v1980 = vor.u32 %v1635, %v1978
        %v1981 = vrot.slane %v1646, 1
        %v1982 = vsel %vm1966, %v1980, %v1981
        %v1983 = vor.u32 %v1643, %v1981
        %v1984 = vrot.slane %v1654, 1
        %v1985 = vsel %vm1966, %v1983, %v1984
        %v1986 = vor.u32 %v1651, %v1984
        %v1987 = vrot.slane %v1662, 1
        %v1988 = vsel %vm1966, %v1986, %v1987
        %v1989 = vor.u32 %v1659, %v1987
        %v1990 = vrot.slane %v1670, 1
        %v1991 = vsel %vm1966, %v1989, %v1990
        %v1992 = vor.u32 %v1667, %v1990
        %v1993 = vrot.slane %v1678, 1
        %v1994 = vsel %vm1966, %v1992, %v1993
        %v1995 = vor.u32 %v1675, %v1993
        %v1996 = vrot.slane %v1686, 1
        %v1997 = vsel %vm1966, %v1995, %v1996
        %v1998 = vor.u32 %v1683, %v1996
        %v1999 = vrot.slane %v1694, 1
        %v2000 = vsel %vm1966, %v1998, %v1999
        %v2001 = vor.u32 %v1691, %v1999
        %v2002 = vrot.slane %v1702, 1
        %v2003 = vsel %vm1966, %v2001, %v2002
        %v2004 = vor.u32 %v1699, %v2002
        %v2005 = vrot.slane %v1710, 1
        %v2006 = vsel %vm1966, %v2004, %v2005
        %v2007 = vor.u32 %v1707, %v2005
        %v2008 = vrot.slane %v1718, 1
        %v2009 = vsel %vm1966, %v2007, %v2008
        %v2010 = vor.u32 %v1715, %v2008
        %v2011 = vrot.slane %v1726, 1
        %v2012 = vsel %vm1966, %v2010, %v2011
        %v2013 = vor.u32 %v1723, %v2011
        %v2014 = vrot.slane %v1734, 1
        %v2015 = vsel %vm1966, %v2013, %v2014
        %v2016 = vor.u32 %v1731, %v2014
        %v2017 = vrot.slane %v1742, 1
        %v2018 = vsel %vm1966, %v2016, %v2017
        %v2019 = vor.u32 %v1739, %v2017
        %v2020 = vrot.slane %v1750, 1
        %v2021 = vsel %vm1966, %v2019, %v2020
        %v2022 = vor.u32 %v1747, %v2020
        %v2023 = vrot.slane %v1758, 1
        %v2024 = vsel %vm1966, %v2022, %v2023
        %v2025 = vor.u32 %v1755, %v2023
        %v2026 = vrot.slane %v1766, 1
        %v2027 = vsel %vm1966, %v2025, %v2026
        %v2028 = vor.u32 %v1763, %v2026
        %v2029 = vrot.slane %v1774, 1
        %v2030 = vsel %vm1966, %v2028, %v2029
        %v2031 = vor.u32 %v1771, %v2029
        %v2032 = vrot.slane %v1782, 1
        %v2033 = vsel %vm1966, %v2031, %v2032
        %v2034 = vor.u32 %v1779, %v2032
        %v2035 = vrot.slane %v1790, 1
        %v2036 = vsel %vm1966, %v2034, %v2035
        %v2037 = vor.u32 %v1787, %v2035
        %v2038 = vrot.slane %v1798, 1
        %v2039 = vsel %vm1966, %v2037, %v2038
        %v2040 = vor.u32 %v1795, %v2038
        %v2041 = vrot.slane %v1806, 1
        %v2042 = vsel %vm1966, %v2040, %v2041
        %v2043 = vor.u32 %v1803, %v2041
        %v2044 = vrot.slane %v1814, 1
        %v2045 = vsel %vm1966, %v2043, %v2044
        %v2046 = vor.u32 %v1811, %v2044
        %v2047 = vrot.slane %v1822, 1
        %v2048 = vsel %vm1966, %v2046, %v2047
        %v2049 = vor.u32 %v1819, %v2047
        %v2050 = vrot.slane %v1830, 1
        %v2051 = vsel %vm1966, %v2049, %v2050
        %v2052 = vor.u32 %v1827, %v2050
        %v2053 = vrot.slane %v1838, 1
        %v2054 = vsel %vm1966, %v2052, %v2053
        %v2055 = vor.u32 %v1835, %v2053
        %v2056 = vrot.slane %v1846, 1
        %v2057 = vsel %vm1966, %v2055, %v2056
        %v2058 = vor.u32 %v1843, %v2056
        %v2059 = vrot.slane %v1854, 1
        %v2060 = vsel %vm1966, %v2058, %v2059
        %v2061 = vor.u32 %v1851, %v2059
        %s2095 = scalar_lea.vmem [#allocation2], 608
        %vm2096 = vcmask 1047559
        %vm2097 = vsmask.f32 7966
        %vm2098 = vmand %vm2096, %vm2097
        %v2099 = vld [vmem:[%s2095] sm:$0x80]
        %v2100 = vsel %vm2098, %v1967, %v2099
        %2101 = vst [vmem:[%s2095] sm:$0x80] %v2100
        %2102 = vst [vmem:[%s2095 + $0x8] sm:$0xff] %v1970
        %2103 = vst [vmem:[%s2095 + $0x10] sm:$0xff] %v1973
        %2104 = vst [vmem:[%s2095 + $0x18] sm:$0xff] %v1976
        %2105 = vst [vmem:[%s2095 + $0x20] sm:$0xff] %v1979
        %2106 = vst [vmem:[%s2095 + $0x28] sm:$0xff] %v1982
        %2107 = vst [vmem:[%s2095 + $0x30] sm:$0xff] %v1985
        %2108 = vst [vmem:[%s2095 + $0x38] sm:$0xff] %v1988
        %2109 = vst [vmem:[%s2095 + $0x40] sm:$0xff] %v1991
        %2110 = vst [vmem:[%s2095 + $0x48] sm:$0xff] %v1994
        %2111 = vst [vmem:[%s2095 + $0x50] sm:$0xff] %v1997
        %2112 = vst [vmem:[%s2095 + $0x58] sm:$0xff] %v2000
        %2113 = vst [vmem:[%s2095 + $0x60] sm:$0xff] %v2003
        %2114 = vst [vmem:[%s2095 + $0x68] sm:$0xff] %v2006
        %2115 = vst [vmem:[%s2095 + $0x70] sm:$0xff] %v2009
        %2116 = vst [vmem:[%s2095 + $0x78] sm:$0xff] %v2012
        %2117 = vst [vmem:[%s2095 + $0x80] sm:$0xff] %v2015
        %2118 = vst [vmem:[%s2095 + $0x88] sm:$0xff] %v2018
        %2119 = vst [vmem:[%s2095 + $0x90] sm:$0xff] %v2021
        %2120 = vst [vmem:[%s2095 + $0x98] sm:$0xff] %v2024
        %2121 = vst [vmem:[%s2095 + $0xa0] sm:$0xff] %v2027
        %2122 = vst [vmem:[%s2095 + $0xa8] sm:$0xff] %v2030
        %2123 = vst [vmem:[%s2095 + $0xb0] sm:$0xff] %v2033
        %2124 = vst [vmem:[%s2095 + $0xb8] sm:$0xff] %v2036
        %2125 = vst [vmem:[%s2095 + $0xc0] sm:$0xff] %v2039
        %2126 = vst [vmem:[%s2095 + $0xc8] sm:$0xff] %v2042
        %2127 = vst [vmem:[%s2095 + $0xd0] sm:$0xff] %v2045
        %2128 = vst [vmem:[%s2095 + $0xd8] sm:$0xff] %v2048
        %2129 = vst [vmem:[%s2095 + $0xe0] sm:$0xff] %v2051
        %2130 = vst [vmem:[%s2095 + $0xe8] sm:$0xff] %v2054
        %2131 = vst [vmem:[%s2095 + $0xf0] sm:$0xff] %v2057
        %2132 = vst [vmem:[%s2095 + $0xf8] sm:$0xff] %v2060
        %vm2133 = vmand %vm1891, %vm1966
        %v2134 = vld [vmem:[%s2095 + $0x100] sm:$0xff]
        %v2135 = vsel %vm2133, %v2061, %v2134
        %2136 = vst [vmem:[%s2095 + $0x100] sm:$0xff] %v2135
        %s2137 = sadd.s32 %s436, 512
        %s2138 = sshra.s32 %s2137, 3
        %s2139 = sand.u32 %s2137, 7
        %s2140 = smul.addr %s2138, 4
        %s2141 = scalar_lea.vmem %s373, %s2140 [#allocation3]
        %v2142 = vld [vmem:[%s2141] sm:$0xf]
        %v2143 = vld [vmem:[%s2141 + $0x4] sm:$0xf]
        %v2144 = vld [vmem:[%s2141 + $0x8] sm:$0xf]
        %v2145 = vld [vmem:[%s2141 + $0xc] sm:$0xf]
        %v2146 = vld [vmem:[%s2141 + $0x10] sm:$0xf]
        %v2147 = vld [vmem:[%s2141 + $0x14] sm:$0xf]
        %v2148 = vld [vmem:[%s2141 + $0x18] sm:$0xf]
        %v2149 = vld [vmem:[%s2141 + $0x1c] sm:$0xf]
        %v2150 = vld [vmem:[#allocation8] sm:$0xf]
        %v2151 = vld [vmem:[#allocation8 + $0x4] sm:$0xf]
        %v2152 = vld [vmem:[#allocation8 + $0x8] sm:$0xf]
        %v2153 = vld [vmem:[#allocation8 + $0xc] sm:$0xf]
        %v2154 = vld [vmem:[#allocation8 + $0x10] sm:$0xf]
        %v2155 = vld [vmem:[#allocation8 + $0x14] sm:$0xf]
        %v2156 = vld [vmem:[#allocation8 + $0x18] sm:$0xf]
        %v2157 = vld [vmem:[#allocation8 + $0x1c] sm:$0xf]
        %v2158 = vld [vmem:[#allocation8 + $0x20] sm:$0xf]
        %v2159 = vld [vmem:[#allocation8 + $0x24] sm:$0xf]
        %v2160 = vld [vmem:[#allocation8 + $0x28] sm:$0xf]
        %v2161 = vld [vmem:[#allocation8 + $0x2c] sm:$0xf]
        %v2162 = vld [vmem:[#allocation8 + $0x30] sm:$0xf]
        %v2163 = vld [vmem:[#allocation8 + $0x34] sm:$0xf]
        %v2164 = vld [vmem:[#allocation8 + $0x38] sm:$0xf]
        %v2165 = vld [vmem:[#allocation8 + $0x3c] sm:$0xf]
        %v2166 = vld [vmem:[#allocation9] sm:$0x1]
        %v2168 = vlaneseq
        %v2169 = vshrl.u32 %v2168, 7
        %v2170 = vsub.s32 0, %v2169
        %v2171 = vrot.slane %v2166, %v2170
        %v2181 = vunpack.c.l.b16 %v2142
        %v2182 = vunpack.c.l.b16 %v2143
        %v2183 = vunpack.c.l.b16 %v2144
        %v2184 = vunpack.c.l.b16 %v2145
        %v2185 = vunpack.c.l.b16 %v2146
        %v2186 = vunpack.c.l.b16 %v2147
        %v2187 = vunpack.c.l.b16 %v2148
        %v2188 = vunpack.c.l.b16 %v2149
        %v2189 = vpack.c.b16 %v2182, %v2181
        %v2190 = vpack.c.b16 %v2184, %v2183
        %v2191 = vpack.c.b16 %v2186, %v2185
        %v2192 = vpack.c.b16 %v2188, %v2187
        %v2213 = vunpack.c.l.b16 %v2150
        %v2214 = vunpack.c.l.b16 %v2151
        %v2215 = vunpack.c.l.b16 %v2152
        %v2216 = vunpack.c.l.b16 %v2153
        %v2217 = vunpack.c.l.b16 %v2154
        %v2218 = vunpack.c.l.b16 %v2155
        %v2219 = vunpack.c.l.b16 %v2156
        %v2220 = vunpack.c.l.b16 %v2157
        %v2221 = vunpack.c.l.b16 %v2158
        %v2222 = vunpack.c.l.b16 %v2159
        %v2223 = vunpack.c.l.b16 %v2160
        %v2224 = vunpack.c.l.b16 %v2161
        %v2225 = vunpack.c.l.b16 %v2162
        %v2226 = vunpack.c.l.b16 %v2163
        %v2227 = vunpack.c.l.b16 %v2164
        %v2228 = vunpack.c.l.b16 %v2165
        %v2229 = vpack.c.b16 %v2214, %v2213
        %v2230 = vpack.c.b16 %v2216, %v2215
        %v2231 = vpack.c.b16 %v2218, %v2217
        %v2232 = vpack.c.b16 %v2220, %v2219
        %v2233 = vpack.c.b16 %v2222, %v2221
        %v2234 = vpack.c.b16 %v2224, %v2223
        %v2235 = vpack.c.b16 %v2226, %v2225
        %v2236 = vpack.c.b16 %v2228, %v2227
        %2245 = vmatprep.subr.bf16.mxu0 0
        %2246 = vmatpush1.bf16.msra.mxu0 %v2229
        %2247 = vmatprep.subr.bf16.mxu0 0
        %2248 = vmatpush1.bf16.msra.mxu0 %v2230
        %2249 = vmatprep.subr.bf16.mxu0 0
        %2250 = vmatpush1.bf16.msra.mxu0 %v2231
        %2251 = vmatprep.subr.bf16.mxu0 0
        %2252 = vmatpush1.bf16.msra.mxu0 %v2232
        %2253 = vmatprep.subr.bf16.mxu0 0
        %2254 = vmatpush1.bf16.msra.mxu0 %v2233
        %2255 = vmatprep.subr.bf16.mxu0 0
        %2256 = vmatpush1.bf16.msra.mxu0 %v2234
        %2257 = vmatprep.subr.bf16.mxu0 0
        %2258 = vmatpush1.bf16.msra.mxu0 %v2235
        %2259 = vmatprep.subr.bf16.mxu0 0
        %2260 = vmatpush1.bf16.msra.mxu0 %v2236
        %2261 = vmatprep.subr.bf16.mxu0 0
        %2262 = vmatpush1.bf16.msra.mxu0 0
        %2263 = vmatprep.subr.bf16.mxu0 0
        %2264 = vmatpush1.bf16.msra.mxu0 0
        %2265 = vmatprep.subr.bf16.mxu0 0
        %2266 = vmatpush1.bf16.msra.mxu0 0
        %2267 = vmatprep.subr.bf16.mxu0 0
        %2268 = vmatpush1.bf16.msra.mxu0 0
        %2269 = vmatprep.subr.bf16.mxu0 0
        %2270 = vmatpush1.bf16.msra.mxu0 0
        %2271 = vmatprep.subr.bf16.mxu0 0
        %2272 = vmatpush1.bf16.msra.mxu0 0
        %2273 = vmatprep.subr.bf16.mxu0 0
        %2274 = vmatpush1.bf16.msra.mxu0 0
        %2275 = vmatprep.subr.bf16.mxu0 0
        %2276 = vmatpush1.bf16.msra.mxu0 0
        %2277 = vmatprep.mubr.bf16.mxu0 0
        %2278 = vmatmul.mubr.bf16.gmra.mrb[0].mxu0 %v2189
        %v2279 = vpop.f32.mrb[0].mxu0
        %v2280 = vadd.f32 %v2171, %v2279
        %v2281 = vpop.f32.mrb[0].mxu0
        %v2282 = vpop.f32.mrb[0].mxu0
        %v2283 = vadd.f32 %v2171, %v2282
        %v2284 = vpop.f32.mrb[0].mxu0
        %2285 = vmatprep.mubr.bf16.mxu0 0
        %2286 = vmatmul.mubr.bf16.gmra.mrb[0].mxu0 %v2190
        %v2287 = vpop.f32.mrb[0].mxu0
        %v2288 = vadd.f32 %v2171, %v2287
        %v2289 = vpop.f32.mrb[0].mxu0
        %v2290 = vpop.f32.mrb[0].mxu0
        %v2291 = vadd.f32 %v2171, %v2290
        %v2292 = vpop.f32.mrb[0].mxu0
        %2293 = vmatprep.mubr.bf16.mxu0 0
        %2294 = vmatmul.mubr.bf16.gmra.mrb[0].mxu0 %v2191
        %v2295 = vpop.f32.mrb[0].mxu0
        %v2296 = vadd.f32 %v2171, %v2295
        %v2297 = vpop.f32.mrb[0].mxu0
        %v2298 = vpop.f32.mrb[0].mxu0
        %v2299 = vadd.f32 %v2171, %v2298
        %v2300 = vpop.f32.mrb[0].mxu0
        %2301 = vmatprep.mubr.bf16.mxu0 0
        %2302 = vmatmul.mubr.bf16.gmra.mrb[0].mxu0 %v2192
        %v2303 = vpop.f32.mrb[0].mxu0
        %v2304 = vadd.f32 %v2171, %v2303
        %v2305 = vpop.f32.mrb[0].mxu0
        %v2306 = vpop.f32.mrb[0].mxu0
        %v2307 = vadd.f32 %v2171, %v2306
        %v2308 = vpop.f32.mrb[0].mxu0
        %2309 = vdwg.mxu0
        %v2310 = vmax.f32 %v2280, 0.0
        %v2311 = vmax.f32 %v2283, 0.0
        %v2312 = vmax.f32 %v2288, 0.0
        %v2313 = vmax.f32 %v2291, 0.0
        %v2314 = vmax.f32 %v2296, 0.0
        %v2315 = vmax.f32 %v2299, 0.0
        %v2316 = vmax.f32 %v2304, 0.0
        %v2317 = vmax.f32 %v2307, 0.0
        %s2318 = scalar_lea.vmem [#allocation6], %s2137
        %v2319 = vld [vmem:[%s2318] sm:$0xff]
        %v2320 = vld [vmem:[%s2318 + $0x8] sm:$0xff]
        %v2321 = vld [vmem:[%s2318 + $0x10] sm:$0xff]
        %v2322 = vld [vmem:[%s2318 + $0x18] sm:$0xff]
        %v2323 = vld [vmem:[%s2318 + $0x20] sm:$0xff]
        %v2324 = vld [vmem:[%s2318 + $0x28] sm:$0xff]
        %v2325 = vld [vmem:[%s2318 + $0x30] sm:$0xff]
        %v2326 = vld [vmem:[%s2318 + $0x38] sm:$0xff]
        %2328 = vset.pattern.permute.xlu0 0
        %2329 = vperm.xlu0 %2328, %v2319
        %v2330 = vpop.permute.xlu0 %2329
        %2333 = vset.pattern.permute.xlu0 0
        %2334 = vperm.xlu0 %2333, %v2320
        %v2335 = vpop.permute.xlu0 %2334
        %2338 = vset.pattern.permute.xlu0 0
        %2339 = vperm.xlu0 %2338, %v2321
        %v2340 = vpop.permute.xlu0 %2339
        %2343 = vset.pattern.permute.xlu0 0
        %2344 = vperm.xlu0 %2343, %v2322
        %v2345 = vpop.permute.xlu0 %2344
        %2348 = vset.pattern.permute.xlu0 0
        %2349 = vperm.xlu0 %2348, %v2323
        %v2350 = vpop.permute.xlu0 %2349
        %2353 = vset.pattern.permute.xlu0 0
        %2354 = vperm.xlu0 %2353, %v2324
        %v2355 = vpop.permute.xlu0 %2354
        %2358 = vset.pattern.permute.xlu0 0
        %2359 = vperm.xlu0 %2358, %v2325
        %v2360 = vpop.permute.xlu0 %2359
        %2363 = vset.pattern.permute.xlu0 0
        %2364 = vperm.xlu0 %2363, %v2326
        %v2365 = vpop.permute.xlu0 %2364
        %v2367 = vmul.f32 %v2310, %v2330
        %v2368 = vmul.f32 %v2311, %v2335
        %v2369 = vmul.f32 %v2312, %v2340
        %v2370 = vmul.f32 %v2313, %v2345
        %v2371 = vmul.f32 %v2314, %v2350
        %v2372 = vmul.f32 %v2315, %v2355
        %v2373 = vmul.f32 %v2316, %v2360
        %v2374 = vmul.f32 %v2317, %v2365
        %v2375 = vpack.c.bf16 %v2368, %v2367
        %v2376 = vpack.c.bf16 %v2370, %v2369
        %v2377 = vpack.c.bf16 %v2372, %v2371
        %v2378 = vpack.c.bf16 %v2374, %v2373
        %v2380 = vshrl.u32 %v2375, 16
        %v2382 = vrot.slane %v2380, 7
        %v2383 = vshll.u32 %v2375, 16
        %v2385 = vor.u32 %v2382, %v2383
        %v2387 = vshrl.u32 %v2376, 16
        %v2389 = vrot.slane %v2387, 7
        %v2390 = vshll.u32 %v2376, 16
        %v2392 = vor.u32 %v2389, %v2390
        %v2393 = vsel %vm1602, %v2382, %v2392
        %v2395 = vshrl.u32 %v2377, 16
        %v2397 = vrot.slane %v2395, 7
        %v2398 = vshll.u32 %v2377, 16
        %v2400 = vor.u32 %v2397, %v2398
        %v2401 = vsel %vm1602, %v2389, %v2400
        %v2403 = vshrl.u32 %v2378, 16
        %v2405 = vrot.slane %v2403, 7
        %v2406 = vshll.u32 %v2378, 16
        %v2408 = vor.u32 %v2405, %v2406
        %v2409 = vsel %vm1602, %v2397, %v2408
        %v2415 = vld [vmem:[#allocation2 + $0x108] sm:$0xff]
        %v2416 = vsel %vm1893, %v2385, %v2415
        %2417 = vst [vmem:[#allocation2 + $0x108] sm:$0xff] %v2416
        %2418 = vst [vmem:[#allocation2 + $0x110] sm:$0xff] %v2393
        %2419 = vst [vmem:[#allocation2 + $0x118] sm:$0xff] %v2401
        %2420 = vst [vmem:[#allocation2 + $0x120] sm:$0xff] %v2409
        %v2421 = vld [vmem:[#allocation2 + $0x128] sm:$0x1]
        %v2422 = vsel %vm1929, %v2405, %v2421
        %2423 = vst [vmem:[#allocation2 + $0x128] sm:$0x1] %v2422
        %2424 = vst [vmem:[%s1933 + $0x108] sm:$0xff] %v2375
        %2425 = vst [vmem:[%s1933 + $0x110] sm:$0xff] %v2376
        %2426 = vst [vmem:[%s1933 + $0x118] sm:$0xff] %v2377
        %2427 = vst [vmem:[%s1933 + $0x120] sm:$0xff] %v2378
        %v2428 = vrot.slane %v2383, 1
        %v2429 = vor.u32 %v2380, %v2428
        %v2430 = vrot.slane %v2390, 1
        %v2431 = vsel %vm1966, %v2429, %v2430
        %v2432 = vor.u32 %v2387, %v2430
        %v2433 = vrot.slane %v2398, 1
        %v2434 = vsel %vm1966, %v2432, %v2433
        %v2435 = vor.u32 %v2395, %v2433
        %v2436 = vrot.slane %v2406, 1
        %v2437 = vsel %vm1966, %v2435, %v2436
        %v2438 = vor.u32 %v2403, %v2436
        %v2444 = vld [vmem:[%s2095 + $0x100] sm:$0x80]
        %v2445 = vsel %vm2098, %v2428, %v2444
        %2446 = vst [vmem:[%s2095 + $0x100] sm:$0x80] %v2445
        %2447 = vst [vmem:[%s2095 + $0x108] sm:$0xff] %v2431
        %2448 = vst [vmem:[%s2095 + $0x110] sm:$0xff] %v2434
        %2449 = vst [vmem:[%s2095 + $0x118] sm:$0xff] %v2437
        %v2450 = vld [vmem:[%s2095 + $0x120] sm:$0xff]
        %v2451 = vsel %vm2133, %v2438, %v2450
        %2452 = vst [vmem:[%s2095 + $0x120] sm:$0xff] %v2451
        %v2453 = vld [vmem:[#allocation2 + $0x8] sm:$0xff]
        %v2454 = vld [vmem:[#allocation2 + $0x10] sm:$0xff]
        %v2455 = vld [vmem:[#allocation2 + $0x18] sm:$0xff]
        %v2456 = vld [vmem:[#allocation2 + $0x20] sm:$0xff]
        %v2457 = vld [vmem:[#allocation2 + $0x28] sm:$0xff]
        %v2458 = vld [vmem:[#allocation2 + $0x30] sm:$0xff]
        %v2459 = vld [vmem:[#allocation2 + $0x38] sm:$0xff]
        %v2460 = vld [vmem:[#allocation2 + $0x40] sm:$0xff]
        %v2461 = vld [vmem:[#allocation2 + $0x48] sm:$0xff]
        %v2462 = vld [vmem:[#allocation2 + $0x50] sm:$0xff]
        %v2463 = vld [vmem:[#allocation2 + $0x58] sm:$0xff]
        %v2464 = vld [vmem:[#allocation2 + $0x60] sm:$0xff]
        %v2465 = vld [vmem:[#allocation2 + $0x68] sm:$0xff]
        %v2466 = vld [vmem:[#allocation2 + $0x70] sm:$0xff]
        %v2467 = vld [vmem:[#allocation2 + $0x78] sm:$0xff]
        %v2468 = vld [vmem:[#allocation2 + $0x80] sm:$0xff]
        %v2469 = vld [vmem:[#allocation2 + $0x88] sm:$0xff]
        %v2470 = vld [vmem:[#allocation2 + $0x90] sm:$0xff]
        %v2471 = vld [vmem:[#allocation2 + $0x98] sm:$0xff]
        %v2472 = vld [vmem:[#allocation2 + $0xa0] sm:$0xff]
        %v2473 = vld [vmem:[#allocation2 + $0xa8] sm:$0xff]
        %v2474 = vld [vmem:[#allocation2 + $0xb0] sm:$0xff]
        %v2475 = vld [vmem:[#allocation2 + $0xb8] sm:$0xff]
        %v2476 = vld [vmem:[#allocation2 + $0xc0] sm:$0xff]
        %v2477 = vld [vmem:[#allocation2 + $0xc8] sm:$0xff]
        %v2478 = vld [vmem:[#allocation2 + $0xd0] sm:$0xff]
        %v2479 = vld [vmem:[#allocation2 + $0xd8] sm:$0xff]
        %v2480 = vld [vmem:[#allocation2 + $0xe0] sm:$0xff]
        %v2481 = vld [vmem:[#allocation2 + $0xe8] sm:$0xff]
        %v2482 = vld [vmem:[#allocation2 + $0xf0] sm:$0xff]
        %v2483 = vld [vmem:[#allocation2 + $0xf8] sm:$0xff]
        %v2484 = vld [vmem:[#allocation2 + $0x100] sm:$0xff]
        %v2485 = vld [vmem:[#allocation11] sm:$0xf]
        %v2486 = vld [vmem:[#allocation11 + $0x4] sm:$0xf]
        %v2487 = vld [vmem:[#allocation11 + $0x8] sm:$0xf]
        %v2488 = vld [vmem:[#allocation11 + $0xc] sm:$0xf]
        %v2489 = vld [vmem:[#allocation11 + $0x10] sm:$0xf]
        %v2490 = vld [vmem:[#allocation11 + $0x14] sm:$0xf]
        %v2491 = vld [vmem:[#allocation11 + $0x18] sm:$0xf]
        %v2492 = vld [vmem:[#allocation11 + $0x1c] sm:$0xf]
        %v2493 = vld [vmem:[#allocation11 + $0x20] sm:$0xf]
        %v2494 = vld [vmem:[#allocation11 + $0x24] sm:$0xf]
        %v2495 = vld [vmem:[#allocation11 + $0x28] sm:$0xf]
        %v2496 = vld [vmem:[#allocation11 + $0x2c] sm:$0xf]
        %v2497 = vld [vmem:[#allocation11 + $0x30] sm:$0xf]
        %v2498 = vld [vmem:[#allocation11 + $0x34] sm:$0xf]
        %v2499 = vld [vmem:[#allocation11 + $0x38] sm:$0xf]
        %v2500 = vld [vmem:[#allocation11 + $0x3c] sm:$0xf]
        %v2501 = vld [vmem:[%s1933 + $0x8] sm:$0xff]
        %v2502 = vld [vmem:[%s1933 + $0x10] sm:$0xff]
        %v2503 = vld [vmem:[%s1933 + $0x18] sm:$0xff]
        %v2504 = vld [vmem:[%s1933 + $0x20] sm:$0xff]
        %v2505 = vld [vmem:[%s1933 + $0x28] sm:$0xff]
        %v2506 = vld [vmem:[%s1933 + $0x30] sm:$0xff]
        %v2507 = vld [vmem:[%s1933 + $0x38] sm:$0xff]
        %v2508 = vld [vmem:[%s1933 + $0x40] sm:$0xff]
        %v2509 = vld [vmem:[%s1933 + $0x48] sm:$0xff]
        %v2510 = vld [vmem:[%s1933 + $0x50] sm:$0xff]
        %v2511 = vld [vmem:[%s1933 + $0x58] sm:$0xff]
        %v2512 = vld [vmem:[%s1933 + $0x60] sm:$0xff]
        %v2513 = vld [vmem:[%s1933 + $0x68] sm:$0xff]
        %v2514 = vld [vmem:[%s1933 + $0x70] sm:$0xff]
        %v2515 = vld [vmem:[%s1933 + $0x78] sm:$0xff]
        %v2516 = vld [vmem:[%s1933 + $0x80] sm:$0xff]
        %v2517 = vld [vmem:[%s1933 + $0x88] sm:$0xff]
        %v2518 = vld [vmem:[%s1933 + $0x90] sm:$0xff]
        %v2519 = vld [vmem:[%s1933 + $0x98] sm:$0xff]
        %v2520 = vld [vmem:[%s1933 + $0xa0] sm:$0xff]
        %v2521 = vld [vmem:[%s1933 + $0xa8] sm:$0xff]
        %v2522 = vld [vmem:[%s1933 + $0xb0] sm:$0xff]
        %v2523 = vld [vmem:[%s1933 + $0xb8] sm:$0xff]
        %v2524 = vld [vmem:[%s1933 + $0xc0] sm:$0xff]
        %v2525 = vld [vmem:[%s1933 + $0xc8] sm:$0xff]
        %v2526 = vld [vmem:[%s1933 + $0xd0] sm:$0xff]
        %v2527 = vld [vmem:[%s1933 + $0xd8] sm:$0xff]
        %v2528 = vld [vmem:[%s1933 + $0xe0] sm:$0xff]
        %v2529 = vld [vmem:[%s1933 + $0xe8] sm:$0xff]
        %v2530 = vld [vmem:[%s1933 + $0xf0] sm:$0xff]
        %v2531 = vld [vmem:[%s1933 + $0xf8] sm:$0xff]
        %v2532 = vld [vmem:[%s1933 + $0x100] sm:$0xff]
        %s2533 = scalar_lea.vmem [#allocation11], 64
        %v2534 = vld [vmem:[%s2533] sm:$0xf]
        %v2535 = vld [vmem:[%s2533 + $0x4] sm:$0xf]
        %v2536 = vld [vmem:[%s2533 + $0x8] sm:$0xf]
        %v2537 = vld [vmem:[%s2533 + $0xc] sm:$0xf]
        %v2538 = vld [vmem:[%s2533 + $0x10] sm:$0xf]
        %v2539 = vld [vmem:[%s2533 + $0x14] sm:$0xf]
        %v2540 = vld [vmem:[%s2533 + $0x18] sm:$0xf]
        %v2541 = vld [vmem:[%s2533 + $0x1c] sm:$0xf]
        %v2542 = vld [vmem:[%s2533 + $0x20] sm:$0xf]
        %v2543 = vld [vmem:[%s2533 + $0x24] sm:$0xf]
        %v2544 = vld [vmem:[%s2533 + $0x28] sm:$0xf]
        %v2545 = vld [vmem:[%s2533 + $0x2c] sm:$0xf]
        %v2546 = vld [vmem:[%s2533 + $0x30] sm:$0xf]
        %v2547 = vld [vmem:[%s2533 + $0x34] sm:$0xf]
        %v2548 = vld [vmem:[%s2533 + $0x38] sm:$0xf]
        %v2549 = vld [vmem:[%s2533 + $0x3c] sm:$0xf]
        %v2566 = vunpack.c.l.b16 %v2534
        %v2567 = vunpack.c.l.b16 %v2535
        %v2568 = vunpack.c.l.b16 %v2536
        %v2569 = vunpack.c.l.b16 %v2537
        %v2570 = vunpack.c.l.b16 %v2538
        %v2571 = vunpack.c.l.b16 %v2539
        %v2572 = vunpack.c.l.b16 %v2540
        %v2573 = vunpack.c.l.b16 %v2541
        %v2574 = vunpack.c.l.b16 %v2542
        %v2575 = vunpack.c.l.b16 %v2543
        %v2576 = vunpack.c.l.b16 %v2544
        %v2577 = vunpack.c.l.b16 %v2545
        %v2578 = vunpack.c.l.b16 %v2546
        %v2579 = vunpack.c.l.b16 %v2547
        %v2580 = vunpack.c.l.b16 %v2548
        %v2581 = vunpack.c.l.b16 %v2549
        %v2582 = vpack.c.b16 %v2567, %v2566
        %v2583 = vpack.c.b16 %v2569, %v2568
        %v2584 = vpack.c.b16 %v2571, %v2570
        %v2585 = vpack.c.b16 %v2573, %v2572
        %v2586 = vpack.c.b16 %v2575, %v2574
        %v2587 = vpack.c.b16 %v2577, %v2576
        %v2588 = vpack.c.b16 %v2579, %v2578
        %v2589 = vpack.c.b16 %v2581, %v2580
        %2598 = vmatprep.subr.bf16.mxu0 0
        %2599 = vmatpush1.bf16.msra.mxu0 %v2582
        %2600 = vmatprep.subr.bf16.mxu0 0
        %2601 = vmatpush1.bf16.msra.mxu0 %v2583
        %2602 = vmatprep.subr.bf16.mxu0 0
        %2603 = vmatpush1.bf16.msra.mxu0 %v2584
        %2604 = vmatprep.subr.bf16.mxu0 0
        %2605 = vmatpush1.bf16.msra.mxu0 %v2585
        %2606 = vmatprep.subr.bf16.mxu0 0
        %2607 = vmatpush1.bf16.msra.mxu0 %v2586
        %2608 = vmatprep.subr.bf16.mxu0 0
        %2609 = vmatpush1.bf16.msra.mxu0 %v2587
        %2610 = vmatprep.subr.bf16.mxu0 0
        %2611 = vmatpush1.bf16.msra.mxu0 %v2588
        %2612 = vmatprep.subr.bf16.mxu0 0
        %2613 = vmatpush1.bf16.msra.mxu0 %v2589
        %2614 = vmatprep.subr.bf16.mxu0 0
        %2615 = vmatpush1.bf16.msra.mxu0 0
        %2616 = vmatprep.subr.bf16.mxu0 0
        %2617 = vmatpush1.bf16.msra.mxu0 0
        %2618 = vmatprep.subr.bf16.mxu0 0
        %2619 = vmatpush1.bf16.msra.mxu0 0
        %2620 = vmatprep.subr.bf16.mxu0 0
        %2621 = vmatpush1.bf16.msra.mxu0 0
        %2622 = vmatprep.subr.bf16.mxu0 0
        %2623 = vmatpush1.bf16.msra.mxu0 0
        %2624 = vmatprep.subr.bf16.mxu0 0
        %2625 = vmatpush1.bf16.msra.mxu0 0
        %2626 = vmatprep.subr.bf16.mxu0 0
        %2627 = vmatpush1.bf16.msra.mxu0 0
        %2628 = vmatprep.subr.bf16.mxu0 0
        %2629 = vmatpush1.bf16.msra.mxu0 0
        %2630 = vmatprep.mubr.bf16.mxu0 0
        %2631 = vmatmul.mubr.bf16.gmra.mrb[0].mxu0 %v2501
        %v2632 = vpop.f32.mrb[0].mxu0
        %v2633 = vadd.f32 0.0, %v2632
        %v2634 = vpop.f32.mrb[0].mxu0
        %v2635 = vpop.f32.mrb[0].mxu0
        %v2636 = vadd.f32 0.0, %v2635
        %v2637 = vpop.f32.mrb[0].mxu0
        %2638 = vmatprep.mubr.bf16.mxu0 0
        %2639 = vmatmul.mubr.bf16.gmra.mrb[0].mxu0 %v2502
        %v2640 = vpop.f32.mrb[0].mxu0
        %v2641 = vadd.f32 0.0, %v2640
        %v2642 = vpop.f32.mrb[0].mxu0
        %v2643 = vpop.f32.mrb[0].mxu0
        %v2644 = vadd.f32 0.0, %v2643
        %v2645 = vpop.f32.mrb[0].mxu0
        %2646 = vmatprep.mubr.bf16.mxu0 0
        %2647 = vmatmul.mubr.bf16.gmra.mrb[0].mxu0 %v2503
        %v2648 = vpop.f32.mrb[0].mxu0
        %v2649 = vadd.f32 0.0, %v2648
        %v2650 = vpop.f32.mrb[0].mxu0
        %v2651 = vpop.f32.mrb[0].mxu0
        %v2652 = vadd.f32 0.0, %v2651
        %v2653 = vpop.f32.mrb[0].mxu0
        %2654 = vmatprep.mubr.bf16.mxu0 0
        %2655 = vmatmul.mubr.bf16.gmra.mrb[0].mxu0 %v2504
        %v2656 = vpop.f32.mrb[0].mxu0
        %v2657 = vadd.f32 0.0, %v2656
        %v2658 = vpop.f32.mrb[0].mxu0
        %v2659 = vpop.f32.mrb[0].mxu0
        %v2660 = vadd.f32 0.0, %v2659
        %v2661 = vpop.f32.mrb[0].mxu0
        %2662 = vmatprep.mubr.bf16.mxu0 0
        %2663 = vmatmul.mubr.bf16.gmra.mrb[0].mxu0 %v2505
        %v2664 = vpop.f32.mrb[0].mxu0
        %v2665 = vadd.f32 0.0, %v2664
        %v2666 = vpop.f32.mrb[0].mxu0
        %v2667 = vpop.f32.mrb[0].mxu0
        %v2668 = vadd.f32 0.0, %v2667
        %v2669 = vpop.f32.mrb[0].mxu0
        %2670 = vmatprep.mubr.bf16.mxu0 0
        %2671 = vmatmul.mubr.bf16.gmra.mrb[0].mxu0 %v2506
        %v2672 = vpop.f32.mrb[0].mxu0
        %v2673 = vadd.f32 0.0, %v2672
        %v2674 = vpop.f32.mrb[0].mxu0
        %v2675 = vpop.f32.mrb[0].mxu0
        %v2676 = vadd.f32 0.0, %v2675
        %v2677 = vpop.f32.mrb[0].mxu0
        %2678 = vmatprep.mubr.bf16.mxu0 0
        %2679 = vmatmul.mubr.bf16.gmra.mrb[0].mxu0 %v2507
        %v2680 = vpop.f32.mrb[0].mxu0
        %v2681 = vadd.f32 0.0, %v2680
        %v2682 = vpop.f32.mrb[0].mxu0
        %v2683 = vpop.f32.mrb[0].mxu0
        %v2684 = vadd.f32 0.0, %v2683
        %v2685 = vpop.f32.mrb[0].mxu0
        %2686 = vmatprep.mubr.bf16.mxu0 0
        %2687 = vmatmul.mubr.bf16.gmra.mrb[0].mxu0 %v2508
        %v2688 = vpop.f32.mrb[0].mxu0
        %v2689 = vadd.f32 0.0, %v2688
        %v2690 = vpop.f32.mrb[0].mxu0
        %v2691 = vpop.f32.mrb[0].mxu0
        %v2692 = vadd.f32 0.0, %v2691
        %v2693 = vpop.f32.mrb[0].mxu0
        %2694 = vmatprep.mubr.bf16.mxu0 0
        %2695 = vmatmul.mubr.bf16.gmra.mrb[0].mxu0 %v2509
        %v2696 = vpop.f32.mrb[0].mxu0
        %v2697 = vadd.f32 0.0, %v2696
        %v2698 = vpop.f32.mrb[0].mxu0
        %v2699 = vpop.f32.mrb[0].mxu0
        %v2700 = vadd.f32 0.0, %v2699
        %v2701 = vpop.f32.mrb[0].mxu0
        %2702 = vmatprep.mubr.bf16.mxu0 0
        %2703 = vmatmul.mubr.bf16.gmra.mrb[0].mxu0 %v2510
        %v2704 = vpop.f32.mrb[0].mxu0
        %v2705 = vadd.f32 0.0, %v2704
        %v2706 = vpop.f32.mrb[0].mxu0
        %v2707 = vpop.f32.mrb[0].mxu0
        %v2708 = vadd.f32 0.0, %v2707
        %v2709 = vpop.f32.mrb[0].mxu0
        %2710 = vmatprep.mubr.bf16.mxu0 0
        %2711 = vmatmul.mubr.bf16.gmra.mrb[0].mxu0 %v2511
        %v2712 = vpop.f32.mrb[0].mxu0
        %v2713 = vadd.f32 0.0, %v2712
        %v2714 = vpop.f32.mrb[0].mxu0
        %v2715 = vpop.f32.mrb[0].mxu0
        %v2716 = vadd.f32 0.0, %v2715
        %v2717 = vpop.f32.mrb[0].mxu0
        %2718 = vmatprep.mubr.bf16.mxu0 0
        %2719 = vmatmul.mubr.bf16.gmra.mrb[0].mxu0 %v2512
        %v2720 = vpop.f32.mrb[0].mxu0
        %v2721 = vadd.f32 0.0, %v2720
        %v2722 = vpop.f32.mrb[0].mxu0
        %v2723 = vpop.f32.mrb[0].mxu0
        %v2724 = vadd.f32 0.0, %v2723
        %v2725 = vpop.f32.mrb[0].mxu0
        %2726 = vmatprep.mubr.bf16.mxu0 0
        %2727 = vmatmul.mubr.bf16.gmra.mrb[0].mxu0 %v2513
        %v2728 = vpop.f32.mrb[0].mxu0
        %v2729 = vadd.f32 0.0, %v2728
        %v2730 = vpop.f32.mrb[0].mxu0
        %v2731 = vpop.f32.mrb[0].mxu0
        %v2732 = vadd.f32 0.0, %v2731
        %v2733 = vpop.f32.mrb[0].mxu0
        %2734 = vmatprep.mubr.bf16.mxu0 0
        %2735 = vmatmul.mubr.bf16.gmra.mrb[0].mxu0 %v2514
        %v2736 = vpop.f32.mrb[0].mxu0
        %v2737 = vadd.f32 0.0, %v2736
        %v2738 = vpop.f32.mrb[0].mxu0
        %v2739 = vpop.f32.mrb[0].mxu0
        %v2740 = vadd.f32 0.0, %v2739
        %v2741 = vpop.f32.mrb[0].mxu0
        %2742 = vmatprep.mubr.bf16.mxu0 0
        %2743 = vmatmul.mubr.bf16.gmra.mrb[0].mxu0 %v2515
        %v2744 = vpop.f32.mrb[0].mxu0
        %v2745 = vadd.f32 0.0, %v2744
        %v2746 = vpop.f32.mrb[0].mxu0
        %v2747 = vpop.f32.mrb[0].mxu0
        %v2748 = vadd.f32 0.0, %v2747
        %v2749 = vpop.f32.mrb[0].mxu0
        %2750 = vmatprep.mubr.bf16.mxu0 0
        %2751 = vmatmul.mubr.bf16.gmra.mrb[0].mxu0 %v2516
        %v2752 = vpop.f32.mrb[0].mxu0
        %v2753 = vadd.f32 0.0, %v2752
        %v2754 = vpop.f32.mrb[0].mxu0
        %v2755 = vpop.f32.mrb[0].mxu0
        %v2756 = vadd.f32 0.0, %v2755
        %v2757 = vpop.f32.mrb[0].mxu0
        %2758 = vmatprep.mubr.bf16.mxu0 0
        %2759 = vmatmul.mubr.bf16.gmra.mrb[0].mxu0 %v2517
        %v2760 = vpop.f32.mrb[0].mxu0
        %v2761 = vadd.f32 0.0, %v2760
        %v2762 = vpop.f32.mrb[0].mxu0
        %v2763 = vpop.f32.mrb[0].mxu0
        %v2764 = vadd.f32 0.0, %v2763
        %v2765 = vpop.f32.mrb[0].mxu0
        %2766 = vmatprep.mubr.bf16.mxu0 0
        %2767 = vmatmul.mubr.bf16.gmra.mrb[0].mxu0 %v2518
        %v2768 = vpop.f32.mrb[0].mxu0
        %v2769 = vadd.f32 0.0, %v2768
        %v2770 = vpop.f32.mrb[0].mxu0
        %v2771 = vpop.f32.mrb[0].mxu0
        %v2772 = vadd.f32 0.0, %v2771
        %v2773 = vpop.f32.mrb[0].mxu0
        %2774 = vmatprep.mubr.bf16.mxu0 0
        %2775 = vmatmul.mubr.bf16.gmra.mrb[0].mxu0 %v2519
        %v2776 = vpop.f32.mrb[0].mxu0
        %v2777 = vadd.f32 0.0, %v2776
        %v2778 = vpop.f32.mrb[0].mxu0
        %v2779 = vpop.f32.mrb[0].mxu0
        %v2780 = vadd.f32 0.0, %v2779
        %v2781 = vpop.f32.mrb[0].mxu0
        %2782 = vmatprep.mubr.bf16.mxu0 0
        %2783 = vmatmul.mubr.bf16.gmra.mrb[0].mxu0 %v2520
        %v2784 = vpop.f32.mrb[0].mxu0
        %v2785 = vadd.f32 0.0, %v2784
        %v2786 = vpop.f32.mrb[0].mxu0
        %v2787 = vpop.f32.mrb[0].mxu0
        %v2788 = vadd.f32 0.0, %v2787
        %v2789 = vpop.f32.mrb[0].mxu0
        %2790 = vmatprep.mubr.bf16.mxu0 0
        %2791 = vmatmul.mubr.bf16.gmra.mrb[0].mxu0 %v2521
        %v2792 = vpop.f32.mrb[0].mxu0
        %v2793 = vadd.f32 0.0, %v2792
        %v2794 = vpop.f32.mrb[0].mxu0
        %v2795 = vpop.f32.mrb[0].mxu0
        %v2796 = vadd.f32 0.0, %v2795
        %v2797 = vpop.f32.mrb[0].mxu0
        %2798 = vmatprep.mubr.bf16.mxu0 0
        %2799 = vmatmul.mubr.bf16.gmra.mrb[0].mxu0 %v2522
        %v2800 = vpop.f32.mrb[0].mxu0
        %v2801 = vadd.f32 0.0, %v2800
        %v2802 = vpop.f32.mrb[0].mxu0
        %v2803 = vpop.f32.mrb[0].mxu0
        %v2804 = vadd.f32 0.0, %v2803
        %v2805 = vpop.f32.mrb[0].mxu0
        %2806 = vmatprep.mubr.bf16.mxu0 0
        %2807 = vmatmul.mubr.bf16.gmra.mrb[0].mxu0 %v2523
        %v2808 = vpop.f32.mrb[0].mxu0
        %v2809 = vadd.f32 0.0, %v2808
        %v2810 = vpop.f32.mrb[0].mxu0
        %v2811 = vpop.f32.mrb[0].mxu0
        %v2812 = vadd.f32 0.0, %v2811
        %v2813 = vpop.f32.mrb[0].mxu0
        %2814 = vmatprep.mubr.bf16.mxu0 0
        %2815 = vmatmul.mubr.bf16.gmra.mrb[0].mxu0 %v2524
        %v2816 = vpop.f32.mrb[0].mxu0
        %v2817 = vadd.f32 0.0, %v2816
        %v2818 = vpop.f32.mrb[0].mxu0
        %v2819 = vpop.f32.mrb[0].mxu0
        %v2820 = vadd.f32 0.0, %v2819
        %v2821 = vpop.f32.mrb[0].mxu0
        %2822 = vmatprep.mubr.bf16.mxu0 0
        %2823 = vmatmul.mubr.bf16.gmra.mrb[0].mxu0 %v2525
        %v2824 = vpop.f32.mrb[0].mxu0
        %v2825 = vadd.f32 0.0, %v2824
        %v2826 = vpop.f32.mrb[0].mxu0
        %v2827 = vpop.f32.mrb[0].mxu0
        %v2828 = vadd.f32 0.0, %v2827
        %v2829 = vpop.f32.mrb[0].mxu0
        %2830 = vmatprep.mubr.bf16.mxu0 0
        %2831 = vmatmul.mubr.bf16.gmra.mrb[0].mxu0 %v2526
        %v2832 = vpop.f32.mrb[0].mxu0
        %v2833 = vadd.f32 0.0, %v2832
        %v2834 = vpop.f32.mrb[0].mxu0
        %v2835 = vpop.f32.mrb[0].mxu0
        %v2836 = vadd.f32 0.0, %v2835
        %v2837 = vpop.f32.mrb[0].mxu0
        %2838 = vmatprep.mubr.bf16.mxu0 0
        %2839 = vmatmul.mubr.bf16.gmra.mrb[0].mxu0 %v2527
        %v2840 = vpop.f32.mrb[0].mxu0
        %v2841 = vadd.f32 0.0, %v2840
        %v2842 = vpop.f32.mrb[0].mxu0
        %v2843 = vpop.f32.mrb[0].mxu0
        %v2844 = vadd.f32 0.0, %v2843
        %v2845 = vpop.f32.mrb[0].mxu0
        %2846 = vmatprep.mubr.bf16.mxu0 0
        %2847 = vmatmul.mubr.bf16.gmra.mrb[0].mxu0 %v2528
        %v2848 = vpop.f32.mrb[0].mxu0
        %v2849 = vadd.f32 0.0, %v2848
        %v2850 = vpop.f32.mrb[0].mxu0
        %v2851 = vpop.f32.mrb[0].mxu0
        %v2852 = vadd.f32 0.0, %v2851
        %v2853 = vpop.f32.mrb[0].mxu0
        %2854 = vmatprep.mubr.bf16.mxu0 0
        %2855 = vmatmul.mubr.bf16.gmra.mrb[0].mxu0 %v2529
        %v2856 = vpop.f32.mrb[0].mxu0
        %v2857 = vadd.f32 0.0, %v2856
        %v2858 = vpop.f32.mrb[0].mxu0
        %v2859 = vpop.f32.mrb[0].mxu0
        %v2860 = vadd.f32 0.0, %v2859
        %v2861 = vpop.f32.mrb[0].mxu0
        %2862 = vmatprep.mubr.bf16.mxu0 0
        %2863 = vmatmul.mubr.bf16.gmra.mrb[0].mxu0 %v2530
        %v2864 = vpop.f32.mrb[0].mxu0
        %v2865 = vadd.f32 0.0, %v2864
        %v2866 = vpop.f32.mrb[0].mxu0
        %v2867 = vpop.f32.mrb[0].mxu0
        %v2868 = vadd.f32 0.0, %v2867
        %v2869 = vpop.f32.mrb[0].mxu0
        %2870 = vmatprep.mubr.bf16.mxu0 0
        %2871 = vmatmul.mubr.bf16.gmra.mrb[0].mxu0 %v2531
        %v2872 = vpop.f32.mrb[0].mxu0
        %v2873 = vadd.f32 0.0, %v2872
        %v2874 = vpop.f32.mrb[0].mxu0
        %v2875 = vpop.f32.mrb[0].mxu0
        %v2876 = vadd.f32 0.0, %v2875
        %v2877 = vpop.f32.mrb[0].mxu0
        %2878 = vmatprep.mubr.bf16.mxu0 0
        %2879 = vmatmul.mubr.bf16.gmra.mrb[0].mxu0 %v2532
        %v2880 = vpop.f32.mrb[0].mxu0
        %v2881 = vadd.f32 0.0, %v2880
        %v2882 = vpop.f32.mrb[0].mxu0
        %v2883 = vpop.f32.mrb[0].mxu0
        %v2884 = vadd.f32 0.0, %v2883
        %v2885 = vpop.f32.mrb[0].mxu0
        %2886 = vdwg.mxu0
        %v2903 = vunpack.c.l.b16 %v2485
        %v2904 = vunpack.c.l.b16 %v2486
        %v2905 = vunpack.c.l.b16 %v2487
        %v2906 = vunpack.c.l.b16 %v2488
        %v2907 = vunpack.c.l.b16 %v2489
        %v2908 = vunpack.c.l.b16 %v2490
        %v2909 = vunpack.c.l.b16 %v2491
        %v2910 = vunpack.c.l.b16 %v2492
        %v2911 = vunpack.c.l.b16 %v2493
        %v2912 = vunpack.c.l.b16 %v2494
        %v2913 = vunpack.c.l.b16 %v2495
        %v2914 = vunpack.c.l.b16 %v2496
        %v2915 = vunpack.c.l.b16 %v2497
        %v2916 = vunpack.c.l.b16 %v2498
        %v2917 = vunpack.c.l.b16 %v2499
        %v2918 = vunpack.c.l.b16 %v2500
        %v2919 = vpack.c.b16 %v2904, %v2903
        %v2920 = vpack.c.b16 %v2906, %v2905
        %v2921 = vpack.c.b16 %v2908, %v2907
        %v2922 = vpack.c.b16 %v2910, %v2909
        %v2923 = vpack.c.b16 %v2912, %v2911
        %v2924 = vpack.c.b16 %v2914, %v2913
        %v2925 = vpack.c.b16 %v2916, %v2915
        %v2926 = vpack.c.b16 %v2918, %v2917
        %2935 = vmatprep.subr.bf16.mxu0 0
        %2936 = vmatpush1.bf16.msra.mxu0 %v2919
        %2937 = vmatprep.subr.bf16.mxu0 0
        %2938 = vmatpush1.bf16.msra.mxu0 %v2920
        %2939 = vmatprep.subr.bf16.mxu0 0
        %2940 = vmatpush1.bf16.msra.mxu0 %v2921
        %2941 = vmatprep.subr.bf16.mxu0 0
        %2942 = vmatpush1.bf16.msra.mxu0 %v2922
        %2943 = vmatprep.subr.bf16.mxu0 0
        %2944 = vmatpush1.bf16.msra.mxu0 %v2923
        %2945 = vmatprep.subr.bf16.mxu0 0
        %2946 = vmatpush1.bf16.msra.mxu0 %v2924
        %2947 = vmatprep.subr.bf16.mxu0 0
        %2948 = vmatpush1.bf16.msra.mxu0 %v2925
        %2949 = vmatprep.subr.bf16.mxu0 0
        %2950 = vmatpush1.bf16.msra.mxu0 %v2926
        %2951 = vmatprep.subr.bf16.mxu0 0
        %2952 = vmatpush1.bf16.msra.mxu0 0
        %2953 = vmatprep.subr.bf16.mxu0 0
        %2954 = vmatpush1.bf16.msra.mxu0 0
        %2955 = vmatprep.subr.bf16.mxu0 0
        %2956 = vmatpush1.bf16.msra.mxu0 0
        %2957 = vmatprep.subr.bf16.mxu0 0
        %2958 = vmatpush1.bf16.msra.mxu0 0
        %2959 = vmatprep.subr.bf16.mxu0 0
        %2960 = vmatpush1.bf16.msra.mxu0 0
        %2961 = vmatprep.subr.bf16.mxu0 0
        %2962 = vmatpush1.bf16.msra.mxu0 0
        %2963 = vmatprep.subr.bf16.mxu0 0
        %2964 = vmatpush1.bf16.msra.mxu0 0
        %2965 = vmatprep.subr.bf16.mxu0 0
        %2966 = vmatpush1.bf16.msra.mxu0 0
        %2967 = vmatprep.mubr.bf16.mxu0 0
        %2968 = vmatmul.mubr.bf16.gmra.mrb[0].mxu0 %v2453
        %v2969 = vpop.f32.mrb[0].mxu0
        %v2970 = vadd.f32 %v2633, %v2969
        %v2971 = vpop.f32.mrb[0].mxu0
        %v2972 = vpop.f32.mrb[0].mxu0
        %v2973 = vadd.f32 %v2636, %v2972
        %v2974 = vpop.f32.mrb[0].mxu0
        %2975 = vmatprep.mubr.bf16.mxu0 0
        %2976 = vmatmul.mubr.bf16.gmra.mrb[0].mxu0 %v2454
        %v2977 = vpop.f32.mrb[0].mxu0
        %v2978 = vadd.f32 %v2641, %v2977
        %v2979 = vpop.f32.mrb[0].mxu0
        %v2980 = vpop.f32.mrb[0].mxu0
        %v2981 = vadd.f32 %v2644, %v2980
        %v2982 = vpop.f32.mrb[0].mxu0
        %2983 = vmatprep.mubr.bf16.mxu0 0
        %2984 = vmatmul.mubr.bf16.gmra.mrb[0].mxu0 %v2455
        %v2985 = vpop.f32.mrb[0].mxu0
        %v2986 = vadd.f32 %v2649, %v2985
        %v2987 = vpop.f32.mrb[0].mxu0
        %v2988 = vpop.f32.mrb[0].mxu0
        %v2989 = vadd.f32 %v2652, %v2988
        %v2990 = vpop.f32.mrb[0].mxu0
        %2991 = vmatprep.mubr.bf16.mxu0 0
        %2992 = vmatmul.mubr.bf16.gmra.mrb[0].mxu0 %v2456
        %v2993 = vpop.f32.mrb[0].mxu0
        %v2994 = vadd.f32 %v2657, %v2993
        %v2995 = vpop.f32.mrb[0].mxu0
        %v2996 = vpop.f32.mrb[0].mxu0
        %v2997 = vadd.f32 %v2660, %v2996
        %v2998 = vpop.f32.mrb[0].mxu0
        %2999 = vmatprep.mubr.bf16.mxu0 0
        %3000 = vmatmul.mubr.bf16.gmra.mrb[0].mxu0 %v2457
        %v3001 = vpop.f32.mrb[0].mxu0
        %v3002 = vadd.f32 %v2665, %v3001
        %v3003 = vpop.f32.mrb[0].mxu0
        %v3004 = vpop.f32.mrb[0].mxu0
        %v3005 = vadd.f32 %v2668, %v3004
        %v3006 = vpop.f32.mrb[0].mxu0
        %3007 = vmatprep.mubr.bf16.mxu0 0
        %3008 = vmatmul.mubr.bf16.gmra.mrb[0].mxu0 %v2458
        %v3009 = vpop.f32.mrb[0].mxu0
        %v3010 = vadd.f32 %v2673, %v3009
        %v3011 = vpop.f32.mrb[0].mxu0
        %v3012 = vpop.f32.mrb[0].mxu0
        %v3013 = vadd.f32 %v2676, %v3012
        %v3014 = vpop.f32.mrb[0].mxu0
        %3015 = vmatprep.mubr.bf16.mxu0 0
        %3016 = vmatmul.mubr.bf16.gmra.mrb[0].mxu0 %v2459
        %v3017 = vpop.f32.mrb[0].mxu0
        %v3018 = vadd.f32 %v2681, %v3017
        %v3019 = vpop.f32.mrb[0].mxu0
        %v3020 = vpop.f32.mrb[0].mxu0
        %v3021 = vadd.f32 %v2684, %v3020
        %v3022 = vpop.f32.mrb[0].mxu0
        %3023 = vmatprep.mubr.bf16.mxu0 0
        %3024 = vmatmul.mubr.bf16.gmra.mrb[0].mxu0 %v2460
        %v3025 = vpop.f32.mrb[0].mxu0
        %v3026 = vadd.f32 %v2689, %v3025
        %v3027 = vpop.f32.mrb[0].mxu0
        %v3028 = vpop.f32.mrb[0].mxu0
        %v3029 = vadd.f32 %v2692, %v3028
        %v3030 = vpop.f32.mrb[0].mxu0
        %3031 = vmatprep.mubr.bf16.mxu0 0
        %3032 = vmatmul.mubr.bf16.gmra.mrb[0].mxu0 %v2461
        %v3033 = vpop.f32.mrb[0].mxu0
        %v3034 = vadd.f32 %v2697, %v3033
        %v3035 = vpop.f32.mrb[0].mxu0
        %v3036 = vpop.f32.mrb[0].mxu0
        %v3037 = vadd.f32 %v2700, %v3036
        %v3038 = vpop.f32.mrb[0].mxu0
        %3039 = vmatprep.mubr.bf16.mxu0 0
        %3040 = vmatmul.mubr.bf16.gmra.mrb[0].mxu0 %v2462
        %v3041 = vpop.f32.mrb[0].mxu0
        %v3042 = vadd.f32 %v2705, %v3041
        %v3043 = vpop.f32.mrb[0].mxu0
        %v3044 = vpop.f32.mrb[0].mxu0
        %v3045 = vadd.f32 %v2708, %v3044
        %v3046 = vpop.f32.mrb[0].mxu0
        %3047 = vmatprep.mubr.bf16.mxu0 0
        %3048 = vmatmul.mubr.bf16.gmra.mrb[0].mxu0 %v2463
        %v3049 = vpop.f32.mrb[0].mxu0
        %v3050 = vadd.f32 %v2713, %v3049
        %v3051 = vpop.f32.mrb[0].mxu0
        %v3052 = vpop.f32.mrb[0].mxu0
        %v3053 = vadd.f32 %v2716, %v3052
        %v3054 = vpop.f32.mrb[0].mxu0
        %3055 = vmatprep.mubr.bf16.mxu0 0
        %3056 = vmatmul.mubr.bf16.gmra.mrb[0].mxu0 %v2464
        %v3057 = vpop.f32.mrb[0].mxu0
        %v3058 = vadd.f32 %v2721, %v3057
        %v3059 = vpop.f32.mrb[0].mxu0
        %v3060 = vpop.f32.mrb[0].mxu0
        %v3061 = vadd.f32 %v2724, %v3060
        %v3062 = vpop.f32.mrb[0].mxu0
        %3063 = vmatprep.mubr.bf16.mxu0 0
        %3064 = vmatmul.mubr.bf16.gmra.mrb[0].mxu0 %v2465
        %v3065 = vpop.f32.mrb[0].mxu0
        %v3066 = vadd.f32 %v2729, %v3065
        %v3067 = vpop.f32.mrb[0].mxu0
        %v3068 = vpop.f32.mrb[0].mxu0
        %v3069 = vadd.f32 %v2732, %v3068
        %v3070 = vpop.f32.mrb[0].mxu0
        %3071 = vmatprep.mubr.bf16.mxu0 0
        %3072 = vmatmul.mubr.bf16.gmra.mrb[0].mxu0 %v2466
        %v3073 = vpop.f32.mrb[0].mxu0
        %v3074 = vadd.f32 %v2737, %v3073
        %v3075 = vpop.f32.mrb[0].mxu0
        %v3076 = vpop.f32.mrb[0].mxu0
        %v3077 = vadd.f32 %v2740, %v3076
        %v3078 = vpop.f32.mrb[0].mxu0
        %3079 = vmatprep.mubr.bf16.mxu0 0
        %3080 = vmatmul.mubr.bf16.gmra.mrb[0].mxu0 %v2467
        %v3081 = vpop.f32.mrb[0].mxu0
        %v3082 = vadd.f32 %v2745, %v3081
        %v3083 = vpop.f32.mrb[0].mxu0
        %v3084 = vpop.f32.mrb[0].mxu0
        %v3085 = vadd.f32 %v2748, %v3084
        %v3086 = vpop.f32.mrb[0].mxu0
        %3087 = vmatprep.mubr.bf16.mxu0 0
        %3088 = vmatmul.mubr.bf16.gmra.mrb[0].mxu0 %v2468
        %v3089 = vpop.f32.mrb[0].mxu0
        %v3090 = vadd.f32 %v2753, %v3089
        %v3091 = vpop.f32.mrb[0].mxu0
        %v3092 = vpop.f32.mrb[0].mxu0
        %v3093 = vadd.f32 %v2756, %v3092
        %v3094 = vpop.f32.mrb[0].mxu0
        %3095 = vmatprep.mubr.bf16.mxu0 0
        %3096 = vmatmul.mubr.bf16.gmra.mrb[0].mxu0 %v2469
        %v3097 = vpop.f32.mrb[0].mxu0
        %v3098 = vadd.f32 %v2761, %v3097
        %v3099 = vpop.f32.mrb[0].mxu0
        %v3100 = vpop.f32.mrb[0].mxu0
        %v3101 = vadd.f32 %v2764, %v3100
        %v3102 = vpop.f32.mrb[0].mxu0
        %3103 = vmatprep.mubr.bf16.mxu0 0
        %3104 = vmatmul.mubr.bf16.gmra.mrb[0].mxu0 %v2470
        %v3105 = vpop.f32.mrb[0].mxu0
        %v3106 = vadd.f32 %v2769, %v3105
        %v3107 = vpop.f32.mrb[0].mxu0
        %v3108 = vpop.f32.mrb[0].mxu0
        %v3109 = vadd.f32 %v2772, %v3108
        %v3110 = vpop.f32.mrb[0].mxu0
        %3111 = vmatprep.mubr.bf16.mxu0 0
        %3112 = vmatmul.mubr.bf16.gmra.mrb[0].mxu0 %v2471
        %v3113 = vpop.f32.mrb[0].mxu0
        %v3114 = vadd.f32 %v2777, %v3113
        %v3115 = vpop.f32.mrb[0].mxu0
        %v3116 = vpop.f32.mrb[0].mxu0
        %v3117 = vadd.f32 %v2780, %v3116
        %v3118 = vpop.f32.mrb[0].mxu0
        %3119 = vmatprep.mubr.bf16.mxu0 0
        %3120 = vmatmul.mubr.bf16.gmra.mrb[0].mxu0 %v2472
        %v3121 = vpop.f32.mrb[0].mxu0
        %v3122 = vadd.f32 %v2785, %v3121
        %v3123 = vpop.f32.mrb[0].mxu0
        %v3124 = vpop.f32.mrb[0].mxu0
        %v3125 = vadd.f32 %v2788, %v3124
        %v3126 = vpop.f32.mrb[0].mxu0
        %3127 = vmatprep.mubr.bf16.mxu0 0
        %3128 = vmatmul.mubr.bf16.gmra.mrb[0].mxu0 %v2473
        %v3129 = vpop.f32.mrb[0].mxu0
        %v3130 = vadd.f32 %v2793, %v3129
        %v3131 = vpop.f32.mrb[0].mxu0
        %v3132 = vpop.f32.mrb[0].mxu0
        %v3133 = vadd.f32 %v2796, %v3132
        %v3134 = vpop.f32.mrb[0].mxu0
        %3135 = vmatprep.mubr.bf16.mxu0 0
        %3136 = vmatmul.mubr.bf16.gmra.mrb[0].mxu0 %v2474
        %v3137 = vpop.f32.mrb[0].mxu0
        %v3138 = vadd.f32 %v2801, %v3137
        %v3139 = vpop.f32.mrb[0].mxu0
        %v3140 = vpop.f32.mrb[0].mxu0
        %v3141 = vadd.f32 %v2804, %v3140
        %v3142 = vpop.f32.mrb[0].mxu0
        %3143 = vmatprep.mubr.bf16.mxu0 0
        %3144 = vmatmul.mubr.bf16.gmra.mrb[0].mxu0 %v2475
        %v3145 = vpop.f32.mrb[0].mxu0
        %v3146 = vadd.f32 %v2809, %v3145
        %v3147 = vpop.f32.mrb[0].mxu0
        %v3148 = vpop.f32.mrb[0].mxu0
        %v3149 = vadd.f32 %v2812, %v3148
        %v3150 = vpop.f32.mrb[0].mxu0
        %3151 = vmatprep.mubr.bf16.mxu0 0
        %3152 = vmatmul.mubr.bf16.gmra.mrb[0].mxu0 %v2476
        %v3153 = vpop.f32.mrb[0].mxu0
        %v3154 = vadd.f32 %v2817, %v3153
        %v3155 = vpop.f32.mrb[0].mxu0
        %v3156 = vpop.f32.mrb[0].mxu0
        %v3157 = vadd.f32 %v2820, %v3156
        %v3158 = vpop.f32.mrb[0].mxu0
        %3159 = vmatprep.mubr.bf16.mxu0 0
        %3160 = vmatmul.mubr.bf16.gmra.mrb[0].mxu0 %v2477
        %v3161 = vpop.f32.mrb[0].mxu0
        %v3162 = vadd.f32 %v2825, %v3161
        %v3163 = vpop.f32.mrb[0].mxu0
        %v3164 = vpop.f32.mrb[0].mxu0
        %v3165 = vadd.f32 %v2828, %v3164
        %v3166 = vpop.f32.mrb[0].mxu0
        %3167 = vmatprep.mubr.bf16.mxu0 0
        %3168 = vmatmul.mubr.bf16.gmra.mrb[0].mxu0 %v2478
        %v3169 = vpop.f32.mrb[0].mxu0
        %v3170 = vadd.f32 %v2833, %v3169
        %v3171 = vpop.f32.mrb[0].mxu0
        %v3172 = vpop.f32.mrb[0].mxu0
        %v3173 = vadd.f32 %v2836, %v3172
        %v3174 = vpop.f32.mrb[0].mxu0
        %3175 = vmatprep.mubr.bf16.mxu0 0
        %3176 = vmatmul.mubr.bf16.gmra.mrb[0].mxu0 %v2479
        %v3177 = vpop.f32.mrb[0].mxu0
        %v3178 = vadd.f32 %v2841, %v3177
        %v3179 = vpop.f32.mrb[0].mxu0
        %v3180 = vpop.f32.mrb[0].mxu0
        %v3181 = vadd.f32 %v2844, %v3180
        %v3182 = vpop.f32.mrb[0].mxu0
        %3183 = vmatprep.mubr.bf16.mxu0 0
        %3184 = vmatmul.mubr.bf16.gmra.mrb[0].mxu0 %v2480
        %v3185 = vpop.f32.mrb[0].mxu0
        %v3186 = vadd.f32 %v2849, %v3185
        %v3187 = vpop.f32.mrb[0].mxu0
        %v3188 = vpop.f32.mrb[0].mxu0
        %v3189 = vadd.f32 %v2852, %v3188
        %v3190 = vpop.f32.mrb[0].mxu0
        %3191 = vmatprep.mubr.bf16.mxu0 0
        %3192 = vmatmul.mubr.bf16.gmra.mrb[0].mxu0 %v2481
        %v3193 = vpop.f32.mrb[0].mxu0
        %v3194 = vadd.f32 %v2857, %v3193
        %v3195 = vpop.f32.mrb[0].mxu0
        %v3196 = vpop.f32.mrb[0].mxu0
        %v3197 = vadd.f32 %v2860, %v3196
        %v3198 = vpop.f32.mrb[0].mxu0
        %3199 = vmatprep.mubr.bf16.mxu0 0
        %3200 = vmatmul.mubr.bf16.gmra.mrb[0].mxu0 %v2482
        %v3201 = vpop.f32.mrb[0].mxu0
        %v3202 = vadd.f32 %v2865, %v3201
        %v3203 = vpop.f32.mrb[0].mxu0
        %v3204 = vpop.f32.mrb[0].mxu0
        %v3205 = vadd.f32 %v2868, %v3204
        %v3206 = vpop.f32.mrb[0].mxu0
        %3207 = vmatprep.mubr.bf16.mxu0 0
        %3208 = vmatmul.mubr.bf16.gmra.mrb[0].mxu0 %v2483
        %v3209 = vpop.f32.mrb[0].mxu0
        %v3210 = vadd.f32 %v2873, %v3209
        %v3211 = vpop.f32.mrb[0].mxu0
        %v3212 = vpop.f32.mrb[0].mxu0
        %v3213 = vadd.f32 %v2876, %v3212
        %v3214 = vpop.f32.mrb[0].mxu0
        %3215 = vmatprep.mubr.bf16.mxu0 0
        %3216 = vmatmul.mubr.bf16.gmra.mrb[0].mxu0 %v2484
        %v3217 = vpop.f32.mrb[0].mxu0
        %v3218 = vadd.f32 %v2881, %v3217
        %v3219 = vpop.f32.mrb[0].mxu0
        %v3220 = vpop.f32.mrb[0].mxu0
        %v3221 = vadd.f32 %v2884, %v3220
        %v3222 = vpop.f32.mrb[0].mxu0
        %3223 = vdwg.mxu0
        %v3224 = vld [vmem:[%s2095 + $0x8] sm:$0xff]
        %v3225 = vld [vmem:[%s2095 + $0x10] sm:$0xff]
        %v3226 = vld [vmem:[%s2095 + $0x18] sm:$0xff]
        %v3227 = vld [vmem:[%s2095 + $0x20] sm:$0xff]
        %v3228 = vld [vmem:[%s2095 + $0x28] sm:$0xff]
        %v3229 = vld [vmem:[%s2095 + $0x30] sm:$0xff]
        %v3230 = vld [vmem:[%s2095 + $0x38] sm:$0xff]
        %v3231 = vld [vmem:[%s2095 + $0x40] sm:$0xff]
        %v3232 = vld [vmem:[%s2095 + $0x48] sm:$0xff]
        %v3233 = vld [vmem:[%s2095 + $0x50] sm:$0xff]
        %v3234 = vld [vmem:[%s2095 + $0x58] sm:$0xff]
        %v3235 = vld [vmem:[%s2095 + $0x60] sm:$0xff]
        %v3236 = vld [vmem:[%s2095 + $0x68] sm:$0xff]
        %v3237 = vld [vmem:[%s2095 + $0x70] sm:$0xff]
        %v3238 = vld [vmem:[%s2095 + $0x78] sm:$0xff]
        %v3239 = vld [vmem:[%s2095 + $0x80] sm:$0xff]
        %v3240 = vld [vmem:[%s2095 + $0x88] sm:$0xff]
        %v3241 = vld [vmem:[%s2095 + $0x90] sm:$0xff]
        %v3242 = vld [vmem:[%s2095 + $0x98] sm:$0xff]
        %v3243 = vld [vmem:[%s2095 + $0xa0] sm:$0xff]
        %v3244 = vld [vmem:[%s2095 + $0xa8] sm:$0xff]
        %v3245 = vld [vmem:[%s2095 + $0xb0] sm:$0xff]
        %v3246 = vld [vmem:[%s2095 + $0xb8] sm:$0xff]
        %v3247 = vld [vmem:[%s2095 + $0xc0] sm:$0xff]
        %v3248 = vld [vmem:[%s2095 + $0xc8] sm:$0xff]
        %v3249 = vld [vmem:[%s2095 + $0xd0] sm:$0xff]
        %v3250 = vld [vmem:[%s2095 + $0xd8] sm:$0xff]
        %v3251 = vld [vmem:[%s2095 + $0xe0] sm:$0xff]
        %v3252 = vld [vmem:[%s2095 + $0xe8] sm:$0xff]
        %v3253 = vld [vmem:[%s2095 + $0xf0] sm:$0xff]
        %v3254 = vld [vmem:[%s2095 + $0xf8] sm:$0xff]
        %v3255 = vld [vmem:[%s2095 + $0x100] sm:$0xff]
        %s3256 = scalar_lea.vmem [#allocation11], 128
        %v3257 = vld [vmem:[%s3256] sm:$0xf]
        %v3258 = vld [vmem:[%s3256 + $0x4] sm:$0xf]
        %v3259 = vld [vmem:[%s3256 + $0x8] sm:$0xf]
        %v3260 = vld [vmem:[%s3256 + $0xc] sm:$0xf]
        %v3261 = vld [vmem:[%s3256 + $0x10] sm:$0xf]
        %v3262 = vld [vmem:[%s3256 + $0x14] sm:$0xf]
        %v3263 = vld [vmem:[%s3256 + $0x18] sm:$0xf]
        %v3264 = vld [vmem:[%s3256 + $0x1c] sm:$0xf]
        %v3265 = vld [vmem:[%s3256 + $0x20] sm:$0xf]
        %v3266 = vld [vmem:[%s3256 + $0x24] sm:$0xf]
        %v3267 = vld [vmem:[%s3256 + $0x28] sm:$0xf]
        %v3268 = vld [vmem:[%s3256 + $0x2c] sm:$0xf]
        %v3269 = vld [vmem:[%s3256 + $0x30] sm:$0xf]
        %v3270 = vld [vmem:[%s3256 + $0x34] sm:$0xf]
        %v3271 = vld [vmem:[%s3256 + $0x38] sm:$0xf]
        %v3272 = vld [vmem:[%s3256 + $0x3c] sm:$0xf]
        %v3289 = vunpack.c.l.b16 %v3257
        %v3290 = vunpack.c.l.b16 %v3258
        %v3291 = vunpack.c.l.b16 %v3259
        %v3292 = vunpack.c.l.b16 %v3260
        %v3293 = vunpack.c.l.b16 %v3261
        %v3294 = vunpack.c.l.b16 %v3262
        %v3295 = vunpack.c.l.b16 %v3263
        %v3296 = vunpack.c.l.b16 %v3264
        %v3297 = vunpack.c.l.b16 %v3265
        %v3298 = vunpack.c.l.b16 %v3266
        %v3299 = vunpack.c.l.b16 %v3267
        %v3300 = vunpack.c.l.b16 %v3268
        %v3301 = vunpack.c.l.b16 %v3269
        %v3302 = vunpack.c.l.b16 %v3270
        %v3303 = vunpack.c.l.b16 %v3271
        %v3304 = vunpack.c.l.b16 %v3272
        %v3305 = vpack.c.b16 %v3290, %v3289
        %v3306 = vpack.c.b16 %v3292, %v3291
        %v3307 = vpack.c.b16 %v3294, %v3293
        %v3308 = vpack.c.b16 %v3296, %v3295
        %v3309 = vpack.c.b16 %v3298, %v3297
        %v3310 = vpack.c.b16 %v3300, %v3299
        %v3311 = vpack.c.b16 %v3302, %v3301
        %v3312 = vpack.c.b16 %v3304, %v3303
        %3321 = vmatprep.subr.bf16.mxu0 0
        %3322 = vmatpush1.bf16.msra.mxu0 %v3305
        %3323 = vmatprep.subr.bf16.mxu0 0
        %3324 = vmatpush1.bf16.msra.mxu0 %v3306
        %3325 = vmatprep.subr.bf16.mxu0 0
        %3326 = vmatpush1.bf16.msra.mxu0 %v3307
        %3327 = vmatprep.subr.bf16.mxu0 0
        %3328 = vmatpush1.bf16.msra.mxu0 %v3308
        %3329 = vmatprep.subr.bf16.mxu0 0
        %3330 = vmatpush1.bf16.msra.mxu0 %v3309
        %3331 = vmatprep.subr.bf16.mxu0 0
        %3332 = vmatpush1.bf16.msra.mxu0 %v3310
        %3333 = vmatprep.subr.bf16.mxu0 0
        %3334 = vmatpush1.bf16.msra.mxu0 %v3311
        %3335 = vmatprep.subr.bf16.mxu0 0
        %3336 = vmatpush1.bf16.msra.mxu0 %v3312
        %3337 = vmatprep.subr.bf16.mxu0 0
        %3338 = vmatpush1.bf16.msra.mxu0 0
        %3339 = vmatprep.subr.bf16.mxu0 0
        %3340 = vmatpush1.bf16.msra.mxu0 0
        %3341 = vmatprep.subr.bf16.mxu0 0
        %3342 = vmatpush1.bf16.msra.mxu0 0
        %3343 = vmatprep.subr.bf16.mxu0 0
        %3344 = vmatpush1.bf16.msra.mxu0 0
        %3345 = vmatprep.subr.bf16.mxu0 0
        %3346 = vmatpush1.bf16.msra.mxu0 0
        %3347 = vmatprep.subr.bf16.mxu0 0
        %3348 = vmatpush1.bf16.msra.mxu0 0
        %3349 = vmatprep.subr.bf16.mxu0 0
        %3350 = vmatpush1.bf16.msra.mxu0 0
        %3351 = vmatprep.subr.bf16.mxu0 0
        %3352 = vmatpush1.bf16.msra.mxu0 0
        %3353 = vmatprep.mubr.bf16.mxu0 0
        %3354 = vmatmul.mubr.bf16.gmra.mrb[0].mxu0 %v3224
        %v3355 = vpop.f32.mrb[0].mxu0
        %v3356 = vadd.f32 0.0, %v3355
        %v3357 = vpop.f32.mrb[0].mxu0
        %v3358 = vpop.f32.mrb[0].mxu0
        %v3359 = vadd.f32 0.0, %v3358
        %v3360 = vpop.f32.mrb[0].mxu0
        %3361 = vmatprep.mubr.bf16.mxu0 0
        %3362 = vmatmul.mubr.bf16.gmra.mrb[0].mxu0 %v3225
        %v3363 = vpop.f32.mrb[0].mxu0
        %v3364 = vadd.f32 0.0, %v3363
        %v3365 = vpop.f32.mrb[0].mxu0
        %v3366 = vpop.f32.mrb[0].mxu0
        %v3367 = vadd.f32 0.0, %v3366
        %v3368 = vpop.f32.mrb[0].mxu0
        %3369 = vmatprep.mubr.bf16.mxu0 0
        %3370 = vmatmul.mubr.bf16.gmra.mrb[0].mxu0 %v3226
        %v3371 = vpop.f32.mrb[0].mxu0
        %v3372 = vadd.f32 0.0, %v3371
        %v3373 = vpop.f32.mrb[0].mxu0
        %v3374 = vpop.f32.mrb[0].mxu0
        %v3375 = vadd.f32 0.0, %v3374
        %v3376 = vpop.f32.mrb[0].mxu0
        %3377 = vmatprep.mubr.bf16.mxu0 0
        %3378 = vmatmul.mubr.bf16.gmra.mrb[0].mxu0 %v3227
        %v3379 = vpop.f32.mrb[0].mxu0
        %v3380 = vadd.f32 0.0, %v3379
        %v3381 = vpop.f32.mrb[0].mxu0
        %v3382 = vpop.f32.mrb[0].mxu0
        %v3383 = vadd.f32 0.0, %v3382
        %v3384 = vpop.f32.mrb[0].mxu0
        %3385 = vmatprep.mubr.bf16.mxu0 0
        %3386 = vmatmul.mubr.bf16.gmra.mrb[0].mxu0 %v3228
        %v3387 = vpop.f32.mrb[0].mxu0
        %v3388 = vadd.f32 0.0, %v3387
        %v3389 = vpop.f32.mrb[0].mxu0
        %v3390 = vpop.f32.mrb[0].mxu0
        %v3391 = vadd.f32 0.0, %v3390
        %v3392 = vpop.f32.mrb[0].mxu0
        %3393 = vmatprep.mubr.bf16.mxu0 0
        %3394 = vmatmul.mubr.bf16.gmra.mrb[0].mxu0 %v3229
        %v3395 = vpop.f32.mrb[0].mxu0
        %v3396 = vadd.f32 0.0, %v3395
        %v3397 = vpop.f32.mrb[0].mxu0
        %v3398 = vpop.f32.mrb[0].mxu0
        %v3399 = vadd.f32 0.0, %v3398
        %v3400 = vpop.f32.mrb[0].mxu0
        %3401 = vmatprep.mubr.bf16.mxu0 0
        %3402 = vmatmul.mubr.bf16.gmra.mrb[0].mxu0 %v3230
        %v3403 = vpop.f32.mrb[0].mxu0
        %v3404 = vadd.f32 0.0, %v3403
        %v3405 = vpop.f32.mrb[0].mxu0
        %v3406 = vpop.f32.mrb[0].mxu0
        %v3407 = vadd.f32 0.0, %v3406
        %v3408 = vpop.f32.mrb[0].mxu0
        %3409 = vmatprep.mubr.bf16.mxu0 0
        %3410 = vmatmul.mubr.bf16.gmra.mrb[0].mxu0 %v3231
        %v3411 = vpop.f32.mrb[0].mxu0
        %v3412 = vadd.f32 0.0, %v3411
        %v3413 = vpop.f32.mrb[0].mxu0
        %v3414 = vpop.f32.mrb[0].mxu0
        %v3415 = vadd.f32 0.0, %v3414
        %v3416 = vpop.f32.mrb[0].mxu0
        %3417 = vmatprep.mubr.bf16.mxu0 0
        %3418 = vmatmul.mubr.bf16.gmra.mrb[0].mxu0 %v3232
        %v3419 = vpop.f32.mrb[0].mxu0
        %v3420 = vadd.f32 0.0, %v3419
        %v3421 = vpop.f32.mrb[0].mxu0
        %v3422 = vpop.f32.mrb[0].mxu0
        %v3423 = vadd.f32 0.0, %v3422
        %v3424 = vpop.f32.mrb[0].mxu0
        %3425 = vmatprep.mubr.bf16.mxu0 0
        %3426 = vmatmul.mubr.bf16.gmra.mrb[0].mxu0 %v3233
        %v3427 = vpop.f32.mrb[0].mxu0
        %v3428 = vadd.f32 0.0, %v3427
        %v3429 = vpop.f32.mrb[0].mxu0
        %v3430 = vpop.f32.mrb[0].mxu0
        %v3431 = vadd.f32 0.0, %v3430
        %v3432 = vpop.f32.mrb[0].mxu0
        %3433 = vmatprep.mubr.bf16.mxu0 0
        %3434 = vmatmul.mubr.bf16.gmra.mrb[0].mxu0 %v3234
        %v3435 = vpop.f32.mrb[0].mxu0
        %v3436 = vadd.f32 0.0, %v3435
        %v3437 = vpop.f32.mrb[0].mxu0
        %v3438 = vpop.f32.mrb[0].mxu0
        %v3439 = vadd.f32 0.0, %v3438
        %v3440 = vpop.f32.mrb[0].mxu0
        %3441 = vmatprep.mubr.bf16.mxu0 0
        %3442 = vmatmul.mubr.bf16.gmra.mrb[0].mxu0 %v3235
        %v3443 = vpop.f32.mrb[0].mxu0
        %v3444 = vadd.f32 0.0, %v3443
        %v3445 = vpop.f32.mrb[0].mxu0
        %v3446 = vpop.f32.mrb[0].mxu0
        %v3447 = vadd.f32 0.0, %v3446
        %v3448 = vpop.f32.mrb[0].mxu0
        %3449 = vmatprep.mubr.bf16.mxu0 0
        %3450 = vmatmul.mubr.bf16.gmra.mrb[0].mxu0 %v3236
        %v3451 = vpop.f32.mrb[0].mxu0
        %v3452 = vadd.f32 0.0, %v3451
        %v3453 = vpop.f32.mrb[0].mxu0
        %v3454 = vpop.f32.mrb[0].mxu0
        %v3455 = vadd.f32 0.0, %v3454
        %v3456 = vpop.f32.mrb[0].mxu0
        %3457 = vmatprep.mubr.bf16.mxu0 0
        %3458 = vmatmul.mubr.bf16.gmra.mrb[0].mxu0 %v3237
        %v3459 = vpop.f32.mrb[0].mxu0
        %v3460 = vadd.f32 0.0, %v3459
        %v3461 = vpop.f32.mrb[0].mxu0
        %v3462 = vpop.f32.mrb[0].mxu0
        %v3463 = vadd.f32 0.0, %v3462
        %v3464 = vpop.f32.mrb[0].mxu0
        %3465 = vmatprep.mubr.bf16.mxu0 0
        %3466 = vmatmul.mubr.bf16.gmra.mrb[0].mxu0 %v3238
        %v3467 = vpop.f32.mrb[0].mxu0
        %v3468 = vadd.f32 0.0, %v3467
        %v3469 = vpop.f32.mrb[0].mxu0
        %v3470 = vpop.f32.mrb[0].mxu0
        %v3471 = vadd.f32 0.0, %v3470
        %v3472 = vpop.f32.mrb[0].mxu0
        %3473 = vmatprep.mubr.bf16.mxu0 0
        %3474 = vmatmul.mubr.bf16.gmra.mrb[0].mxu0 %v3239
        %v3475 = vpop.f32.mrb[0].mxu0
        %v3476 = vadd.f32 0.0, %v3475
        %v3477 = vpop.f32.mrb[0].mxu0
        %v3478 = vpop.f32.mrb[0].mxu0
        %v3479 = vadd.f32 0.0, %v3478
        %v3480 = vpop.f32.mrb[0].mxu0
        %3481 = vmatprep.mubr.bf16.mxu0 0
        %3482 = vmatmul.mubr.bf16.gmra.mrb[0].mxu0 %v3240
        %v3483 = vpop.f32.mrb[0].mxu0
        %v3484 = vadd.f32 0.0, %v3483
        %v3485 = vpop.f32.mrb[0].mxu0
        %v3486 = vpop.f32.mrb[0].mxu0
        %v3487 = vadd.f32 0.0, %v3486
        %v3488 = vpop.f32.mrb[0].mxu0
        %3489 = vmatprep.mubr.bf16.mxu0 0
        %3490 = vmatmul.mubr.bf16.gmra.mrb[0].mxu0 %v3241
        %v3491 = vpop.f32.mrb[0].mxu0
        %v3492 = vadd.f32 0.0, %v3491
        %v3493 = vpop.f32.mrb[0].mxu0
        %v3494 = vpop.f32.mrb[0].mxu0
        %v3495 = vadd.f32 0.0, %v3494
        %v3496 = vpop.f32.mrb[0].mxu0
        %3497 = vmatprep.mubr.bf16.mxu0 0
        %3498 = vmatmul.mubr.bf16.gmra.mrb[0].mxu0 %v3242
        %v3499 = vpop.f32.mrb[0].mxu0
        %v3500 = vadd.f32 0.0, %v3499
        %v3501 = vpop.f32.mrb[0].mxu0
        %v3502 = vpop.f32.mrb[0].mxu0
        %v3503 = vadd.f32 0.0, %v3502
        %v3504 = vpop.f32.mrb[0].mxu0
        %3505 = vmatprep.mubr.bf16.mxu0 0
        %3506 = vmatmul.mubr.bf16.gmra.mrb[0].mxu0 %v3243
        %v3507 = vpop.f32.mrb[0].mxu0
        %v3508 = vadd.f32 0.0, %v3507
        %v3509 = vpop.f32.mrb[0].mxu0
        %v3510 = vpop.f32.mrb[0].mxu0
        %v3511 = vadd.f32 0.0, %v3510
        %v3512 = vpop.f32.mrb[0].mxu0
        %3513 = vmatprep.mubr.bf16.mxu0 0
        %3514 = vmatmul.mubr.bf16.gmra.mrb[0].mxu0 %v3244
        %v3515 = vpop.f32.mrb[0].mxu0
        %v3516 = vadd.f32 0.0, %v3515
        %v3517 = vpop.f32.mrb[0].mxu0
        %v3518 = vpop.f32.mrb[0].mxu0
        %v3519 = vadd.f32 0.0, %v3518
        %v3520 = vpop.f32.mrb[0].mxu0
        %3521 = vmatprep.mubr.bf16.mxu0 0
        %3522 = vmatmul.mubr.bf16.gmra.mrb[0].mxu0 %v3245
        %v3523 = vpop.f32.mrb[0].mxu0
        %v3524 = vadd.f32 0.0, %v3523
        %v3525 = vpop.f32.mrb[0].mxu0
        %v3526 = vpop.f32.mrb[0].mxu0
        %v3527 = vadd.f32 0.0, %v3526
        %v3528 = vpop.f32.mrb[0].mxu0
        %3529 = vmatprep.mubr.bf16.mxu0 0
        %3530 = vmatmul.mubr.bf16.gmra.mrb[0].mxu0 %v3246
        %v3531 = vpop.f32.mrb[0].mxu0
        %v3532 = vadd.f32 0.0, %v3531
        %v3533 = vpop.f32.mrb[0].mxu0
        %v3534 = vpop.f32.mrb[0].mxu0
        %v3535 = vadd.f32 0.0, %v3534
        %v3536 = vpop.f32.mrb[0].mxu0
        %3537 = vmatprep.mubr.bf16.mxu0 0
        %3538 = vmatmul.mubr.bf16.gmra.mrb[0].mxu0 %v3247
        %v3539 = vpop.f32.mrb[0].mxu0
        %v3540 = vadd.f32 0.0, %v3539
        %v3541 = vpop.f32.mrb[0].mxu0
        %v3542 = vpop.f32.mrb[0].mxu0
        %v3543 = vadd.f32 0.0, %v3542
        %v3544 = vpop.f32.mrb[0].mxu0
        %3545 = vmatprep.mubr.bf16.mxu0 0
        %3546 = vmatmul.mubr.bf16.gmra.mrb[0].mxu0 %v3248
        %v3547 = vpop.f32.mrb[0].mxu0
        %v3548 = vadd.f32 0.0, %v3547
        %v3549 = vpop.f32.mrb[0].mxu0
        %v3550 = vpop.f32.mrb[0].mxu0
        %v3551 = vadd.f32 0.0, %v3550
        %v3552 = vpop.f32.mrb[0].mxu0
        %3553 = vmatprep.mubr.bf16.mxu0 0
        %3554 = vmatmul.mubr.bf16.gmra.mrb[0].mxu0 %v3249
        %v3555 = vpop.f32.mrb[0].mxu0
        %v3556 = vadd.f32 0.0, %v3555
        %v3557 = vpop.f32.mrb[0].mxu0
        %v3558 = vpop.f32.mrb[0].mxu0
        %v3559 = vadd.f32 0.0, %v3558
        %v3560 = vpop.f32.mrb[0].mxu0
        %3561 = vmatprep.mubr.bf16.mxu0 0
        %3562 = vmatmul.mubr.bf16.gmra.mrb[0].mxu0 %v3250
        %v3563 = vpop.f32.mrb[0].mxu0
        %v3564 = vadd.f32 0.0, %v3563
        %v3565 = vpop.f32.mrb[0].mxu0
        %v3566 = vpop.f32.mrb[0].mxu0
        %v3567 = vadd.f32 0.0, %v3566
        %v3568 = vpop.f32.mrb[0].mxu0
        %3569 = vmatprep.mubr.bf16.mxu0 0
        %3570 = vmatmul.mubr.bf16.gmra.mrb[0].mxu0 %v3251
        %v3571 = vpop.f32.mrb[0].mxu0
        %v3572 = vadd.f32 0.0, %v3571
        %v3573 = vpop.f32.mrb[0].mxu0
        %v3574 = vpop.f32.mrb[0].mxu0
        %v3575 = vadd.f32 0.0, %v3574
        %v3576 = vpop.f32.mrb[0].mxu0
        %3577 = vmatprep.mubr.bf16.mxu0 0
        %3578 = vmatmul.mubr.bf16.gmra.mrb[0].mxu0 %v3252
        %v3579 = vpop.f32.mrb[0].mxu0
        %v3580 = vadd.f32 0.0, %v3579
        %v3581 = vpop.f32.mrb[0].mxu0
        %v3582 = vpop.f32.mrb[0].mxu0
        %v3583 = vadd.f32 0.0, %v3582
        %v3584 = vpop.f32.mrb[0].mxu0
        %3585 = vmatprep.mubr.bf16.mxu0 0
        %3586 = vmatmul.mubr.bf16.gmra.mrb[0].mxu0 %v3253
        %v3587 = vpop.f32.mrb[0].mxu0
        %v3588 = vadd.f32 0.0, %v3587
        %v3589 = vpop.f32.mrb[0].mxu0
        %v3590 = vpop.f32.mrb[0].mxu0
        %v3591 = vadd.f32 0.0, %v3590
        %v3592 = vpop.f32.mrb[0].mxu0
        %3593 = vmatprep.mubr.bf16.mxu0 0
        %3594 = vmatmul.mubr.bf16.gmra.mrb[0].mxu0 %v3254
        %v3595 = vpop.f32.mrb[0].mxu0
        %v3596 = vadd.f32 0.0, %v3595
        %v3597 = vpop.f32.mrb[0].mxu0
        %v3598 = vpop.f32.mrb[0].mxu0
        %v3599 = vadd.f32 0.0, %v3598
        %v3600 = vpop.f32.mrb[0].mxu0
        %3601 = vmatprep.mubr.bf16.mxu0 0
        %3602 = vmatmul.mubr.bf16.gmra.mrb[0].mxu0 %v3255
        %v3603 = vpop.f32.mrb[0].mxu0
        %v3604 = vadd.f32 0.0, %v3603
        %v3605 = vpop.f32.mrb[0].mxu0
        %v3606 = vpop.f32.mrb[0].mxu0
        %v3607 = vadd.f32 0.0, %v3606
        %v3608 = vpop.f32.mrb[0].mxu0
        %3609 = vdwg.mxu0
        %v3610 = vadd.f32 %v2970, %v3356
        %v3611 = vadd.f32 %v2973, %v3359
        %v3612 = vadd.f32 %v2978, %v3364
        %v3613 = vadd.f32 %v2981, %v3367
        %v3614 = vadd.f32 %v2986, %v3372
        %v3615 = vadd.f32 %v2989, %v3375
        %v3616 = vadd.f32 %v2994, %v3380
        %v3617 = vadd.f32 %v2997, %v3383
        %v3618 = vadd.f32 %v3002, %v3388
        %v3619 = vadd.f32 %v3005, %v3391
        %v3620 = vadd.f32 %v3010, %v3396
        %v3621 = vadd.f32 %v3013, %v3399
        %v3622 = vadd.f32 %v3018, %v3404
        %v3623 = vadd.f32 %v3021, %v3407
        %v3624 = vadd.f32 %v3026, %v3412
        %v3625 = vadd.f32 %v3029, %v3415
        %v3626 = vadd.f32 %v3034, %v3420
        %v3627 = vadd.f32 %v3037, %v3423
        %v3628 = vadd.f32 %v3042, %v3428
        %v3629 = vadd.f32 %v3045, %v3431
        %v3630 = vadd.f32 %v3050, %v3436
        %v3631 = vadd.f32 %v3053, %v3439
        %v3632 = vadd.f32 %v3058, %v3444
        %v3633 = vadd.f32 %v3061, %v3447
        %v3634 = vadd.f32 %v3066, %v3452
        %v3635 = vadd.f32 %v3069, %v3455
        %v3636 = vadd.f32 %v3074, %v3460
        %v3637 = vadd.f32 %v3077, %v3463
        %v3638 = vadd.f32 %v3082, %v3468
        %v3639 = vadd.f32 %v3085, %v3471
        %v3640 = vadd.f32 %v3090, %v3476
        %v3641 = vadd.f32 %v3093, %v3479
        %v3642 = vadd.f32 %v3098, %v3484
        %v3643 = vadd.f32 %v3101, %v3487
        %v3644 = vadd.f32 %v3106, %v3492
        %v3645 = vadd.f32 %v3109, %v3495
        %v3646 = vadd.f32 %v3114, %v3500
        %v3647 = vadd.f32 %v3117, %v3503
        %v3648 = vadd.f32 %v3122, %v3508
        %v3649 = vadd.f32 %v3125, %v3511
        %v3650 = vadd.f32 %v3130, %v3516
        %v3651 = vadd.f32 %v3133, %v3519
        %v3652 = vadd.f32 %v3138, %v3524
        %v3653 = vadd.f32 %v3141, %v3527
        %v3654 = vadd.f32 %v3146, %v3532
        %v3655 = vadd.f32 %v3149, %v3535
        %v3656 = vadd.f32 %v3154, %v3540
        %v3657 = vadd.f32 %v3157, %v3543
        %v3658 = vadd.f32 %v3162, %v3548
        %v3659 = vadd.f32 %v3165, %v3551
        %v3660 = vadd.f32 %v3170, %v3556
        %v3661 = vadd.f32 %v3173, %v3559
        %v3662 = vadd.f32 %v3178, %v3564
        %v3663 = vadd.f32 %v3181, %v3567
        %v3664 = vadd.f32 %v3186, %v3572
        %v3665 = vadd.f32 %v3189, %v3575
        %v3666 = vadd.f32 %v3194, %v3580
        %v3667 = vadd.f32 %v3197, %v3583
        %v3668 = vadd.f32 %v3202, %v3588
        %v3669 = vadd.f32 %v3205, %v3591
        %v3670 = vadd.f32 %v3210, %v3596
        %v3671 = vadd.f32 %v3213, %v3599
        %v3672 = vadd.f32 %v3218, %v3604
        %v3673 = vadd.f32 %v3221, %v3607
        %v3674 = vld [vmem:[#allocation2 + $0x18] sm:$0xff]
        %v3675 = vld [vmem:[#allocation2 + $0x20] sm:$0xff]
        %v3676 = vld [vmem:[#allocation2 + $0x28] sm:$0xff]
        %v3677 = vld [vmem:[#allocation2 + $0x30] sm:$0xff]
        %v3678 = vld [vmem:[#allocation2 + $0x38] sm:$0xff]
        %v3679 = vld [vmem:[#allocation2 + $0x40] sm:$0xff]
        %v3680 = vld [vmem:[#allocation2 + $0x48] sm:$0xff]
        %v3681 = vld [vmem:[#allocation2 + $0x50] sm:$0xff]
        %v3682 = vld [vmem:[#allocation2 + $0x58] sm:$0xff]
        %v3683 = vld [vmem:[#allocation2 + $0x60] sm:$0xff]
        %v3684 = vld [vmem:[#allocation2 + $0x68] sm:$0xff]
        %v3685 = vld [vmem:[#allocation2 + $0x70] sm:$0xff]
        %v3686 = vld [vmem:[#allocation2 + $0x78] sm:$0xff]
        %v3687 = vld [vmem:[#allocation2 + $0x80] sm:$0xff]
        %v3688 = vld [vmem:[#allocation2 + $0x88] sm:$0xff]
        %v3689 = vld [vmem:[#allocation2 + $0x90] sm:$0xff]
        %v3690 = vld [vmem:[#allocation2 + $0x98] sm:$0xff]
        %v3691 = vld [vmem:[#allocation2 + $0xa0] sm:$0xff]
        %v3692 = vld [vmem:[#allocation2 + $0xa8] sm:$0xff]
        %v3693 = vld [vmem:[#allocation2 + $0xb0] sm:$0xff]
        %v3694 = vld [vmem:[#allocation2 + $0xb8] sm:$0xff]
        %v3695 = vld [vmem:[#allocation2 + $0xc0] sm:$0xff]
        %v3696 = vld [vmem:[#allocation2 + $0xc8] sm:$0xff]
        %v3697 = vld [vmem:[#allocation2 + $0xd0] sm:$0xff]
        %v3698 = vld [vmem:[#allocation2 + $0xd8] sm:$0xff]
        %v3699 = vld [vmem:[#allocation2 + $0xe0] sm:$0xff]
        %v3700 = vld [vmem:[#allocation2 + $0xe8] sm:$0xff]
        %v3701 = vld [vmem:[#allocation2 + $0xf0] sm:$0xff]
        %v3702 = vld [vmem:[#allocation2 + $0xf8] sm:$0xff]
        %v3703 = vld [vmem:[#allocation2 + $0x100] sm:$0xff]
        %v3704 = vld [vmem:[#allocation2 + $0x108] sm:$0xff]
        %v3705 = vld [vmem:[#allocation2 + $0x110] sm:$0xff]
        %s3706 = scalar_lea.vmem [#allocation11], 192
        %v3707 = vld [vmem:[%s3706] sm:$0xf]
        %v3708 = vld [vmem:[%s3706 + $0x4] sm:$0xf]
        %v3709 = vld [vmem:[%s3706 + $0x8] sm:$0xf]
        %v3710 = vld [vmem:[%s3706 + $0xc] sm:$0xf]
        %v3711 = vld [vmem:[%s3706 + $0x10] sm:$0xf]
        %v3712 = vld [vmem:[%s3706 + $0x14] sm:$0xf]
        %v3713 = vld [vmem:[%s3706 + $0x18] sm:$0xf]
        %v3714 = vld [vmem:[%s3706 + $0x1c] sm:$0xf]
        %v3715 = vld [vmem:[%s3706 + $0x20] sm:$0xf]
        %v3716 = vld [vmem:[%s3706 + $0x24] sm:$0xf]
        %v3717 = vld [vmem:[%s3706 + $0x28] sm:$0xf]
        %v3718 = vld [vmem:[%s3706 + $0x2c] sm:$0xf]
        %v3719 = vld [vmem:[%s3706 + $0x30] sm:$0xf]
        %v3720 = vld [vmem:[%s3706 + $0x34] sm:$0xf]
        %v3721 = vld [vmem:[%s3706 + $0x38] sm:$0xf]
        %v3722 = vld [vmem:[%s3706 + $0x3c] sm:$0xf]
        %v3739 = vunpack.c.l.b16 %v3707
        %v3740 = vunpack.c.l.b16 %v3708
        %v3741 = vunpack.c.l.b16 %v3709
        %v3742 = vunpack.c.l.b16 %v3710
        %v3743 = vunpack.c.l.b16 %v3711
        %v3744 = vunpack.c.l.b16 %v3712
        %v3745 = vunpack.c.l.b16 %v3713
        %v3746 = vunpack.c.l.b16 %v3714
        %v3747 = vunpack.c.l.b16 %v3715
        %v3748 = vunpack.c.l.b16 %v3716
        %v3749 = vunpack.c.l.b16 %v3717
        %v3750 = vunpack.c.l.b16 %v3718
        %v3751 = vunpack.c.l.b16 %v3719
        %v3752 = vunpack.c.l.b16 %v3720
        %v3753 = vunpack.c.l.b16 %v3721
        %v3754 = vunpack.c.l.b16 %v3722
        %v3755 = vpack.c.b16 %v3740, %v3739
        %v3756 = vpack.c.b16 %v3742, %v3741
        %v3757 = vpack.c.b16 %v3744, %v3743
        %v3758 = vpack.c.b16 %v3746, %v3745
        %v3759 = vpack.c.b16 %v3748, %v3747
        %v3760 = vpack.c.b16 %v3750, %v3749
        %v3761 = vpack.c.b16 %v3752, %v3751
        %v3762 = vpack.c.b16 %v3754, %v3753
        %3771 = vmatprep.subr.bf16.mxu0 0
        %3772 = vmatpush1.bf16.msra.mxu0 %v3755
        %3773 = vmatprep.subr.bf16.mxu0 0
        %3774 = vmatpush1.bf16.msra.mxu0 %v3756
        %3775 = vmatprep.subr.bf16.mxu0 0
        %3776 = vmatpush1.bf16.msra.mxu0 %v3757
        %3777 = vmatprep.subr.bf16.mxu0 0
        %3778 = vmatpush1.bf16.msra.mxu0 %v3758
        %3779 = vmatprep.subr.bf16.mxu0 0
        %3780 = vmatpush1.bf16.msra.mxu0 %v3759
        %3781 = vmatprep.subr.bf16.mxu0 0
        %3782 = vmatpush1.bf16.msra.mxu0 %v3760
        %3783 = vmatprep.subr.bf16.mxu0 0
        %3784 = vmatpush1.bf16.msra.mxu0 %v3761
        %3785 = vmatprep.subr.bf16.mxu0 0
        %3786 = vmatpush1.bf16.msra.mxu0 %v3762
        %3787 = vmatprep.subr.bf16.mxu0 0
        %3788 = vmatpush1.bf16.msra.mxu0 0
        %3789 = vmatprep.subr.bf16.mxu0 0
        %3790 = vmatpush1.bf16.msra.mxu0 0
        %3791 = vmatprep.subr.bf16.mxu0 0
        %3792 = vmatpush1.bf16.msra.mxu0 0
        %3793 = vmatprep.subr.bf16.mxu0 0
        %3794 = vmatpush1.bf16.msra.mxu0 0
        %3795 = vmatprep.subr.bf16.mxu0 0
        %3796 = vmatpush1.bf16.msra.mxu0 0
        %3797 = vmatprep.subr.bf16.mxu0 0
        %3798 = vmatpush1.bf16.msra.mxu0 0
        %3799 = vmatprep.subr.bf16.mxu0 0
        %3800 = vmatpush1.bf16.msra.mxu0 0
        %3801 = vmatprep.subr.bf16.mxu0 0
        %3802 = vmatpush1.bf16.msra.mxu0 0
        %3803 = vmatprep.mubr.bf16.mxu0 0
        %3804 = vmatmul.mubr.bf16.gmra.mrb[0].mxu0 %v3674
        %v3805 = vpop.f32.mrb[0].mxu0
        %v3806 = vadd.f32 0.0, %v3805
        %v3807 = vpop.f32.mrb[0].mxu0
        %v3808 = vpop.f32.mrb[0].mxu0
        %v3809 = vadd.f32 0.0, %v3808
        %v3810 = vpop.f32.mrb[0].mxu0
        %3811 = vmatprep.mubr.bf16.mxu0 0
        %3812 = vmatmul.mubr.bf16.gmra.mrb[0].mxu0 %v3675
        %v3813 = vpop.f32.mrb[0].mxu0
        %v3814 = vadd.f32 0.0, %v3813
        %v3815 = vpop.f32.mrb[0].mxu0
        %v3816 = vpop.f32.mrb[0].mxu0
        %v3817 = vadd.f32 0.0, %v3816
        %v3818 = vpop.f32.mrb[0].mxu0
        %3819 = vmatprep.mubr.bf16.mxu0 0
        %3820 = vmatmul.mubr.bf16.gmra.mrb[0].mxu0 %v3676
        %v3821 = vpop.f32.mrb[0].mxu0
        %v3822 = vadd.f32 0.0, %v3821
        %v3823 = vpop.f32.mrb[0].mxu0
        %v3824 = vpop.f32.mrb[0].mxu0
        %v3825 = vadd.f32 0.0, %v3824
        %v3826 = vpop.f32.mrb[0].mxu0
        %3827 = vmatprep.mubr.bf16.mxu0 0
        %3828 = vmatmul.mubr.bf16.gmra.mrb[0].mxu0 %v3677
        %v3829 = vpop.f32.mrb[0].mxu0
        %v3830 = vadd.f32 0.0, %v3829
        %v3831 = vpop.f32.mrb[0].mxu0
        %v3832 = vpop.f32.mrb[0].mxu0
        %v3833 = vadd.f32 0.0, %v3832
        %v3834 = vpop.f32.mrb[0].mxu0
        %3835 = vmatprep.mubr.bf16.mxu0 0
        %3836 = vmatmul.mubr.bf16.gmra.mrb[0].mxu0 %v3678
        %v3837 = vpop.f32.mrb[0].mxu0
        %v3838 = vadd.f32 0.0, %v3837
        %v3839 = vpop.f32.mrb[0].mxu0
        %v3840 = vpop.f32.mrb[0].mxu0
        %v3841 = vadd.f32 0.0, %v3840
        %v3842 = vpop.f32.mrb[0].mxu0
        %3843 = vmatprep.mubr.bf16.mxu0 0
        %3844 = vmatmul.mubr.bf16.gmra.mrb[0].mxu0 %v3679
        %v3845 = vpop.f32.mrb[0].mxu0
        %v3846 = vadd.f32 0.0, %v3845
        %v3847 = vpop.f32.mrb[0].mxu0
        %v3848 = vpop.f32.mrb[0].mxu0
        %v3849 = vadd.f32 0.0, %v3848
        %v3850 = vpop.f32.mrb[0].mxu0
        %3851 = vmatprep.mubr.bf16.mxu0 0
        %3852 = vmatmul.mubr.bf16.gmra.mrb[0].mxu0 %v3680
        %v3853 = vpop.f32.mrb[0].mxu0
        %v3854 = vadd.f32 0.0, %v3853
        %v3855 = vpop.f32.mrb[0].mxu0
        %v3856 = vpop.f32.mrb[0].mxu0
        %v3857 = vadd.f32 0.0, %v3856
        %v3858 = vpop.f32.mrb[0].mxu0
        %3859 = vmatprep.mubr.bf16.mxu0 0
        %3860 = vmatmul.mubr.bf16.gmra.mrb[0].mxu0 %v3681
        %v3861 = vpop.f32.mrb[0].mxu0
        %v3862 = vadd.f32 0.0, %v3861
        %v3863 = vpop.f32.mrb[0].mxu0
        %v3864 = vpop.f32.mrb[0].mxu0
        %v3865 = vadd.f32 0.0, %v3864
        %v3866 = vpop.f32.mrb[0].mxu0
        %3867 = vmatprep.mubr.bf16.mxu0 0
        %3868 = vmatmul.mubr.bf16.gmra.mrb[0].mxu0 %v3682
        %v3869 = vpop.f32.mrb[0].mxu0
        %v3870 = vadd.f32 0.0, %v3869
        %v3871 = vpop.f32.mrb[0].mxu0
        %v3872 = vpop.f32.mrb[0].mxu0
        %v3873 = vadd.f32 0.0, %v3872
        %v3874 = vpop.f32.mrb[0].mxu0
        %3875 = vmatprep.mubr.bf16.mxu0 0
        %3876 = vmatmul.mubr.bf16.gmra.mrb[0].mxu0 %v3683
        %v3877 = vpop.f32.mrb[0].mxu0
        %v3878 = vadd.f32 0.0, %v3877
        %v3879 = vpop.f32.mrb[0].mxu0
        %v3880 = vpop.f32.mrb[0].mxu0
        %v3881 = vadd.f32 0.0, %v3880
        %v3882 = vpop.f32.mrb[0].mxu0
        %3883 = vmatprep.mubr.bf16.mxu0 0
        %3884 = vmatmul.mubr.bf16.gmra.mrb[0].mxu0 %v3684
        %v3885 = vpop.f32.mrb[0].mxu0
        %v3886 = vadd.f32 0.0, %v3885
        %v3887 = vpop.f32.mrb[0].mxu0
        %v3888 = vpop.f32.mrb[0].mxu0
        %v3889 = vadd.f32 0.0, %v3888
        %v3890 = vpop.f32.mrb[0].mxu0
        %3891 = vmatprep.mubr.bf16.mxu0 0
        %3892 = vmatmul.mubr.bf16.gmra.mrb[0].mxu0 %v3685
        %v3893 = vpop.f32.mrb[0].mxu0
        %v3894 = vadd.f32 0.0, %v3893
        %v3895 = vpop.f32.mrb[0].mxu0
        %v3896 = vpop.f32.mrb[0].mxu0
        %v3897 = vadd.f32 0.0, %v3896
        %v3898 = vpop.f32.mrb[0].mxu0
        %3899 = vmatprep.mubr.bf16.mxu0 0
        %3900 = vmatmul.mubr.bf16.gmra.mrb[0].mxu0 %v3686
        %v3901 = vpop.f32.mrb[0].mxu0
        %v3902 = vadd.f32 0.0, %v3901
        %v3903 = vpop.f32.mrb[0].mxu0
        %v3904 = vpop.f32.mrb[0].mxu0
        %v3905 = vadd.f32 0.0, %v3904
        %v3906 = vpop.f32.mrb[0].mxu0
        %3907 = vmatprep.mubr.bf16.mxu0 0
        %3908 = vmatmul.mubr.bf16.gmra.mrb[0].mxu0 %v3687
        %v3909 = vpop.f32.mrb[0].mxu0
        %v3910 = vadd.f32 0.0, %v3909
        %v3911 = vpop.f32.mrb[0].mxu0
        %v3912 = vpop.f32.mrb[0].mxu0
        %v3913 = vadd.f32 0.0, %v3912
        %v3914 = vpop.f32.mrb[0].mxu0
        %3915 = vmatprep.mubr.bf16.mxu0 0
        %3916 = vmatmul.mubr.bf16.gmra.mrb[0].mxu0 %v3688
        %v3917 = vpop.f32.mrb[0].mxu0
        %v3918 = vadd.f32 0.0, %v3917
        %v3919 = vpop.f32.mrb[0].mxu0
        %v3920 = vpop.f32.mrb[0].mxu0
        %v3921 = vadd.f32 0.0, %v3920
        %v3922 = vpop.f32.mrb[0].mxu0
        %3923 = vmatprep.mubr.bf16.mxu0 0
        %3924 = vmatmul.mubr.bf16.gmra.mrb[0].mxu0 %v3689
        %v3925 = vpop.f32.mrb[0].mxu0
        %v3926 = vadd.f32 0.0, %v3925
        %v3927 = vpop.f32.mrb[0].mxu0
        %v3928 = vpop.f32.mrb[0].mxu0
        %v3929 = vadd.f32 0.0, %v3928
        %v3930 = vpop.f32.mrb[0].mxu0
        %3931 = vmatprep.mubr.bf16.mxu0 0
        %3932 = vmatmul.mubr.bf16.gmra.mrb[0].mxu0 %v3690
        %v3933 = vpop.f32.mrb[0].mxu0
        %v3934 = vadd.f32 0.0, %v3933
        %v3935 = vpop.f32.mrb[0].mxu0
        %v3936 = vpop.f32.mrb[0].mxu0
        %v3937 = vadd.f32 0.0, %v3936
        %v3938 = vpop.f32.mrb[0].mxu0
        %3939 = vmatprep.mubr.bf16.mxu0 0
        %3940 = vmatmul.mubr.bf16.gmra.mrb[0].mxu0 %v3691
        %v3941 = vpop.f32.mrb[0].mxu0
        %v3942 = vadd.f32 0.0, %v3941
        %v3943 = vpop.f32.mrb[0].mxu0
        %v3944 = vpop.f32.mrb[0].mxu0
        %v3945 = vadd.f32 0.0, %v3944
        %v3946 = vpop.f32.mrb[0].mxu0
        %3947 = vmatprep.mubr.bf16.mxu0 0
        %3948 = vmatmul.mubr.bf16.gmra.mrb[0].mxu0 %v3692
        %v3949 = vpop.f32.mrb[0].mxu0
        %v3950 = vadd.f32 0.0, %v3949
        %v3951 = vpop.f32.mrb[0].mxu0
        %v3952 = vpop.f32.mrb[0].mxu0
        %v3953 = vadd.f32 0.0, %v3952
        %v3954 = vpop.f32.mrb[0].mxu0
        %3955 = vmatprep.mubr.bf16.mxu0 0
        %3956 = vmatmul.mubr.bf16.gmra.mrb[0].mxu0 %v3693
        %v3957 = vpop.f32.mrb[0].mxu0
        %v3958 = vadd.f32 0.0, %v3957
        %v3959 = vpop.f32.mrb[0].mxu0
        %v3960 = vpop.f32.mrb[0].mxu0
        %v3961 = vadd.f32 0.0, %v3960
        %v3962 = vpop.f32.mrb[0].mxu0
        %3963 = vmatprep.mubr.bf16.mxu0 0
        %3964 = vmatmul.mubr.bf16.gmra.mrb[0].mxu0 %v3694
        %v3965 = vpop.f32.mrb[0].mxu0
        %v3966 = vadd.f32 0.0, %v3965
        %v3967 = vpop.f32.mrb[0].mxu0
        %v3968 = vpop.f32.mrb[0].mxu0
        %v3969 = vadd.f32 0.0, %v3968
        %v3970 = vpop.f32.mrb[0].mxu0
        %3971 = vmatprep.mubr.bf16.mxu0 0
        %3972 = vmatmul.mubr.bf16.gmra.mrb[0].mxu0 %v3695
        %v3973 = vpop.f32.mrb[0].mxu0
        %v3974 = vadd.f32 0.0, %v3973
        %v3975 = vpop.f32.mrb[0].mxu0
        %v3976 = vpop.f32.mrb[0].mxu0
        %v3977 = vadd.f32 0.0, %v3976
        %v3978 = vpop.f32.mrb[0].mxu0
        %3979 = vmatprep.mubr.bf16.mxu0 0
        %3980 = vmatmul.mubr.bf16.gmra.mrb[0].mxu0 %v3696
        %v3981 = vpop.f32.mrb[0].mxu0
        %v3982 = vadd.f32 0.0, %v3981
        %v3983 = vpop.f32.mrb[0].mxu0
        %v3984 = vpop.f32.mrb[0].mxu0
        %v3985 = vadd.f32 0.0, %v3984
        %v3986 = vpop.f32.mrb[0].mxu0
        %3987 = vmatprep.mubr.bf16.mxu0 0
        %3988 = vmatmul.mubr.bf16.gmra.mrb[0].mxu0 %v3697
        %v3989 = vpop.f32.mrb[0].mxu0
        %v3990 = vadd.f32 0.0, %v3989
        %v3991 = vpop.f32.mrb[0].mxu0
        %v3992 = vpop.f32.mrb[0].mxu0
        %v3993 = vadd.f32 0.0, %v3992
        %v3994 = vpop.f32.mrb[0].mxu0
        %3995 = vmatprep.mubr.bf16.mxu0 0
        %3996 = vmatmul.mubr.bf16.gmra.mrb[0].mxu0 %v3698
        %v3997 = vpop.f32.mrb[0].mxu0
        %v3998 = vadd.f32 0.0, %v3997
        %v3999 = vpop.f32.mrb[0].mxu0
        %v4000 = vpop.f32.mrb[0].mxu0
        %v4001 = vadd.f32 0.0, %v4000
        %v4002 = vpop.f32.mrb[0].mxu0
        %4003 = vmatprep.mubr.bf16.mxu0 0
        %4004 = vmatmul.mubr.bf16.gmra.mrb[0].mxu0 %v3699
        %v4005 = vpop.f32.mrb[0].mxu0
        %v4006 = vadd.f32 0.0, %v4005
        %v4007 = vpop.f32.mrb[0].mxu0
        %v4008 = vpop.f32.mrb[0].mxu0
        %v4009 = vadd.f32 0.0, %v4008
        %v4010 = vpop.f32.mrb[0].mxu0
        %4011 = vmatprep.mubr.bf16.mxu0 0
        %4012 = vmatmul.mubr.bf16.gmra.mrb[0].mxu0 %v3700
        %v4013 = vpop.f32.mrb[0].mxu0
        %v4014 = vadd.f32 0.0, %v4013
        %v4015 = vpop.f32.mrb[0].mxu0
        %v4016 = vpop.f32.mrb[0].mxu0
        %v4017 = vadd.f32 0.0, %v4016
        %v4018 = vpop.f32.mrb[0].mxu0
        %4019 = vmatprep.mubr.bf16.mxu0 0
        %4020 = vmatmul.mubr.bf16.gmra.mrb[0].mxu0 %v3701
        %v4021 = vpop.f32.mrb[0].mxu0
        %v4022 = vadd.f32 0.0, %v4021
        %v4023 = vpop.f32.mrb[0].mxu0
        %v4024 = vpop.f32.mrb[0].mxu0
        %v4025 = vadd.f32 0.0, %v4024
        %v4026 = vpop.f32.mrb[0].mxu0
        %4027 = vmatprep.mubr.bf16.mxu0 0
        %4028 = vmatmul.mubr.bf16.gmra.mrb[0].mxu0 %v3702
        %v4029 = vpop.f32.mrb[0].mxu0
        %v4030 = vadd.f32 0.0, %v4029
        %v4031 = vpop.f32.mrb[0].mxu0
        %v4032 = vpop.f32.mrb[0].mxu0
        %v4033 = vadd.f32 0.0, %v4032
        %v4034 = vpop.f32.mrb[0].mxu0
        %4035 = vmatprep.mubr.bf16.mxu0 0
        %4036 = vmatmul.mubr.bf16.gmra.mrb[0].mxu0 %v3703
        %v4037 = vpop.f32.mrb[0].mxu0
        %v4038 = vadd.f32 0.0, %v4037
        %v4039 = vpop.f32.mrb[0].mxu0
        %v4040 = vpop.f32.mrb[0].mxu0
        %v4041 = vadd.f32 0.0, %v4040
        %v4042 = vpop.f32.mrb[0].mxu0
        %4043 = vmatprep.mubr.bf16.mxu0 0
        %4044 = vmatmul.mubr.bf16.gmra.mrb[0].mxu0 %v3704
        %v4045 = vpop.f32.mrb[0].mxu0
        %v4046 = vadd.f32 0.0, %v4045
        %v4047 = vpop.f32.mrb[0].mxu0
        %v4048 = vpop.f32.mrb[0].mxu0
        %v4049 = vadd.f32 0.0, %v4048
        %v4050 = vpop.f32.mrb[0].mxu0
        %4051 = vmatprep.mubr.bf16.mxu0 0
        %4052 = vmatmul.mubr.bf16.gmra.mrb[0].mxu0 %v3705
        %v4053 = vpop.f32.mrb[0].mxu0
        %v4054 = vadd.f32 0.0, %v4053
        %v4055 = vpop.f32.mrb[0].mxu0
        %v4056 = vpop.f32.mrb[0].mxu0
        %v4057 = vadd.f32 0.0, %v4056
        %v4058 = vpop.f32.mrb[0].mxu0
        %4059 = vdwg.mxu0
        %v4060 = vadd.f32 %v3610, %v3806
        %v4061 = vadd.f32 %v3611, %v3809
        %v4062 = vadd.f32 %v3612, %v3814
        %v4063 = vadd.f32 %v3613, %v3817
        %v4064 = vadd.f32 %v3614, %v3822
        %v4065 = vadd.f32 %v3615, %v3825
        %v4066 = vadd.f32 %v3616, %v3830
        %v4067 = vadd.f32 %v3617, %v3833
        %v4068 = vadd.f32 %v3618, %v3838
        %v4069 = vadd.f32 %v3619, %v3841
        %v4070 = vadd.f32 %v3620, %v3846
        %v4071 = vadd.f32 %v3621, %v3849
        %v4072 = vadd.f32 %v3622, %v3854
        %v4073 = vadd.f32 %v3623, %v3857
        %v4074 = vadd.f32 %v3624, %v3862
        %v4075 = vadd.f32 %v3625, %v3865
        %v4076 = vadd.f32 %v3626, %v3870
        %v4077 = vadd.f32 %v3627, %v3873
        %v4078 = vadd.f32 %v3628, %v3878
        %v4079 = vadd.f32 %v3629, %v3881
        %v4080 = vadd.f32 %v3630, %v3886
        %v4081 = vadd.f32 %v3631, %v3889
        %v4082 = vadd.f32 %v3632, %v3894
        %v4083 = vadd.f32 %v3633, %v3897
        %v4084 = vadd.f32 %v3634, %v3902
        %v4085 = vadd.f32 %v3635, %v3905
        %v4086 = vadd.f32 %v3636, %v3910
        %v4087 = vadd.f32 %v3637, %v3913
        %v4088 = vadd.f32 %v3638, %v3918
        %v4089 = vadd.f32 %v3639, %v3921
        %v4090 = vadd.f32 %v3640, %v3926
        %v4091 = vadd.f32 %v3641, %v3929
        %v4092 = vadd.f32 %v3642, %v3934
        %v4093 = vadd.f32 %v3643, %v3937
        %v4094 = vadd.f32 %v3644, %v3942
        %v4095 = vadd.f32 %v3645, %v3945
        %v4096 = vadd.f32 %v3646, %v3950
        %v4097 = vadd.f32 %v3647, %v3953
        %v4098 = vadd.f32 %v3648, %v3958
        %v4099 = vadd.f32 %v3649, %v3961
        %v4100 = vadd.f32 %v3650, %v3966
        %v4101 = vadd.f32 %v3651, %v3969
        %v4102 = vadd.f32 %v3652, %v3974
        %v4103 = vadd.f32 %v3653, %v3977
        %v4104 = vadd.f32 %v3654, %v3982
        %v4105 = vadd.f32 %v3655, %v3985
        %v4106 = vadd.f32 %v3656, %v3990
        %v4107 = vadd.f32 %v3657, %v3993
        %v4108 = vadd.f32 %v3658, %v3998
        %v4109 = vadd.f32 %v3659, %v4001
        %v4110 = vadd.f32 %v3660, %v4006
        %v4111 = vadd.f32 %v3661, %v4009
        %v4112 = vadd.f32 %v3662, %v4014
        %v4113 = vadd.f32 %v3663, %v4017
        %v4114 = vadd.f32 %v3664, %v4022
        %v4115 = vadd.f32 %v3665, %v4025
        %v4116 = vadd.f32 %v3666, %v4030
        %v4117 = vadd.f32 %v3667, %v4033
        %v4118 = vadd.f32 %v3668, %v4038
        %v4119 = vadd.f32 %v3669, %v4041
        %v4120 = vadd.f32 %v3670, %v4046
        %v4121 = vadd.f32 %v3671, %v4049
        %v4122 = vadd.f32 %v3672, %v4054
        %v4123 = vadd.f32 %v3673, %v4057
        %v4124 = vld [vmem:[%s1933 + $0x18] sm:$0xff]
        %v4125 = vld [vmem:[%s1933 + $0x20] sm:$0xff]
        %v4126 = vld [vmem:[%s1933 + $0x28] sm:$0xff]
        %v4127 = vld [vmem:[%s1933 + $0x30] sm:$0xff]
        %v4128 = vld [vmem:[%s1933 + $0x38] sm:$0xff]
        %v4129 = vld [vmem:[%s1933 + $0x40] sm:$0xff]
        %v4130 = vld [vmem:[%s1933 + $0x48] sm:$0xff]
        %v4131 = vld [vmem:[%s1933 + $0x50] sm:$0xff]
        %v4132 = vld [vmem:[%s1933 + $0x58] sm:$0xff]
        %v4133 = vld [vmem:[%s1933 + $0x60] sm:$0xff]
        %v4134 = vld [vmem:[%s1933 + $0x68] sm:$0xff]
        %v4135 = vld [vmem:[%s1933 + $0x70] sm:$0xff]
        %v4136 = vld [vmem:[%s1933 + $0x78] sm:$0xff]
        %v4137 = vld [vmem:[%s1933 + $0x80] sm:$0xff]
        %v4138 = vld [vmem:[%s1933 + $0x88] sm:$0xff]
        %v4139 = vld [vmem:[%s1933 + $0x90] sm:$0xff]
        %v4140 = vld [vmem:[%s1933 + $0x98] sm:$0xff]
        %v4141 = vld [vmem:[%s1933 + $0xa0] sm:$0xff]
        %v4142 = vld [vmem:[%s1933 + $0xa8] sm:$0xff]
        %v4143 = vld [vmem:[%s1933 + $0xb0] sm:$0xff]
        %v4144 = vld [vmem:[%s1933 + $0xb8] sm:$0xff]
        %v4145 = vld [vmem:[%s1933 + $0xc0] sm:$0xff]
        %v4146 = vld [vmem:[%s1933 + $0xc8] sm:$0xff]
        %v4147 = vld [vmem:[%s1933 + $0xd0] sm:$0xff]
        %v4148 = vld [vmem:[%s1933 + $0xd8] sm:$0xff]
        %v4149 = vld [vmem:[%s1933 + $0xe0] sm:$0xff]
        %v4150 = vld [vmem:[%s1933 + $0xe8] sm:$0xff]
        %v4151 = vld [vmem:[%s1933 + $0xf0] sm:$0xff]
        %v4152 = vld [vmem:[%s1933 + $0xf8] sm:$0xff]
        %v4153 = vld [vmem:[%s1933 + $0x100] sm:$0xff]
        %v4154 = vld [vmem:[%s1933 + $0x108] sm:$0xff]
        %v4155 = vld [vmem:[%s1933 + $0x110] sm:$0xff]
        %s4156 = scalar_lea.vmem [#allocation11], 256
        %v4157 = vld [vmem:[%s4156] sm:$0xf]
        %v4158 = vld [vmem:[%s4156 + $0x4] sm:$0xf]
        %v4159 = vld [vmem:[%s4156 + $0x8] sm:$0xf]
        %v4160 = vld [vmem:[%s4156 + $0xc] sm:$0xf]
        %v4161 = vld [vmem:[%s4156 + $0x10] sm:$0xf]
        %v4162 = vld [vmem:[%s4156 + $0x14] sm:$0xf]
        %v4163 = vld [vmem:[%s4156 + $0x18] sm:$0xf]
        %v4164 = vld [vmem:[%s4156 + $0x1c] sm:$0xf]
        %v4165 = vld [vmem:[%s4156 + $0x20] sm:$0xf]
        %v4166 = vld [vmem:[%s4156 + $0x24] sm:$0xf]
        %v4167 = vld [vmem:[%s4156 + $0x28] sm:$0xf]
        %v4168 = vld [vmem:[%s4156 + $0x2c] sm:$0xf]
        %v4169 = vld [vmem:[%s4156 + $0x30] sm:$0xf]
        %v4170 = vld [vmem:[%s4156 + $0x34] sm:$0xf]
        %v4171 = vld [vmem:[%s4156 + $0x38] sm:$0xf]
        %v4172 = vld [vmem:[%s4156 + $0x3c] sm:$0xf]
        %v4189 = vunpack.c.l.b16 %v4157
        %v4190 = vunpack.c.l.b16 %v4158
        %v4191 = vunpack.c.l.b16 %v4159
        %v4192 = vunpack.c.l.b16 %v4160
        %v4193 = vunpack.c.l.b16 %v4161
        %v4194 = vunpack.c.l.b16 %v4162
        %v4195 = vunpack.c.l.b16 %v4163
        %v4196 = vunpack.c.l.b16 %v4164
        %v4197 = vunpack.c.l.b16 %v4165
        %v4198 = vunpack.c.l.b16 %v4166
        %v4199 = vunpack.c.l.b16 %v4167
        %v4200 = vunpack.c.l.b16 %v4168
        %v4201 = vunpack.c.l.b16 %v4169
        %v4202 = vunpack.c.l.b16 %v4170
        %v4203 = vunpack.c.l.b16 %v4171
        %v4204 = vunpack.c.l.b16 %v4172
        %v4205 = vpack.c.b16 %v4190, %v4189
        %v4206 = vpack.c.b16 %v4192, %v4191
        %v4207 = vpack.c.b16 %v4194, %v4193
        %v4208 = vpack.c.b16 %v4196, %v4195
        %v4209 = vpack.c.b16 %v4198, %v4197
        %v4210 = vpack.c.b16 %v4200, %v4199
        %v4211 = vpack.c.b16 %v4202, %v4201
        %v4212 = vpack.c.b16 %v4204, %v4203
        %4221 = vmatprep.subr.bf16.mxu0 0
        %4222 = vmatpush1.bf16.msra.mxu0 %v4205
        %4223 = vmatprep.subr.bf16.mxu0 0
        %4224 = vmatpush1.bf16.msra.mxu0 %v4206
        %4225 = vmatprep.subr.bf16.mxu0 0
        %4226 = vmatpush1.bf16.msra.mxu0 %v4207
        %4227 = vmatprep.subr.bf16.mxu0 0
        %4228 = vmatpush1.bf16.msra.mxu0 %v4208
        %4229 = vmatprep.subr.bf16.mxu0 0
        %4230 = vmatpush1.bf16.msra.mxu0 %v4209
        %4231 = vmatprep.subr.bf16.mxu0 0
        %4232 = vmatpush1.bf16.msra.mxu0 %v4210
        %4233 = vmatprep.subr.bf16.mxu0 0
        %4234 = vmatpush1.bf16.msra.mxu0 %v4211
        %4235 = vmatprep.subr.bf16.mxu0 0
        %4236 = vmatpush1.bf16.msra.mxu0 %v4212
        %4237 = vmatprep.subr.bf16.mxu0 0
        %4238 = vmatpush1.bf16.msra.mxu0 0
        %4239 = vmatprep.subr.bf16.mxu0 0
        %4240 = vmatpush1.bf16.msra.mxu0 0
        %4241 = vmatprep.subr.bf16.mxu0 0
        %4242 = vmatpush1.bf16.msra.mxu0 0
        %4243 = vmatprep.subr.bf16.mxu0 0
        %4244 = vmatpush1.bf16.msra.mxu0 0
        %4245 = vmatprep.subr.bf16.mxu0 0
        %4246 = vmatpush1.bf16.msra.mxu0 0
        %4247 = vmatprep.subr.bf16.mxu0 0
        %4248 = vmatpush1.bf16.msra.mxu0 0
        %4249 = vmatprep.subr.bf16.mxu0 0
        %4250 = vmatpush1.bf16.msra.mxu0 0
        %4251 = vmatprep.subr.bf16.mxu0 0
        %4252 = vmatpush1.bf16.msra.mxu0 0
        %4253 = vmatprep.mubr.bf16.mxu0 0
        %4254 = vmatmul.mubr.bf16.gmra.mrb[0].mxu0 %v4124
        %v4255 = vpop.f32.mrb[0].mxu0
        %v4256 = vadd.f32 0.0, %v4255
        %v4257 = vpop.f32.mrb[0].mxu0
        %v4258 = vpop.f32.mrb[0].mxu0
        %v4259 = vadd.f32 0.0, %v4258
        %v4260 = vpop.f32.mrb[0].mxu0
        %4261 = vmatprep.mubr.bf16.mxu0 0
        %4262 = vmatmul.mubr.bf16.gmra.mrb[0].mxu0 %v4125
        %v4263 = vpop.f32.mrb[0].mxu0
        %v4264 = vadd.f32 0.0, %v4263
        %v4265 = vpop.f32.mrb[0].mxu0
        %v4266 = vpop.f32.mrb[0].mxu0
        %v4267 = vadd.f32 0.0, %v4266
        %v4268 = vpop.f32.mrb[0].mxu0
        %4269 = vmatprep.mubr.bf16.mxu0 0
        %4270 = vmatmul.mubr.bf16.gmra.mrb[0].mxu0 %v4126
        %v4271 = vpop.f32.mrb[0].mxu0
        %v4272 = vadd.f32 0.0, %v4271
        %v4273 = vpop.f32.mrb[0].mxu0
        %v4274 = vpop.f32.mrb[0].mxu0
        %v4275 = vadd.f32 0.0, %v4274
        %v4276 = vpop.f32.mrb[0].mxu0
        %4277 = vmatprep.mubr.bf16.mxu0 0
        %4278 = vmatmul.mubr.bf16.gmra.mrb[0].mxu0 %v4127
        %v4279 = vpop.f32.mrb[0].mxu0
        %v4280 = vadd.f32 0.0, %v4279
        %v4281 = vpop.f32.mrb[0].mxu0
        %v4282 = vpop.f32.mrb[0].mxu0
        %v4283 = vadd.f32 0.0, %v4282
        %v4284 = vpop.f32.mrb[0].mxu0
        %4285 = vmatprep.mubr.bf16.mxu0 0
        %4286 = vmatmul.mubr.bf16.gmra.mrb[0].mxu0 %v4128
        %v4287 = vpop.f32.mrb[0].mxu0
        %v4288 = vadd.f32 0.0, %v4287
        %v4289 = vpop.f32.mrb[0].mxu0
        %v4290 = vpop.f32.mrb[0].mxu0
        %v4291 = vadd.f32 0.0, %v4290
        %v4292 = vpop.f32.mrb[0].mxu0
        %4293 = vmatprep.mubr.bf16.mxu0 0
        %4294 = vmatmul.mubr.bf16.gmra.mrb[0].mxu0 %v4129
        %v4295 = vpop.f32.mrb[0].mxu0
        %v4296 = vadd.f32 0.0, %v4295
        %v4297 = vpop.f32.mrb[0].mxu0
        %v4298 = vpop.f32.mrb[0].mxu0
        %v4299 = vadd.f32 0.0, %v4298
        %v4300 = vpop.f32.mrb[0].mxu0
        %4301 = vmatprep.mubr.bf16.mxu0 0
        %4302 = vmatmul.mubr.bf16.gmra.mrb[0].mxu0 %v4130
        %v4303 = vpop.f32.mrb[0].mxu0
        %v4304 = vadd.f32 0.0, %v4303
        %v4305 = vpop.f32.mrb[0].mxu0
        %v4306 = vpop.f32.mrb[0].mxu0
        %v4307 = vadd.f32 0.0, %v4306
        %v4308 = vpop.f32.mrb[0].mxu0
        %4309 = vmatprep.mubr.bf16.mxu0 0
        %4310 = vmatmul.mubr.bf16.gmra.mrb[0].mxu0 %v4131
        %v4311 = vpop.f32.mrb[0].mxu0
        %v4312 = vadd.f32 0.0, %v4311
        %v4313 = vpop.f32.mrb[0].mxu0
        %v4314 = vpop.f32.mrb[0].mxu0
        %v4315 = vadd.f32 0.0, %v4314
        %v4316 = vpop.f32.mrb[0].mxu0
        %4317 = vmatprep.mubr.bf16.mxu0 0
        %4318 = vmatmul.mubr.bf16.gmra.mrb[0].mxu0 %v4132
        %v4319 = vpop.f32.mrb[0].mxu0
        %v4320 = vadd.f32 0.0, %v4319
        %v4321 = vpop.f32.mrb[0].mxu0
        %v4322 = vpop.f32.mrb[0].mxu0
        %v4323 = vadd.f32 0.0, %v4322
        %v4324 = vpop.f32.mrb[0].mxu0
        %4325 = vmatprep.mubr.bf16.mxu0 0
        %4326 = vmatmul.mubr.bf16.gmra.mrb[0].mxu0 %v4133
        %v4327 = vpop.f32.mrb[0].mxu0
        %v4328 = vadd.f32 0.0, %v4327
        %v4329 = vpop.f32.mrb[0].mxu0
        %v4330 = vpop.f32.mrb[0].mxu0
        %v4331 = vadd.f32 0.0, %v4330
        %v4332 = vpop.f32.mrb[0].mxu0
        %4333 = vmatprep.mubr.bf16.mxu0 0
        %4334 = vmatmul.mubr.bf16.gmra.mrb[0].mxu0 %v4134
        %v4335 = vpop.f32.mrb[0].mxu0
        %v4336 = vadd.f32 0.0, %v4335
        %v4337 = vpop.f32.mrb[0].mxu0
        %v4338 = vpop.f32.mrb[0].mxu0
        %v4339 = vadd.f32 0.0, %v4338
        %v4340 = vpop.f32.mrb[0].mxu0
        %4341 = vmatprep.mubr.bf16.mxu0 0
        %4342 = vmatmul.mubr.bf16.gmra.mrb[0].mxu0 %v4135
        %v4343 = vpop.f32.mrb[0].mxu0
        %v4344 = vadd.f32 0.0, %v4343
        %v4345 = vpop.f32.mrb[0].mxu0
        %v4346 = vpop.f32.mrb[0].mxu0
        %v4347 = vadd.f32 0.0, %v4346
        %v4348 = vpop.f32.mrb[0].mxu0
        %4349 = vmatprep.mubr.bf16.mxu0 0
        %4350 = vmatmul.mubr.bf16.gmra.mrb[0].mxu0 %v4136
        %v4351 = vpop.f32.mrb[0].mxu0
        %v4352 = vadd.f32 0.0, %v4351
        %v4353 = vpop.f32.mrb[0].mxu0
        %v4354 = vpop.f32.mrb[0].mxu0
        %v4355 = vadd.f32 0.0, %v4354
        %v4356 = vpop.f32.mrb[0].mxu0
        %4357 = vmatprep.mubr.bf16.mxu0 0
        %4358 = vmatmul.mubr.bf16.gmra.mrb[0].mxu0 %v4137
        %v4359 = vpop.f32.mrb[0].mxu0
        %v4360 = vadd.f32 0.0, %v4359
        %v4361 = vpop.f32.mrb[0].mxu0
        %v4362 = vpop.f32.mrb[0].mxu0
        %v4363 = vadd.f32 0.0, %v4362
        %v4364 = vpop.f32.mrb[0].mxu0
        %4365 = vmatprep.mubr.bf16.mxu0 0
        %4366 = vmatmul.mubr.bf16.gmra.mrb[0].mxu0 %v4138
        %v4367 = vpop.f32.mrb[0].mxu0
        %v4368 = vadd.f32 0.0, %v4367
        %v4369 = vpop.f32.mrb[0].mxu0
        %v4370 = vpop.f32.mrb[0].mxu0
        %v4371 = vadd.f32 0.0, %v4370
        %v4372 = vpop.f32.mrb[0].mxu0
        %4373 = vmatprep.mubr.bf16.mxu0 0
        %4374 = vmatmul.mubr.bf16.gmra.mrb[0].mxu0 %v4139
        %v4375 = vpop.f32.mrb[0].mxu0
        %v4376 = vadd.f32 0.0, %v4375
        %v4377 = vpop.f32.mrb[0].mxu0
        %v4378 = vpop.f32.mrb[0].mxu0
        %v4379 = vadd.f32 0.0, %v4378
        %v4380 = vpop.f32.mrb[0].mxu0
        %4381 = vmatprep.mubr.bf16.mxu0 0
        %4382 = vmatmul.mubr.bf16.gmra.mrb[0].mxu0 %v4140
        %v4383 = vpop.f32.mrb[0].mxu0
        %v4384 = vadd.f32 0.0, %v4383
        %v4385 = vpop.f32.mrb[0].mxu0
        %v4386 = vpop.f32.mrb[0].mxu0
        %v4387 = vadd.f32 0.0, %v4386
        %v4388 = vpop.f32.mrb[0].mxu0
        %4389 = vmatprep.mubr.bf16.mxu0 0
        %4390 = vmatmul.mubr.bf16.gmra.mrb[0].mxu0 %v4141
        %v4391 = vpop.f32.mrb[0].mxu0
        %v4392 = vadd.f32 0.0, %v4391
        %v4393 = vpop.f32.mrb[0].mxu0
        %v4394 = vpop.f32.mrb[0].mxu0
        %v4395 = vadd.f32 0.0, %v4394
        %v4396 = vpop.f32.mrb[0].mxu0
        %4397 = vmatprep.mubr.bf16.mxu0 0
        %4398 = vmatmul.mubr.bf16.gmra.mrb[0].mxu0 %v4142
        %v4399 = vpop.f32.mrb[0].mxu0
        %v4400 = vadd.f32 0.0, %v4399
        %v4401 = vpop.f32.mrb[0].mxu0
        %v4402 = vpop.f32.mrb[0].mxu0
        %v4403 = vadd.f32 0.0, %v4402
        %v4404 = vpop.f32.mrb[0].mxu0
        %4405 = vmatprep.mubr.bf16.mxu0 0
        %4406 = vmatmul.mubr.bf16.gmra.mrb[0].mxu0 %v4143
        %v4407 = vpop.f32.mrb[0].mxu0
        %v4408 = vadd.f32 0.0, %v4407
        %v4409 = vpop.f32.mrb[0].mxu0
        %v4410 = vpop.f32.mrb[0].mxu0
        %v4411 = vadd.f32 0.0, %v4410
        %v4412 = vpop.f32.mrb[0].mxu0
        %4413 = vmatprep.mubr.bf16.mxu0 0
        %4414 = vmatmul.mubr.bf16.gmra.mrb[0].mxu0 %v4144
        %v4415 = vpop.f32.mrb[0].mxu0
        %v4416 = vadd.f32 0.0, %v4415
        %v4417 = vpop.f32.mrb[0].mxu0
        %v4418 = vpop.f32.mrb[0].mxu0
        %v4419 = vadd.f32 0.0, %v4418
        %v4420 = vpop.f32.mrb[0].mxu0
        %4421 = vmatprep.mubr.bf16.mxu0 0
        %4422 = vmatmul.mubr.bf16.gmra.mrb[0].mxu0 %v4145
        %v4423 = vpop.f32.mrb[0].mxu0
        %v4424 = vadd.f32 0.0, %v4423
        %v4425 = vpop.f32.mrb[0].mxu0
        %v4426 = vpop.f32.mrb[0].mxu0
        %v4427 = vadd.f32 0.0, %v4426
        %v4428 = vpop.f32.mrb[0].mxu0
        %4429 = vmatprep.mubr.bf16.mxu0 0
        %4430 = vmatmul.mubr.bf16.gmra.mrb[0].mxu0 %v4146
        %v4431 = vpop.f32.mrb[0].mxu0
        %v4432 = vadd.f32 0.0, %v4431
        %v4433 = vpop.f32.mrb[0].mxu0
        %v4434 = vpop.f32.mrb[0].mxu0
        %v4435 = vadd.f32 0.0, %v4434
        %v4436 = vpop.f32.mrb[0].mxu0
        %4437 = vmatprep.mubr.bf16.mxu0 0
        %4438 = vmatmul.mubr.bf16.gmra.mrb[0].mxu0 %v4147
        %v4439 = vpop.f32.mrb[0].mxu0
        %v4440 = vadd.f32 0.0, %v4439
        %v4441 = vpop.f32.mrb[0].mxu0
        %v4442 = vpop.f32.mrb[0].mxu0
        %v4443 = vadd.f32 0.0, %v4442
        %v4444 = vpop.f32.mrb[0].mxu0
        %4445 = vmatprep.mubr.bf16.mxu0 0
        %4446 = vmatmul.mubr.bf16.gmra.mrb[0].mxu0 %v4148
        %v4447 = vpop.f32.mrb[0].mxu0
        %v4448 = vadd.f32 0.0, %v4447
        %v4449 = vpop.f32.mrb[0].mxu0
        %v4450 = vpop.f32.mrb[0].mxu0
        %v4451 = vadd.f32 0.0, %v4450
        %v4452 = vpop.f32.mrb[0].mxu0
        %4453 = vmatprep.mubr.bf16.mxu0 0
        %4454 = vmatmul.mubr.bf16.gmra.mrb[0].mxu0 %v4149
        %v4455 = vpop.f32.mrb[0].mxu0
        %v4456 = vadd.f32 0.0, %v4455
        %v4457 = vpop.f32.mrb[0].mxu0
        %v4458 = vpop.f32.mrb[0].mxu0
        %v4459 = vadd.f32 0.0, %v4458
        %v4460 = vpop.f32.mrb[0].mxu0
        %4461 = vmatprep.mubr.bf16.mxu0 0
        %4462 = vmatmul.mubr.bf16.gmra.mrb[0].mxu0 %v4150
        %v4463 = vpop.f32.mrb[0].mxu0
        %v4464 = vadd.f32 0.0, %v4463
        %v4465 = vpop.f32.mrb[0].mxu0
        %v4466 = vpop.f32.mrb[0].mxu0
        %v4467 = vadd.f32 0.0, %v4466
        %v4468 = vpop.f32.mrb[0].mxu0
        %4469 = vmatprep.mubr.bf16.mxu0 0
        %4470 = vmatmul.mubr.bf16.gmra.mrb[0].mxu0 %v4151
        %v4471 = vpop.f32.mrb[0].mxu0
        %v4472 = vadd.f32 0.0, %v4471
        %v4473 = vpop.f32.mrb[0].mxu0
        %v4474 = vpop.f32.mrb[0].mxu0
        %v4475 = vadd.f32 0.0, %v4474
        %v4476 = vpop.f32.mrb[0].mxu0
        %4477 = vmatprep.mubr.bf16.mxu0 0
        %4478 = vmatmul.mubr.bf16.gmra.mrb[0].mxu0 %v4152
        %v4479 = vpop.f32.mrb[0].mxu0
        %v4480 = vadd.f32 0.0, %v4479
        %v4481 = vpop.f32.mrb[0].mxu0
        %v4482 = vpop.f32.mrb[0].mxu0
        %v4483 = vadd.f32 0.0, %v4482
        %v4484 = vpop.f32.mrb[0].mxu0
        %4485 = vmatprep.mubr.bf16.mxu0 0
        %4486 = vmatmul.mubr.bf16.gmra.mrb[0].mxu0 %v4153
        %v4487 = vpop.f32.mrb[0].mxu0
        %v4488 = vadd.f32 0.0, %v4487
        %v4489 = vpop.f32.mrb[0].mxu0
        %v4490 = vpop.f32.mrb[0].mxu0
        %v4491 = vadd.f32 0.0, %v4490
        %v4492 = vpop.f32.mrb[0].mxu0
        %4493 = vmatprep.mubr.bf16.mxu0 0
        %4494 = vmatmul.mubr.bf16.gmra.mrb[0].mxu0 %v4154
        %v4495 = vpop.f32.mrb[0].mxu0
        %v4496 = vadd.f32 0.0, %v4495
        %v4497 = vpop.f32.mrb[0].mxu0
        %v4498 = vpop.f32.mrb[0].mxu0
        %v4499 = vadd.f32 0.0, %v4498
        %v4500 = vpop.f32.mrb[0].mxu0
        %4501 = vmatprep.mubr.bf16.mxu0 0
        %4502 = vmatmul.mubr.bf16.gmra.mrb[0].mxu0 %v4155
        %v4503 = vpop.f32.mrb[0].mxu0
        %v4504 = vadd.f32 0.0, %v4503
        %v4505 = vpop.f32.mrb[0].mxu0
        %v4506 = vpop.f32.mrb[0].mxu0
        %v4507 = vadd.f32 0.0, %v4506
        %v4508 = vpop.f32.mrb[0].mxu0
        %4509 = vdwg.mxu0
        %v4510 = vadd.f32 %v4060, %v4256
        %v4511 = vadd.f32 %v4061, %v4259
        %v4512 = vadd.f32 %v4062, %v4264
        %v4513 = vadd.f32 %v4063, %v4267
        %v4514 = vadd.f32 %v4064, %v4272
        %v4515 = vadd.f32 %v4065, %v4275
        %v4516 = vadd.f32 %v4066, %v4280
        %v4517 = vadd.f32 %v4067, %v4283
        %v4518 = vadd.f32 %v4068, %v4288
        %v4519 = vadd.f32 %v4069, %v4291
        %v4520 = vadd.f32 %v4070, %v4296
        %v4521 = vadd.f32 %v4071, %v4299
        %v4522 = vadd.f32 %v4072, %v4304
        %v4523 = vadd.f32 %v4073, %v4307
        %v4524 = vadd.f32 %v4074, %v4312
        %v4525 = vadd.f32 %v4075, %v4315
        %v4526 = vadd.f32 %v4076, %v4320
        %v4527 = vadd.f32 %v4077, %v4323
        %v4528 = vadd.f32 %v4078, %v4328
        %v4529 = vadd.f32 %v4079, %v4331
        %v4530 = vadd.f32 %v4080, %v4336
        %v4531 = vadd.f32 %v4081, %v4339
        %v4532 = vadd.f32 %v4082, %v4344
        %v4533 = vadd.f32 %v4083, %v4347
        %v4534 = vadd.f32 %v4084, %v4352
        %v4535 = vadd.f32 %v4085, %v4355
        %v4536 = vadd.f32 %v4086, %v4360
        %v4537 = vadd.f32 %v4087, %v4363
        %v4538 = vadd.f32 %v4088, %v4368
        %v4539 = vadd.f32 %v4089, %v4371
        %v4540 = vadd.f32 %v4090, %v4376
        %v4541 = vadd.f32 %v4091, %v4379
        %v4542 = vadd.f32 %v4092, %v4384
        %v4543 = vadd.f32 %v4093, %v4387
        %v4544 = vadd.f32 %v4094, %v4392
        %v4545 = vadd.f32 %v4095, %v4395
        %v4546 = vadd.f32 %v4096, %v4400
        %v4547 = vadd.f32 %v4097, %v4403
        %v4548 = vadd.f32 %v4098, %v4408
        %v4549 = vadd.f32 %v4099, %v4411
        %v4550 = vadd.f32 %v4100, %v4416
        %v4551 = vadd.f32 %v4101, %v4419
        %v4552 = vadd.f32 %v4102, %v4424
        %v4553 = vadd.f32 %v4103, %v4427
        %v4554 = vadd.f32 %v4104, %v4432
        %v4555 = vadd.f32 %v4105, %v4435
        %v4556 = vadd.f32 %v4106, %v4440
        %v4557 = vadd.f32 %v4107, %v4443
        %v4558 = vadd.f32 %v4108, %v4448
        %v4559 = vadd.f32 %v4109, %v4451
        %v4560 = vadd.f32 %v4110, %v4456
        %v4561 = vadd.f32 %v4111, %v4459
        %v4562 = vadd.f32 %v4112, %v4464
        %v4563 = vadd.f32 %v4113, %v4467
        %v4564 = vadd.f32 %v4114, %v4472
        %v4565 = vadd.f32 %v4115, %v4475
        %v4566 = vadd.f32 %v4116, %v4480
        %v4567 = vadd.f32 %v4117, %v4483
        %v4568 = vadd.f32 %v4118, %v4488
        %v4569 = vadd.f32 %v4119, %v4491
        %v4570 = vadd.f32 %v4120, %v4496
        %v4571 = vadd.f32 %v4121, %v4499
        %v4572 = vadd.f32 %v4122, %v4504
        %v4573 = vadd.f32 %v4123, %v4507
        %v4574 = vld [vmem:[%s2095 + $0x18] sm:$0xff]
        %v4575 = vld [vmem:[%s2095 + $0x20] sm:$0xff]
        %v4576 = vld [vmem:[%s2095 + $0x28] sm:$0xff]
        %v4577 = vld [vmem:[%s2095 + $0x30] sm:$0xff]
        %v4578 = vld [vmem:[%s2095 + $0x38] sm:$0xff]
        %v4579 = vld [vmem:[%s2095 + $0x40] sm:$0xff]
        %v4580 = vld [vmem:[%s2095 + $0x48] sm:$0xff]
        %v4581 = vld [vmem:[%s2095 + $0x50] sm:$0xff]
        %v4582 = vld [vmem:[%s2095 + $0x58] sm:$0xff]
        %v4583 = vld [vmem:[%s2095 + $0x60] sm:$0xff]
        %v4584 = vld [vmem:[%s2095 + $0x68] sm:$0xff]
        %v4585 = vld [vmem:[%s2095 + $0x70] sm:$0xff]
        %v4586 = vld [vmem:[%s2095 + $0x78] sm:$0xff]
        %v4587 = vld [vmem:[%s2095 + $0x80] sm:$0xff]
        %v4588 = vld [vmem:[%s2095 + $0x88] sm:$0xff]
        %v4589 = vld [vmem:[%s2095 + $0x90] sm:$0xff]
        %v4590 = vld [vmem:[%s2095 + $0x98] sm:$0xff]
        %v4591 = vld [vmem:[%s2095 + $0xa0] sm:$0xff]
        %v4592 = vld [vmem:[%s2095 + $0xa8] sm:$0xff]
        %v4593 = vld [vmem:[%s2095 + $0xb0] sm:$0xff]
        %v4594 = vld [vmem:[%s2095 + $0xb8] sm:$0xff]
        %v4595 = vld [vmem:[%s2095 + $0xc0] sm:$0xff]
        %v4596 = vld [vmem:[%s2095 + $0xc8] sm:$0xff]
        %v4597 = vld [vmem:[%s2095 + $0xd0] sm:$0xff]
        %v4598 = vld [vmem:[%s2095 + $0xd8] sm:$0xff]
        %v4599 = vld [vmem:[%s2095 + $0xe0] sm:$0xff]
        %v4600 = vld [vmem:[%s2095 + $0xe8] sm:$0xff]
        %v4601 = vld [vmem:[%s2095 + $0xf0] sm:$0xff]
        %v4602 = vld [vmem:[%s2095 + $0xf8] sm:$0xff]
        %v4603 = vld [vmem:[%s2095 + $0x100] sm:$0xff]
        %v4604 = vld [vmem:[%s2095 + $0x108] sm:$0xff]
        %v4605 = vld [vmem:[%s2095 + $0x110] sm:$0xff]
        %s4606 = scalar_lea.vmem [#allocation11], 320
        %v4607 = vld [vmem:[%s4606] sm:$0xf]
        %v4608 = vld [vmem:[%s4606 + $0x4] sm:$0xf]
        %v4609 = vld [vmem:[%s4606 + $0x8] sm:$0xf]
        %v4610 = vld [vmem:[%s4606 + $0xc] sm:$0xf]
        %v4611 = vld [vmem:[%s4606 + $0x10] sm:$0xf]
        %v4612 = vld [vmem:[%s4606 + $0x14] sm:$0xf]
        %v4613 = vld [vmem:[%s4606 + $0x18] sm:$0xf]
        %v4614 = vld [vmem:[%s4606 + $0x1c] sm:$0xf]
        %v4615 = vld [vmem:[%s4606 + $0x20] sm:$0xf]
        %v4616 = vld [vmem:[%s4606 + $0x24] sm:$0xf]
        %v4617 = vld [vmem:[%s4606 + $0x28] sm:$0xf]
        %v4618 = vld [vmem:[%s4606 + $0x2c] sm:$0xf]
        %v4619 = vld [vmem:[%s4606 + $0x30] sm:$0xf]
        %v4620 = vld [vmem:[%s4606 + $0x34] sm:$0xf]
        %v4621 = vld [vmem:[%s4606 + $0x38] sm:$0xf]
        %v4622 = vld [vmem:[%s4606 + $0x3c] sm:$0xf]
        %v4639 = vunpack.c.l.b16 %v4607
        %v4640 = vunpack.c.l.b16 %v4608
        %v4641 = vunpack.c.l.b16 %v4609
        %v4642 = vunpack.c.l.b16 %v4610
        %v4643 = vunpack.c.l.b16 %v4611
        %v4644 = vunpack.c.l.b16 %v4612
        %v4645 = vunpack.c.l.b16 %v4613
        %v4646 = vunpack.c.l.b16 %v4614
        %v4647 = vunpack.c.l.b16 %v4615
        %v4648 = vunpack.c.l.b16 %v4616
        %v4649 = vunpack.c.l.b16 %v4617
        %v4650 = vunpack.c.l.b16 %v4618
        %v4651 = vunpack.c.l.b16 %v4619
        %v4652 = vunpack.c.l.b16 %v4620
        %v4653 = vunpack.c.l.b16 %v4621
        %v4654 = vunpack.c.l.b16 %v4622
        %v4655 = vpack.c.b16 %v4640, %v4639
        %v4656 = vpack.c.b16 %v4642, %v4641
        %v4657 = vpack.c.b16 %v4644, %v4643
        %v4658 = vpack.c.b16 %v4646, %v4645
        %v4659 = vpack.c.b16 %v4648, %v4647
        %v4660 = vpack.c.b16 %v4650, %v4649
        %v4661 = vpack.c.b16 %v4652, %v4651
        %v4662 = vpack.c.b16 %v4654, %v4653
        %4671 = vmatprep.subr.bf16.mxu0 0
        %4672 = vmatpush1.bf16.msra.mxu0 %v4655
        %4673 = vmatprep.subr.bf16.mxu0 0
        %4674 = vmatpush1.bf16.msra.mxu0 %v4656
        %4675 = vmatprep.subr.bf16.mxu0 0
        %4676 = vmatpush1.bf16.msra.mxu0 %v4657
        %4677 = vmatprep.subr.bf16.mxu0 0
        %4678 = vmatpush1.bf16.msra.mxu0 %v4658
        %4679 = vmatprep.subr.bf16.mxu0 0
        %4680 = vmatpush1.bf16.msra.mxu0 %v4659
        %4681 = vmatprep.subr.bf16.mxu0 0
        %4682 = vmatpush1.bf16.msra.mxu0 %v4660
        %4683 = vmatprep.subr.bf16.mxu0 0
        %4684 = vmatpush1.bf16.msra.mxu0 %v4661
        %4685 = vmatprep.subr.bf16.mxu0 0
        %4686 = vmatpush1.bf16.msra.mxu0 %v4662
        %4687 = vmatprep.subr.bf16.mxu0 0
        %4688 = vmatpush1.bf16.msra.mxu0 0
        %4689 = vmatprep.subr.bf16.mxu0 0
        %4690 = vmatpush1.bf16.msra.mxu0 0
        %4691 = vmatprep.subr.bf16.mxu0 0
        %4692 = vmatpush1.bf16.msra.mxu0 0
        %4693 = vmatprep.subr.bf16.mxu0 0
        %4694 = vmatpush1.bf16.msra.mxu0 0
        %4695 = vmatprep.subr.bf16.mxu0 0
        %4696 = vmatpush1.bf16.msra.mxu0 0
        %4697 = vmatprep.subr.bf16.mxu0 0
        %4698 = vmatpush1.bf16.msra.mxu0 0
        %4699 = vmatprep.subr.bf16.mxu0 0
        %4700 = vmatpush1.bf16.msra.mxu0 0
        %4701 = vmatprep.subr.bf16.mxu0 0
        %4702 = vmatpush1.bf16.msra.mxu0 0
        %4703 = vmatprep.mubr.bf16.mxu0 0
        %4704 = vmatmul.mubr.bf16.gmra.mrb[0].mxu0 %v4574
        %v4705 = vpop.f32.mrb[0].mxu0
        %v4706 = vadd.f32 0.0, %v4705
        %v4707 = vpop.f32.mrb[0].mxu0
        %v4708 = vpop.f32.mrb[0].mxu0
        %v4709 = vadd.f32 0.0, %v4708
        %v4710 = vpop.f32.mrb[0].mxu0
        %4711 = vmatprep.mubr.bf16.mxu0 0
        %4712 = vmatmul.mubr.bf16.gmra.mrb[0].mxu0 %v4575
        %v4713 = vpop.f32.mrb[0].mxu0
        %v4714 = vadd.f32 0.0, %v4713
        %v4715 = vpop.f32.mrb[0].mxu0
        %v4716 = vpop.f32.mrb[0].mxu0
        %v4717 = vadd.f32 0.0, %v4716
        %v4718 = vpop.f32.mrb[0].mxu0
        %4719 = vmatprep.mubr.bf16.mxu0 0
        %4720 = vmatmul.mubr.bf16.gmra.mrb[0].mxu0 %v4576
        %v4721 = vpop.f32.mrb[0].mxu0
        %v4722 = vadd.f32 0.0, %v4721
        %v4723 = vpop.f32.mrb[0].mxu0
        %v4724 = vpop.f32.mrb[0].mxu0
        %v4725 = vadd.f32 0.0, %v4724
        %v4726 = vpop.f32.mrb[0].mxu0
        %4727 = vmatprep.mubr.bf16.mxu0 0
        %4728 = vmatmul.mubr.bf16.gmra.mrb[0].mxu0 %v4577
        %v4729 = vpop.f32.mrb[0].mxu0
        %v4730 = vadd.f32 0.0, %v4729
        %v4731 = vpop.f32.mrb[0].mxu0
        %v4732 = vpop.f32.mrb[0].mxu0
        %v4733 = vadd.f32 0.0, %v4732
        %v4734 = vpop.f32.mrb[0].mxu0
        %4735 = vmatprep.mubr.bf16.mxu0 0
        %4736 = vmatmul.mubr.bf16.gmra.mrb[0].mxu0 %v4578
        %v4737 = vpop.f32.mrb[0].mxu0
        %v4738 = vadd.f32 0.0, %v4737
        %v4739 = vpop.f32.mrb[0].mxu0
        %v4740 = vpop.f32.mrb[0].mxu0
        %v4741 = vadd.f32 0.0, %v4740
        %v4742 = vpop.f32.mrb[0].mxu0
        %4743 = vmatprep.mubr.bf16.mxu0 0
        %4744 = vmatmul.mubr.bf16.gmra.mrb[0].mxu0 %v4579
        %v4745 = vpop.f32.mrb[0].mxu0
        %v4746 = vadd.f32 0.0, %v4745
        %v4747 = vpop.f32.mrb[0].mxu0
        %v4748 = vpop.f32.mrb[0].mxu0
        %v4749 = vadd.f32 0.0, %v4748
        %v4750 = vpop.f32.mrb[0].mxu0
        %4751 = vmatprep.mubr.bf16.mxu0 0
        %4752 = vmatmul.mubr.bf16.gmra.mrb[0].mxu0 %v4580
        %v4753 = vpop.f32.mrb[0].mxu0
        %v4754 = vadd.f32 0.0, %v4753
        %v4755 = vpop.f32.mrb[0].mxu0
        %v4756 = vpop.f32.mrb[0].mxu0
        %v4757 = vadd.f32 0.0, %v4756
        %v4758 = vpop.f32.mrb[0].mxu0
        %4759 = vmatprep.mubr.bf16.mxu0 0
        %4760 = vmatmul.mubr.bf16.gmra.mrb[0].mxu0 %v4581
        %v4761 = vpop.f32.mrb[0].mxu0
        %v4762 = vadd.f32 0.0, %v4761
        %v4763 = vpop.f32.mrb[0].mxu0
        %v4764 = vpop.f32.mrb[0].mxu0
        %v4765 = vadd.f32 0.0, %v4764
        %v4766 = vpop.f32.mrb[0].mxu0
        %4767 = vmatprep.mubr.bf16.mxu0 0
        %4768 = vmatmul.mubr.bf16.gmra.mrb[0].mxu0 %v4582
        %v4769 = vpop.f32.mrb[0].mxu0
        %v4770 = vadd.f32 0.0, %v4769
        %v4771 = vpop.f32.mrb[0].mxu0
        %v4772 = vpop.f32.mrb[0].mxu0
        %v4773 = vadd.f32 0.0, %v4772
        %v4774 = vpop.f32.mrb[0].mxu0
        %4775 = vmatprep.mubr.bf16.mxu0 0
        %4776 = vmatmul.mubr.bf16.gmra.mrb[0].mxu0 %v4583
        %v4777 = vpop.f32.mrb[0].mxu0
        %v4778 = vadd.f32 0.0, %v4777
        %v4779 = vpop.f32.mrb[0].mxu0
        %v4780 = vpop.f32.mrb[0].mxu0
        %v4781 = vadd.f32 0.0, %v4780
        %v4782 = vpop.f32.mrb[0].mxu0
        %4783 = vmatprep.mubr.bf16.mxu0 0
        %4784 = vmatmul.mubr.bf16.gmra.mrb[0].mxu0 %v4584
        %v4785 = vpop.f32.mrb[0].mxu0
        %v4786 = vadd.f32 0.0, %v4785
        %v4787 = vpop.f32.mrb[0].mxu0
        %v4788 = vpop.f32.mrb[0].mxu0
        %v4789 = vadd.f32 0.0, %v4788
        %v4790 = vpop.f32.mrb[0].mxu0
        %4791 = vmatprep.mubr.bf16.mxu0 0
        %4792 = vmatmul.mubr.bf16.gmra.mrb[0].mxu0 %v4585
        %v4793 = vpop.f32.mrb[0].mxu0
        %v4794 = vadd.f32 0.0, %v4793
        %v4795 = vpop.f32.mrb[0].mxu0
        %v4796 = vpop.f32.mrb[0].mxu0
        %v4797 = vadd.f32 0.0, %v4796
        %v4798 = vpop.f32.mrb[0].mxu0
        %4799 = vmatprep.mubr.bf16.mxu0 0
        %4800 = vmatmul.mubr.bf16.gmra.mrb[0].mxu0 %v4586
        %v4801 = vpop.f32.mrb[0].mxu0
        %v4802 = vadd.f32 0.0, %v4801
        %v4803 = vpop.f32.mrb[0].mxu0
        %v4804 = vpop.f32.mrb[0].mxu0
        %v4805 = vadd.f32 0.0, %v4804
        %v4806 = vpop.f32.mrb[0].mxu0
        %4807 = vmatprep.mubr.bf16.mxu0 0
        %4808 = vmatmul.mubr.bf16.gmra.mrb[0].mxu0 %v4587
        %v4809 = vpop.f32.mrb[0].mxu0
        %v4810 = vadd.f32 0.0, %v4809
        %v4811 = vpop.f32.mrb[0].mxu0
        %v4812 = vpop.f32.mrb[0].mxu0
        %v4813 = vadd.f32 0.0, %v4812
        %v4814 = vpop.f32.mrb[0].mxu0
        %4815 = vmatprep.mubr.bf16.mxu0 0
        %4816 = vmatmul.mubr.bf16.gmra.mrb[0].mxu0 %v4588
        %v4817 = vpop.f32.mrb[0].mxu0
        %v4818 = vadd.f32 0.0, %v4817
        %v4819 = vpop.f32.mrb[0].mxu0
        %v4820 = vpop.f32.mrb[0].mxu0
        %v4821 = vadd.f32 0.0, %v4820
        %v4822 = vpop.f32.mrb[0].mxu0
        %4823 = vmatprep.mubr.bf16.mxu0 0
        %4824 = vmatmul.mubr.bf16.gmra.mrb[0].mxu0 %v4589
        %v4825 = vpop.f32.mrb[0].mxu0
        %v4826 = vadd.f32 0.0, %v4825
        %v4827 = vpop.f32.mrb[0].mxu0
        %v4828 = vpop.f32.mrb[0].mxu0
        %v4829 = vadd.f32 0.0, %v4828
        %v4830 = vpop.f32.mrb[0].mxu0
        %4831 = vmatprep.mubr.bf16.mxu0 0
        %4832 = vmatmul.mubr.bf16.gmra.mrb[0].mxu0 %v4590
        %v4833 = vpop.f32.mrb[0].mxu0
        %v4834 = vadd.f32 0.0, %v4833
        %v4835 = vpop.f32.mrb[0].mxu0
        %v4836 = vpop.f32.mrb[0].mxu0
        %v4837 = vadd.f32 0.0, %v4836
        %v4838 = vpop.f32.mrb[0].mxu0
        %4839 = vmatprep.mubr.bf16.mxu0 0
        %4840 = vmatmul.mubr.bf16.gmra.mrb[0].mxu0 %v4591
        %v4841 = vpop.f32.mrb[0].mxu0
        %v4842 = vadd.f32 0.0, %v4841
        %v4843 = vpop.f32.mrb[0].mxu0
        %v4844 = vpop.f32.mrb[0].mxu0
        %v4845 = vadd.f32 0.0, %v4844
        %v4846 = vpop.f32.mrb[0].mxu0
        %4847 = vmatprep.mubr.bf16.mxu0 0
        %4848 = vmatmul.mubr.bf16.gmra.mrb[0].mxu0 %v4592
        %v4849 = vpop.f32.mrb[0].mxu0
        %v4850 = vadd.f32 0.0, %v4849
        %v4851 = vpop.f32.mrb[0].mxu0
        %v4852 = vpop.f32.mrb[0].mxu0
        %v4853 = vadd.f32 0.0, %v4852
        %v4854 = vpop.f32.mrb[0].mxu0
        %4855 = vmatprep.mubr.bf16.mxu0 0
        %4856 = vmatmul.mubr.bf16.gmra.mrb[0].mxu0 %v4593
        %v4857 = vpop.f32.mrb[0].mxu0
        %v4858 = vadd.f32 0.0, %v4857
        %v4859 = vpop.f32.mrb[0].mxu0
        %v4860 = vpop.f32.mrb[0].mxu0
        %v4861 = vadd.f32 0.0, %v4860
        %v4862 = vpop.f32.mrb[0].mxu0
        %4863 = vmatprep.mubr.bf16.mxu0 0
        %4864 = vmatmul.mubr.bf16.gmra.mrb[0].mxu0 %v4594
        %v4865 = vpop.f32.mrb[0].mxu0
        %v4866 = vadd.f32 0.0, %v4865
        %v4867 = vpop.f32.mrb[0].mxu0
        %v4868 = vpop.f32.mrb[0].mxu0
        %v4869 = vadd.f32 0.0, %v4868
        %v4870 = vpop.f32.mrb[0].mxu0
        %4871 = vmatprep.mubr.bf16.mxu0 0
        %4872 = vmatmul.mubr.bf16.gmra.mrb[0].mxu0 %v4595
        %v4873 = vpop.f32.mrb[0].mxu0
        %v4874 = vadd.f32 0.0, %v4873
        %v4875 = vpop.f32.mrb[0].mxu0
        %v4876 = vpop.f32.mrb[0].mxu0
        %v4877 = vadd.f32 0.0, %v4876
        %v4878 = vpop.f32.mrb[0].mxu0
        %4879 = vmatprep.mubr.bf16.mxu0 0
        %4880 = vmatmul.mubr.bf16.gmra.mrb[0].mxu0 %v4596
        %v4881 = vpop.f32.mrb[0].mxu0
        %v4882 = vadd.f32 0.0, %v4881
        %v4883 = vpop.f32.mrb[0].mxu0
        %v4884 = vpop.f32.mrb[0].mxu0
        %v4885 = vadd.f32 0.0, %v4884
        %v4886 = vpop.f32.mrb[0].mxu0
        %4887 = vmatprep.mubr.bf16.mxu0 0
        %4888 = vmatmul.mubr.bf16.gmra.mrb[0].mxu0 %v4597
        %v4889 = vpop.f32.mrb[0].mxu0
        %v4890 = vadd.f32 0.0, %v4889
        %v4891 = vpop.f32.mrb[0].mxu0
        %v4892 = vpop.f32.mrb[0].mxu0
        %v4893 = vadd.f32 0.0, %v4892
        %v4894 = vpop.f32.mrb[0].mxu0
        %4895 = vmatprep.mubr.bf16.mxu0 0
        %4896 = vmatmul.mubr.bf16.gmra.mrb[0].mxu0 %v4598
        %v4897 = vpop.f32.mrb[0].mxu0
        %v4898 = vadd.f32 0.0, %v4897
        %v4899 = vpop.f32.mrb[0].mxu0
        %v4900 = vpop.f32.mrb[0].mxu0
        %v4901 = vadd.f32 0.0, %v4900
        %v4902 = vpop.f32.mrb[0].mxu0
        %4903 = vmatprep.mubr.bf16.mxu0 0
        %4904 = vmatmul.mubr.bf16.gmra.mrb[0].mxu0 %v4599
        %v4905 = vpop.f32.mrb[0].mxu0
        %v4906 = vadd.f32 0.0, %v4905
        %v4907 = vpop.f32.mrb[0].mxu0
        %v4908 = vpop.f32.mrb[0].mxu0
        %v4909 = vadd.f32 0.0, %v4908
        %v4910 = vpop.f32.mrb[0].mxu0
        %4911 = vmatprep.mubr.bf16.mxu0 0
        %4912 = vmatmul.mubr.bf16.gmra.mrb[0].mxu0 %v4600
        %v4913 = vpop.f32.mrb[0].mxu0
        %v4914 = vadd.f32 0.0, %v4913
        %v4915 = vpop.f32.mrb[0].mxu0
        %v4916 = vpop.f32.mrb[0].mxu0
        %v4917 = vadd.f32 0.0, %v4916
        %v4918 = vpop.f32.mrb[0].mxu0
        %4919 = vmatprep.mubr.bf16.mxu0 0
        %4920 = vmatmul.mubr.bf16.gmra.mrb[0].mxu0 %v4601
        %v4921 = vpop.f32.mrb[0].mxu0
        %v4922 = vadd.f32 0.0, %v4921
        %v4923 = vpop.f32.mrb[0].mxu0
        %v4924 = vpop.f32.mrb[0].mxu0
        %v4925 = vadd.f32 0.0, %v4924
        %v4926 = vpop.f32.mrb[0].mxu0
        %4927 = vmatprep.mubr.bf16.mxu0 0
        %4928 = vmatmul.mubr.bf16.gmra.mrb[0].mxu0 %v4602
        %v4929 = vpop.f32.mrb[0].mxu0
        %v4930 = vadd.f32 0.0, %v4929
        %v4931 = vpop.f32.mrb[0].mxu0
        %v4932 = vpop.f32.mrb[0].mxu0
        %v4933 = vadd.f32 0.0, %v4932
        %v4934 = vpop.f32.mrb[0].mxu0
        %4935 = vmatprep.mubr.bf16.mxu0 0
        %4936 = vmatmul.mubr.bf16.gmra.mrb[0].mxu0 %v4603
        %v4937 = vpop.f32.mrb[0].mxu0
        %v4938 = vadd.f32 0.0, %v4937
        %v4939 = vpop.f32.mrb[0].mxu0
        %v4940 = vpop.f32.mrb[0].mxu0
        %v4941 = vadd.f32 0.0, %v4940
        %v4942 = vpop.f32.mrb[0].mxu0
        %4943 = vmatprep.mubr.bf16.mxu0 0
        %4944 = vmatmul.mubr.bf16.gmra.mrb[0].mxu0 %v4604
        %v4945 = vpop.f32.mrb[0].mxu0
        %v4946 = vadd.f32 0.0, %v4945
        %v4947 = vpop.f32.mrb[0].mxu0
        %v4948 = vpop.f32.mrb[0].mxu0
        %v4949 = vadd.f32 0.0, %v4948
        %v4950 = vpop.f32.mrb[0].mxu0
        %4951 = vmatprep.mubr.bf16.mxu0 0
        %4952 = vmatmul.mubr.bf16.gmra.mrb[0].mxu0 %v4605
        %v4953 = vpop.f32.mrb[0].mxu0
        %v4954 = vadd.f32 0.0, %v4953
        %v4955 = vpop.f32.mrb[0].mxu0
        %v4956 = vpop.f32.mrb[0].mxu0
        %v4957 = vadd.f32 0.0, %v4956
        %v4958 = vpop.f32.mrb[0].mxu0
        %4959 = vdwg.mxu0
        %v4960 = vadd.f32 %v4510, %v4706
        %v4961 = vadd.f32 %v4511, %v4709
        %v4962 = vadd.f32 %v4512, %v4714
        %v4963 = vadd.f32 %v4513, %v4717
        %v4964 = vadd.f32 %v4514, %v4722
        %v4965 = vadd.f32 %v4515, %v4725
        %v4966 = vadd.f32 %v4516, %v4730
        %v4967 = vadd.f32 %v4517, %v4733
        %v4968 = vadd.f32 %v4518, %v4738
        %v4969 = vadd.f32 %v4519, %v4741
        %v4970 = vadd.f32 %v4520, %v4746
        %v4971 = vadd.f32 %v4521, %v4749
        %v4972 = vadd.f32 %v4522, %v4754
        %v4973 = vadd.f32 %v4523, %v4757
        %v4974 = vadd.f32 %v4524, %v4762
        %v4975 = vadd.f32 %v4525, %v4765
        %v4976 = vadd.f32 %v4526, %v4770
        %v4977 = vadd.f32 %v4527, %v4773
        %v4978 = vadd.f32 %v4528, %v4778
        %v4979 = vadd.f32 %v4529, %v4781
        %v4980 = vadd.f32 %v4530, %v4786
        %v4981 = vadd.f32 %v4531, %v4789
        %v4982 = vadd.f32 %v4532, %v4794
        %v4983 = vadd.f32 %v4533, %v4797
        %v4984 = vadd.f32 %v4534, %v4802
        %v4985 = vadd.f32 %v4535, %v4805
        %v4986 = vadd.f32 %v4536, %v4810
        %v4987 = vadd.f32 %v4537, %v4813
        %v4988 = vadd.f32 %v4538, %v4818
        %v4989 = vadd.f32 %v4539, %v4821
        %v4990 = vadd.f32 %v4540, %v4826
        %v4991 = vadd.f32 %v4541, %v4829
        %v4992 = vadd.f32 %v4542, %v4834
        %v4993 = vadd.f32 %v4543, %v4837
        %v4994 = vadd.f32 %v4544, %v4842
        %v4995 = vadd.f32 %v4545, %v4845
        %v4996 = vadd.f32 %v4546, %v4850
        %v4997 = vadd.f32 %v4547, %v4853
        %v4998 = vadd.f32 %v4548, %v4858
        %v4999 = vadd.f32 %v4549, %v4861
        %v5000 = vadd.f32 %v4550, %v4866
        %v5001 = vadd.f32 %v4551, %v4869
        %v5002 = vadd.f32 %v4552, %v4874
        %v5003 = vadd.f32 %v4553, %v4877
        %v5004 = vadd.f32 %v4554, %v4882
        %v5005 = vadd.f32 %v4555, %v4885
        %v5006 = vadd.f32 %v4556, %v4890
        %v5007 = vadd.f32 %v4557, %v4893
        %v5008 = vadd.f32 %v4558, %v4898
        %v5009 = vadd.f32 %v4559, %v4901
        %v5010 = vadd.f32 %v4560, %v4906
        %v5011 = vadd.f32 %v4561, %v4909
        %v5012 = vadd.f32 %v4562, %v4914
        %v5013 = vadd.f32 %v4563, %v4917
        %v5014 = vadd.f32 %v4564, %v4922
        %v5015 = vadd.f32 %v4565, %v4925
        %v5016 = vadd.f32 %v4566, %v4930
        %v5017 = vadd.f32 %v4567, %v4933
        %v5018 = vadd.f32 %v4568, %v4938
        %v5019 = vadd.f32 %v4569, %v4941
        %v5020 = vadd.f32 %v4570, %v4946
        %v5021 = vadd.f32 %v4571, %v4949
        %v5022 = vadd.f32 %v4572, %v4954
        %v5023 = vadd.f32 %v4573, %v4957
        %v5024 = vld [vmem:[#allocation2 + $0x28] sm:$0xff]
        %v5025 = vld [vmem:[#allocation2 + $0x30] sm:$0xff]
        %v5026 = vld [vmem:[#allocation2 + $0x38] sm:$0xff]
        %v5027 = vld [vmem:[#allocation2 + $0x40] sm:$0xff]
        %v5028 = vld [vmem:[#allocation2 + $0x48] sm:$0xff]
        %v5029 = vld [vmem:[#allocation2 + $0x50] sm:$0xff]
        %v5030 = vld [vmem:[#allocation2 + $0x58] sm:$0xff]
        %v5031 = vld [vmem:[#allocation2 + $0x60] sm:$0xff]
        %v5032 = vld [vmem:[#allocation2 + $0x68] sm:$0xff]
        %v5033 = vld [vmem:[#allocation2 + $0x70] sm:$0xff]
        %v5034 = vld [vmem:[#allocation2 + $0x78] sm:$0xff]
        %v5035 = vld [vmem:[#allocation2 + $0x80] sm:$0xff]
        %v5036 = vld [vmem:[#allocation2 + $0x88] sm:$0xff]
        %v5037 = vld [vmem:[#allocation2 + $0x90] sm:$0xff]
        %v5038 = vld [vmem:[#allocation2 + $0x98] sm:$0xff]
        %v5039 = vld [vmem:[#allocation2 + $0xa0] sm:$0xff]
        %v5040 = vld [vmem:[#allocation2 + $0xa8] sm:$0xff]
        %v5041 = vld [vmem:[#allocation2 + $0xb0] sm:$0xff]
        %v5042 = vld [vmem:[#allocation2 + $0xb8] sm:$0xff]
        %v5043 = vld [vmem:[#allocation2 + $0xc0] sm:$0xff]
        %v5044 = vld [vmem:[#allocation2 + $0xc8] sm:$0xff]
        %v5045 = vld [vmem:[#allocation2 + $0xd0] sm:$0xff]
        %v5046 = vld [vmem:[#allocation2 + $0xd8] sm:$0xff]
        %v5047 = vld [vmem:[#allocation2 + $0xe0] sm:$0xff]
        %v5048 = vld [vmem:[#allocation2 + $0xe8] sm:$0xff]
        %v5049 = vld [vmem:[#allocation2 + $0xf0] sm:$0xff]
        %v5050 = vld [vmem:[#allocation2 + $0xf8] sm:$0xff]
        %v5051 = vld [vmem:[#allocation2 + $0x100] sm:$0xff]
        %v5052 = vld [vmem:[#allocation2 + $0x108] sm:$0xff]
        %v5053 = vld [vmem:[#allocation2 + $0x110] sm:$0xff]
        %v5054 = vld [vmem:[#allocation2 + $0x118] sm:$0xff]
        %v5055 = vld [vmem:[#allocation2 + $0x120] sm:$0xff]
        %s5056 = scalar_lea.vmem [#allocation11], 384
        %v5057 = vld [vmem:[%s5056] sm:$0xf]
        %v5058 = vld [vmem:[%s5056 + $0x4] sm:$0xf]
        %v5059 = vld [vmem:[%s5056 + $0x8] sm:$0xf]
        %v5060 = vld [vmem:[%s5056 + $0xc] sm:$0xf]
        %v5061 = vld [vmem:[%s5056 + $0x10] sm:$0xf]
        %v5062 = vld [vmem:[%s5056 + $0x14] sm:$0xf]
        %v5063 = vld [vmem:[%s5056 + $0x18] sm:$0xf]
        %v5064 = vld [vmem:[%s5056 + $0x1c] sm:$0xf]
        %v5065 = vld [vmem:[%s5056 + $0x20] sm:$0xf]
        %v5066 = vld [vmem:[%s5056 + $0x24] sm:$0xf]
        %v5067 = vld [vmem:[%s5056 + $0x28] sm:$0xf]
        %v5068 = vld [vmem:[%s5056 + $0x2c] sm:$0xf]
        %v5069 = vld [vmem:[%s5056 + $0x30] sm:$0xf]
        %v5070 = vld [vmem:[%s5056 + $0x34] sm:$0xf]
        %v5071 = vld [vmem:[%s5056 + $0x38] sm:$0xf]
        %v5072 = vld [vmem:[%s5056 + $0x3c] sm:$0xf]
        %v5089 = vunpack.c.l.b16 %v5057
        %v5090 = vunpack.c.l.b16 %v5058
        %v5091 = vunpack.c.l.b16 %v5059
        %v5092 = vunpack.c.l.b16 %v5060
        %v5093 = vunpack.c.l.b16 %v5061
        %v5094 = vunpack.c.l.b16 %v5062
        %v5095 = vunpack.c.l.b16 %v5063
        %v5096 = vunpack.c.l.b16 %v5064
        %v5097 = vunpack.c.l.b16 %v5065
        %v5098 = vunpack.c.l.b16 %v5066
        %v5099 = vunpack.c.l.b16 %v5067
        %v5100 = vunpack.c.l.b16 %v5068
        %v5101 = vunpack.c.l.b16 %v5069
        %v5102 = vunpack.c.l.b16 %v5070
        %v5103 = vunpack.c.l.b16 %v5071
        %v5104 = vunpack.c.l.b16 %v5072
        %v5105 = vpack.c.b16 %v5090, %v5089
        %v5106 = vpack.c.b16 %v5092, %v5091
        %v5107 = vpack.c.b16 %v5094, %v5093
        %v5108 = vpack.c.b16 %v5096, %v5095
        %v5109 = vpack.c.b16 %v5098, %v5097
        %v5110 = vpack.c.b16 %v5100, %v5099
        %v5111 = vpack.c.b16 %v5102, %v5101
        %v5112 = vpack.c.b16 %v5104, %v5103
        %5121 = vmatprep.subr.bf16.mxu0 0
        %5122 = vmatpush1.bf16.msra.mxu0 %v5105
        %5123 = vmatprep.subr.bf16.mxu0 0
        %5124 = vmatpush1.bf16.msra.mxu0 %v5106
        %5125 = vmatprep.subr.bf16.mxu0 0
        %5126 = vmatpush1.bf16.msra.mxu0 %v5107
        %5127 = vmatprep.subr.bf16.mxu0 0
        %5128 = vmatpush1.bf16.msra.mxu0 %v5108
        %5129 = vmatprep.subr.bf16.mxu0 0
        %5130 = vmatpush1.bf16.msra.mxu0 %v5109
        %5131 = vmatprep.subr.bf16.mxu0 0
        %5132 = vmatpush1.bf16.msra.mxu0 %v5110
        %5133 = vmatprep.subr.bf16.mxu0 0
        %5134 = vmatpush1.bf16.msra.mxu0 %v5111
        %5135 = vmatprep.subr.bf16.mxu0 0
        %5136 = vmatpush1.bf16.msra.mxu0 %v5112
        %5137 = vmatprep.subr.bf16.mxu0 0
        %5138 = vmatpush1.bf16.msra.mxu0 0
        %5139 = vmatprep.subr.bf16.mxu0 0
        %5140 = vmatpush1.bf16.msra.mxu0 0
        %5141 = vmatprep.subr.bf16.mxu0 0
        %5142 = vmatpush1.bf16.msra.mxu0 0
        %5143 = vmatprep.subr.bf16.mxu0 0
        %5144 = vmatpush1.bf16.msra.mxu0 0
        %5145 = vmatprep.subr.bf16.mxu0 0
        %5146 = vmatpush1.bf16.msra.mxu0 0
        %5147 = vmatprep.subr.bf16.mxu0 0
        %5148 = vmatpush1.bf16.msra.mxu0 0
        %5149 = vmatprep.subr.bf16.mxu0 0
        %5150 = vmatpush1.bf16.msra.mxu0 0
        %5151 = vmatprep.subr.bf16.mxu0 0
        %5152 = vmatpush1.bf16.msra.mxu0 0
        %5153 = vmatprep.mubr.bf16.mxu0 0
        %5154 = vmatmul.mubr.bf16.gmra.mrb[0].mxu0 %v5024
        %v5155 = vpop.f32.mrb[0].mxu0
        %v5156 = vadd.f32 0.0, %v5155
        %v5157 = vpop.f32.mrb[0].mxu0
        %v5158 = vpop.f32.mrb[0].mxu0
        %v5159 = vadd.f32 0.0, %v5158
        %v5160 = vpop.f32.mrb[0].mxu0
        %5161 = vmatprep.mubr.bf16.mxu0 0
        %5162 = vmatmul.mubr.bf16.gmra.mrb[0].mxu0 %v5025
        %v5163 = vpop.f32.mrb[0].mxu0
        %v5164 = vadd.f32 0.0, %v5163
        %v5165 = vpop.f32.mrb[0].mxu0
        %v5166 = vpop.f32.mrb[0].mxu0
        %v5167 = vadd.f32 0.0, %v5166
        %v5168 = vpop.f32.mrb[0].mxu0
        %5169 = vmatprep.mubr.bf16.mxu0 0
        %5170 = vmatmul.mubr.bf16.gmra.mrb[0].mxu0 %v5026
        %v5171 = vpop.f32.mrb[0].mxu0
        %v5172 = vadd.f32 0.0, %v5171
        %v5173 = vpop.f32.mrb[0].mxu0
        %v5174 = vpop.f32.mrb[0].mxu0
        %v5175 = vadd.f32 0.0, %v5174
        %v5176 = vpop.f32.mrb[0].mxu0
        %5177 = vmatprep.mubr.bf16.mxu0 0
        %5178 = vmatmul.mubr.bf16.gmra.mrb[0].mxu0 %v5027
        %v5179 = vpop.f32.mrb[0].mxu0
        %v5180 = vadd.f32 0.0, %v5179
        %v5181 = vpop.f32.mrb[0].mxu0
        %v5182 = vpop.f32.mrb[0].mxu0
        %v5183 = vadd.f32 0.0, %v5182
        %v5184 = vpop.f32.mrb[0].mxu0
        %5185 = vmatprep.mubr.bf16.mxu0 0
        %5186 = vmatmul.mubr.bf16.gmra.mrb[0].mxu0 %v5028
        %v5187 = vpop.f32.mrb[0].mxu0
        %v5188 = vadd.f32 0.0, %v5187
        %v5189 = vpop.f32.mrb[0].mxu0
        %v5190 = vpop.f32.mrb[0].mxu0
        %v5191 = vadd.f32 0.0, %v5190
        %v5192 = vpop.f32.mrb[0].mxu0
        %5193 = vmatprep.mubr.bf16.mxu0 0
        %5194 = vmatmul.mubr.bf16.gmra.mrb[0].mxu0 %v5029
        %v5195 = vpop.f32.mrb[0].mxu0
        %v5196 = vadd.f32 0.0, %v5195
        %v5197 = vpop.f32.mrb[0].mxu0
        %v5198 = vpop.f32.mrb[0].mxu0
        %v5199 = vadd.f32 0.0, %v5198
        %v5200 = vpop.f32.mrb[0].mxu0
        %5201 = vmatprep.mubr.bf16.mxu0 0
        %5202 = vmatmul.mubr.bf16.gmra.mrb[0].mxu0 %v5030
        %v5203 = vpop.f32.mrb[0].mxu0
        %v5204 = vadd.f32 0.0, %v5203
        %v5205 = vpop.f32.mrb[0].mxu0
        %v5206 = vpop.f32.mrb[0].mxu0
        %v5207 = vadd.f32 0.0, %v5206
        %v5208 = vpop.f32.mrb[0].mxu0
        %5209 = vmatprep.mubr.bf16.mxu0 0
        %5210 = vmatmul.mubr.bf16.gmra.mrb[0].mxu0 %v5031
        %v5211 = vpop.f32.mrb[0].mxu0
        %v5212 = vadd.f32 0.0, %v5211
        %v5213 = vpop.f32.mrb[0].mxu0
        %v5214 = vpop.f32.mrb[0].mxu0
        %v5215 = vadd.f32 0.0, %v5214
        %v5216 = vpop.f32.mrb[0].mxu0
        %5217 = vmatprep.mubr.bf16.mxu0 0
        %5218 = vmatmul.mubr.bf16.gmra.mrb[0].mxu0 %v5032
        %v5219 = vpop.f32.mrb[0].mxu0
        %v5220 = vadd.f32 0.0, %v5219
        %v5221 = vpop.f32.mrb[0].mxu0
        %v5222 = vpop.f32.mrb[0].mxu0
        %v5223 = vadd.f32 0.0, %v5222
        %v5224 = vpop.f32.mrb[0].mxu0
        %5225 = vmatprep.mubr.bf16.mxu0 0
        %5226 = vmatmul.mubr.bf16.gmra.mrb[0].mxu0 %v5033
        %v5227 = vpop.f32.mrb[0].mxu0
        %v5228 = vadd.f32 0.0, %v5227
        %v5229 = vpop.f32.mrb[0].mxu0
        %v5230 = vpop.f32.mrb[0].mxu0
        %v5231 = vadd.f32 0.0, %v5230
        %v5232 = vpop.f32.mrb[0].mxu0
        %5233 = vmatprep.mubr.bf16.mxu0 0
        %5234 = vmatmul.mubr.bf16.gmra.mrb[0].mxu0 %v5034
        %v5235 = vpop.f32.mrb[0].mxu0
        %v5236 = vadd.f32 0.0, %v5235
        %v5237 = vpop.f32.mrb[0].mxu0
        %v5238 = vpop.f32.mrb[0].mxu0
        %v5239 = vadd.f32 0.0, %v5238
        %v5240 = vpop.f32.mrb[0].mxu0
        %5241 = vmatprep.mubr.bf16.mxu0 0
        %5242 = vmatmul.mubr.bf16.gmra.mrb[0].mxu0 %v5035
        %v5243 = vpop.f32.mrb[0].mxu0
        %v5244 = vadd.f32 0.0, %v5243
        %v5245 = vpop.f32.mrb[0].mxu0
        %v5246 = vpop.f32.mrb[0].mxu0
        %v5247 = vadd.f32 0.0, %v5246
        %v5248 = vpop.f32.mrb[0].mxu0
        %5249 = vmatprep.mubr.bf16.mxu0 0
        %5250 = vmatmul.mubr.bf16.gmra.mrb[0].mxu0 %v5036
        %v5251 = vpop.f32.mrb[0].mxu0
        %v5252 = vadd.f32 0.0, %v5251
        %v5253 = vpop.f32.mrb[0].mxu0
        %v5254 = vpop.f32.mrb[0].mxu0
        %v5255 = vadd.f32 0.0, %v5254
        %v5256 = vpop.f32.mrb[0].mxu0
        %5257 = vmatprep.mubr.bf16.mxu0 0
        %5258 = vmatmul.mubr.bf16.gmra.mrb[0].mxu0 %v5037
        %v5259 = vpop.f32.mrb[0].mxu0
        %v5260 = vadd.f32 0.0, %v5259
        %v5261 = vpop.f32.mrb[0].mxu0
        %v5262 = vpop.f32.mrb[0].mxu0
        %v5263 = vadd.f32 0.0, %v5262
        %v5264 = vpop.f32.mrb[0].mxu0
        %5265 = vmatprep.mubr.bf16.mxu0 0
        %5266 = vmatmul.mubr.bf16.gmra.mrb[0].mxu0 %v5038
        %v5267 = vpop.f32.mrb[0].mxu0
        %v5268 = vadd.f32 0.0, %v5267
        %v5269 = vpop.f32.mrb[0].mxu0
        %v5270 = vpop.f32.mrb[0].mxu0
        %v5271 = vadd.f32 0.0, %v5270
        %v5272 = vpop.f32.mrb[0].mxu0
        %5273 = vmatprep.mubr.bf16.mxu0 0
        %5274 = vmatmul.mubr.bf16.gmra.mrb[0].mxu0 %v5039
        %v5275 = vpop.f32.mrb[0].mxu0
        %v5276 = vadd.f32 0.0, %v5275
        %v5277 = vpop.f32.mrb[0].mxu0
        %v5278 = vpop.f32.mrb[0].mxu0
        %v5279 = vadd.f32 0.0, %v5278
        %v5280 = vpop.f32.mrb[0].mxu0
        %5281 = vmatprep.mubr.bf16.mxu0 0
        %5282 = vmatmul.mubr.bf16.gmra.mrb[0].mxu0 %v5040
        %v5283 = vpop.f32.mrb[0].mxu0
        %v5284 = vadd.f32 0.0, %v5283
        %v5285 = vpop.f32.mrb[0].mxu0
        %v5286 = vpop.f32.mrb[0].mxu0
        %v5287 = vadd.f32 0.0, %v5286
        %v5288 = vpop.f32.mrb[0].mxu0
        %5289 = vmatprep.mubr.bf16.mxu0 0
        %5290 = vmatmul.mubr.bf16.gmra.mrb[0].mxu0 %v5041
        %v5291 = vpop.f32.mrb[0].mxu0
        %v5292 = vadd.f32 0.0, %v5291
        %v5293 = vpop.f32.mrb[0].mxu0
        %v5294 = vpop.f32.mrb[0].mxu0
        %v5295 = vadd.f32 0.0, %v5294
        %v5296 = vpop.f32.mrb[0].mxu0
        %5297 = vmatprep.mubr.bf16.mxu0 0
        %5298 = vmatmul.mubr.bf16.gmra.mrb[0].mxu0 %v5042
        %v5299 = vpop.f32.mrb[0].mxu0
        %v5300 = vadd.f32 0.0, %v5299
        %v5301 = vpop.f32.mrb[0].mxu0
        %v5302 = vpop.f32.mrb[0].mxu0
        %v5303 = vadd.f32 0.0, %v5302
        %v5304 = vpop.f32.mrb[0].mxu0
        %5305 = vmatprep.mubr.bf16.mxu0 0
        %5306 = vmatmul.mubr.bf16.gmra.mrb[0].mxu0 %v5043
        %v5307 = vpop.f32.mrb[0].mxu0
        %v5308 = vadd.f32 0.0, %v5307
        %v5309 = vpop.f32.mrb[0].mxu0
        %v5310 = vpop.f32.mrb[0].mxu0
        %v5311 = vadd.f32 0.0, %v5310
        %v5312 = vpop.f32.mrb[0].mxu0
        %5313 = vmatprep.mubr.bf16.mxu0 0
        %5314 = vmatmul.mubr.bf16.gmra.mrb[0].mxu0 %v5044
        %v5315 = vpop.f32.mrb[0].mxu0
        %v5316 = vadd.f32 0.0, %v5315
        %v5317 = vpop.f32.mrb[0].mxu0
        %v5318 = vpop.f32.mrb[0].mxu0
        %v5319 = vadd.f32 0.0, %v5318
        %v5320 = vpop.f32.mrb[0].mxu0
        %5321 = vmatprep.mubr.bf16.mxu0 0
        %5322 = vmatmul.mubr.bf16.gmra.mrb[0].mxu0 %v5045
        %v5323 = vpop.f32.mrb[0].mxu0
        %v5324 = vadd.f32 0.0, %v5323
        %v5325 = vpop.f32.mrb[0].mxu0
        %v5326 = vpop.f32.mrb[0].mxu0
        %v5327 = vadd.f32 0.0, %v5326
        %v5328 = vpop.f32.mrb[0].mxu0
        %5329 = vmatprep.mubr.bf16.mxu0 0
        %5330 = vmatmul.mubr.bf16.gmra.mrb[0].mxu0 %v5046
        %v5331 = vpop.f32.mrb[0].mxu0
        %v5332 = vadd.f32 0.0, %v5331
        %v5333 = vpop.f32.mrb[0].mxu0
        %v5334 = vpop.f32.mrb[0].mxu0
        %v5335 = vadd.f32 0.0, %v5334
        %v5336 = vpop.f32.mrb[0].mxu0
        %5337 = vmatprep.mubr.bf16.mxu0 0
        %5338 = vmatmul.mubr.bf16.gmra.mrb[0].mxu0 %v5047
        %v5339 = vpop.f32.mrb[0].mxu0
        %v5340 = vadd.f32 0.0, %v5339
        %v5341 = vpop.f32.mrb[0].mxu0
        %v5342 = vpop.f32.mrb[0].mxu0
        %v5343 = vadd.f32 0.0, %v5342
        %v5344 = vpop.f32.mrb[0].mxu0
        %5345 = vmatprep.mubr.bf16.mxu0 0
        %5346 = vmatmul.mubr.bf16.gmra.mrb[0].mxu0 %v5048
        %v5347 = vpop.f32.mrb[0].mxu0
        %v5348 = vadd.f32 0.0, %v5347
        %v5349 = vpop.f32.mrb[0].mxu0
        %v5350 = vpop.f32.mrb[0].mxu0
        %v5351 = vadd.f32 0.0, %v5350
        %v5352 = vpop.f32.mrb[0].mxu0
        %5353 = vmatprep.mubr.bf16.mxu0 0
        %5354 = vmatmul.mubr.bf16.gmra.mrb[0].mxu0 %v5049
        %v5355 = vpop.f32.mrb[0].mxu0
        %v5356 = vadd.f32 0.0, %v5355
        %v5357 = vpop.f32.mrb[0].mxu0
        %v5358 = vpop.f32.mrb[0].mxu0
        %v5359 = vadd.f32 0.0, %v5358
        %v5360 = vpop.f32.mrb[0].mxu0
        %5361 = vmatprep.mubr.bf16.mxu0 0
        %5362 = vmatmul.mubr.bf16.gmra.mrb[0].mxu0 %v5050
        %v5363 = vpop.f32.mrb[0].mxu0
        %v5364 = vadd.f32 0.0, %v5363
        %v5365 = vpop.f32.mrb[0].mxu0
        %v5366 = vpop.f32.mrb[0].mxu0
        %v5367 = vadd.f32 0.0, %v5366
        %v5368 = vpop.f32.mrb[0].mxu0
        %5369 = vmatprep.mubr.bf16.mxu0 0
        %5370 = vmatmul.mubr.bf16.gmra.mrb[0].mxu0 %v5051
        %v5371 = vpop.f32.mrb[0].mxu0
        %v5372 = vadd.f32 0.0, %v5371
        %v5373 = vpop.f32.mrb[0].mxu0
        %v5374 = vpop.f32.mrb[0].mxu0
        %v5375 = vadd.f32 0.0, %v5374
        %v5376 = vpop.f32.mrb[0].mxu0
        %5377 = vmatprep.mubr.bf16.mxu0 0
        %5378 = vmatmul.mubr.bf16.gmra.mrb[0].mxu0 %v5052
        %v5379 = vpop.f32.mrb[0].mxu0
        %v5380 = vadd.f32 0.0, %v5379
        %v5381 = vpop.f32.mrb[0].mxu0
        %v5382 = vpop.f32.mrb[0].mxu0
        %v5383 = vadd.f32 0.0, %v5382
        %v5384 = vpop.f32.mrb[0].mxu0
        %5385 = vmatprep.mubr.bf16.mxu0 0
        %5386 = vmatmul.mubr.bf16.gmra.mrb[0].mxu0 %v5053
        %v5387 = vpop.f32.mrb[0].mxu0
        %v5388 = vadd.f32 0.0, %v5387
        %v5389 = vpop.f32.mrb[0].mxu0
        %v5390 = vpop.f32.mrb[0].mxu0
        %v5391 = vadd.f32 0.0, %v5390
        %v5392 = vpop.f32.mrb[0].mxu0
        %5393 = vmatprep.mubr.bf16.mxu0 0
        %5394 = vmatmul.mubr.bf16.gmra.mrb[0].mxu0 %v5054
        %v5395 = vpop.f32.mrb[0].mxu0
        %v5396 = vadd.f32 0.0, %v5395
        %v5397 = vpop.f32.mrb[0].mxu0
        %v5398 = vpop.f32.mrb[0].mxu0
        %v5399 = vadd.f32 0.0, %v5398
        %v5400 = vpop.f32.mrb[0].mxu0
        %5401 = vmatprep.mubr.bf16.mxu0 0
        %5402 = vmatmul.mubr.bf16.gmra.mrb[0].mxu0 %v5055
        %v5403 = vpop.f32.mrb[0].mxu0
        %v5404 = vadd.f32 0.0, %v5403
        %v5405 = vpop.f32.mrb[0].mxu0
        %v5406 = vpop.f32.mrb[0].mxu0
        %v5407 = vadd.f32 0.0, %v5406
        %v5408 = vpop.f32.mrb[0].mxu0
        %5409 = vdwg.mxu0
        %v5410 = vadd.f32 %v4960, %v5156
        %v5411 = vadd.f32 %v4961, %v5159
        %v5412 = vadd.f32 %v4962, %v5164
        %v5413 = vadd.f32 %v4963, %v5167
        %v5414 = vadd.f32 %v4964, %v5172
        %v5415 = vadd.f32 %v4965, %v5175
        %v5416 = vadd.f32 %v4966, %v5180
        %v5417 = vadd.f32 %v4967, %v5183
        %v5418 = vadd.f32 %v4968, %v5188
        %v5419 = vadd.f32 %v4969, %v5191
        %v5420 = vadd.f32 %v4970, %v5196
        %v5421 = vadd.f32 %v4971, %v5199
        %v5422 = vadd.f32 %v4972, %v5204
        %v5423 = vadd.f32 %v4973, %v5207
        %v5424 = vadd.f32 %v4974, %v5212
        %v5425 = vadd.f32 %v4975, %v5215
        %v5426 = vadd.f32 %v4976, %v5220
        %v5427 = vadd.f32 %v4977, %v5223
        %v5428 = vadd.f32 %v4978, %v5228
        %v5429 = vadd.f32 %v4979, %v5231
        %v5430 = vadd.f32 %v4980, %v5236
        %v5431 = vadd.f32 %v4981, %v5239
        %v5432 = vadd.f32 %v4982, %v5244
        %v5433 = vadd.f32 %v4983, %v5247
        %v5434 = vadd.f32 %v4984, %v5252
        %v5435 = vadd.f32 %v4985, %v5255
        %v5436 = vadd.f32 %v4986, %v5260
        %v5437 = vadd.f32 %v4987, %v5263
        %v5438 = vadd.f32 %v4988, %v5268
        %v5439 = vadd.f32 %v4989, %v5271
        %v5440 = vadd.f32 %v4990, %v5276
        %v5441 = vadd.f32 %v4991, %v5279
        %v5442 = vadd.f32 %v4992, %v5284
        %v5443 = vadd.f32 %v4993, %v5287
        %v5444 = vadd.f32 %v4994, %v5292
        %v5445 = vadd.f32 %v4995, %v5295
        %v5446 = vadd.f32 %v4996, %v5300
        %v5447 = vadd.f32 %v4997, %v5303
        %v5448 = vadd.f32 %v4998, %v5308
        %v5449 = vadd.f32 %v4999, %v5311
        %v5450 = vadd.f32 %v5000, %v5316
        %v5451 = vadd.f32 %v5001, %v5319
        %v5452 = vadd.f32 %v5002, %v5324
        %v5453 = vadd.f32 %v5003, %v5327
        %v5454 = vadd.f32 %v5004, %v5332
        %v5455 = vadd.f32 %v5005, %v5335
        %v5456 = vadd.f32 %v5006, %v5340
        %v5457 = vadd.f32 %v5007, %v5343
        %v5458 = vadd.f32 %v5008, %v5348
        %v5459 = vadd.f32 %v5009, %v5351
        %v5460 = vadd.f32 %v5010, %v5356
        %v5461 = vadd.f32 %v5011, %v5359
        %v5462 = vadd.f32 %v5012, %v5364
        %v5463 = vadd.f32 %v5013, %v5367
        %v5464 = vadd.f32 %v5014, %v5372
        %v5465 = vadd.f32 %v5015, %v5375
        %v5466 = vadd.f32 %v5016, %v5380
        %v5467 = vadd.f32 %v5017, %v5383
        %v5468 = vadd.f32 %v5018, %v5388
        %v5469 = vadd.f32 %v5019, %v5391
        %v5470 = vadd.f32 %v5020, %v5396
        %v5471 = vadd.f32 %v5021, %v5399
        %v5472 = vadd.f32 %v5022, %v5404
        %v5473 = vadd.f32 %v5023, %v5407
        %v5474 = vld [vmem:[%s1933 + $0x28] sm:$0xff]
        %v5475 = vld [vmem:[%s1933 + $0x30] sm:$0xff]
        %v5476 = vld [vmem:[%s1933 + $0x38] sm:$0xff]
        %v5477 = vld [vmem:[%s1933 + $0x40] sm:$0xff]
        %v5478 = vld [vmem:[%s1933 + $0x48] sm:$0xff]
        %v5479 = vld [vmem:[%s1933 + $0x50] sm:$0xff]
        %v5480 = vld [vmem:[%s1933 + $0x58] sm:$0xff]
        %v5481 = vld [vmem:[%s1933 + $0x60] sm:$0xff]
        %v5482 = vld [vmem:[%s1933 + $0x68] sm:$0xff]
        %v5483 = vld [vmem:[%s1933 + $0x70] sm:$0xff]
        %v5484 = vld [vmem:[%s1933 + $0x78] sm:$0xff]
        %v5485 = vld [vmem:[%s1933 + $0x80] sm:$0xff]
        %v5486 = vld [vmem:[%s1933 + $0x88] sm:$0xff]
        %v5487 = vld [vmem:[%s1933 + $0x90] sm:$0xff]
        %v5488 = vld [vmem:[%s1933 + $0x98] sm:$0xff]
        %v5489 = vld [vmem:[%s1933 + $0xa0] sm:$0xff]
        %v5490 = vld [vmem:[%s1933 + $0xa8] sm:$0xff]
        %v5491 = vld [vmem:[%s1933 + $0xb0] sm:$0xff]
        %v5492 = vld [vmem:[%s1933 + $0xb8] sm:$0xff]
        %v5493 = vld [vmem:[%s1933 + $0xc0] sm:$0xff]
        %v5494 = vld [vmem:[%s1933 + $0xc8] sm:$0xff]
        %v5495 = vld [vmem:[%s1933 + $0xd0] sm:$0xff]
        %v5496 = vld [vmem:[%s1933 + $0xd8] sm:$0xff]
        %v5497 = vld [vmem:[%s1933 + $0xe0] sm:$0xff]
        %v5498 = vld [vmem:[%s1933 + $0xe8] sm:$0xff]
        %v5499 = vld [vmem:[%s1933 + $0xf0] sm:$0xff]
        %v5500 = vld [vmem:[%s1933 + $0xf8] sm:$0xff]
        %v5501 = vld [vmem:[%s1933 + $0x100] sm:$0xff]
        %v5502 = vld [vmem:[%s1933 + $0x108] sm:$0xff]
        %v5503 = vld [vmem:[%s1933 + $0x110] sm:$0xff]
        %v5504 = vld [vmem:[%s1933 + $0x118] sm:$0xff]
        %v5505 = vld [vmem:[%s1933 + $0x120] sm:$0xff]
        %s5506 = scalar_lea.vmem [#allocation11], 448
        %v5507 = vld [vmem:[%s5506] sm:$0xf]
        %v5508 = vld [vmem:[%s5506 + $0x4] sm:$0xf]
        %v5509 = vld [vmem:[%s5506 + $0x8] sm:$0xf]
        %v5510 = vld [vmem:[%s5506 + $0xc] sm:$0xf]
        %v5511 = vld [vmem:[%s5506 + $0x10] sm:$0xf]
        %v5512 = vld [vmem:[%s5506 + $0x14] sm:$0xf]
        %v5513 = vld [vmem:[%s5506 + $0x18] sm:$0xf]
        %v5514 = vld [vmem:[%s5506 + $0x1c] sm:$0xf]
        %v5515 = vld [vmem:[%s5506 + $0x20] sm:$0xf]
        %v5516 = vld [vmem:[%s5506 + $0x24] sm:$0xf]
        %v5517 = vld [vmem:[%s5506 + $0x28] sm:$0xf]
        %v5518 = vld [vmem:[%s5506 + $0x2c] sm:$0xf]
        %v5519 = vld [vmem:[%s5506 + $0x30] sm:$0xf]
        %v5520 = vld [vmem:[%s5506 + $0x34] sm:$0xf]
        %v5521 = vld [vmem:[%s5506 + $0x38] sm:$0xf]
        %v5522 = vld [vmem:[%s5506 + $0x3c] sm:$0xf]
        %v5539 = vunpack.c.l.b16 %v5507
        %v5540 = vunpack.c.l.b16 %v5508
        %v5541 = vunpack.c.l.b16 %v5509
        %v5542 = vunpack.c.l.b16 %v5510
        %v5543 = vunpack.c.l.b16 %v5511
        %v5544 = vunpack.c.l.b16 %v5512
        %v5545 = vunpack.c.l.b16 %v5513
        %v5546 = vunpack.c.l.b16 %v5514
        %v5547 = vunpack.c.l.b16 %v5515
        %v5548 = vunpack.c.l.b16 %v5516
        %v5549 = vunpack.c.l.b16 %v5517
        %v5550 = vunpack.c.l.b16 %v5518
        %v5551 = vunpack.c.l.b16 %v5519
        %v5552 = vunpack.c.l.b16 %v5520
        %v5553 = vunpack.c.l.b16 %v5521
        %v5554 = vunpack.c.l.b16 %v5522
        %v5555 = vpack.c.b16 %v5540, %v5539
        %v5556 = vpack.c.b16 %v5542, %v5541
        %v5557 = vpack.c.b16 %v5544, %v5543
        %v5558 = vpack.c.b16 %v5546, %v5545
        %v5559 = vpack.c.b16 %v5548, %v5547
        %v5560 = vpack.c.b16 %v5550, %v5549
        %v5561 = vpack.c.b16 %v5552, %v5551
        %v5562 = vpack.c.b16 %v5554, %v5553
        %5571 = vmatprep.subr.bf16.mxu0 0
        %5572 = vmatpush1.bf16.msra.mxu0 %v5555
        %5573 = vmatprep.subr.bf16.mxu0 0
        %5574 = vmatpush1.bf16.msra.mxu0 %v5556
        %5575 = vmatprep.subr.bf16.mxu0 0
        %5576 = vmatpush1.bf16.msra.mxu0 %v5557
        %5577 = vmatprep.subr.bf16.mxu0 0
        %5578 = vmatpush1.bf16.msra.mxu0 %v5558
        %5579 = vmatprep.subr.bf16.mxu0 0
        %5580 = vmatpush1.bf16.msra.mxu0 %v5559
        %5581 = vmatprep.subr.bf16.mxu0 0
        %5582 = vmatpush1.bf16.msra.mxu0 %v5560
        %5583 = vmatprep.subr.bf16.mxu0 0
        %5584 = vmatpush1.bf16.msra.mxu0 %v5561
        %5585 = vmatprep.subr.bf16.mxu0 0
        %5586 = vmatpush1.bf16.msra.mxu0 %v5562
        %5587 = vmatprep.subr.bf16.mxu0 0
        %5588 = vmatpush1.bf16.msra.mxu0 0
        %5589 = vmatprep.subr.bf16.mxu0 0
        %5590 = vmatpush1.bf16.msra.mxu0 0
        %5591 = vmatprep.subr.bf16.mxu0 0
        %5592 = vmatpush1.bf16.msra.mxu0 0
        %5593 = vmatprep.subr.bf16.mxu0 0
        %5594 = vmatpush1.bf16.msra.mxu0 0
        %5595 = vmatprep.subr.bf16.mxu0 0
        %5596 = vmatpush1.bf16.msra.mxu0 0
        %5597 = vmatprep.subr.bf16.mxu0 0
        %5598 = vmatpush1.bf16.msra.mxu0 0
        %5599 = vmatprep.subr.bf16.mxu0 0
        %5600 = vmatpush1.bf16.msra.mxu0 0
        %5601 = vmatprep.subr.bf16.mxu0 0
        %5602 = vmatpush1.bf16.msra.mxu0 0
        %5603 = vmatprep.mubr.bf16.mxu0 0
        %5604 = vmatmul.mubr.bf16.gmra.mrb[0].mxu0 %v5474
        %v5605 = vpop.f32.mrb[0].mxu0
        %v5606 = vadd.f32 0.0, %v5605
        %v5607 = vpop.f32.mrb[0].mxu0
        %v5608 = vpop.f32.mrb[0].mxu0
        %v5609 = vadd.f32 0.0, %v5608
        %v5610 = vpop.f32.mrb[0].mxu0
        %5611 = vmatprep.mubr.bf16.mxu0 0
        %5612 = vmatmul.mubr.bf16.gmra.mrb[0].mxu0 %v5475
        %v5613 = vpop.f32.mrb[0].mxu0
        %v5614 = vadd.f32 0.0, %v5613
        %v5615 = vpop.f32.mrb[0].mxu0
        %v5616 = vpop.f32.mrb[0].mxu0
        %v5617 = vadd.f32 0.0, %v5616
        %v5618 = vpop.f32.mrb[0].mxu0
        %5619 = vmatprep.mubr.bf16.mxu0 0
        %5620 = vmatmul.mubr.bf16.gmra.mrb[0].mxu0 %v5476
        %v5621 = vpop.f32.mrb[0].mxu0
        %v5622 = vadd.f32 0.0, %v5621
        %v5623 = vpop.f32.mrb[0].mxu0
        %v5624 = vpop.f32.mrb[0].mxu0
        %v5625 = vadd.f32 0.0, %v5624
        %v5626 = vpop.f32.mrb[0].mxu0
        %5627 = vmatprep.mubr.bf16.mxu0 0
        %5628 = vmatmul.mubr.bf16.gmra.mrb[0].mxu0 %v5477
        %v5629 = vpop.f32.mrb[0].mxu0
        %v5630 = vadd.f32 0.0, %v5629
        %v5631 = vpop.f32.mrb[0].mxu0
        %v5632 = vpop.f32.mrb[0].mxu0
        %v5633 = vadd.f32 0.0, %v5632
        %v5634 = vpop.f32.mrb[0].mxu0
        %5635 = vmatprep.mubr.bf16.mxu0 0
        %5636 = vmatmul.mubr.bf16.gmra.mrb[0].mxu0 %v5478
        %v5637 = vpop.f32.mrb[0].mxu0
        %v5638 = vadd.f32 0.0, %v5637
        %v5639 = vpop.f32.mrb[0].mxu0
        %v5640 = vpop.f32.mrb[0].mxu0
        %v5641 = vadd.f32 0.0, %v5640
        %v5642 = vpop.f32.mrb[0].mxu0
        %5643 = vmatprep.mubr.bf16.mxu0 0
        %5644 = vmatmul.mubr.bf16.gmra.mrb[0].mxu0 %v5479
        %v5645 = vpop.f32.mrb[0].mxu0
        %v5646 = vadd.f32 0.0, %v5645
        %v5647 = vpop.f32.mrb[0].mxu0
        %v5648 = vpop.f32.mrb[0].mxu0
        %v5649 = vadd.f32 0.0, %v5648
        %v5650 = vpop.f32.mrb[0].mxu0
        %5651 = vmatprep.mubr.bf16.mxu0 0
        %5652 = vmatmul.mubr.bf16.gmra.mrb[0].mxu0 %v5480
        %v5653 = vpop.f32.mrb[0].mxu0
        %v5654 = vadd.f32 0.0, %v5653
        %v5655 = vpop.f32.mrb[0].mxu0
        %v5656 = vpop.f32.mrb[0].mxu0
        %v5657 = vadd.f32 0.0, %v5656
        %v5658 = vpop.f32.mrb[0].mxu0
        %5659 = vmatprep.mubr.bf16.mxu0 0
        %5660 = vmatmul.mubr.bf16.gmra.mrb[0].mxu0 %v5481
        %v5661 = vpop.f32.mrb[0].mxu0
        %v5662 = vadd.f32 0.0, %v5661
        %v5663 = vpop.f32.mrb[0].mxu0
        %v5664 = vpop.f32.mrb[0].mxu0
        %v5665 = vadd.f32 0.0, %v5664
        %v5666 = vpop.f32.mrb[0].mxu0
        %5667 = vmatprep.mubr.bf16.mxu0 0
        %5668 = vmatmul.mubr.bf16.gmra.mrb[0].mxu0 %v5482
        %v5669 = vpop.f32.mrb[0].mxu0
        %v5670 = vadd.f32 0.0, %v5669
        %v5671 = vpop.f32.mrb[0].mxu0
        %v5672 = vpop.f32.mrb[0].mxu0
        %v5673 = vadd.f32 0.0, %v5672
        %v5674 = vpop.f32.mrb[0].mxu0
        %5675 = vmatprep.mubr.bf16.mxu0 0
        %5676 = vmatmul.mubr.bf16.gmra.mrb[0].mxu0 %v5483
        %v5677 = vpop.f32.mrb[0].mxu0
        %v5678 = vadd.f32 0.0, %v5677
        %v5679 = vpop.f32.mrb[0].mxu0
        %v5680 = vpop.f32.mrb[0].mxu0
        %v5681 = vadd.f32 0.0, %v5680
        %v5682 = vpop.f32.mrb[0].mxu0
        %5683 = vmatprep.mubr.bf16.mxu0 0
        %5684 = vmatmul.mubr.bf16.gmra.mrb[0].mxu0 %v5484
        %v5685 = vpop.f32.mrb[0].mxu0
        %v5686 = vadd.f32 0.0, %v5685
        %v5687 = vpop.f32.mrb[0].mxu0
        %v5688 = vpop.f32.mrb[0].mxu0
        %v5689 = vadd.f32 0.0, %v5688
        %v5690 = vpop.f32.mrb[0].mxu0
        %5691 = vmatprep.mubr.bf16.mxu0 0
        %5692 = vmatmul.mubr.bf16.gmra.mrb[0].mxu0 %v5485
        %v5693 = vpop.f32.mrb[0].mxu0
        %v5694 = vadd.f32 0.0, %v5693
        %v5695 = vpop.f32.mrb[0].mxu0
        %v5696 = vpop.f32.mrb[0].mxu0
        %v5697 = vadd.f32 0.0, %v5696
        %v5698 = vpop.f32.mrb[0].mxu0
        %5699 = vmatprep.mubr.bf16.mxu0 0
        %5700 = vmatmul.mubr.bf16.gmra.mrb[0].mxu0 %v5486
        %v5701 = vpop.f32.mrb[0].mxu0
        %v5702 = vadd.f32 0.0, %v5701
        %v5703 = vpop.f32.mrb[0].mxu0
        %v5704 = vpop.f32.mrb[0].mxu0
        %v5705 = vadd.f32 0.0, %v5704
        %v5706 = vpop.f32.mrb[0].mxu0
        %5707 = vmatprep.mubr.bf16.mxu0 0
        %5708 = vmatmul.mubr.bf16.gmra.mrb[0].mxu0 %v5487
        %v5709 = vpop.f32.mrb[0].mxu0
        %v5710 = vadd.f32 0.0, %v5709
        %v5711 = vpop.f32.mrb[0].mxu0
        %v5712 = vpop.f32.mrb[0].mxu0
        %v5713 = vadd.f32 0.0, %v5712
        %v5714 = vpop.f32.mrb[0].mxu0
        %5715 = vmatprep.mubr.bf16.mxu0 0
        %5716 = vmatmul.mubr.bf16.gmra.mrb[0].mxu0 %v5488
        %v5717 = vpop.f32.mrb[0].mxu0
        %v5718 = vadd.f32 0.0, %v5717
        %v5719 = vpop.f32.mrb[0].mxu0
        %v5720 = vpop.f32.mrb[0].mxu0
        %v5721 = vadd.f32 0.0, %v5720
        %v5722 = vpop.f32.mrb[0].mxu0
        %5723 = vmatprep.mubr.bf16.mxu0 0
        %5724 = vmatmul.mubr.bf16.gmra.mrb[0].mxu0 %v5489
        %v5725 = vpop.f32.mrb[0].mxu0
        %v5726 = vadd.f32 0.0, %v5725
        %v5727 = vpop.f32.mrb[0].mxu0
        %v5728 = vpop.f32.mrb[0].mxu0
        %v5729 = vadd.f32 0.0, %v5728
        %v5730 = vpop.f32.mrb[0].mxu0
        %5731 = vmatprep.mubr.bf16.mxu0 0
        %5732 = vmatmul.mubr.bf16.gmra.mrb[0].mxu0 %v5490
        %v5733 = vpop.f32.mrb[0].mxu0
        %v5734 = vadd.f32 0.0, %v5733
        %v5735 = vpop.f32.mrb[0].mxu0
        %v5736 = vpop.f32.mrb[0].mxu0
        %v5737 = vadd.f32 0.0, %v5736
        %v5738 = vpop.f32.mrb[0].mxu0
        %5739 = vmatprep.mubr.bf16.mxu0 0
        %5740 = vmatmul.mubr.bf16.gmra.mrb[0].mxu0 %v5491
        %v5741 = vpop.f32.mrb[0].mxu0
        %v5742 = vadd.f32 0.0, %v5741
        %v5743 = vpop.f32.mrb[0].mxu0
        %v5744 = vpop.f32.mrb[0].mxu0
        %v5745 = vadd.f32 0.0, %v5744
        %v5746 = vpop.f32.mrb[0].mxu0
        %5747 = vmatprep.mubr.bf16.mxu0 0
        %5748 = vmatmul.mubr.bf16.gmra.mrb[0].mxu0 %v5492
        %v5749 = vpop.f32.mrb[0].mxu0
        %v5750 = vadd.f32 0.0, %v5749
        %v5751 = vpop.f32.mrb[0].mxu0
        %v5752 = vpop.f32.mrb[0].mxu0
        %v5753 = vadd.f32 0.0, %v5752
        %v5754 = vpop.f32.mrb[0].mxu0
        %5755 = vmatprep.mubr.bf16.mxu0 0
        %5756 = vmatmul.mubr.bf16.gmra.mrb[0].mxu0 %v5493
        %v5757 = vpop.f32.mrb[0].mxu0
        %v5758 = vadd.f32 0.0, %v5757
        %v5759 = vpop.f32.mrb[0].mxu0
        %v5760 = vpop.f32.mrb[0].mxu0
        %v5761 = vadd.f32 0.0, %v5760
        %v5762 = vpop.f32.mrb[0].mxu0
        %5763 = vmatprep.mubr.bf16.mxu0 0
        %5764 = vmatmul.mubr.bf16.gmra.mrb[0].mxu0 %v5494
        %v5765 = vpop.f32.mrb[0].mxu0
        %v5766 = vadd.f32 0.0, %v5765
        %v5767 = vpop.f32.mrb[0].mxu0
        %v5768 = vpop.f32.mrb[0].mxu0
        %v5769 = vadd.f32 0.0, %v5768
        %v5770 = vpop.f32.mrb[0].mxu0
        %5771 = vmatprep.mubr.bf16.mxu0 0
        %5772 = vmatmul.mubr.bf16.gmra.mrb[0].mxu0 %v5495
        %v5773 = vpop.f32.mrb[0].mxu0
        %v5774 = vadd.f32 0.0, %v5773
        %v5775 = vpop.f32.mrb[0].mxu0
        %v5776 = vpop.f32.mrb[0].mxu0
        %v5777 = vadd.f32 0.0, %v5776
        %v5778 = vpop.f32.mrb[0].mxu0
        %5779 = vmatprep.mubr.bf16.mxu0 0
        %5780 = vmatmul.mubr.bf16.gmra.mrb[0].mxu0 %v5496
        %v5781 = vpop.f32.mrb[0].mxu0
        %v5782 = vadd.f32 0.0, %v5781
        %v5783 = vpop.f32.mrb[0].mxu0
        %v5784 = vpop.f32.mrb[0].mxu0
        %v5785 = vadd.f32 0.0, %v5784
        %v5786 = vpop.f32.mrb[0].mxu0
        %5787 = vmatprep.mubr.bf16.mxu0 0
        %5788 = vmatmul.mubr.bf16.gmra.mrb[0].mxu0 %v5497
        %v5789 = vpop.f32.mrb[0].mxu0
        %v5790 = vadd.f32 0.0, %v5789
        %v5791 = vpop.f32.mrb[0].mxu0
        %v5792 = vpop.f32.mrb[0].mxu0
        %v5793 = vadd.f32 0.0, %v5792
        %v5794 = vpop.f32.mrb[0].mxu0
        %5795 = vmatprep.mubr.bf16.mxu0 0
        %5796 = vmatmul.mubr.bf16.gmra.mrb[0].mxu0 %v5498
        %v5797 = vpop.f32.mrb[0].mxu0
        %v5798 = vadd.f32 0.0, %v5797
        %v5799 = vpop.f32.mrb[0].mxu0
        %v5800 = vpop.f32.mrb[0].mxu0
        %v5801 = vadd.f32 0.0, %v5800
        %v5802 = vpop.f32.mrb[0].mxu0
        %5803 = vmatprep.mubr.bf16.mxu0 0
        %5804 = vmatmul.mubr.bf16.gmra.mrb[0].mxu0 %v5499
        %v5805 = vpop.f32.mrb[0].mxu0
        %v5806 = vadd.f32 0.0, %v5805
        %v5807 = vpop.f32.mrb[0].mxu0
        %v5808 = vpop.f32.mrb[0].mxu0
        %v5809 = vadd.f32 0.0, %v5808
        %v5810 = vpop.f32.mrb[0].mxu0
        %5811 = vmatprep.mubr.bf16.mxu0 0
        %5812 = vmatmul.mubr.bf16.gmra.mrb[0].mxu0 %v5500
        %v5813 = vpop.f32.mrb[0].mxu0
        %v5814 = vadd.f32 0.0, %v5813
        %v5815 = vpop.f32.mrb[0].mxu0
        %v5816 = vpop.f32.mrb[0].mxu0
        %v5817 = vadd.f32 0.0, %v5816
        %v5818 = vpop.f32.mrb[0].mxu0
        %5819 = vmatprep.mubr.bf16.mxu0 0
        %5820 = vmatmul.mubr.bf16.gmra.mrb[0].mxu0 %v5501
        %v5821 = vpop.f32.mrb[0].mxu0
        %v5822 = vadd.f32 0.0, %v5821
        %v5823 = vpop.f32.mrb[0].mxu0
        %v5824 = vpop.f32.mrb[0].mxu0
        %v5825 = vadd.f32 0.0, %v5824
        %v5826 = vpop.f32.mrb[0].mxu0
        %5827 = vmatprep.mubr.bf16.mxu0 0
        %5828 = vmatmul.mubr.bf16.gmra.mrb[0].mxu0 %v5502
        %v5829 = vpop.f32.mrb[0].mxu0
        %v5830 = vadd.f32 0.0, %v5829
        %v5831 = vpop.f32.mrb[0].mxu0
        %v5832 = vpop.f32.mrb[0].mxu0
        %v5833 = vadd.f32 0.0, %v5832
        %v5834 = vpop.f32.mrb[0].mxu0
        %5835 = vmatprep.mubr.bf16.mxu0 0
        %5836 = vmatmul.mubr.bf16.gmra.mrb[0].mxu0 %v5503
        %v5837 = vpop.f32.mrb[0].mxu0
        %v5838 = vadd.f32 0.0, %v5837
        %v5839 = vpop.f32.mrb[0].mxu0
        %v5840 = vpop.f32.mrb[0].mxu0
        %v5841 = vadd.f32 0.0, %v5840
        %v5842 = vpop.f32.mrb[0].mxu0
        %5843 = vmatprep.mubr.bf16.mxu0 0
        %5844 = vmatmul.mubr.bf16.gmra.mrb[0].mxu0 %v5504
        %v5845 = vpop.f32.mrb[0].mxu0
        %v5846 = vadd.f32 0.0, %v5845
        %v5847 = vpop.f32.mrb[0].mxu0
        %v5848 = vpop.f32.mrb[0].mxu0
        %v5849 = vadd.f32 0.0, %v5848
        %v5850 = vpop.f32.mrb[0].mxu0
        %5851 = vmatprep.mubr.bf16.mxu0 0
        %5852 = vmatmul.mubr.bf16.gmra.mrb[0].mxu0 %v5505
        %v5853 = vpop.f32.mrb[0].mxu0
        %v5854 = vadd.f32 0.0, %v5853
        %v5855 = vpop.f32.mrb[0].mxu0
        %v5856 = vpop.f32.mrb[0].mxu0
        %v5857 = vadd.f32 0.0, %v5856
        %v5858 = vpop.f32.mrb[0].mxu0
        %5859 = vdwg.mxu0
        %v5860 = vadd.f32 %v5410, %v5606
        %v5861 = vadd.f32 %v5411, %v5609
        %v5862 = vadd.f32 %v5412, %v5614
        %v5863 = vadd.f32 %v5413, %v5617
        %v5864 = vadd.f32 %v5414, %v5622
        %v5865 = vadd.f32 %v5415, %v5625
        %v5866 = vadd.f32 %v5416, %v5630
        %v5867 = vadd.f32 %v5417, %v5633
        %v5868 = vadd.f32 %v5418, %v5638
        %v5869 = vadd.f32 %v5419, %v5641
        %v5870 = vadd.f32 %v5420, %v5646
        %v5871 = vadd.f32 %v5421, %v5649
        %v5872 = vadd.f32 %v5422, %v5654
        %v5873 = vadd.f32 %v5423, %v5657
        %v5874 = vadd.f32 %v5424, %v5662
        %v5875 = vadd.f32 %v5425, %v5665
        %v5876 = vadd.f32 %v5426, %v5670
        %v5877 = vadd.f32 %v5427, %v5673
        %v5878 = vadd.f32 %v5428, %v5678
        %v5879 = vadd.f32 %v5429, %v5681
        %v5880 = vadd.f32 %v5430, %v5686
        %v5881 = vadd.f32 %v5431, %v5689
        %v5882 = vadd.f32 %v5432, %v5694
        %v5883 = vadd.f32 %v5433, %v5697
        %v5884 = vadd.f32 %v5434, %v5702
        %v5885 = vadd.f32 %v5435, %v5705
        %v5886 = vadd.f32 %v5436, %v5710
        %v5887 = vadd.f32 %v5437, %v5713
        %v5888 = vadd.f32 %v5438, %v5718
        %v5889 = vadd.f32 %v5439, %v5721
        %v5890 = vadd.f32 %v5440, %v5726
        %v5891 = vadd.f32 %v5441, %v5729
        %v5892 = vadd.f32 %v5442, %v5734
        %v5893 = vadd.f32 %v5443, %v5737
        %v5894 = vadd.f32 %v5444, %v5742
        %v5895 = vadd.f32 %v5445, %v5745
        %v5896 = vadd.f32 %v5446, %v5750
        %v5897 = vadd.f32 %v5447, %v5753
        %v5898 = vadd.f32 %v5448, %v5758
        %v5899 = vadd.f32 %v5449, %v5761
        %v5900 = vadd.f32 %v5450, %v5766
        %v5901 = vadd.f32 %v5451, %v5769
        %v5902 = vadd.f32 %v5452, %v5774
        %v5903 = vadd.f32 %v5453, %v5777
        %v5904 = vadd.f32 %v5454, %v5782
        %v5905 = vadd.f32 %v5455, %v5785
        %v5906 = vadd.f32 %v5456, %v5790
        %v5907 = vadd.f32 %v5457, %v5793
        %v5908 = vadd.f32 %v5458, %v5798
        %v5909 = vadd.f32 %v5459, %v5801
        %v5910 = vadd.f32 %v5460, %v5806
        %v5911 = vadd.f32 %v5461, %v5809
        %v5912 = vadd.f32 %v5462, %v5814
        %v5913 = vadd.f32 %v5463, %v5817
        %v5914 = vadd.f32 %v5464, %v5822
        %v5915 = vadd.f32 %v5465, %v5825
        %v5916 = vadd.f32 %v5466, %v5830
        %v5917 = vadd.f32 %v5467, %v5833
        %v5918 = vadd.f32 %v5468, %v5838
        %v5919 = vadd.f32 %v5469, %v5841
        %v5920 = vadd.f32 %v5470, %v5846
        %v5921 = vadd.f32 %v5471, %v5849
        %v5922 = vadd.f32 %v5472, %v5854
        %v5923 = vadd.f32 %v5473, %v5857
        %v5924 = vld [vmem:[%s2095 + $0x28] sm:$0xff]
        %v5925 = vld [vmem:[%s2095 + $0x30] sm:$0xff]
        %v5926 = vld [vmem:[%s2095 + $0x38] sm:$0xff]
        %v5927 = vld [vmem:[%s2095 + $0x40] sm:$0xff]
        %v5928 = vld [vmem:[%s2095 + $0x48] sm:$0xff]
        %v5929 = vld [vmem:[%s2095 + $0x50] sm:$0xff]
        %v5930 = vld [vmem:[%s2095 + $0x58] sm:$0xff]
        %v5931 = vld [vmem:[%s2095 + $0x60] sm:$0xff]
        %v5932 = vld [vmem:[%s2095 + $0x68] sm:$0xff]
        %v5933 = vld [vmem:[%s2095 + $0x70] sm:$0xff]
        %v5934 = vld [vmem:[%s2095 + $0x78] sm:$0xff]
        %v5935 = vld [vmem:[%s2095 + $0x80] sm:$0xff]
        %v5936 = vld [vmem:[%s2095 + $0x88] sm:$0xff]
        %v5937 = vld [vmem:[%s2095 + $0x90] sm:$0xff]
        %v5938 = vld [vmem:[%s2095 + $0x98] sm:$0xff]
        %v5939 = vld [vmem:[%s2095 + $0xa0] sm:$0xff]
        %v5940 = vld [vmem:[%s2095 + $0xa8] sm:$0xff]
        %v5941 = vld [vmem:[%s2095 + $0xb0] sm:$0xff]
        %v5942 = vld [vmem:[%s2095 + $0xb8] sm:$0xff]
        %v5943 = vld [vmem:[%s2095 + $0xc0] sm:$0xff]
        %v5944 = vld [vmem:[%s2095 + $0xc8] sm:$0xff]
        %v5945 = vld [vmem:[%s2095 + $0xd0] sm:$0xff]
        %v5946 = vld [vmem:[%s2095 + $0xd8] sm:$0xff]
        %v5947 = vld [vmem:[%s2095 + $0xe0] sm:$0xff]
        %v5948 = vld [vmem:[%s2095 + $0xe8] sm:$0xff]
        %v5949 = vld [vmem:[%s2095 + $0xf0] sm:$0xff]
        %v5950 = vld [vmem:[%s2095 + $0xf8] sm:$0xff]
        %v5951 = vld [vmem:[%s2095 + $0x100] sm:$0xff]
        %v5952 = vld [vmem:[%s2095 + $0x108] sm:$0xff]
        %v5953 = vld [vmem:[%s2095 + $0x110] sm:$0xff]
        %v5954 = vld [vmem:[%s2095 + $0x118] sm:$0xff]
        %v5955 = vld [vmem:[%s2095 + $0x120] sm:$0xff]
        %s5956 = scalar_lea.vmem [#allocation11], 512
        %v5957 = vld [vmem:[%s5956] sm:$0xf]
        %v5958 = vld [vmem:[%s5956 + $0x4] sm:$0xf]
        %v5959 = vld [vmem:[%s5956 + $0x8] sm:$0xf]
        %v5960 = vld [vmem:[%s5956 + $0xc] sm:$0xf]
        %v5961 = vld [vmem:[%s5956 + $0x10] sm:$0xf]
        %v5962 = vld [vmem:[%s5956 + $0x14] sm:$0xf]
        %v5963 = vld [vmem:[%s5956 + $0x18] sm:$0xf]
        %v5964 = vld [vmem:[%s5956 + $0x1c] sm:$0xf]
        %v5965 = vld [vmem:[%s5956 + $0x20] sm:$0xf]
        %v5966 = vld [vmem:[%s5956 + $0x24] sm:$0xf]
        %v5967 = vld [vmem:[%s5956 + $0x28] sm:$0xf]
        %v5968 = vld [vmem:[%s5956 + $0x2c] sm:$0xf]
        %v5969 = vld [vmem:[%s5956 + $0x30] sm:$0xf]
        %v5970 = vld [vmem:[%s5956 + $0x34] sm:$0xf]
        %v5971 = vld [vmem:[%s5956 + $0x38] sm:$0xf]
        %v5972 = vld [vmem:[%s5956 + $0x3c] sm:$0xf]
        %v5989 = vunpack.c.l.b16 %v5957
        %v5990 = vunpack.c.l.b16 %v5958
        %v5991 = vunpack.c.l.b16 %v5959
        %v5992 = vunpack.c.l.b16 %v5960
        %v5993 = vunpack.c.l.b16 %v5961
        %v5994 = vunpack.c.l.b16 %v5962
        %v5995 = vunpack.c.l.b16 %v5963
        %v5996 = vunpack.c.l.b16 %v5964
        %v5997 = vunpack.c.l.b16 %v5965
        %v5998 = vunpack.c.l.b16 %v5966
        %v5999 = vunpack.c.l.b16 %v5967
        %v6000 = vunpack.c.l.b16 %v5968
        %v6001 = vunpack.c.l.b16 %v5969
        %v6002 = vunpack.c.l.b16 %v5970
        %v6003 = vunpack.c.l.b16 %v5971
        %v6004 = vunpack.c.l.b16 %v5972
        %v6005 = vpack.c.b16 %v5990, %v5989
        %v6006 = vpack.c.b16 %v5992, %v5991
        %v6007 = vpack.c.b16 %v5994, %v5993
        %v6008 = vpack.c.b16 %v5996, %v5995
        %v6009 = vpack.c.b16 %v5998, %v5997
        %v6010 = vpack.c.b16 %v6000, %v5999
        %v6011 = vpack.c.b16 %v6002, %v6001
        %v6012 = vpack.c.b16 %v6004, %v6003
        %6021 = vmatprep.subr.bf16.mxu0 0
        %6022 = vmatpush1.bf16.msra.mxu0 %v6005
        %6023 = vmatprep.subr.bf16.mxu0 0
        %6024 = vmatpush1.bf16.msra.mxu0 %v6006
        %6025 = vmatprep.subr.bf16.mxu0 0
        %6026 = vmatpush1.bf16.msra.mxu0 %v6007
        %6027 = vmatprep.subr.bf16.mxu0 0
        %6028 = vmatpush1.bf16.msra.mxu0 %v6008
        %6029 = vmatprep.subr.bf16.mxu0 0
        %6030 = vmatpush1.bf16.msra.mxu0 %v6009
        %6031 = vmatprep.subr.bf16.mxu0 0
        %6032 = vmatpush1.bf16.msra.mxu0 %v6010
        %6033 = vmatprep.subr.bf16.mxu0 0
        %6034 = vmatpush1.bf16.msra.mxu0 %v6011
        %6035 = vmatprep.subr.bf16.mxu0 0
        %6036 = vmatpush1.bf16.msra.mxu0 %v6012
        %6037 = vmatprep.subr.bf16.mxu0 0
        %6038 = vmatpush1.bf16.msra.mxu0 0
        %6039 = vmatprep.subr.bf16.mxu0 0
        %6040 = vmatpush1.bf16.msra.mxu0 0
        %6041 = vmatprep.subr.bf16.mxu0 0
        %6042 = vmatpush1.bf16.msra.mxu0 0
        %6043 = vmatprep.subr.bf16.mxu0 0
        %6044 = vmatpush1.bf16.msra.mxu0 0
        %6045 = vmatprep.subr.bf16.mxu0 0
        %6046 = vmatpush1.bf16.msra.mxu0 0
        %6047 = vmatprep.subr.bf16.mxu0 0
        %6048 = vmatpush1.bf16.msra.mxu0 0
        %6049 = vmatprep.subr.bf16.mxu0 0
        %6050 = vmatpush1.bf16.msra.mxu0 0
        %6051 = vmatprep.subr.bf16.mxu0 0
        %6052 = vmatpush1.bf16.msra.mxu0 0
        %6053 = vmatprep.mubr.bf16.mxu0 0
        %6054 = vmatmul.mubr.bf16.gmra.mrb[0].mxu0 %v5924
        %v6055 = vpop.f32.mrb[0].mxu0
        %v6056 = vadd.f32 0.0, %v6055
        %v6057 = vpop.f32.mrb[0].mxu0
        %v6058 = vpop.f32.mrb[0].mxu0
        %v6059 = vadd.f32 0.0, %v6058
        %v6060 = vpop.f32.mrb[0].mxu0
        %6061 = vmatprep.mubr.bf16.mxu0 0
        %6062 = vmatmul.mubr.bf16.gmra.mrb[0].mxu0 %v5925
        %v6063 = vpop.f32.mrb[0].mxu0
        %v6064 = vadd.f32 0.0, %v6063
        %v6065 = vpop.f32.mrb[0].mxu0
        %v6066 = vpop.f32.mrb[0].mxu0
        %v6067 = vadd.f32 0.0, %v6066
        %v6068 = vpop.f32.mrb[0].mxu0
        %6069 = vmatprep.mubr.bf16.mxu0 0
        %6070 = vmatmul.mubr.bf16.gmra.mrb[0].mxu0 %v5926
        %v6071 = vpop.f32.mrb[0].mxu0
        %v6072 = vadd.f32 0.0, %v6071
        %v6073 = vpop.f32.mrb[0].mxu0
        %v6074 = vpop.f32.mrb[0].mxu0
        %v6075 = vadd.f32 0.0, %v6074
        %v6076 = vpop.f32.mrb[0].mxu0
        %6077 = vmatprep.mubr.bf16.mxu0 0
        %6078 = vmatmul.mubr.bf16.gmra.mrb[0].mxu0 %v5927
        %v6079 = vpop.f32.mrb[0].mxu0
        %v6080 = vadd.f32 0.0, %v6079
        %v6081 = vpop.f32.mrb[0].mxu0
        %v6082 = vpop.f32.mrb[0].mxu0
        %v6083 = vadd.f32 0.0, %v6082
        %v6084 = vpop.f32.mrb[0].mxu0
        %6085 = vmatprep.mubr.bf16.mxu0 0
        %6086 = vmatmul.mubr.bf16.gmra.mrb[0].mxu0 %v5928
        %v6087 = vpop.f32.mrb[0].mxu0
        %v6088 = vadd.f32 0.0, %v6087
        %v6089 = vpop.f32.mrb[0].mxu0
        %v6090 = vpop.f32.mrb[0].mxu0
        %v6091 = vadd.f32 0.0, %v6090
        %v6092 = vpop.f32.mrb[0].mxu0
        %6093 = vmatprep.mubr.bf16.mxu0 0
        %6094 = vmatmul.mubr.bf16.gmra.mrb[0].mxu0 %v5929
        %v6095 = vpop.f32.mrb[0].mxu0
        %v6096 = vadd.f32 0.0, %v6095
        %v6097 = vpop.f32.mrb[0].mxu0
        %v6098 = vpop.f32.mrb[0].mxu0
        %v6099 = vadd.f32 0.0, %v6098
        %v6100 = vpop.f32.mrb[0].mxu0
        %6101 = vmatprep.mubr.bf16.mxu0 0
        %6102 = vmatmul.mubr.bf16.gmra.mrb[0].mxu0 %v5930
        %v6103 = vpop.f32.mrb[0].mxu0
        %v6104 = vadd.f32 0.0, %v6103
        %v6105 = vpop.f32.mrb[0].mxu0
        %v6106 = vpop.f32.mrb[0].mxu0
        %v6107 = vadd.f32 0.0, %v6106
        %v6108 = vpop.f32.mrb[0].mxu0
        %6109 = vmatprep.mubr.bf16.mxu0 0
        %6110 = vmatmul.mubr.bf16.gmra.mrb[0].mxu0 %v5931
        %v6111 = vpop.f32.mrb[0].mxu0
        %v6112 = vadd.f32 0.0, %v6111
        %v6113 = vpop.f32.mrb[0].mxu0
        %v6114 = vpop.f32.mrb[0].mxu0
        %v6115 = vadd.f32 0.0, %v6114
        %v6116 = vpop.f32.mrb[0].mxu0
        %6117 = vmatprep.mubr.bf16.mxu0 0
        %6118 = vmatmul.mubr.bf16.gmra.mrb[0].mxu0 %v5932
        %v6119 = vpop.f32.mrb[0].mxu0
        %v6120 = vadd.f32 0.0, %v6119
        %v6121 = vpop.f32.mrb[0].mxu0
        %v6122 = vpop.f32.mrb[0].mxu0
        %v6123 = vadd.f32 0.0, %v6122
        %v6124 = vpop.f32.mrb[0].mxu0
        %6125 = vmatprep.mubr.bf16.mxu0 0
        %6126 = vmatmul.mubr.bf16.gmra.mrb[0].mxu0 %v5933
        %v6127 = vpop.f32.mrb[0].mxu0
        %v6128 = vadd.f32 0.0, %v6127
        %v6129 = vpop.f32.mrb[0].mxu0
        %v6130 = vpop.f32.mrb[0].mxu0
        %v6131 = vadd.f32 0.0, %v6130
        %v6132 = vpop.f32.mrb[0].mxu0
        %6133 = vmatprep.mubr.bf16.mxu0 0
        %6134 = vmatmul.mubr.bf16.gmra.mrb[0].mxu0 %v5934
        %v6135 = vpop.f32.mrb[0].mxu0
        %v6136 = vadd.f32 0.0, %v6135
        %v6137 = vpop.f32.mrb[0].mxu0
        %v6138 = vpop.f32.mrb[0].mxu0
        %v6139 = vadd.f32 0.0, %v6138
        %v6140 = vpop.f32.mrb[0].mxu0
        %6141 = vmatprep.mubr.bf16.mxu0 0
        %6142 = vmatmul.mubr.bf16.gmra.mrb[0].mxu0 %v5935
        %v6143 = vpop.f32.mrb[0].mxu0
        %v6144 = vadd.f32 0.0, %v6143
        %v6145 = vpop.f32.mrb[0].mxu0
        %v6146 = vpop.f32.mrb[0].mxu0
        %v6147 = vadd.f32 0.0, %v6146
        %v6148 = vpop.f32.mrb[0].mxu0
        %6149 = vmatprep.mubr.bf16.mxu0 0
        %6150 = vmatmul.mubr.bf16.gmra.mrb[0].mxu0 %v5936
        %v6151 = vpop.f32.mrb[0].mxu0
        %v6152 = vadd.f32 0.0, %v6151
        %v6153 = vpop.f32.mrb[0].mxu0
        %v6154 = vpop.f32.mrb[0].mxu0
        %v6155 = vadd.f32 0.0, %v6154
        %v6156 = vpop.f32.mrb[0].mxu0
        %6157 = vmatprep.mubr.bf16.mxu0 0
        %6158 = vmatmul.mubr.bf16.gmra.mrb[0].mxu0 %v5937
        %v6159 = vpop.f32.mrb[0].mxu0
        %v6160 = vadd.f32 0.0, %v6159
        %v6161 = vpop.f32.mrb[0].mxu0
        %v6162 = vpop.f32.mrb[0].mxu0
        %v6163 = vadd.f32 0.0, %v6162
        %v6164 = vpop.f32.mrb[0].mxu0
        %6165 = vmatprep.mubr.bf16.mxu0 0
        %6166 = vmatmul.mubr.bf16.gmra.mrb[0].mxu0 %v5938
        %v6167 = vpop.f32.mrb[0].mxu0
        %v6168 = vadd.f32 0.0, %v6167
        %v6169 = vpop.f32.mrb[0].mxu0
        %v6170 = vpop.f32.mrb[0].mxu0
        %v6171 = vadd.f32 0.0, %v6170
        %v6172 = vpop.f32.mrb[0].mxu0
        %6173 = vmatprep.mubr.bf16.mxu0 0
        %6174 = vmatmul.mubr.bf16.gmra.mrb[0].mxu0 %v5939
        %v6175 = vpop.f32.mrb[0].mxu0
        %v6176 = vadd.f32 0.0, %v6175
        %v6177 = vpop.f32.mrb[0].mxu0
        %v6178 = vpop.f32.mrb[0].mxu0
        %v6179 = vadd.f32 0.0, %v6178
        %v6180 = vpop.f32.mrb[0].mxu0
        %6181 = vmatprep.mubr.bf16.mxu0 0
        %6182 = vmatmul.mubr.bf16.gmra.mrb[0].mxu0 %v5940
        %v6183 = vpop.f32.mrb[0].mxu0
        %v6184 = vadd.f32 0.0, %v6183
        %v6185 = vpop.f32.mrb[0].mxu0
        %v6186 = vpop.f32.mrb[0].mxu0
        %v6187 = vadd.f32 0.0, %v6186
        %v6188 = vpop.f32.mrb[0].mxu0
        %6189 = vmatprep.mubr.bf16.mxu0 0
        %6190 = vmatmul.mubr.bf16.gmra.mrb[0].mxu0 %v5941
        %v6191 = vpop.f32.mrb[0].mxu0
        %v6192 = vadd.f32 0.0, %v6191
        %v6193 = vpop.f32.mrb[0].mxu0
        %v6194 = vpop.f32.mrb[0].mxu0
        %v6195 = vadd.f32 0.0, %v6194
        %v6196 = vpop.f32.mrb[0].mxu0
        %6197 = vmatprep.mubr.bf16.mxu0 0
        %6198 = vmatmul.mubr.bf16.gmra.mrb[0].mxu0 %v5942
        %v6199 = vpop.f32.mrb[0].mxu0
        %v6200 = vadd.f32 0.0, %v6199
        %v6201 = vpop.f32.mrb[0].mxu0
        %v6202 = vpop.f32.mrb[0].mxu0
        %v6203 = vadd.f32 0.0, %v6202
        %v6204 = vpop.f32.mrb[0].mxu0
        %6205 = vmatprep.mubr.bf16.mxu0 0
        %6206 = vmatmul.mubr.bf16.gmra.mrb[0].mxu0 %v5943
        %v6207 = vpop.f32.mrb[0].mxu0
        %v6208 = vadd.f32 0.0, %v6207
        %v6209 = vpop.f32.mrb[0].mxu0
        %v6210 = vpop.f32.mrb[0].mxu0
        %v6211 = vadd.f32 0.0, %v6210
        %v6212 = vpop.f32.mrb[0].mxu0
        %6213 = vmatprep.mubr.bf16.mxu0 0
        %6214 = vmatmul.mubr.bf16.gmra.mrb[0].mxu0 %v5944
        %v6215 = vpop.f32.mrb[0].mxu0
        %v6216 = vadd.f32 0.0, %v6215
        %v6217 = vpop.f32.mrb[0].mxu0
        %v6218 = vpop.f32.mrb[0].mxu0
        %v6219 = vadd.f32 0.0, %v6218
        %v6220 = vpop.f32.mrb[0].mxu0
        %6221 = vmatprep.mubr.bf16.mxu0 0
        %6222 = vmatmul.mubr.bf16.gmra.mrb[0].mxu0 %v5945
        %v6223 = vpop.f32.mrb[0].mxu0
        %v6224 = vadd.f32 0.0, %v6223
        %v6225 = vpop.f32.mrb[0].mxu0
        %v6226 = vpop.f32.mrb[0].mxu0
        %v6227 = vadd.f32 0.0, %v6226
        %v6228 = vpop.f32.mrb[0].mxu0
        %6229 = vmatprep.mubr.bf16.mxu0 0
        %6230 = vmatmul.mubr.bf16.gmra.mrb[0].mxu0 %v5946
        %v6231 = vpop.f32.mrb[0].mxu0
        %v6232 = vadd.f32 0.0, %v6231
        %v6233 = vpop.f32.mrb[0].mxu0
        %v6234 = vpop.f32.mrb[0].mxu0
        %v6235 = vadd.f32 0.0, %v6234
        %v6236 = vpop.f32.mrb[0].mxu0
        %6237 = vmatprep.mubr.bf16.mxu0 0
        %6238 = vmatmul.mubr.bf16.gmra.mrb[0].mxu0 %v5947
        %v6239 = vpop.f32.mrb[0].mxu0
        %v6240 = vadd.f32 0.0, %v6239
        %v6241 = vpop.f32.mrb[0].mxu0
        %v6242 = vpop.f32.mrb[0].mxu0
        %v6243 = vadd.f32 0.0, %v6242
        %v6244 = vpop.f32.mrb[0].mxu0
        %6245 = vmatprep.mubr.bf16.mxu0 0
        %6246 = vmatmul.mubr.bf16.gmra.mrb[0].mxu0 %v5948
        %v6247 = vpop.f32.mrb[0].mxu0
        %v6248 = vadd.f32 0.0, %v6247
        %v6249 = vpop.f32.mrb[0].mxu0
        %v6250 = vpop.f32.mrb[0].mxu0
        %v6251 = vadd.f32 0.0, %v6250
        %v6252 = vpop.f32.mrb[0].mxu0
        %6253 = vmatprep.mubr.bf16.mxu0 0
        %6254 = vmatmul.mubr.bf16.gmra.mrb[0].mxu0 %v5949
        %v6255 = vpop.f32.mrb[0].mxu0
        %v6256 = vadd.f32 0.0, %v6255
        %v6257 = vpop.f32.mrb[0].mxu0
        %v6258 = vpop.f32.mrb[0].mxu0
        %v6259 = vadd.f32 0.0, %v6258
        %v6260 = vpop.f32.mrb[0].mxu0
        %6261 = vmatprep.mubr.bf16.mxu0 0
        %6262 = vmatmul.mubr.bf16.gmra.mrb[0].mxu0 %v5950
        %v6263 = vpop.f32.mrb[0].mxu0
        %v6264 = vadd.f32 0.0, %v6263
        %v6265 = vpop.f32.mrb[0].mxu0
        %v6266 = vpop.f32.mrb[0].mxu0
        %v6267 = vadd.f32 0.0, %v6266
        %v6268 = vpop.f32.mrb[0].mxu0
        %6269 = vmatprep.mubr.bf16.mxu0 0
        %6270 = vmatmul.mubr.bf16.gmra.mrb[0].mxu0 %v5951
        %v6271 = vpop.f32.mrb[0].mxu0
        %v6272 = vadd.f32 0.0, %v6271
        %v6273 = vpop.f32.mrb[0].mxu0
        %v6274 = vpop.f32.mrb[0].mxu0
        %v6275 = vadd.f32 0.0, %v6274
        %v6276 = vpop.f32.mrb[0].mxu0
        %6277 = vmatprep.mubr.bf16.mxu0 0
        %6278 = vmatmul.mubr.bf16.gmra.mrb[0].mxu0 %v5952
        %v6279 = vpop.f32.mrb[0].mxu0
        %v6280 = vadd.f32 0.0, %v6279
        %v6281 = vpop.f32.mrb[0].mxu0
        %v6282 = vpop.f32.mrb[0].mxu0
        %v6283 = vadd.f32 0.0, %v6282
        %v6284 = vpop.f32.mrb[0].mxu0
        %6285 = vmatprep.mubr.bf16.mxu0 0
        %6286 = vmatmul.mubr.bf16.gmra.mrb[0].mxu0 %v5953
        %v6287 = vpop.f32.mrb[0].mxu0
        %v6288 = vadd.f32 0.0, %v6287
        %v6289 = vpop.f32.mrb[0].mxu0
        %v6290 = vpop.f32.mrb[0].mxu0
        %v6291 = vadd.f32 0.0, %v6290
        %v6292 = vpop.f32.mrb[0].mxu0
        %6293 = vmatprep.mubr.bf16.mxu0 0
        %6294 = vmatmul.mubr.bf16.gmra.mrb[0].mxu0 %v5954
        %v6295 = vpop.f32.mrb[0].mxu0
        %v6296 = vadd.f32 0.0, %v6295
        %v6297 = vpop.f32.mrb[0].mxu0
        %v6298 = vpop.f32.mrb[0].mxu0
        %v6299 = vadd.f32 0.0, %v6298
        %v6300 = vpop.f32.mrb[0].mxu0
        %6301 = vmatprep.mubr.bf16.mxu0 0
        %6302 = vmatmul.mubr.bf16.gmra.mrb[0].mxu0 %v5955
        %v6303 = vpop.f32.mrb[0].mxu0
        %v6304 = vadd.f32 0.0, %v6303
        %v6305 = vpop.f32.mrb[0].mxu0
        %v6306 = vpop.f32.mrb[0].mxu0
        %v6307 = vadd.f32 0.0, %v6306
        %v6308 = vpop.f32.mrb[0].mxu0
        %6309 = vdwg.mxu0
        %v6310 = vadd.f32 %v5860, %v6056
        %v6311 = vadd.f32 %v5861, %v6059
        %v6312 = vadd.f32 %v5862, %v6064
        %v6313 = vadd.f32 %v5863, %v6067
        %v6314 = vadd.f32 %v5864, %v6072
        %v6315 = vadd.f32 %v5865, %v6075
        %v6316 = vadd.f32 %v5866, %v6080
        %v6317 = vadd.f32 %v5867, %v6083
        %v6318 = vadd.f32 %v5868, %v6088
        %v6319 = vadd.f32 %v5869, %v6091
        %v6320 = vadd.f32 %v5870, %v6096
        %v6321 = vadd.f32 %v5871, %v6099
        %v6322 = vadd.f32 %v5872, %v6104
        %v6323 = vadd.f32 %v5873, %v6107
        %v6324 = vadd.f32 %v5874, %v6112
        %v6325 = vadd.f32 %v5875, %v6115
        %v6326 = vadd.f32 %v5876, %v6120
        %v6327 = vadd.f32 %v5877, %v6123
        %v6328 = vadd.f32 %v5878, %v6128
        %v6329 = vadd.f32 %v5879, %v6131
        %v6330 = vadd.f32 %v5880, %v6136
        %v6331 = vadd.f32 %v5881, %v6139
        %v6332 = vadd.f32 %v5882, %v6144
        %v6333 = vadd.f32 %v5883, %v6147
        %v6334 = vadd.f32 %v5884, %v6152
        %v6335 = vadd.f32 %v5885, %v6155
        %v6336 = vadd.f32 %v5886, %v6160
        %v6337 = vadd.f32 %v5887, %v6163
        %v6338 = vadd.f32 %v5888, %v6168
        %v6339 = vadd.f32 %v5889, %v6171
        %v6340 = vadd.f32 %v5890, %v6176
        %v6341 = vadd.f32 %v5891, %v6179
        %v6342 = vadd.f32 %v5892, %v6184
        %v6343 = vadd.f32 %v5893, %v6187
        %v6344 = vadd.f32 %v5894, %v6192
        %v6345 = vadd.f32 %v5895, %v6195
        %v6346 = vadd.f32 %v5896, %v6200
        %v6347 = vadd.f32 %v5897, %v6203
        %v6348 = vadd.f32 %v5898, %v6208
        %v6349 = vadd.f32 %v5899, %v6211
        %v6350 = vadd.f32 %v5900, %v6216
        %v6351 = vadd.f32 %v5901, %v6219
        %v6352 = vadd.f32 %v5902, %v6224
        %v6353 = vadd.f32 %v5903, %v6227
        %v6354 = vadd.f32 %v5904, %v6232
        %v6355 = vadd.f32 %v5905, %v6235
        %v6356 = vadd.f32 %v5906, %v6240
        %v6357 = vadd.f32 %v5907, %v6243
        %v6358 = vadd.f32 %v5908, %v6248
        %v6359 = vadd.f32 %v5909, %v6251
        %v6360 = vadd.f32 %v5910, %v6256
        %v6361 = vadd.f32 %v5911, %v6259
        %v6362 = vadd.f32 %v5912, %v6264
        %v6363 = vadd.f32 %v5913, %v6267
        %v6364 = vadd.f32 %v5914, %v6272
        %v6365 = vadd.f32 %v5915, %v6275
        %v6366 = vadd.f32 %v5916, %v6280
        %v6367 = vadd.f32 %v5917, %v6283
        %v6368 = vadd.f32 %v5918, %v6288
        %v6369 = vadd.f32 %v5919, %v6291
        %v6370 = vadd.f32 %v5920, %v6296
        %v6371 = vadd.f32 %v5921, %v6299
        %v6372 = vadd.f32 %v5922, %v6304
        %v6373 = vadd.f32 %v5923, %v6307
        %v6374 = vld [vmem:[#allocation12] sm:$0x1]
        %v6376 = vlaneseq
        %v6377 = vshrl.u32 %v6376, 7
        %v6378 = vsub.s32 0, %v6377
        %v6379 = vrot.slane %v6374, %v6378
        %v6381 = vadd.f32 %v6310, %v6379
        %v6382 = vadd.f32 %v6311, %v6379
        %v6383 = vadd.f32 %v6312, %v6379
        %v6384 = vadd.f32 %v6313, %v6379
        %v6385 = vadd.f32 %v6314, %v6379
        %v6386 = vadd.f32 %v6315, %v6379
        %v6387 = vadd.f32 %v6316, %v6379
        %v6388 = vadd.f32 %v6317, %v6379
        %v6389 = vadd.f32 %v6318, %v6379
        %v6390 = vadd.f32 %v6319, %v6379
        %v6391 = vadd.f32 %v6320, %v6379
        %v6392 = vadd.f32 %v6321, %v6379
        %v6393 = vadd.f32 %v6322, %v6379
        %v6394 = vadd.f32 %v6323, %v6379
        %v6395 = vadd.f32 %v6324, %v6379
        %v6396 = vadd.f32 %v6325, %v6379
        %v6397 = vadd.f32 %v6326, %v6379
        %v6398 = vadd.f32 %v6327, %v6379
        %v6399 = vadd.f32 %v6328, %v6379
        %v6400 = vadd.f32 %v6329, %v6379
        %v6401 = vadd.f32 %v6330, %v6379
        %v6402 = vadd.f32 %v6331, %v6379
        %v6403 = vadd.f32 %v6332, %v6379
        %v6404 = vadd.f32 %v6333, %v6379
        %v6405 = vadd.f32 %v6334, %v6379
        %v6406 = vadd.f32 %v6335, %v6379
        %v6407 = vadd.f32 %v6336, %v6379
        %v6408 = vadd.f32 %v6337, %v6379
        %v6409 = vadd.f32 %v6338, %v6379
        %v6410 = vadd.f32 %v6339, %v6379
        %v6411 = vadd.f32 %v6340, %v6379
        %v6412 = vadd.f32 %v6341, %v6379
        %v6413 = vadd.f32 %v6342, %v6379
        %v6414 = vadd.f32 %v6343, %v6379
        %v6415 = vadd.f32 %v6344, %v6379
        %v6416 = vadd.f32 %v6345, %v6379
        %v6417 = vadd.f32 %v6346, %v6379
        %v6418 = vadd.f32 %v6347, %v6379
        %v6419 = vadd.f32 %v6348, %v6379
        %v6420 = vadd.f32 %v6349, %v6379
        %v6421 = vadd.f32 %v6350, %v6379
        %v6422 = vadd.f32 %v6351, %v6379
        %v6423 = vadd.f32 %v6352, %v6379
        %v6424 = vadd.f32 %v6353, %v6379
        %v6425 = vadd.f32 %v6354, %v6379
        %v6426 = vadd.f32 %v6355, %v6379
        %v6427 = vadd.f32 %v6356, %v6379
        %v6428 = vadd.f32 %v6357, %v6379
        %v6429 = vadd.f32 %v6358, %v6379
        %v6430 = vadd.f32 %v6359, %v6379
        %v6431 = vadd.f32 %v6360, %v6379
        %v6432 = vadd.f32 %v6361, %v6379
        %v6433 = vadd.f32 %v6362, %v6379
        %v6434 = vadd.f32 %v6363, %v6379
        %v6435 = vadd.f32 %v6364, %v6379
        %v6436 = vadd.f32 %v6365, %v6379
        %v6437 = vadd.f32 %v6366, %v6379
        %v6438 = vadd.f32 %v6367, %v6379
        %v6439 = vadd.f32 %v6368, %v6379
        %v6440 = vadd.f32 %v6369, %v6379
        %v6441 = vadd.f32 %v6370, %v6379
        %v6442 = vadd.f32 %v6371, %v6379
        %v6443 = vadd.f32 %v6372, %v6379
        %v6444 = vadd.f32 %v6373, %v6379
        %v6445 = vmax.f32 %v6381, 0.0
        %v6446 = vmax.f32 %v6382, 0.0
        %v6447 = vmax.f32 %v6383, 0.0
        %v6448 = vmax.f32 %v6384, 0.0
        %v6449 = vmax.f32 %v6385, 0.0
        %v6450 = vmax.f32 %v6386, 0.0
        %v6451 = vmax.f32 %v6387, 0.0
        %v6452 = vmax.f32 %v6388, 0.0
        %v6453 = vmax.f32 %v6389, 0.0
        %v6454 = vmax.f32 %v6390, 0.0
        %v6455 = vmax.f32 %v6391, 0.0
        %v6456 = vmax.f32 %v6392, 0.0
        %v6457 = vmax.f32 %v6393, 0.0
        %v6458 = vmax.f32 %v6394, 0.0
        %v6459 = vmax.f32 %v6395, 0.0
        %v6460 = vmax.f32 %v6396, 0.0
        %v6461 = vmax.f32 %v6397, 0.0
        %v6462 = vmax.f32 %v6398, 0.0
        %v6463 = vmax.f32 %v6399, 0.0
        %v6464 = vmax.f32 %v6400, 0.0
        %v6465 = vmax.f32 %v6401, 0.0
        %v6466 = vmax.f32 %v6402, 0.0
        %v6467 = vmax.f32 %v6403, 0.0
        %v6468 = vmax.f32 %v6404, 0.0
        %v6469 = vmax.f32 %v6405, 0.0
        %v6470 = vmax.f32 %v6406, 0.0
        %v6471 = vmax.f32 %v6407, 0.0
        %v6472 = vmax.f32 %v6408, 0.0
        %v6473 = vmax.f32 %v6409, 0.0
        %v6474 = vmax.f32 %v6410, 0.0
        %v6475 = vmax.f32 %v6411, 0.0
        %v6476 = vmax.f32 %v6412, 0.0
        %v6477 = vmax.f32 %v6413, 0.0
        %v6478 = vmax.f32 %v6414, 0.0
        %v6479 = vmax.f32 %v6415, 0.0
        %v6480 = vmax.f32 %v6416, 0.0
        %v6481 = vmax.f32 %v6417, 0.0
        %v6482 = vmax.f32 %v6418, 0.0
        %v6483 = vmax.f32 %v6419, 0.0
        %v6484 = vmax.f32 %v6420, 0.0
        %v6485 = vmax.f32 %v6421, 0.0
        %v6486 = vmax.f32 %v6422, 0.0
        %v6487 = vmax.f32 %v6423, 0.0
        %v6488 = vmax.f32 %v6424, 0.0
        %v6489 = vmax.f32 %v6425, 0.0
        %v6490 = vmax.f32 %v6426, 0.0
        %v6491 = vmax.f32 %v6427, 0.0
        %v6492 = vmax.f32 %v6428, 0.0
        %v6493 = vmax.f32 %v6429, 0.0
        %v6494 = vmax.f32 %v6430, 0.0
        %v6495 = vmax.f32 %v6431, 0.0
        %v6496 = vmax.f32 %v6432, 0.0
        %v6497 = vmax.f32 %v6433, 0.0
        %v6498 = vmax.f32 %v6434, 0.0
        %v6499 = vmax.f32 %v6435, 0.0
        %v6500 = vmax.f32 %v6436, 0.0
        %v6501 = vmax.f32 %v6437, 0.0
        %v6502 = vmax.f32 %v6438, 0.0
        %v6503 = vmax.f32 %v6439, 0.0
        %v6504 = vmax.f32 %v6440, 0.0
        %v6505 = vmax.f32 %v6441, 0.0
        %v6506 = vmax.f32 %v6442, 0.0
        %v6507 = vmax.f32 %v6443, 0.0
        %v6508 = vmax.f32 %v6444, 0.0
        %v6509 = vpack.c.bf16 %v6446, %v6445
        %v6510 = vpack.c.bf16 %v6448, %v6447
        %v6511 = vpack.c.bf16 %v6450, %v6449
        %v6512 = vpack.c.bf16 %v6452, %v6451
        %v6513 = vpack.c.bf16 %v6454, %v6453
        %v6514 = vpack.c.bf16 %v6456, %v6455
        %v6515 = vpack.c.bf16 %v6458, %v6457
        %v6516 = vpack.c.bf16 %v6460, %v6459
        %v6517 = vpack.c.bf16 %v6462, %v6461
        %v6518 = vpack.c.bf16 %v6464, %v6463
        %v6519 = vpack.c.bf16 %v6466, %v6465
        %v6520 = vpack.c.bf16 %v6468, %v6467
        %v6521 = vpack.c.bf16 %v6470, %v6469
        %v6522 = vpack.c.bf16 %v6472, %v6471
        %v6523 = vpack.c.bf16 %v6474, %v6473
        %v6524 = vpack.c.bf16 %v6476, %v6475
        %v6525 = vpack.c.bf16 %v6478, %v6477
        %v6526 = vpack.c.bf16 %v6480, %v6479
        %v6527 = vpack.c.bf16 %v6482, %v6481
        %v6528 = vpack.c.bf16 %v6484, %v6483
        %v6529 = vpack.c.bf16 %v6486, %v6485
        %v6530 = vpack.c.bf16 %v6488, %v6487
        %v6531 = vpack.c.bf16 %v6490, %v6489
        %v6532 = vpack.c.bf16 %v6492, %v6491
        %v6533 = vpack.c.bf16 %v6494, %v6493
        %v6534 = vpack.c.bf16 %v6496, %v6495
        %v6535 = vpack.c.bf16 %v6498, %v6497
        %v6536 = vpack.c.bf16 %v6500, %v6499
        %v6537 = vpack.c.bf16 %v6502, %v6501
        %v6538 = vpack.c.bf16 %v6504, %v6503
        %v6539 = vpack.c.bf16 %v6506, %v6505
        %v6540 = vpack.c.bf16 %v6508, %v6507
        %v6541 = vld [vmem:[#allocation14] sm:$0xf]
        %v6542 = vld [vmem:[#allocation14 + $0x4] sm:$0xf]
        %v6543 = vld [vmem:[#allocation14 + $0x8] sm:$0xf]
        %v6544 = vld [vmem:[#allocation14 + $0xc] sm:$0xf]
        %v6545 = vld [vmem:[#allocation14 + $0x10] sm:$0xf]
        %v6546 = vld [vmem:[#allocation14 + $0x14] sm:$0xf]
        %v6547 = vld [vmem:[#allocation14 + $0x18] sm:$0xf]
        %v6548 = vld [vmem:[#allocation14 + $0x1c] sm:$0xf]
        %v6549 = vld [vmem:[#allocation14 + $0x20] sm:$0xf]
        %v6550 = vld [vmem:[#allocation14 + $0x24] sm:$0xf]
        %v6551 = vld [vmem:[#allocation14 + $0x28] sm:$0xf]
        %v6552 = vld [vmem:[#allocation14 + $0x2c] sm:$0xf]
        %v6553 = vld [vmem:[#allocation14 + $0x30] sm:$0xf]
        %v6554 = vld [vmem:[#allocation14 + $0x34] sm:$0xf]
        %v6555 = vld [vmem:[#allocation14 + $0x38] sm:$0xf]
        %v6556 = vld [vmem:[#allocation14 + $0x3c] sm:$0xf]
        %s6557 = sadd.s32 %s436, 32
        %v6558 = vld [vmem:[#allocation15] sm:$0x1]
        %v6560 = vlaneseq
        %v6561 = vshrl.u32 %v6560, 7
        %v6562 = vsub.s32 0, %v6561
        %v6563 = vrot.slane %v6558, %v6562
        %v6581 = vunpack.c.l.b16 %v6541
        %v6582 = vunpack.c.l.b16 %v6542
        %v6583 = vunpack.c.l.b16 %v6543
        %v6584 = vunpack.c.l.b16 %v6544
        %v6585 = vunpack.c.l.b16 %v6545
        %v6586 = vunpack.c.l.b16 %v6546
        %v6587 = vunpack.c.l.b16 %v6547
        %v6588 = vunpack.c.l.b16 %v6548
        %v6589 = vunpack.c.l.b16 %v6549
        %v6590 = vunpack.c.l.b16 %v6550
        %v6591 = vunpack.c.l.b16 %v6551
        %v6592 = vunpack.c.l.b16 %v6552
        %v6593 = vunpack.c.l.b16 %v6553
        %v6594 = vunpack.c.l.b16 %v6554
        %v6595 = vunpack.c.l.b16 %v6555
        %v6596 = vunpack.c.l.b16 %v6556
        %v6597 = vpack.c.b16 %v6582, %v6581
        %v6598 = vpack.c.b16 %v6584, %v6583
        %v6599 = vpack.c.b16 %v6586, %v6585
        %v6600 = vpack.c.b16 %v6588, %v6587
        %v6601 = vpack.c.b16 %v6590, %v6589
        %v6602 = vpack.c.b16 %v6592, %v6591
        %v6603 = vpack.c.b16 %v6594, %v6593
        %v6604 = vpack.c.b16 %v6596, %v6595
        %6613 = vmatprep.subr.bf16.mxu0 0
        %6614 = vmatpush1.bf16.msra.mxu0 %v6597
        %6615 = vmatprep.subr.bf16.mxu0 0
        %6616 = vmatpush1.bf16.msra.mxu0 %v6598
        %6617 = vmatprep.subr.bf16.mxu0 0
        %6618 = vmatpush1.bf16.msra.mxu0 %v6599
        %6619 = vmatprep.subr.bf16.mxu0 0
        %6620 = vmatpush1.bf16.msra.mxu0 %v6600
        %6621 = vmatprep.subr.bf16.mxu0 0
        %6622 = vmatpush1.bf16.msra.mxu0 %v6601
        %6623 = vmatprep.subr.bf16.mxu0 0
        %6624 = vmatpush1.bf16.msra.mxu0 %v6602
        %6625 = vmatprep.subr.bf16.mxu0 0
        %6626 = vmatpush1.bf16.msra.mxu0 %v6603
        %6627 = vmatprep.subr.bf16.mxu0 0
        %6628 = vmatpush1.bf16.msra.mxu0 %v6604
        %6629 = vmatprep.subr.bf16.mxu0 0
        %6630 = vmatpush1.bf16.msra.mxu0 0
        %6631 = vmatprep.subr.bf16.mxu0 0
        %6632 = vmatpush1.bf16.msra.mxu0 0
        %6633 = vmatprep.subr.bf16.mxu0 0
        %6634 = vmatpush1.bf16.msra.mxu0 0
        %6635 = vmatprep.subr.bf16.mxu0 0
        %6636 = vmatpush1.bf16.msra.mxu0 0
        %6637 = vmatprep.subr.bf16.mxu0 0
        %6638 = vmatpush1.bf16.msra.mxu0 0
        %6639 = vmatprep.subr.bf16.mxu0 0
        %6640 = vmatpush1.bf16.msra.mxu0 0
        %6641 = vmatprep.subr.bf16.mxu0 0
        %6642 = vmatpush1.bf16.msra.mxu0 0
        %6643 = vmatprep.subr.bf16.mxu0 0
        %6644 = vmatpush1.bf16.msra.mxu0 0
        %6645 = vmatprep.mubr.bf16.mxu0 0
        %6646 = vmatmul.mubr.bf16.gmra.mrb[0].mxu0 %v6509
        %v6647 = vpop.f32.mrb[0].mxu0
        %v6648 = vadd.f32 %v6563, %v6647
        %v6649 = vpop.f32.mrb[0].mxu0
        %v6650 = vpop.f32.mrb[0].mxu0
        %v6651 = vadd.f32 %v6563, %v6650
        %v6652 = vpop.f32.mrb[0].mxu0
        %6653 = vmatprep.mubr.bf16.mxu0 0
        %6654 = vmatmul.mubr.bf16.gmra.mrb[0].mxu0 %v6510
        %v6655 = vpop.f32.mrb[0].mxu0
        %v6656 = vadd.f32 %v6563, %v6655
        %v6657 = vpop.f32.mrb[0].mxu0
        %v6658 = vpop.f32.mrb[0].mxu0
        %v6659 = vadd.f32 %v6563, %v6658
        %v6660 = vpop.f32.mrb[0].mxu0
        %6661 = vmatprep.mubr.bf16.mxu0 0
        %6662 = vmatmul.mubr.bf16.gmra.mrb[0].mxu0 %v6511
        %v6663 = vpop.f32.mrb[0].mxu0
        %v6664 = vadd.f32 %v6563, %v6663
        %v6665 = vpop.f32.mrb[0].mxu0
        %v6666 = vpop.f32.mrb[0].mxu0
        %v6667 = vadd.f32 %v6563, %v6666
        %v6668 = vpop.f32.mrb[0].mxu0
        %6669 = vmatprep.mubr.bf16.mxu0 0
        %6670 = vmatmul.mubr.bf16.gmra.mrb[0].mxu0 %v6512
        %v6671 = vpop.f32.mrb[0].mxu0
        %v6672 = vadd.f32 %v6563, %v6671
        %v6673 = vpop.f32.mrb[0].mxu0
        %v6674 = vpop.f32.mrb[0].mxu0
        %v6675 = vadd.f32 %v6563, %v6674
        %v6676 = vpop.f32.mrb[0].mxu0
        %6677 = vmatprep.mubr.bf16.mxu0 0
        %6678 = vmatmul.mubr.bf16.gmra.mrb[0].mxu0 %v6513
        %v6679 = vpop.f32.mrb[0].mxu0
        %v6680 = vadd.f32 %v6563, %v6679
        %v6681 = vpop.f32.mrb[0].mxu0
        %v6682 = vpop.f32.mrb[0].mxu0
        %v6683 = vadd.f32 %v6563, %v6682
        %v6684 = vpop.f32.mrb[0].mxu0
        %6685 = vmatprep.mubr.bf16.mxu0 0
        %6686 = vmatmul.mubr.bf16.gmra.mrb[0].mxu0 %v6514
        %v6687 = vpop.f32.mrb[0].mxu0
        %v6688 = vadd.f32 %v6563, %v6687
        %v6689 = vpop.f32.mrb[0].mxu0
        %v6690 = vpop.f32.mrb[0].mxu0
        %v6691 = vadd.f32 %v6563, %v6690
        %v6692 = vpop.f32.mrb[0].mxu0
        %6693 = vmatprep.mubr.bf16.mxu0 0
        %6694 = vmatmul.mubr.bf16.gmra.mrb[0].mxu0 %v6515
        %v6695 = vpop.f32.mrb[0].mxu0
        %v6696 = vadd.f32 %v6563, %v6695
        %v6697 = vpop.f32.mrb[0].mxu0
        %v6698 = vpop.f32.mrb[0].mxu0
        %v6699 = vadd.f32 %v6563, %v6698
        %v6700 = vpop.f32.mrb[0].mxu0
        %6701 = vmatprep.mubr.bf16.mxu0 0
        %6702 = vmatmul.mubr.bf16.gmra.mrb[0].mxu0 %v6516
        %v6703 = vpop.f32.mrb[0].mxu0
        %v6704 = vadd.f32 %v6563, %v6703
        %v6705 = vpop.f32.mrb[0].mxu0
        %v6706 = vpop.f32.mrb[0].mxu0
        %v6707 = vadd.f32 %v6563, %v6706
        %v6708 = vpop.f32.mrb[0].mxu0
        %6709 = vmatprep.mubr.bf16.mxu0 0
        %6710 = vmatmul.mubr.bf16.gmra.mrb[0].mxu0 %v6517
        %v6711 = vpop.f32.mrb[0].mxu0
        %v6712 = vadd.f32 %v6563, %v6711
        %v6713 = vpop.f32.mrb[0].mxu0
        %v6714 = vpop.f32.mrb[0].mxu0
        %v6715 = vadd.f32 %v6563, %v6714
        %v6716 = vpop.f32.mrb[0].mxu0
        %6717 = vmatprep.mubr.bf16.mxu0 0
        %6718 = vmatmul.mubr.bf16.gmra.mrb[0].mxu0 %v6518
        %v6719 = vpop.f32.mrb[0].mxu0
        %v6720 = vadd.f32 %v6563, %v6719
        %v6721 = vpop.f32.mrb[0].mxu0
        %v6722 = vpop.f32.mrb[0].mxu0
        %v6723 = vadd.f32 %v6563, %v6722
        %v6724 = vpop.f32.mrb[0].mxu0
        %6725 = vmatprep.mubr.bf16.mxu0 0
        %6726 = vmatmul.mubr.bf16.gmra.mrb[0].mxu0 %v6519
        %v6727 = vpop.f32.mrb[0].mxu0
        %v6728 = vadd.f32 %v6563, %v6727
        %v6729 = vpop.f32.mrb[0].mxu0
        %v6730 = vpop.f32.mrb[0].mxu0
        %v6731 = vadd.f32 %v6563, %v6730
        %v6732 = vpop.f32.mrb[0].mxu0
        %6733 = vmatprep.mubr.bf16.mxu0 0
        %6734 = vmatmul.mubr.bf16.gmra.mrb[0].mxu0 %v6520
        %v6735 = vpop.f32.mrb[0].mxu0
        %v6736 = vadd.f32 %v6563, %v6735
        %v6737 = vpop.f32.mrb[0].mxu0
        %v6738 = vpop.f32.mrb[0].mxu0
        %v6739 = vadd.f32 %v6563, %v6738
        %v6740 = vpop.f32.mrb[0].mxu0
        %6741 = vmatprep.mubr.bf16.mxu0 0
        %6742 = vmatmul.mubr.bf16.gmra.mrb[0].mxu0 %v6521
        %v6743 = vpop.f32.mrb[0].mxu0
        %v6744 = vadd.f32 %v6563, %v6743
        %v6745 = vpop.f32.mrb[0].mxu0
        %v6746 = vpop.f32.mrb[0].mxu0
        %v6747 = vadd.f32 %v6563, %v6746
        %v6748 = vpop.f32.mrb[0].mxu0
        %6749 = vmatprep.mubr.bf16.mxu0 0
        %6750 = vmatmul.mubr.bf16.gmra.mrb[0].mxu0 %v6522
        %v6751 = vpop.f32.mrb[0].mxu0
        %v6752 = vadd.f32 %v6563, %v6751
        %v6753 = vpop.f32.mrb[0].mxu0
        %v6754 = vpop.f32.mrb[0].mxu0
        %v6755 = vadd.f32 %v6563, %v6754
        %v6756 = vpop.f32.mrb[0].mxu0
        %6757 = vmatprep.mubr.bf16.mxu0 0
        %6758 = vmatmul.mubr.bf16.gmra.mrb[0].mxu0 %v6523
        %v6759 = vpop.f32.mrb[0].mxu0
        %v6760 = vadd.f32 %v6563, %v6759
        %v6761 = vpop.f32.mrb[0].mxu0
        %v6762 = vpop.f32.mrb[0].mxu0
        %v6763 = vadd.f32 %v6563, %v6762
        %v6764 = vpop.f32.mrb[0].mxu0
        %6765 = vmatprep.mubr.bf16.mxu0 0
        %6766 = vmatmul.mubr.bf16.gmra.mrb[0].mxu0 %v6524
        %v6767 = vpop.f32.mrb[0].mxu0
        %v6768 = vadd.f32 %v6563, %v6767
        %v6769 = vpop.f32.mrb[0].mxu0
        %v6770 = vpop.f32.mrb[0].mxu0
        %v6771 = vadd.f32 %v6563, %v6770
        %v6772 = vpop.f32.mrb[0].mxu0
        %6773 = vmatprep.mubr.bf16.mxu0 0
        %6774 = vmatmul.mubr.bf16.gmra.mrb[0].mxu0 %v6525
        %v6775 = vpop.f32.mrb[0].mxu0
        %v6776 = vadd.f32 %v6563, %v6775
        %v6777 = vpop.f32.mrb[0].mxu0
        %v6778 = vpop.f32.mrb[0].mxu0
        %v6779 = vadd.f32 %v6563, %v6778
        %v6780 = vpop.f32.mrb[0].mxu0
        %6781 = vmatprep.mubr.bf16.mxu0 0
        %6782 = vmatmul.mubr.bf16.gmra.mrb[0].mxu0 %v6526
        %v6783 = vpop.f32.mrb[0].mxu0
        %v6784 = vadd.f32 %v6563, %v6783
        %v6785 = vpop.f32.mrb[0].mxu0
        %v6786 = vpop.f32.mrb[0].mxu0
        %v6787 = vadd.f32 %v6563, %v6786
        %v6788 = vpop.f32.mrb[0].mxu0
        %6789 = vmatprep.mubr.bf16.mxu0 0
        %6790 = vmatmul.mubr.bf16.gmra.mrb[0].mxu0 %v6527
        %v6791 = vpop.f32.mrb[0].mxu0
        %v6792 = vadd.f32 %v6563, %v6791
        %v6793 = vpop.f32.mrb[0].mxu0
        %v6794 = vpop.f32.mrb[0].mxu0
        %v6795 = vadd.f32 %v6563, %v6794
        %v6796 = vpop.f32.mrb[0].mxu0
        %6797 = vmatprep.mubr.bf16.mxu0 0
        %6798 = vmatmul.mubr.bf16.gmra.mrb[0].mxu0 %v6528
        %v6799 = vpop.f32.mrb[0].mxu0
        %v6800 = vadd.f32 %v6563, %v6799
        %v6801 = vpop.f32.mrb[0].mxu0
        %v6802 = vpop.f32.mrb[0].mxu0
        %v6803 = vadd.f32 %v6563, %v6802
        %v6804 = vpop.f32.mrb[0].mxu0
        %6805 = vmatprep.mubr.bf16.mxu0 0
        %6806 = vmatmul.mubr.bf16.gmra.mrb[0].mxu0 %v6529
        %v6807 = vpop.f32.mrb[0].mxu0
        %v6808 = vadd.f32 %v6563, %v6807
        %v6809 = vpop.f32.mrb[0].mxu0
        %v6810 = vpop.f32.mrb[0].mxu0
        %v6811 = vadd.f32 %v6563, %v6810
        %v6812 = vpop.f32.mrb[0].mxu0
        %6813 = vmatprep.mubr.bf16.mxu0 0
        %6814 = vmatmul.mubr.bf16.gmra.mrb[0].mxu0 %v6530
        %v6815 = vpop.f32.mrb[0].mxu0
        %v6816 = vadd.f32 %v6563, %v6815
        %v6817 = vpop.f32.mrb[0].mxu0
        %v6818 = vpop.f32.mrb[0].mxu0
        %v6819 = vadd.f32 %v6563, %v6818
        %v6820 = vpop.f32.mrb[0].mxu0
        %6821 = vmatprep.mubr.bf16.mxu0 0
        %6822 = vmatmul.mubr.bf16.gmra.mrb[0].mxu0 %v6531
        %v6823 = vpop.f32.mrb[0].mxu0
        %v6824 = vadd.f32 %v6563, %v6823
        %v6825 = vpop.f32.mrb[0].mxu0
        %v6826 = vpop.f32.mrb[0].mxu0
        %v6827 = vadd.f32 %v6563, %v6826
        %v6828 = vpop.f32.mrb[0].mxu0
        %6829 = vmatprep.mubr.bf16.mxu0 0
        %6830 = vmatmul.mubr.bf16.gmra.mrb[0].mxu0 %v6532
        %v6831 = vpop.f32.mrb[0].mxu0
        %v6832 = vadd.f32 %v6563, %v6831
        %v6833 = vpop.f32.mrb[0].mxu0
        %v6834 = vpop.f32.mrb[0].mxu0
        %v6835 = vadd.f32 %v6563, %v6834
        %v6836 = vpop.f32.mrb[0].mxu0
        %6837 = vmatprep.mubr.bf16.mxu0 0
        %6838 = vmatmul.mubr.bf16.gmra.mrb[0].mxu0 %v6533
        %v6839 = vpop.f32.mrb[0].mxu0
        %v6840 = vadd.f32 %v6563, %v6839
        %v6841 = vpop.f32.mrb[0].mxu0
        %v6842 = vpop.f32.mrb[0].mxu0
        %v6843 = vadd.f32 %v6563, %v6842
        %v6844 = vpop.f32.mrb[0].mxu0
        %6845 = vmatprep.mubr.bf16.mxu0 0
        %6846 = vmatmul.mubr.bf16.gmra.mrb[0].mxu0 %v6534
        %v6847 = vpop.f32.mrb[0].mxu0
        %v6848 = vadd.f32 %v6563, %v6847
        %v6849 = vpop.f32.mrb[0].mxu0
        %v6850 = vpop.f32.mrb[0].mxu0
        %v6851 = vadd.f32 %v6563, %v6850
        %v6852 = vpop.f32.mrb[0].mxu0
        %6853 = vmatprep.mubr.bf16.mxu0 0
        %6854 = vmatmul.mubr.bf16.gmra.mrb[0].mxu0 %v6535
        %v6855 = vpop.f32.mrb[0].mxu0
        %v6856 = vadd.f32 %v6563, %v6855
        %v6857 = vpop.f32.mrb[0].mxu0
        %v6858 = vpop.f32.mrb[0].mxu0
        %v6859 = vadd.f32 %v6563, %v6858
        %v6860 = vpop.f32.mrb[0].mxu0
        %6861 = vmatprep.mubr.bf16.mxu0 0
        %6862 = vmatmul.mubr.bf16.gmra.mrb[0].mxu0 %v6536
        %v6863 = vpop.f32.mrb[0].mxu0
        %v6864 = vadd.f32 %v6563, %v6863
        %v6865 = vpop.f32.mrb[0].mxu0
        %v6866 = vpop.f32.mrb[0].mxu0
        %v6867 = vadd.f32 %v6563, %v6866
        %v6868 = vpop.f32.mrb[0].mxu0
        %6869 = vmatprep.mubr.bf16.mxu0 0
        %6870 = vmatmul.mubr.bf16.gmra.mrb[0].mxu0 %v6537
        %v6871 = vpop.f32.mrb[0].mxu0
        %v6872 = vadd.f32 %v6563, %v6871
        %v6873 = vpop.f32.mrb[0].mxu0
        %v6874 = vpop.f32.mrb[0].mxu0
        %v6875 = vadd.f32 %v6563, %v6874
        %v6876 = vpop.f32.mrb[0].mxu0
        %6877 = vmatprep.mubr.bf16.mxu0 0
        %6878 = vmatmul.mubr.bf16.gmra.mrb[0].mxu0 %v6538
        %v6879 = vpop.f32.mrb[0].mxu0
        %v6880 = vadd.f32 %v6563, %v6879
        %v6881 = vpop.f32.mrb[0].mxu0
        %v6882 = vpop.f32.mrb[0].mxu0
        %v6883 = vadd.f32 %v6563, %v6882
        %v6884 = vpop.f32.mrb[0].mxu0
        %6885 = vmatprep.mubr.bf16.mxu0 0
        %6886 = vmatmul.mubr.bf16.gmra.mrb[0].mxu0 %v6539
        %v6887 = vpop.f32.mrb[0].mxu0
        %v6888 = vadd.f32 %v6563, %v6887
        %v6889 = vpop.f32.mrb[0].mxu0
        %v6890 = vpop.f32.mrb[0].mxu0
        %v6891 = vadd.f32 %v6563, %v6890
        %v6892 = vpop.f32.mrb[0].mxu0
        %6893 = vmatprep.mubr.bf16.mxu0 0
        %6894 = vmatmul.mubr.bf16.gmra.mrb[0].mxu0 %v6540
        %v6895 = vpop.f32.mrb[0].mxu0
        %v6896 = vadd.f32 %v6563, %v6895
        %v6897 = vpop.f32.mrb[0].mxu0
        %v6898 = vpop.f32.mrb[0].mxu0
        %v6899 = vadd.f32 %v6563, %v6898
        %v6900 = vpop.f32.mrb[0].mxu0
        %6901 = vdwg.mxu0
        %s6902 = sshra.s32 %s6557, 3
        %s6903 = sand.u32 %s6557, 7
        %s6904 = smul.addr %s6902, 4
        %s6905 = scalar_lea.vmem %s373, %s6904 [#allocation3]
        %v6906 = vld [vmem:[%s6905] sm:$0xf]
        %v6907 = vld [vmem:[%s6905 + $0x4] sm:$0xf]
        %v6908 = vld [vmem:[%s6905 + $0x8] sm:$0xf]
        %v6909 = vld [vmem:[%s6905 + $0xc] sm:$0xf]
        %v6910 = vld [vmem:[%s6905 + $0x10] sm:$0xf]
        %v6911 = vld [vmem:[%s6905 + $0x14] sm:$0xf]
        %v6912 = vld [vmem:[%s6905 + $0x18] sm:$0xf]
        %v6913 = vld [vmem:[%s6905 + $0x1c] sm:$0xf]
        %v6914 = vld [vmem:[%s6905 + $0x20] sm:$0xf]
        %v6915 = vld [vmem:[%s6905 + $0x24] sm:$0xf]
        %v6916 = vld [vmem:[%s6905 + $0x28] sm:$0xf]
        %v6917 = vld [vmem:[%s6905 + $0x2c] sm:$0xf]
        %v6918 = vld [vmem:[%s6905 + $0x30] sm:$0xf]
        %v6919 = vld [vmem:[%s6905 + $0x34] sm:$0xf]
        %v6920 = vld [vmem:[%s6905 + $0x38] sm:$0xf]
        %v6921 = vld [vmem:[%s6905 + $0x3c] sm:$0xf]
        %v6922 = vld [vmem:[%s6905 + $0x40] sm:$0xf]
        %v6923 = vld [vmem:[%s6905 + $0x44] sm:$0xf]
        %v6924 = vld [vmem:[%s6905 + $0x48] sm:$0xf]
        %v6925 = vld [vmem:[%s6905 + $0x4c] sm:$0xf]
        %v6926 = vld [vmem:[%s6905 + $0x50] sm:$0xf]
        %v6927 = vld [vmem:[%s6905 + $0x54] sm:$0xf]
        %v6928 = vld [vmem:[%s6905 + $0x58] sm:$0xf]
        %v6929 = vld [vmem:[%s6905 + $0x5c] sm:$0xf]
        %v6930 = vld [vmem:[%s6905 + $0x60] sm:$0xf]
        %v6931 = vld [vmem:[%s6905 + $0x64] sm:$0xf]
        %v6932 = vld [vmem:[%s6905 + $0x68] sm:$0xf]
        %v6933 = vld [vmem:[%s6905 + $0x6c] sm:$0xf]
        %v6934 = vld [vmem:[%s6905 + $0x70] sm:$0xf]
        %v6935 = vld [vmem:[%s6905 + $0x74] sm:$0xf]
        %v6936 = vld [vmem:[%s6905 + $0x78] sm:$0xf]
        %v6937 = vld [vmem:[%s6905 + $0x7c] sm:$0xf]
        %v6938 = vld [vmem:[%s6905 + $0x80] sm:$0xf]
        %v6939 = vld [vmem:[%s6905 + $0x84] sm:$0xf]
        %v6940 = vld [vmem:[%s6905 + $0x88] sm:$0xf]
        %v6941 = vld [vmem:[%s6905 + $0x8c] sm:$0xf]
        %v6942 = vld [vmem:[%s6905 + $0x90] sm:$0xf]
        %v6943 = vld [vmem:[%s6905 + $0x94] sm:$0xf]
        %v6944 = vld [vmem:[%s6905 + $0x98] sm:$0xf]
        %v6945 = vld [vmem:[%s6905 + $0x9c] sm:$0xf]
        %v6946 = vld [vmem:[%s6905 + $0xa0] sm:$0xf]
        %v6947 = vld [vmem:[%s6905 + $0xa4] sm:$0xf]
        %v6948 = vld [vmem:[%s6905 + $0xa8] sm:$0xf]
        %v6949 = vld [vmem:[%s6905 + $0xac] sm:$0xf]
        %v6950 = vld [vmem:[%s6905 + $0xb0] sm:$0xf]
        %v6951 = vld [vmem:[%s6905 + $0xb4] sm:$0xf]
        %v6952 = vld [vmem:[%s6905 + $0xb8] sm:$0xf]
        %v6953 = vld [vmem:[%s6905 + $0xbc] sm:$0xf]
        %v6954 = vld [vmem:[%s6905 + $0xc0] sm:$0xf]
        %v6955 = vld [vmem:[%s6905 + $0xc4] sm:$0xf]
        %v6956 = vld [vmem:[%s6905 + $0xc8] sm:$0xf]
        %v6957 = vld [vmem:[%s6905 + $0xcc] sm:$0xf]
        %v6958 = vld [vmem:[%s6905 + $0xd0] sm:$0xf]
        %v6959 = vld [vmem:[%s6905 + $0xd4] sm:$0xf]
        %v6960 = vld [vmem:[%s6905 + $0xd8] sm:$0xf]
        %v6961 = vld [vmem:[%s6905 + $0xdc] sm:$0xf]
        %v6962 = vld [vmem:[%s6905 + $0xe0] sm:$0xf]
        %v6963 = vld [vmem:[%s6905 + $0xe4] sm:$0xf]
        %v6964 = vld [vmem:[%s6905 + $0xe8] sm:$0xf]
        %v6965 = vld [vmem:[%s6905 + $0xec] sm:$0xf]
        %v6966 = vld [vmem:[%s6905 + $0xf0] sm:$0xf]
        %v6967 = vld [vmem:[%s6905 + $0xf4] sm:$0xf]
        %v6968 = vld [vmem:[%s6905 + $0xf8] sm:$0xf]
        %v6969 = vld [vmem:[%s6905 + $0xfc] sm:$0xf]
        %v6970 = vunpack.c.l.bf16 %v6906
        %v6971 = vunpack.c.l.bf16 %v6907
        %v6972 = vunpack.c.l.bf16 %v6908
        %v6973 = vunpack.c.l.bf16 %v6909
        %v6974 = vunpack.c.l.bf16 %v6910
        %v6975 = vunpack.c.l.bf16 %v6911
        %v6976 = vunpack.c.l.bf16 %v6912
        %v6977 = vunpack.c.l.bf16 %v6913
        %v6978 = vunpack.c.l.bf16 %v6914
        %v6979 = vunpack.c.l.bf16 %v6915
        %v6980 = vunpack.c.l.bf16 %v6916
        %v6981 = vunpack.c.l.bf16 %v6917
        %v6982 = vunpack.c.l.bf16 %v6918
        %v6983 = vunpack.c.l.bf16 %v6919
        %v6984 = vunpack.c.l.bf16 %v6920
        %v6985 = vunpack.c.l.bf16 %v6921
        %v6986 = vunpack.c.l.bf16 %v6922
        %v6987 = vunpack.c.l.bf16 %v6923
        %v6988 = vunpack.c.l.bf16 %v6924
        %v6989 = vunpack.c.l.bf16 %v6925
        %v6990 = vunpack.c.l.bf16 %v6926
        %v6991 = vunpack.c.l.bf16 %v6927
        %v6992 = vunpack.c.l.bf16 %v6928
        %v6993 = vunpack.c.l.bf16 %v6929
        %v6994 = vunpack.c.l.bf16 %v6930
        %v6995 = vunpack.c.l.bf16 %v6931
        %v6996 = vunpack.c.l.bf16 %v6932
        %v6997 = vunpack.c.l.bf16 %v6933
        %v6998 = vunpack.c.l.bf16 %v6934
        %v6999 = vunpack.c.l.bf16 %v6935
        %v7000 = vunpack.c.l.bf16 %v6936
        %v7001 = vunpack.c.l.bf16 %v6937
        %v7002 = vunpack.c.l.bf16 %v6938
        %v7003 = vunpack.c.l.bf16 %v6939
        %v7004 = vunpack.c.l.bf16 %v6940
        %v7005 = vunpack.c.l.bf16 %v6941
        %v7006 = vunpack.c.l.bf16 %v6942
        %v7007 = vunpack.c.l.bf16 %v6943
        %v7008 = vunpack.c.l.bf16 %v6944
        %v7009 = vunpack.c.l.bf16 %v6945
        %v7010 = vunpack.c.l.bf16 %v6946
        %v7011 = vunpack.c.l.bf16 %v6947
        %v7012 = vunpack.c.l.bf16 %v6948
        %v7013 = vunpack.c.l.bf16 %v6949
        %v7014 = vunpack.c.l.bf16 %v6950
        %v7015 = vunpack.c.l.bf16 %v6951
        %v7016 = vunpack.c.l.bf16 %v6952
        %v7017 = vunpack.c.l.bf16 %v6953
        %v7018 = vunpack.c.l.bf16 %v6954
        %v7019 = vunpack.c.l.bf16 %v6955
        %v7020 = vunpack.c.l.bf16 %v6956
        %v7021 = vunpack.c.l.bf16 %v6957
        %v7022 = vunpack.c.l.bf16 %v6958
        %v7023 = vunpack.c.l.bf16 %v6959
        %v7024 = vunpack.c.l.bf16 %v6960
        %v7025 = vunpack.c.l.bf16 %v6961
        %v7026 = vunpack.c.l.bf16 %v6962
        %v7027 = vunpack.c.l.bf16 %v6963
        %v7028 = vunpack.c.l.bf16 %v6964
        %v7029 = vunpack.c.l.bf16 %v6965
        %v7030 = vunpack.c.l.bf16 %v6966
        %v7031 = vunpack.c.l.bf16 %v6967
        %v7032 = vunpack.c.l.bf16 %v6968
        %v7033 = vunpack.c.l.bf16 %v6969
        %v7034 = vadd.f32 %v6648, %v6970
        %v7035 = vadd.f32 %v6651, %v6971
        %v7036 = vadd.f32 %v6656, %v6972
        %v7037 = vadd.f32 %v6659, %v6973
        %v7038 = vadd.f32 %v6664, %v6974
        %v7039 = vadd.f32 %v6667, %v6975
        %v7040 = vadd.f32 %v6672, %v6976
        %v7041 = vadd.f32 %v6675, %v6977
        %v7042 = vadd.f32 %v6680, %v6978
        %v7043 = vadd.f32 %v6683, %v6979
        %v7044 = vadd.f32 %v6688, %v6980
        %v7045 = vadd.f32 %v6691, %v6981
        %v7046 = vadd.f32 %v6696, %v6982
        %v7047 = vadd.f32 %v6699, %v6983
        %v7048 = vadd.f32 %v6704, %v6984
        %v7049 = vadd.f32 %v6707, %v6985
        %v7050 = vadd.f32 %v6712, %v6986
        %v7051 = vadd.f32 %v6715, %v6987
        %v7052 = vadd.f32 %v6720, %v6988
        %v7053 = vadd.f32 %v6723, %v6989
        %v7054 = vadd.f32 %v6728, %v6990
        %v7055 = vadd.f32 %v6731, %v6991
        %v7056 = vadd.f32 %v6736, %v6992
        %v7057 = vadd.f32 %v6739, %v6993
        %v7058 = vadd.f32 %v6744, %v6994
        %v7059 = vadd.f32 %v6747, %v6995
        %v7060 = vadd.f32 %v6752, %v6996
        %v7061 = vadd.f32 %v6755, %v6997
        %v7062 = vadd.f32 %v6760, %v6998
        %v7063 = vadd.f32 %v6763, %v6999
        %v7064 = vadd.f32 %v6768, %v7000
        %v7065 = vadd.f32 %v6771, %v7001
        %v7066 = vadd.f32 %v6776, %v7002
        %v7067 = vadd.f32 %v6779, %v7003
        %v7068 = vadd.f32 %v6784, %v7004
        %v7069 = vadd.f32 %v6787, %v7005
        %v7070 = vadd.f32 %v6792, %v7006
        %v7071 = vadd.f32 %v6795, %v7007
        %v7072 = vadd.f32 %v6800, %v7008
        %v7073 = vadd.f32 %v6803, %v7009
        %v7074 = vadd.f32 %v6808, %v7010
        %v7075 = vadd.f32 %v6811, %v7011
        %v7076 = vadd.f32 %v6816, %v7012
        %v7077 = vadd.f32 %v6819, %v7013
        %v7078 = vadd.f32 %v6824, %v7014
        %v7079 = vadd.f32 %v6827, %v7015
        %v7080 = vadd.f32 %v6832, %v7016
        %v7081 = vadd.f32 %v6835, %v7017
        %v7082 = vadd.f32 %v6840, %v7018
        %v7083 = vadd.f32 %v6843, %v7019
        %v7084 = vadd.f32 %v6848, %v7020
        %v7085 = vadd.f32 %v6851, %v7021
        %v7086 = vadd.f32 %v6856, %v7022
        %v7087 = vadd.f32 %v6859, %v7023
        %v7088 = vadd.f32 %v6864, %v7024
        %v7089 = vadd.f32 %v6867, %v7025
        %v7090 = vadd.f32 %v6872, %v7026
        %v7091 = vadd.f32 %v6875, %v7027
        %v7092 = vadd.f32 %v6880, %v7028
        %v7093 = vadd.f32 %v6883, %v7029
        %v7094 = vadd.f32 %v6888, %v7030
        %v7095 = vadd.f32 %v6891, %v7031
        %v7096 = vadd.f32 %v6896, %v7032
        %v7097 = vadd.f32 %v6899, %v7033
        %v7098 = vmax.f32 %v7034, 0.0
        %v7099 = vmax.f32 %v7035, 0.0
        %v7100 = vmax.f32 %v7036, 0.0
        %v7101 = vmax.f32 %v7037, 0.0
        %v7102 = vmax.f32 %v7038, 0.0
        %v7103 = vmax.f32 %v7039, 0.0
        %v7104 = vmax.f32 %v7040, 0.0
        %v7105 = vmax.f32 %v7041, 0.0
        %v7106 = vmax.f32 %v7042, 0.0
        %v7107 = vmax.f32 %v7043, 0.0
        %v7108 = vmax.f32 %v7044, 0.0
        %v7109 = vmax.f32 %v7045, 0.0
        %v7110 = vmax.f32 %v7046, 0.0
        %v7111 = vmax.f32 %v7047, 0.0
        %v7112 = vmax.f32 %v7048, 0.0
        %v7113 = vmax.f32 %v7049, 0.0
        %v7114 = vmax.f32 %v7050, 0.0
        %v7115 = vmax.f32 %v7051, 0.0
        %v7116 = vmax.f32 %v7052, 0.0
        %v7117 = vmax.f32 %v7053, 0.0
        %v7118 = vmax.f32 %v7054, 0.0
        %v7119 = vmax.f32 %v7055, 0.0
        %v7120 = vmax.f32 %v7056, 0.0
        %v7121 = vmax.f32 %v7057, 0.0
        %v7122 = vmax.f32 %v7058, 0.0
        %v7123 = vmax.f32 %v7059, 0.0
        %v7124 = vmax.f32 %v7060, 0.0
        %v7125 = vmax.f32 %v7061, 0.0
        %v7126 = vmax.f32 %v7062, 0.0
        %v7127 = vmax.f32 %v7063, 0.0
        %v7128 = vmax.f32 %v7064, 0.0
        %v7129 = vmax.f32 %v7065, 0.0
        %v7130 = vmax.f32 %v7066, 0.0
        %v7131 = vmax.f32 %v7067, 0.0
        %v7132 = vmax.f32 %v7068, 0.0
        %v7133 = vmax.f32 %v7069, 0.0
        %v7134 = vmax.f32 %v7070, 0.0
        %v7135 = vmax.f32 %v7071, 0.0
        %v7136 = vmax.f32 %v7072, 0.0
        %v7137 = vmax.f32 %v7073, 0.0
        %v7138 = vmax.f32 %v7074, 0.0
        %v7139 = vmax.f32 %v7075, 0.0
        %v7140 = vmax.f32 %v7076, 0.0
        %v7141 = vmax.f32 %v7077, 0.0
        %v7142 = vmax.f32 %v7078, 0.0
        %v7143 = vmax.f32 %v7079, 0.0
        %v7144 = vmax.f32 %v7080, 0.0
        %v7145 = vmax.f32 %v7081, 0.0
        %v7146 = vmax.f32 %v7082, 0.0
        %v7147 = vmax.f32 %v7083, 0.0
        %v7148 = vmax.f32 %v7084, 0.0
        %v7149 = vmax.f32 %v7085, 0.0
        %v7150 = vmax.f32 %v7086, 0.0
        %v7151 = vmax.f32 %v7087, 0.0
        %v7152 = vmax.f32 %v7088, 0.0
        %v7153 = vmax.f32 %v7089, 0.0
        %v7154 = vmax.f32 %v7090, 0.0
        %v7155 = vmax.f32 %v7091, 0.0
        %v7156 = vmax.f32 %v7092, 0.0
        %v7157 = vmax.f32 %v7093, 0.0
        %v7158 = vmax.f32 %v7094, 0.0
        %v7159 = vmax.f32 %v7095, 0.0
        %v7160 = vmax.f32 %v7096, 0.0
        %v7161 = vmax.f32 %v7097, 0.0
        %v7162 = vpack.c.bf16 %v7099, %v7098
        %v7163 = vpack.c.bf16 %v7101, %v7100
        %v7164 = vpack.c.bf16 %v7103, %v7102
        %v7165 = vpack.c.bf16 %v7105, %v7104
        %v7166 = vpack.c.bf16 %v7107, %v7106
        %v7167 = vpack.c.bf16 %v7109, %v7108
        %v7168 = vpack.c.bf16 %v7111, %v7110
        %v7169 = vpack.c.bf16 %v7113, %v7112
        %v7170 = vpack.c.bf16 %v7115, %v7114
        %v7171 = vpack.c.bf16 %v7117, %v7116
        %v7172 = vpack.c.bf16 %v7119, %v7118
        %v7173 = vpack.c.bf16 %v7121, %v7120
        %v7174 = vpack.c.bf16 %v7123, %v7122
        %v7175 = vpack.c.bf16 %v7125, %v7124
        %v7176 = vpack.c.bf16 %v7127, %v7126
        %v7177 = vpack.c.bf16 %v7129, %v7128
        %v7178 = vpack.c.bf16 %v7131, %v7130
        %v7179 = vpack.c.bf16 %v7133, %v7132
        %v7180 = vpack.c.bf16 %v7135, %v7134
        %v7181 = vpack.c.bf16 %v7137, %v7136
        %v7182 = vpack.c.bf16 %v7139, %v7138
        %v7183 = vpack.c.bf16 %v7141, %v7140
        %v7184 = vpack.c.bf16 %v7143, %v7142
        %v7185 = vpack.c.bf16 %v7145, %v7144
        %v7186 = vpack.c.bf16 %v7147, %v7146
        %v7187 = vpack.c.bf16 %v7149, %v7148
        %v7188 = vpack.c.bf16 %v7151, %v7150
        %v7189 = vpack.c.bf16 %v7153, %v7152
        %v7190 = vpack.c.bf16 %v7155, %v7154
        %v7191 = vpack.c.bf16 %v7157, %v7156
        %v7192 = vpack.c.bf16 %v7159, %v7158
        %v7193 = vpack.c.bf16 %v7161, %v7160
        %v7226 = vunpack.c.l.b16 %v7162
        %v7227 = vunpack.c.h.b16 %v7162
        %v7228 = vunpack.c.l.b16 %v7163
        %v7229 = vunpack.c.h.b16 %v7163
        %v7230 = vunpack.c.l.b16 %v7164
        %v7231 = vunpack.c.h.b16 %v7164
        %v7232 = vunpack.c.l.b16 %v7165
        %v7233 = vunpack.c.h.b16 %v7165
        %v7234 = vunpack.c.l.b16 %v7166
        %v7235 = vunpack.c.h.b16 %v7166
        %v7236 = vunpack.c.l.b16 %v7167
        %v7237 = vunpack.c.h.b16 %v7167
        %v7238 = vunpack.c.l.b16 %v7168
        %v7239 = vunpack.c.h.b16 %v7168
        %v7240 = vunpack.c.l.b16 %v7169
        %v7241 = vunpack.c.h.b16 %v7169
        %v7242 = vunpack.c.l.b16 %v7170
        %v7243 = vunpack.c.h.b16 %v7170
        %v7244 = vunpack.c.l.b16 %v7171
        %v7245 = vunpack.c.h.b16 %v7171
        %v7246 = vunpack.c.l.b16 %v7172
        %v7247 = vunpack.c.h.b16 %v7172
        %v7248 = vunpack.c.l.b16 %v7173
        %v7249 = vunpack.c.h.b16 %v7173
        %v7250 = vunpack.c.l.b16 %v7174
        %v7251 = vunpack.c.h.b16 %v7174
        %v7252 = vunpack.c.l.b16 %v7175
        %v7253 = vunpack.c.h.b16 %v7175
        %v7254 = vunpack.c.l.b16 %v7176
        %v7255 = vunpack.c.h.b16 %v7176
        %v7256 = vunpack.c.l.b16 %v7177
        %v7257 = vunpack.c.h.b16 %v7177
        %v7258 = vunpack.c.l.b16 %v7178
        %v7259 = vunpack.c.h.b16 %v7178
        %v7260 = vunpack.c.l.b16 %v7179
        %v7261 = vunpack.c.h.b16 %v7179
        %v7262 = vunpack.c.l.b16 %v7180
        %v7263 = vunpack.c.h.b16 %v7180
        %v7264 = vunpack.c.l.b16 %v7181
        %v7265 = vunpack.c.h.b16 %v7181
        %v7266 = vunpack.c.l.b16 %v7182
        %v7267 = vunpack.c.h.b16 %v7182
        %v7268 = vunpack.c.l.b16 %v7183
        %v7269 = vunpack.c.h.b16 %v7183
        %v7270 = vunpack.c.l.b16 %v7184
        %v7271 = vunpack.c.h.b16 %v7184
        %v7272 = vunpack.c.l.b16 %v7185
        %v7273 = vunpack.c.h.b16 %v7185
        %v7274 = vunpack.c.l.b16 %v7186
        %v7275 = vunpack.c.h.b16 %v7186
        %v7276 = vunpack.c.l.b16 %v7187
        %v7277 = vunpack.c.h.b16 %v7187
        %v7278 = vunpack.c.l.b16 %v7188
        %v7279 = vunpack.c.h.b16 %v7188
        %v7280 = vunpack.c.l.b16 %v7189
        %v7281 = vunpack.c.h.b16 %v7189
        %v7282 = vunpack.c.l.b16 %v7190
        %v7283 = vunpack.c.h.b16 %v7190
        %v7284 = vunpack.c.l.b16 %v7191
        %v7285 = vunpack.c.h.b16 %v7191
        %v7286 = vunpack.c.l.b16 %v7192
        %v7287 = vunpack.c.h.b16 %v7192
        %v7288 = vunpack.c.l.b16 %v7193
        %v7289 = vunpack.c.h.b16 %v7193
        %v7290 = vpack.c.b16 %v7226, %v7226
        %v7291 = vpack.c.b16 %v7227, %v7227
        %v7292 = vpack.c.b16 %v7228, %v7228
        %v7293 = vpack.c.b16 %v7229, %v7229
        %v7294 = vpack.c.b16 %v7230, %v7230
        %v7295 = vpack.c.b16 %v7231, %v7231
        %v7296 = vpack.c.b16 %v7232, %v7232
        %v7297 = vpack.c.b16 %v7233, %v7233
        %v7298 = vpack.c.b16 %v7234, %v7234
        %v7299 = vpack.c.b16 %v7235, %v7235
        %v7300 = vpack.c.b16 %v7236, %v7236
        %v7301 = vpack.c.b16 %v7237, %v7237
        %v7302 = vpack.c.b16 %v7238, %v7238
        %v7303 = vpack.c.b16 %v7239, %v7239
        %v7304 = vpack.c.b16 %v7240, %v7240
        %v7305 = vpack.c.b16 %v7241, %v7241
        %v7306 = vpack.c.b16 %v7242, %v7242
        %v7307 = vpack.c.b16 %v7243, %v7243
        %v7308 = vpack.c.b16 %v7244, %v7244
        %v7309 = vpack.c.b16 %v7245, %v7245
        %v7310 = vpack.c.b16 %v7246, %v7246
        %v7311 = vpack.c.b16 %v7247, %v7247
        %v7312 = vpack.c.b16 %v7248, %v7248
        %v7313 = vpack.c.b16 %v7249, %v7249
        %v7314 = vpack.c.b16 %v7250, %v7250
        %v7315 = vpack.c.b16 %v7251, %v7251
        %v7316 = vpack.c.b16 %v7252, %v7252
        %v7317 = vpack.c.b16 %v7253, %v7253
        %v7318 = vpack.c.b16 %v7254, %v7254
        %v7319 = vpack.c.b16 %v7255, %v7255
        %v7320 = vpack.c.b16 %v7256, %v7256
        %v7321 = vpack.c.b16 %v7257, %v7257
        %v7322 = vpack.c.b16 %v7258, %v7258
        %v7323 = vpack.c.b16 %v7259, %v7259
        %v7324 = vpack.c.b16 %v7260, %v7260
        %v7325 = vpack.c.b16 %v7261, %v7261
        %v7326 = vpack.c.b16 %v7262, %v7262
        %v7327 = vpack.c.b16 %v7263, %v7263
        %v7328 = vpack.c.b16 %v7264, %v7264
        %v7329 = vpack.c.b16 %v7265, %v7265
        %v7330 = vpack.c.b16 %v7266, %v7266
        %v7331 = vpack.c.b16 %v7267, %v7267
        %v7332 = vpack.c.b16 %v7268, %v7268
        %v7333 = vpack.c.b16 %v7269, %v7269
        %v7334 = vpack.c.b16 %v7270, %v7270
        %v7335 = vpack.c.b16 %v7271, %v7271
        %v7336 = vpack.c.b16 %v7272, %v7272
        %v7337 = vpack.c.b16 %v7273, %v7273
        %v7338 = vpack.c.b16 %v7274, %v7274
        %v7339 = vpack.c.b16 %v7275, %v7275
        %v7340 = vpack.c.b16 %v7276, %v7276
        %v7341 = vpack.c.b16 %v7277, %v7277
        %v7342 = vpack.c.b16 %v7278, %v7278
        %v7343 = vpack.c.b16 %v7279, %v7279
        %v7344 = vpack.c.b16 %v7280, %v7280
        %v7345 = vpack.c.b16 %v7281, %v7281
        %v7346 = vpack.c.b16 %v7282, %v7282
        %v7347 = vpack.c.b16 %v7283, %v7283
        %v7348 = vpack.c.b16 %v7284, %v7284
        %v7349 = vpack.c.b16 %v7285, %v7285
        %v7350 = vpack.c.b16 %v7286, %v7286
        %v7351 = vpack.c.b16 %v7287, %v7287
        %v7352 = vpack.c.b16 %v7288, %v7288
        %v7353 = vpack.c.b16 %v7289, %v7289
        %7418 = vst [vmem:[%s433] sm:$0xf] %v7290
        %7419 = vst [vmem:[%s433 + $0x4] sm:$0xf] %v7291
        %7420 = vst [vmem:[%s433 + $0x8] sm:$0xf] %v7292
        %7421 = vst [vmem:[%s433 + $0xc] sm:$0xf] %v7293
        %7422 = vst [vmem:[%s433 + $0x10] sm:$0xf] %v7294
        %7423 = vst [vmem:[%s433 + $0x14] sm:$0xf] %v7295
        %7424 = vst [vmem:[%s433 + $0x18] sm:$0xf] %v7296
        %7425 = vst [vmem:[%s433 + $0x1c] sm:$0xf] %v7297
        %7426 = vst [vmem:[%s433 + $0x20] sm:$0xf] %v7298
        %7427 = vst [vmem:[%s433 + $0x24] sm:$0xf] %v7299
        %7428 = vst [vmem:[%s433 + $0x28] sm:$0xf] %v7300
        %7429 = vst [vmem:[%s433 + $0x2c] sm:$0xf] %v7301
        %7430 = vst [vmem:[%s433 + $0x30] sm:$0xf] %v7302
        %7431 = vst [vmem:[%s433 + $0x34] sm:$0xf] %v7303
        %7432 = vst [vmem:[%s433 + $0x38] sm:$0xf] %v7304
        %7433 = vst [vmem:[%s433 + $0x3c] sm:$0xf] %v7305
        %7434 = vst [vmem:[%s433 + $0x40] sm:$0xf] %v7306
        %7435 = vst [vmem:[%s433 + $0x44] sm:$0xf] %v7307
        %7436 = vst [vmem:[%s433 + $0x48] sm:$0xf] %v7308
        %7437 = vst [vmem:[%s433 + $0x4c] sm:$0xf] %v7309
        %7438 = vst [vmem:[%s433 + $0x50] sm:$0xf] %v7310
        %7439 = vst [vmem:[%s433 + $0x54] sm:$0xf] %v7311
        %7440 = vst [vmem:[%s433 + $0x58] sm:$0xf] %v7312
        %7441 = vst [vmem:[%s433 + $0x5c] sm:$0xf] %v7313
        %7442 = vst [vmem:[%s433 + $0x60] sm:$0xf] %v7314
        %7443 = vst [vmem:[%s433 + $0x64] sm:$0xf] %v7315
        %7444 = vst [vmem:[%s433 + $0x68] sm:$0xf] %v7316
        %7445 = vst [vmem:[%s433 + $0x6c] sm:$0xf] %v7317
        %7446 = vst [vmem:[%s433 + $0x70] sm:$0xf] %v7318
        %7447 = vst [vmem:[%s433 + $0x74] sm:$0xf] %v7319
        %7448 = vst [vmem:[%s433 + $0x78] sm:$0xf] %v7320
        %7449 = vst [vmem:[%s433 + $0x7c] sm:$0xf] %v7321
        %7450 = vst [vmem:[%s433 + $0x80] sm:$0xf] %v7322
        %7451 = vst [vmem:[%s433 + $0x84] sm:$0xf] %v7323
        %7452 = vst [vmem:[%s433 + $0x88] sm:$0xf] %v7324
        %7453 = vst [vmem:[%s433 + $0x8c] sm:$0xf] %v7325
        %7454 = vst [vmem:[%s433 + $0x90] sm:$0xf] %v7326
        %7455 = vst [vmem:[%s433 + $0x94] sm:$0xf] %v7327
        %7456 = vst [vmem:[%s433 + $0x98] sm:$0xf] %v7328
        %7457 = vst [vmem:[%s433 + $0x9c] sm:$0xf] %v7329
        %7458 = vst [vmem:[%s433 + $0xa0] sm:$0xf] %v7330
        %7459 = vst [vmem:[%s433 + $0xa4] sm:$0xf] %v7331
        %7460 = vst [vmem:[%s433 + $0xa8] sm:$0xf] %v7332
        %7461 = vst [vmem:[%s433 + $0xac] sm:$0xf] %v7333
        %7462 = vst [vmem:[%s433 + $0xb0] sm:$0xf] %v7334
        %7463 = vst [vmem:[%s433 + $0xb4] sm:$0xf] %v7335
        %7464 = vst [vmem:[%s433 + $0xb8] sm:$0xf] %v7336
        %7465 = vst [vmem:[%s433 + $0xbc] sm:$0xf] %v7337
        %7466 = vst [vmem:[%s433 + $0xc0] sm:$0xf] %v7338
        %7467 = vst [vmem:[%s433 + $0xc4] sm:$0xf] %v7339
        %7468 = vst [vmem:[%s433 + $0xc8] sm:$0xf] %v7340
        %7469 = vst [vmem:[%s433 + $0xcc] sm:$0xf] %v7341
        %7470 = vst [vmem:[%s433 + $0xd0] sm:$0xf] %v7342
        %7471 = vst [vmem:[%s433 + $0xd4] sm:$0xf] %v7343
        %7472 = vst [vmem:[%s433 + $0xd8] sm:$0xf] %v7344
        %7473 = vst [vmem:[%s433 + $0xdc] sm:$0xf] %v7345
        %7474 = vst [vmem:[%s433 + $0xe0] sm:$0xf] %v7346
        %7475 = vst [vmem:[%s433 + $0xe4] sm:$0xf] %v7347
        %7476 = vst [vmem:[%s433 + $0xe8] sm:$0xf] %v7348
        %7477 = vst [vmem:[%s433 + $0xec] sm:$0xf] %v7349
        %7478 = vst [vmem:[%s433 + $0xf0] sm:$0xf] %v7350
        %7479 = vst [vmem:[%s433 + $0xf4] sm:$0xf] %v7351
        %7480 = vst [vmem:[%s433 + $0xf8] sm:$0xf] %v7352
        %7481 = vst [vmem:[%s433 + $0xfc] sm:$0xf] %v7353
        %s7482 = sand.u32 %s224, 1
        %s7483 = scalar_lea.sflag [#allocation5], %s7482
        %s7484 = sand.u32 %s224, 1
        %s7485 = smul.addr %s7484, 256
        %s7486 = scalar_lea.vmem [#allocation17], %s7485
        // Predicated region
        $region85: #{bottleneck_forward.1} parent=51 // pred_check
          %p7487 = pneg %p234
        $region86: #{bottleneck_forward.1} parent=51 // pred_check_branch
          %7489 = sbr.rel (%p7487) target = $region88
        $region87: #{bottleneck_forward.1} parent=51 // pred_region
          %s7490 = smul.u32 64, %s34
          %s7492 = ssub.s32 4096, 4096
          %7493 = vsyncadd %s7483, %s7492
          %s7494 = smul.addr %s33, 64
          %s7495 = sadd.s32 %s7490, %s7494
          %s7496 = smul.addr %s7495, 64
          %s7497 = scalar_lea.hbm %s8, %s7496
          %s7498 = sshll.u32 %s7486, 4
          %s7499 = int_to_ptr.vmem [resolvable:$true] %s7498
          %7504 = dma.vmem_to_hbm [thread:$0]  %s7499, 4096, %s7497, %s7483, 64, 64, 4
        $region88: #{bottleneck_forward.1} parent=51 // pred_fallthru
          _
      $region52: #{bottleneck_forward.1} parent=5 // pred_fallthru
        _
      %p7505 = scmp.le.s32.totalorder 2, %s24
      // Predicated region
      $region89: #{bottleneck_forward.1} parent=5 // pred_check
        %p7506 = pneg %p7505
      $region90: #{bottleneck_forward.1} parent=5 // pred_check_branch
        %7508 = sbr.rel (%p7506) target = $region92
      $region91: #{bottleneck_forward.1} parent=5 // pred_region
        %s7509 = ssub.s32 %s24, 2
        // Predicated region
        $region93: #{bottleneck_forward.1} parent=91 // pred_check
          %p7510 = pneg %p240
        $region94: #{bottleneck_forward.1} parent=91 // pred_check_branch
          %7512 = sbr.rel (%p7510) target = $region96
        $region95: #{bottleneck_forward.1} parent=91 // pred_region
          %s7513 = sand.u32 %s225, 1
          %s7514 = scalar_lea.sflag [#allocation5], %s7513
          %s7515 = sand.u32 %s225, 1
          %s7516 = smul.addr %s7515, 256
          %s7517 = scalar_lea.vmem [#allocation17], %s7516
          %7518 = dma.done %s7514, 4096
        $region96: #{bottleneck_forward.1} parent=91 // pred_fallthru
          _
      $region92: #{bottleneck_forward.1} parent=5 // pred_fallthru
        _
    $region6: #{bottleneck_forward.1} parent=1 // loop_footer
      %s28 = sadd.s32 1, %s24
    $region7: #{bottleneck_forward.1} parent=1 // loop_footer_branch
      %23 = sbr.rel target = $region3
    $region8: #{bottleneck_forward.1} parent=1 // loop_exit
      _
    %7519 = vsyncpa [#allocation4], 1
    %s7520 = scalar_lea.sflag [#allocation4], 1
    %7521 = vsyncpa %s7520, 1
    %7522 = vsyncpa [#allocation7], 1
    %7523 = vsyncpa [#allocation10], 1
    %7524 = vsyncpa [#allocation13], 1
    %7525 = vsyncpa [#allocation16], 1
    %7526 = vsyncpa [#allocation5], 1
    %s7527 = scalar_lea.sflag [#allocation5], 1
    %7528 = vsyncpa %s7527, 1

</llo_original>
